<compile_context>
chip_gen: v7x
topology: tpu7x:2x2x1
jax: 0.10.0
libtpu: 0.0.40
codegen_flags: <defaults>
</compile_context>

<pallas_src>
import functools

import numpy as np
import jax
import jax.numpy as jnp
from jax import lax
from jax.experimental import pallas as pl
from jax.experimental.pallas import tpu as pltpu


# ----------------------------- conv tap masks -----------------------------

def _conv_tap_masks_np(h, w, k, pad):
    """{0,1} mask per conv tap: mask[t, p] == 1 iff output position p (= y*w+x)
    reads a valid (non zero-padding, non row-wrapping) input pixel for tap t."""
    m = np.zeros((k * k, h * w), np.float32)
    for i in range(k):
        for j in range(k):
            di, dj = i - pad, j - pad
            for y in range(h):
                if not (0 <= y + di < h):
                    continue
                for x in range(w):
                    if 0 <= x + dj < w:
                        m[i * k + j, y * w + x] = 1.0
    return m


# ----------------------------- fused kernel -----------------------------

def _fused_forward_kernel(*refs, conv_cfg, fc_cfg, h, w, co_group):
    """convs(+ReLU, norm pre-folded) -> flatten -> FCs on one VMEM batch tile.

    Activation layout: lane-dense (bt, H*W) slab per channel, channel-blocked
    columns (== NCHW flatten order).  Convs are stride-1 'same' convs done as
    k*k masked `pltpu.roll` taps + scalar-weight VPU FMAs, with output channels
    processed in groups of `co_group` to bound vreg live ranges.  Per-conv-layer
    outputs live in VMEM scratch; only the FC matmuls use the MXU.
    """
    n_conv = len(conv_cfg)
    n_fc = len(fc_cfg)
    it = iter(refs)
    x_ref = next(it)                                  # (bt, c0*H*W)   VMEM
    mask_refs = [next(it) for _ in range(n_conv)]     # (k*k, H*W)     VMEM
    cw_refs = [next(it) for _ in range(n_conv)]       # (O*I*k*k,)     SMEM
    cbp_refs = [next(it) for _ in range(n_conv)]      # (O, H*W)       VMEM bias planes
    fw_refs = [next(it) for _ in range(n_fc)]         # (in, out) = W^T VMEM
    fb_refs = [next(it) for _ in range(n_fc)]         # (1, out)       VMEM
    o_ref = next(it)                                  # (bt, out_pad)
    act_refs = [next(it) for _ in range(n_conv)]      # (bt, O*H*W)    VMEM scratch

    f32 = jnp.float32
    hw = h * w
    bt = x_ref.shape[0]

    # --- Conv stack (pure VPU/XLU work; normalization folded into layer 0).
    for l, (cin, cout, k, pad) in enumerate(conv_cfg):
        src = x_ref if l == 0 else act_refs[l - 1]
        dst = act_refs[l]
        w_ref = cw_refs[l]
        bp_ref = cbp_refs[l]
        m_ref = mask_refs[l]
        for co0 in range(0, cout, co_group):
            cos = list(range(co0, min(co0 + co_group, cout)))
            accs = [jnp.zeros((bt, hw), f32) for _ in cos]
            for ci in range(cin):
                xin = src[:, ci * hw:(ci + 1) * hw]          # re-load per group
                for i in range(k):
                    for j in range(k):
                        t = i * k + j
                        off = (i - pad) * w + (j - pad)
                        shift = (-off) % hw
                        rolled = pltpu.roll(xin, shift=shift, axis=1) if shift else xin
                        tap = rolled * m_ref[t:t + 1, :]      # mask kills wraps/padding
                        for gi, co in enumerate(cos):
                            widx = ((co * cin + ci) * k + i) * k + j
                            accs[gi] = accs[gi] + w_ref[widx] * tap
            for gi, co in enumerate(cos):
                dst[:, co * hw:(co + 1) * hw] = jnp.maximum(
                    accs[gi] + bp_ref[co:co + 1, :], 0.0)     # bias plane + ReLU

    # --- Flatten (channel-block-major lanes == NCHW flatten order) + FC stack.
    hidden = act_refs[-1][...] if n_conv else x_ref[...]
    for l, (_, _, relu) in enumerate(fc_cfg):
        hidden = jnp.dot(hidden, fw_refs[l][...],
                         preferred_element_type=jnp.float32) + fb_refs[l][...]
        if relu:
            hidden = jnp.maximum(hidden, 0.0)
    o_ref[...] = hidden.astype(o_ref.dtype)


# ----------------------------- builder / wrapper -----------------------------

def build_forward(input_size, conv_layers, fc_layers, *, n_class=10,
                  normalization=True, nonlinearity_after_conv="relu",
                  is_last_layer_relu=False, batch_block=64, co_group=2):
    """Returns (prepare_params, forward): forward(prepared, x) is ONE pallas_call."""
    c0, h, w = input_size
    hw = h * w
    if nonlinearity_after_conv != "relu":
        # TODO(synk): MaxPool2d / AvgPool2d conv nonlinearities not implemented.
        raise NotImplementedError("only nonlinearity_after_conv='relu' is supported")

    conv_cfg = []
    cin = c0
    for cl in conv_layers:
        cout, k, stride, pad = cl[:4]
        if stride != 1 or 2 * pad != k - 1:
            # TODO(synk): general stride / non-'same' conv geometries would need
            # an im2col path; the instantiated config is stride-1 'same'.
            raise NotImplementedError("fused kernel supports stride-1 'same' convs")
        conv_cfg.append((cin, cout, k, pad))
        cin = cout
    conv_cfg = tuple(conv_cfg)

    fc_cfg = []
    prev = cin * hw
    for i, f in enumerate(fc_layers):
        relu = (i + (1 - int(is_last_layer_relu))) < len(fc_layers)
        fc_cfg.append((prev, f, relu))
        prev = f
    fc_cfg = tuple(fc_cfg)
    assert prev == n_class
    n_fc = len(fc_cfg)

    out_pad = max(128, ((n_class + 127) // 128) * 128)       # lane-dense output
    masks_np = [_conv_tap_masks_np(h, w, k, pad) for (_, _, k, pad) in conv_cfg]
    masks = [jnp.asarray(m) for m in masks_np]

    kernel = functools.partial(_fused_forward_kernel, conv_cfg=conv_cfg,
                               fc_cfg=fc_cfg, h=h, w=w, co_group=co_group)

    # ---- one-time parameter preparation (transpose/cast/fold outside hot path)
    def prepare_params(params):
        f32 = jnp.float32
        if normalization:
            mean = jnp.broadcast_to(jnp.asarray(params["mean"], f32).reshape(-1), (c0,))
            sigma = jnp.broadcast_to(jnp.asarray(params["sigma"], f32).reshape(-1), (c0,))

        conv_w, conv_bp = [], []
        for l, (ci_n, co_n, k, pad) in enumerate(conv_cfg):
            wgt = jnp.asarray(params["conv"][l]["w"], f32)          # (O, I, k, k)
            b = jnp.asarray(params["conv"][l]["b"], f32)            # (O,)
            if l == 0 and normalization:
                # Exact padding-aware fold of (x - mean)/sigma into conv1.
                scale = mean / sigma                                 # (c0,)
                coeff = jnp.einsum("oiyx,i->oyx", wgt, scale).reshape(co_n, k * k)
                plane = b[:, None] - coeff @ jnp.asarray(masks_np[0])
                wgt = wgt / sigma.reshape(1, c0, 1, 1)
            else:
                plane = jnp.broadcast_to(b[:, None], (co_n, hw))
            conv_w.append(wgt.reshape(-1))
            conv_bp.append(jnp.asarray(plane, f32))

        fc_w, fc_b = [], []
        for l, (fin, fout, _) in enumerate(fc_cfg):
            wt = jnp.asarray(params["fc"][l]["w"], f32).T            # (in, out)
            bb = jnp.asarray(params["fc"][l]["b"], f32).reshape(1, fout)
            if l == 0 and normalization and not conv_cfg:
                # Fold normalization into fc1 when there are no conv layers.
                scale = jnp.repeat(1.0 / sigma, hw)
                shift = jnp.repeat(mean / sigma, hw)
                bb = bb - shift[None, :] @ wt
                wt = wt * scale[:, None]
            if l == n_fc - 1 and fout < out_pad:
                wt = jnp.pad(wt, ((0, 0), (0, out_pad - fout)))
                bb = jnp.pad(bb, ((0, 0), (0, out_pad - fout)))
            fc_w.append(wt)
            fc_b.append(bb)
        return {"conv_w": conv_w, "conv_bp": conv_bp, "fc_w": fc_w, "fc_b": fc_b}

    def _select_bt(n):
        if n <= 8:
            return 8                                  # sublane-full tiny batch
        bt = min(batch_block, -(-n // 2))             # >=2 grid steps when possible (v7x)
        bt = ((bt + 7) // 8) * 8
        return max(8, min(bt, batch_block))

    def forward(prepared, x):
        f32 = jnp.float32
        n = x.shape[0]
        bt = _select_bt(n)
        n_pad = -(-n // bt) * bt
        x2d = x.reshape(n, c0 * hw).astype(f32)       # NCHW flatten (no data movement)
        if n_pad != n:
            x2d = jnp.pad(x2d, ((0, n_pad - n), (0, 0)))

        inputs = [x2d]
        in_specs = [pl.BlockSpec((bt, c0 * hw), lambda i: (i, 0))]
        for l, (_, _, k, _) in enumerate(conv_cfg):
            inputs.append(masks[l])
            in_specs.append(pl.BlockSpec((k * k, hw), lambda i: (0, 0)))
        for l in range(len(conv_cfg)):
            inputs.append(prepared["conv_w"][l])
            in_specs.append(pl.BlockSpec(memory_space=pltpu.MemorySpace.SMEM))
        for l, (_, co_n, _, _) in enumerate(conv_cfg):
            inputs.append(prepared["conv_bp"][l])
            in_specs.append(pl.BlockSpec((co_n, hw), lambda i: (0, 0)))
        for l, (fin, fout, _) in enumerate(fc_cfg):
            fout_b = out_pad if l == n_fc - 1 else fout
            inputs.append(prepared["fc_w"][l])
            in_specs.append(pl.BlockSpec((fin, fout_b), lambda i: (0, 0)))
        for l, (_, fout, _) in enumerate(fc_cfg):
            fout_b = out_pad if l == n_fc - 1 else fout
            inputs.append(prepared["fc_b"][l])
            in_specs.append(pl.BlockSpec((1, fout_b), lambda i: (0, 0)))

        scratch = [pltpu.VMEM((bt, co_n * hw), f32) for (_, co_n, _, _) in conv_cfg]

        out = pl.pallas_call(
            kernel,
            out_shape=jax.ShapeDtypeStruct((n_pad, out_pad), f32),
            grid=(n_pad // bt,),
            in_specs=in_specs,
            out_specs=pl.BlockSpec((bt, out_pad), lambda i: (i, 0)),
            scratch_shapes=scratch,
            compiler_params=pltpu.CompilerParams(
                dimension_semantics=("parallel",)),
        )(*inputs)
        return out[:n, :n_class]

    return prepare_params, forward
    # TODO(synk): auxiliary_outputs_layers path is inactive in eval forward
    # (use_auxiliary_outputs=False) and is not implemented here.


# ----------------------------- parameter init -----------------------------

def _uniform(key, shape, bound):
    return jax.random.uniform(key, shape, jnp.float32, -bound, bound)


def init_params(key, input_size, conv_layers, fc_layers):
    params = {"mean": jnp.array([0.1307], jnp.float32),
              "sigma": jnp.array([0.3081], jnp.float32),
              "conv": [], "fc": []}
    c, h, w = input_size
    for (oc, k, stride, pad) in conv_layers:
        key, k1, k2 = jax.random.split(key, 3)
        bound = 1.0 / ((c * k * k) ** 0.5)
        params["conv"].append({"w": _uniform(k1, (oc, c, k, k), bound),
                               "b": _uniform(k2, (oc,), bound)})
        c = oc
        h = (h + 2 * pad - k) // stride + 1
        w = (w + 2 * pad - k) // stride + 1
    prev = c * h * w
    for fc_size in fc_layers:
        key, k1, k2 = jax.random.split(key, 3)
        bound = 1.0 / (prev ** 0.5)
        params["fc"].append({"w": _uniform(k1, (fc_size, prev), bound),
                             "b": _uniform(k2, (fc_size,), bound)})
        prev = fc_size
    return params


# ----------------------------- pure-JAX reference -----------------------------

def reference_forward(params, x, conv_layers, fc_layers, *, normalization=True,
                      is_last_layer_relu=False):
    y = x.astype(jnp.float32)
    if normalization:
        y = (y - params["mean"].reshape(1, -1, 1, 1)) / params["sigma"].reshape(1, -1, 1, 1)
    for l, (_, k, stride, pad) in enumerate(conv_layers):
        wgt, b = params["conv"][l]["w"], params["conv"][l]["b"]
        y = lax.conv_general_dilated(y, wgt, (stride, stride),
                                     [(pad, pad), (pad, pad)],
                                     dimension_numbers=("NCHW", "OIHW", "NCHW"))
        y = jnp.maximum(y + b.reshape(1, -1, 1, 1), 0.0)
    y = y.reshape(y.shape[0], -1)
    nf = len(fc_layers)
    for i in range(nf):
        wgt, b = params["fc"][i]["w"], params["fc"][i]["b"]
        y = y @ wgt.T + b
        if (i + (1 - int(is_last_layer_relu))) < nf:
            y = jnp.maximum(y, 0.0)
    return y


# ----------------------------- main -----------------------------

if __name__ == "__main__":
    input_size = (1, 16, 16)
    conv_layers = [(4, 3, 1, 1), (8, 3, 1, 1)]
    fc_layers = [32, 10]

    key = jax.random.PRNGKey(0)
    pkey, xkey = jax.random.split(key)
    params = init_params(pkey, input_size, conv_layers, fc_layers)
    x = jax.random.normal(xkey, (2, *input_size), jnp.float32)   # NCHW

    prepare_params, forward = build_forward(
        input_size, conv_layers, fc_layers, n_class=10,
        normalization=True, is_last_layer_relu=False)

    prepared = prepare_params(params)      # one-time param prep (outside hot path)
    fwd = jax.jit(forward)
    out = fwd(prepared, x)
    jax.block_until_ready(out)

    assert out.shape == (2, 10), out.shape
    assert out.dtype == jnp.float32

    ref = reference_forward(params, x, conv_layers, fc_layers,
                            normalization=True, is_last_layer_relu=False)
    err = float(jnp.max(jnp.abs(out - ref)))
    if not jnp.allclose(out, ref, atol=2e-3, rtol=2e-3):
        raise AssertionError(f"kernel/reference mismatch, max abs err = {err}")

    print("KERNEL_OK")
</pallas_src>

<mosaic_0001>
module attributes {stable_mosaic.version = 11 : i64} {
  func.func @_fused_forward_kernel(%arg0: i32, %arg1: memref<8x256xf32, #tpu.memory_space<vmem>>, %arg2: memref<9x256xf32, #tpu.memory_space<vmem>>, %arg3: memref<9x256xf32, #tpu.memory_space<vmem>>, %arg4: memref<36xf32, #tpu.memory_space<smem>>, %arg5: memref<288xf32, #tpu.memory_space<smem>>, %arg6: memref<4x256xf32, #tpu.memory_space<vmem>>, %arg7: memref<8x256xf32, #tpu.memory_space<vmem>>, %arg8: memref<2048x32xf32, #tpu.memory_space<vmem>>, %arg9: memref<32x128xf32, #tpu.memory_space<vmem>>, %arg10: memref<1x32xf32, #tpu.memory_space<vmem>>, %arg11: memref<1x128xf32, #tpu.memory_space<vmem>>, %arg12: memref<8x128xf32, #tpu.memory_space<vmem>>, %arg13: memref<8x1024xf32, #tpu.memory_space<vmem>>, %arg14: memref<8x2048xf32, #tpu.memory_space<vmem>>) attributes {dimension_semantics = [#tpu.dimension_semantics<parallel>], iteration_bounds = array<i64: 1>, scalar_prefetch = 0 : i64, scratch_operands = 2 : i64, tpu.core_type = #tpu.core_type<tc>, window_params = [{transform_indices = @transform_0, window_bounds = array<i64: 8, 256>}, {pipeline_mode = #tpu.pipeline_mode<synchronous>, transform_indices = @transform_1, window_bounds = array<i64: 9, 256>}, {pipeline_mode = #tpu.pipeline_mode<synchronous>, transform_indices = @transform_2, window_bounds = array<i64: 9, 256>}, {transform_indices = @transform_3, window_bounds = array<i64: 36>}, {transform_indices = @transform_4, window_bounds = array<i64: 288>}, {pipeline_mode = #tpu.pipeline_mode<synchronous>, transform_indices = @transform_5, window_bounds = array<i64: 4, 256>}, {pipeline_mode = #tpu.pipeline_mode<synchronous>, transform_indices = @transform_6, window_bounds = array<i64: 8, 256>}, {pipeline_mode = #tpu.pipeline_mode<synchronous>, transform_indices = @transform_7, window_bounds = array<i64: 2048, 32>}, {pipeline_mode = #tpu.pipeline_mode<synchronous>, transform_indices = @transform_8, window_bounds = array<i64: 32, 128>}, {pipeline_mode = #tpu.pipeline_mode<synchronous>, transform_indices = @transform_9, window_bounds = array<i64: 1, 32>}, {pipeline_mode = #tpu.pipeline_mode<synchronous>, transform_indices = @transform_10, window_bounds = array<i64: 1, 128>}, {transform_indices = @transform_11, window_bounds = array<i64: 8, 128>}]} {
    %cst = arith.constant 0.000000e+00 : f32
    %0 = vector.broadcast %cst : f32 to vector<8x256xf32>
    %cst_0 = arith.constant 0.000000e+00 : f32
    %1 = vector.broadcast %cst_0 : f32 to vector<8x256xf32>
    %c0 = arith.constant 0 : index
    %c0_1 = arith.constant 0 : index
    %2 = vector.load %arg1[%c0, %c0_1] : memref<8x256xf32, #tpu.memory_space<vmem>>, vector<8x256xf32>
    %c17_i32 = arith.constant 17 : i32
    %3 = tpu.dynamic_rotate %2 by %c17_i32 dim 1 : vector<8x256xf32>, i32 -> vector<8x256xf32>
    %c0_2 = arith.constant 0 : index
    %c0_3 = arith.constant 0 : index
    %4 = vector.load %arg2[%c0_2, %c0_3] : memref<9x256xf32, #tpu.memory_space<vmem>>, vector<1x256xf32>
    %5 = vector.broadcast %4 : vector<1x256xf32> to vector<8x256xf32>
    %6 = arith.mulf %3, %5 : vector<8x256xf32>
    %c0_4 = arith.constant 0 : index
    %7 = memref.load %arg4[%c0_4] : memref<36xf32, #tpu.memory_space<smem>>
    %8 = vector.broadcast %7 : f32 to vector<8x256xf32>
    %9 = arith.mulf %8, %6 : vector<8x256xf32>
    %10 = arith.addf %0, %9 : vector<8x256xf32>
    %c9 = arith.constant 9 : index
    %11 = memref.load %arg4[%c9] : memref<36xf32, #tpu.memory_space<smem>>
    %12 = vector.broadcast %11 : f32 to vector<8x256xf32>
    %13 = arith.mulf %12, %6 : vector<8x256xf32>
    %14 = arith.addf %1, %13 : vector<8x256xf32>
    %c16_i32 = arith.constant 16 : i32
    %15 = tpu.dynamic_rotate %2 by %c16_i32 dim 1 : vector<8x256xf32>, i32 -> vector<8x256xf32>
    %c1 = arith.constant 1 : index
    %c0_5 = arith.constant 0 : index
    %16 = vector.load %arg2[%c1, %c0_5] : memref<9x256xf32, #tpu.memory_space<vmem>>, vector<1x256xf32>
    %17 = vector.broadcast %16 : vector<1x256xf32> to vector<8x256xf32>
    %18 = arith.mulf %15, %17 : vector<8x256xf32>
    %c1_6 = arith.constant 1 : index
    %19 = memref.load %arg4[%c1_6] : memref<36xf32, #tpu.memory_space<smem>>
    %20 = vector.broadcast %19 : f32 to vector<8x256xf32>
    %21 = arith.mulf %20, %18 : vector<8x256xf32>
    %22 = arith.addf %10, %21 : vector<8x256xf32>
    %c10 = arith.constant 10 : index
    %23 = memref.load %arg4[%c10] : memref<36xf32, #tpu.memory_space<smem>>
    %24 = vector.broadcast %23 : f32 to vector<8x256xf32>
    %25 = arith.mulf %24, %18 : vector<8x256xf32>
    %26 = arith.addf %14, %25 : vector<8x256xf32>
    %c15_i32 = arith.constant 15 : i32
    %27 = tpu.dynamic_rotate %2 by %c15_i32 dim 1 : vector<8x256xf32>, i32 -> vector<8x256xf32>
    %c2 = arith.constant 2 : index
    %c0_7 = arith.constant 0 : index
    %28 = vector.load %arg2[%c2, %c0_7] : memref<9x256xf32, #tpu.memory_space<vmem>>, vector<1x256xf32>
    %29 = vector.broadcast %28 : vector<1x256xf32> to vector<8x256xf32>
    %30 = arith.mulf %27, %29 : vector<8x256xf32>
    %c2_8 = arith.constant 2 : index
    %31 = memref.load %arg4[%c2_8] : memref<36xf32, #tpu.memory_space<smem>>
    %32 = vector.broadcast %31 : f32 to vector<8x256xf32>
    %33 = arith.mulf %32, %30 : vector<8x256xf32>
    %34 = arith.addf %22, %33 : vector<8x256xf32>
    %c11 = arith.constant 11 : index
    %35 = memref.load %arg4[%c11] : memref<36xf32, #tpu.memory_space<smem>>
    %36 = vector.broadcast %35 : f32 to vector<8x256xf32>
    %37 = arith.mulf %36, %30 : vector<8x256xf32>
    %38 = arith.addf %26, %37 : vector<8x256xf32>
    %c1_i32 = arith.constant 1 : i32
    %39 = tpu.dynamic_rotate %2 by %c1_i32 dim 1 : vector<8x256xf32>, i32 -> vector<8x256xf32>
    %c3 = arith.constant 3 : index
    %c0_9 = arith.constant 0 : index
    %40 = vector.load %arg2[%c3, %c0_9] : memref<9x256xf32, #tpu.memory_space<vmem>>, vector<1x256xf32>
    %41 = vector.broadcast %40 : vector<1x256xf32> to vector<8x256xf32>
    %42 = arith.mulf %39, %41 : vector<8x256xf32>
    %c3_10 = arith.constant 3 : index
    %43 = memref.load %arg4[%c3_10] : memref<36xf32, #tpu.memory_space<smem>>
    %44 = vector.broadcast %43 : f32 to vector<8x256xf32>
    %45 = arith.mulf %44, %42 : vector<8x256xf32>
    %46 = arith.addf %34, %45 : vector<8x256xf32>
    %c12 = arith.constant 12 : index
    %47 = memref.load %arg4[%c12] : memref<36xf32, #tpu.memory_space<smem>>
    %48 = vector.broadcast %47 : f32 to vector<8x256xf32>
    %49 = arith.mulf %48, %42 : vector<8x256xf32>
    %50 = arith.addf %38, %49 : vector<8x256xf32>
    %c4 = arith.constant 4 : index
    %c0_11 = arith.constant 0 : index
    %51 = vector.load %arg2[%c4, %c0_11] : memref<9x256xf32, #tpu.memory_space<vmem>>, vector<1x256xf32>
    %52 = vector.broadcast %51 : vector<1x256xf32> to vector<8x256xf32>
    %53 = arith.mulf %2, %52 : vector<8x256xf32>
    %c4_12 = arith.constant 4 : index
    %54 = memref.load %arg4[%c4_12] : memref<36xf32, #tpu.memory_space<smem>>
    %55 = vector.broadcast %54 : f32 to vector<8x256xf32>
    %56 = arith.mulf %55, %53 : vector<8x256xf32>
    %57 = arith.addf %46, %56 : vector<8x256xf32>
    %c13 = arith.constant 13 : index
    %58 = memref.load %arg4[%c13] : memref<36xf32, #tpu.memory_space<smem>>
    %59 = vector.broadcast %58 : f32 to vector<8x256xf32>
    %60 = arith.mulf %59, %53 : vector<8x256xf32>
    %61 = arith.addf %50, %60 : vector<8x256xf32>
    %c255_i32 = arith.constant 255 : i32
    %62 = tpu.dynamic_rotate %2 by %c255_i32 dim 1 : vector<8x256xf32>, i32 -> vector<8x256xf32>
    %c5 = arith.constant 5 : index
    %c0_13 = arith.constant 0 : index
    %63 = vector.load %arg2[%c5, %c0_13] : memref<9x256xf32, #tpu.memory_space<vmem>>, vector<1x256xf32>
    %64 = vector.broadcast %63 : vector<1x256xf32> to vector<8x256xf32>
    %65 = arith.mulf %62, %64 : vector<8x256xf32>
    %c5_14 = arith.constant 5 : index
    %66 = memref.load %arg4[%c5_14] : memref<36xf32, #tpu.memory_space<smem>>
    %67 = vector.broadcast %66 : f32 to vector<8x256xf32>
    %68 = arith.mulf %67, %65 : vector<8x256xf32>
    %69 = arith.addf %57, %68 : vector<8x256xf32>
    %c14 = arith.constant 14 : index
    %70 = memref.load %arg4[%c14] : memref<36xf32, #tpu.memory_space<smem>>
    %71 = vector.broadcast %70 : f32 to vector<8x256xf32>
    %72 = arith.mulf %71, %65 : vector<8x256xf32>
    %73 = arith.addf %61, %72 : vector<8x256xf32>
    %c241_i32 = arith.constant 241 : i32
    %74 = tpu.dynamic_rotate %2 by %c241_i32 dim 1 : vector<8x256xf32>, i32 -> vector<8x256xf32>
    %c6 = arith.constant 6 : index
    %c0_15 = arith.constant 0 : index
    %75 = vector.load %arg2[%c6, %c0_15] : memref<9x256xf32, #tpu.memory_space<vmem>>, vector<1x256xf32>
    %76 = vector.broadcast %75 : vector<1x256xf32> to vector<8x256xf32>
    %77 = arith.mulf %74, %76 : vector<8x256xf32>
    %c6_16 = arith.constant 6 : index
    %78 = memref.load %arg4[%c6_16] : memref<36xf32, #tpu.memory_space<smem>>
    %79 = vector.broadcast %78 : f32 to vector<8x256xf32>
    %80 = arith.mulf %79, %77 : vector<8x256xf32>
    %81 = arith.addf %69, %80 : vector<8x256xf32>
    %c15 = arith.constant 15 : index
    %82 = memref.load %arg4[%c15] : memref<36xf32, #tpu.memory_space<smem>>
    %83 = vector.broadcast %82 : f32 to vector<8x256xf32>
    %84 = arith.mulf %83, %77 : vector<8x256xf32>
    %85 = arith.addf %73, %84 : vector<8x256xf32>
    %c240_i32 = arith.constant 240 : i32
    %86 = tpu.dynamic_rotate %2 by %c240_i32 dim 1 : vector<8x256xf32>, i32 -> vector<8x256xf32>
    %c7 = arith.constant 7 : index
    %c0_17 = arith.constant 0 : index
    %87 = vector.load %arg2[%c7, %c0_17] : memref<9x256xf32, #tpu.memory_space<vmem>>, vector<1x256xf32>
    %88 = vector.broadcast %87 : vector<1x256xf32> to vector<8x256xf32>
    %89 = arith.mulf %86, %88 : vector<8x256xf32>
    %c7_18 = arith.constant 7 : index
    %90 = memref.load %arg4[%c7_18] : memref<36xf32, #tpu.memory_space<smem>>
    %91 = vector.broadcast %90 : f32 to vector<8x256xf32>
    %92 = arith.mulf %91, %89 : vector<8x256xf32>
    %93 = arith.addf %81, %92 : vector<8x256xf32>
    %c16 = arith.constant 16 : index
    %94 = memref.load %arg4[%c16] : memref<36xf32, #tpu.memory_space<smem>>
    %95 = vector.broadcast %94 : f32 to vector<8x256xf32>
    %96 = arith.mulf %95, %89 : vector<8x256xf32>
    %97 = arith.addf %85, %96 : vector<8x256xf32>
    %c239_i32 = arith.constant 239 : i32
    %98 = tpu.dynamic_rotate %2 by %c239_i32 dim 1 : vector<8x256xf32>, i32 -> vector<8x256xf32>
    %c8 = arith.constant 8 : index
    %c0_19 = arith.constant 0 : index
    %99 = vector.load %arg2[%c8, %c0_19] : memref<9x256xf32, #tpu.memory_space<vmem>>, vector<1x256xf32>
    %100 = vector.broadcast %99 : vector<1x256xf32> to vector<8x256xf32>
    %101 = arith.mulf %98, %100 : vector<8x256xf32>
    %c8_20 = arith.constant 8 : index
    %102 = memref.load %arg4[%c8_20] : memref<36xf32, #tpu.memory_space<smem>>
    %103 = vector.broadcast %102 : f32 to vector<8x256xf32>
    %104 = arith.mulf %103, %101 : vector<8x256xf32>
    %105 = arith.addf %93, %104 : vector<8x256xf32>
    %c17 = arith.constant 17 : index
    %106 = memref.load %arg4[%c17] : memref<36xf32, #tpu.memory_space<smem>>
    %107 = vector.broadcast %106 : f32 to vector<8x256xf32>
    %108 = arith.mulf %107, %101 : vector<8x256xf32>
    %109 = arith.addf %97, %108 : vector<8x256xf32>
    %c0_21 = arith.constant 0 : index
    %c0_22 = arith.constant 0 : index
    %110 = vector.load %arg6[%c0_21, %c0_22] : memref<4x256xf32, #tpu.memory_space<vmem>>, vector<1x256xf32>
    %111 = vector.broadcast %110 : vector<1x256xf32> to vector<8x256xf32>
    %112 = arith.addf %105, %111 : vector<8x256xf32>
    %cst_23 = arith.constant 0.000000e+00 : f32
    %113 = vector.broadcast %cst_23 : f32 to vector<8x256xf32>
    %114 = arith.maximumf %112, %113 : vector<8x256xf32>
    %c0_24 = arith.constant 0 : index
    %c0_25 = arith.constant 0 : index
    %115 = vector.load %arg13[%c0_24, %c0_25] : memref<8x1024xf32, #tpu.memory_space<vmem>>, vector<8x256xf32>
    tpu.vector_store %arg13[%c0_24, %c0_25], %114 {strides = array<i32>} : memref<8x1024xf32, #tpu.memory_space<vmem>>, vector<8x256xf32>,
    %c1_26 = arith.constant 1 : index
    %c0_27 = arith.constant 0 : index
    %116 = vector.load %arg6[%c1_26, %c0_27] : memref<4x256xf32, #tpu.memory_space<vmem>>, vector<1x256xf32>
    %117 = vector.broadcast %116 : vector<1x256xf32> to vector<8x256xf32>
    %118 = arith.addf %109, %117 : vector<8x256xf32>
    %cst_28 = arith.constant 0.000000e+00 : f32
    %119 = vector.broadcast %cst_28 : f32 to vector<8x256xf32>
    %120 = arith.maximumf %118, %119 : vector<8x256xf32>
    %c0_29 = arith.constant 0 : index
    %c256 = arith.constant 256 : index
    %121 = vector.load %arg13[%c0_29, %c256] : memref<8x1024xf32, #tpu.memory_space<vmem>>, vector<8x256xf32>
    tpu.vector_store %arg13[%c0_29, %c256], %120 {strides = array<i32>} : memref<8x1024xf32, #tpu.memory_space<vmem>>, vector<8x256xf32>,
    %cst_30 = arith.constant 0.000000e+00 : f32
    %122 = vector.broadcast %cst_30 : f32 to vector<8x256xf32>
    %cst_31 = arith.constant 0.000000e+00 : f32
    %123 = vector.broadcast %cst_31 : f32 to vector<8x256xf32>
    %c0_32 = arith.constant 0 : index
    %c0_33 = arith.constant 0 : index
    %124 = vector.load %arg1[%c0_32, %c0_33] : memref<8x256xf32, #tpu.memory_space<vmem>>, vector<8x256xf32>
    %c17_i32_34 = arith.constant 17 : i32
    %125 = tpu.dynamic_rotate %124 by %c17_i32_34 dim 1 : vector<8x256xf32>, i32 -> vector<8x256xf32>
    %c0_35 = arith.constant 0 : index
    %c0_36 = arith.constant 0 : index
    %126 = vector.load %arg2[%c0_35, %c0_36] : memref<9x256xf32, #tpu.memory_space<vmem>>, vector<1x256xf32>
    %127 = vector.broadcast %126 : vector<1x256xf32> to vector<8x256xf32>
    %128 = arith.mulf %125, %127 : vector<8x256xf32>
    %c18 = arith.constant 18 : index
    %129 = memref.load %arg4[%c18] : memref<36xf32, #tpu.memory_space<smem>>
    %130 = vector.broadcast %129 : f32 to vector<8x256xf32>
    %131 = arith.mulf %130, %128 : vector<8x256xf32>
    %132 = arith.addf %122, %131 : vector<8x256xf32>
    %c27 = arith.constant 27 : index
    %133 = memref.load %arg4[%c27] : memref<36xf32, #tpu.memory_space<smem>>
    %134 = vector.broadcast %133 : f32 to vector<8x256xf32>
    %135 = arith.mulf %134, %128 : vector<8x256xf32>
    %136 = arith.addf %123, %135 : vector<8x256xf32>
    %c16_i32_37 = arith.constant 16 : i32
    %137 = tpu.dynamic_rotate %124 by %c16_i32_37 dim 1 : vector<8x256xf32>, i32 -> vector<8x256xf32>
    %c1_38 = arith.constant 1 : index
    %c0_39 = arith.constant 0 : index
    %138 = vector.load %arg2[%c1_38, %c0_39] : memref<9x256xf32, #tpu.memory_space<vmem>>, vector<1x256xf32>
    %139 = vector.broadcast %138 : vector<1x256xf32> to vector<8x256xf32>
    %140 = arith.mulf %137, %139 : vector<8x256xf32>
    %c19 = arith.constant 19 : index
    %141 = memref.load %arg4[%c19] : memref<36xf32, #tpu.memory_space<smem>>
    %142 = vector.broadcast %141 : f32 to vector<8x256xf32>
    %143 = arith.mulf %142, %140 : vector<8x256xf32>
    %144 = arith.addf %132, %143 : vector<8x256xf32>
    %c28 = arith.constant 28 : index
    %145 = memref.load %arg4[%c28] : memref<36xf32, #tpu.memory_space<smem>>
    %146 = vector.broadcast %145 : f32 to vector<8x256xf32>
    %147 = arith.mulf %146, %140 : vector<8x256xf32>
    %148 = arith.addf %136, %147 : vector<8x256xf32>
    %c15_i32_40 = arith.constant 15 : i32
    %149 = tpu.dynamic_rotate %124 by %c15_i32_40 dim 1 : vector<8x256xf32>, i32 -> vector<8x256xf32>
    %c2_41 = arith.constant 2 : index
    %c0_42 = arith.constant 0 : index
    %150 = vector.load %arg2[%c2_41, %c0_42] : memref<9x256xf32, #tpu.memory_space<vmem>>, vector<1x256xf32>
    %151 = vector.broadcast %150 : vector<1x256xf32> to vector<8x256xf32>
    %152 = arith.mulf %149, %151 : vector<8x256xf32>
    %c20 = arith.constant 20 : index
    %153 = memref.load %arg4[%c20] : memref<36xf32, #tpu.memory_space<smem>>
    %154 = vector.broadcast %153 : f32 to vector<8x256xf32>
    %155 = arith.mulf %154, %152 : vector<8x256xf32>
    %156 = arith.addf %144, %155 : vector<8x256xf32>
    %c29 = arith.constant 29 : index
    %157 = memref.load %arg4[%c29] : memref<36xf32, #tpu.memory_space<smem>>
    %158 = vector.broadcast %157 : f32 to vector<8x256xf32>
    %159 = arith.mulf %158, %152 : vector<8x256xf32>
    %160 = arith.addf %148, %159 : vector<8x256xf32>
    %c1_i32_43 = arith.constant 1 : i32
    %161 = tpu.dynamic_rotate %124 by %c1_i32_43 dim 1 : vector<8x256xf32>, i32 -> vector<8x256xf32>
    %c3_44 = arith.constant 3 : index
    %c0_45 = arith.constant 0 : index
    %162 = vector.load %arg2[%c3_44, %c0_45] : memref<9x256xf32, #tpu.memory_space<vmem>>, vector<1x256xf32>
    %163 = vector.broadcast %162 : vector<1x256xf32> to vector<8x256xf32>
    %164 = arith.mulf %161, %163 : vector<8x256xf32>
    %c21 = arith.constant 21 : index
    %165 = memref.load %arg4[%c21] : memref<36xf32, #tpu.memory_space<smem>>
    %166 = vector.broadcast %165 : f32 to vector<8x256xf32>
    %167 = arith.mulf %166, %164 : vector<8x256xf32>
    %168 = arith.addf %156, %167 : vector<8x256xf32>
    %c30 = arith.constant 30 : index
    %169 = memref.load %arg4[%c30] : memref<36xf32, #tpu.memory_space<smem>>
    %170 = vector.broadcast %169 : f32 to vector<8x256xf32>
    %171 = arith.mulf %170, %164 : vector<8x256xf32>
    %172 = arith.addf %160, %171 : vector<8x256xf32>
    %c4_46 = arith.constant 4 : index
    %c0_47 = arith.constant 0 : index
    %173 = vector.load %arg2[%c4_46, %c0_47] : memref<9x256xf32, #tpu.memory_space<vmem>>, vector<1x256xf32>
    %174 = vector.broadcast %173 : vector<1x256xf32> to vector<8x256xf32>
    %175 = arith.mulf %124, %174 : vector<8x256xf32>
    %c22 = arith.constant 22 : index
    %176 = memref.load %arg4[%c22] : memref<36xf32, #tpu.memory_space<smem>>
    %177 = vector.broadcast %176 : f32 to vector<8x256xf32>
    %178 = arith.mulf %177, %175 : vector<8x256xf32>
    %179 = arith.addf %168, %178 : vector<8x256xf32>
    %c31 = arith.constant 31 : index
    %180 = memref.load %arg4[%c31] : memref<36xf32, #tpu.memory_space<smem>>
    %181 = vector.broadcast %180 : f32 to vector<8x256xf32>
    %182 = arith.mulf %181, %175 : vector<8x256xf32>
    %183 = arith.addf %172, %182 : vector<8x256xf32>
    %c255_i32_48 = arith.constant 255 : i32
    %184 = tpu.dynamic_rotate %124 by %c255_i32_48 dim 1 : vector<8x256xf32>, i32 -> vector<8x256xf32>
    %c5_49 = arith.constant 5 : index
    %c0_50 = arith.constant 0 : index
    %185 = vector.load %arg2[%c5_49, %c0_50] : memref<9x256xf32, #tpu.memory_space<vmem>>, vector<1x256xf32>
    %186 = vector.broadcast %185 : vector<1x256xf32> to vector<8x256xf32>
    %187 = arith.mulf %184, %186 : vector<8x256xf32>
    %c23 = arith.constant 23 : index
    %188 = memref.load %arg4[%c23] : memref<36xf32, #tpu.memory_space<smem>>
    %189 = vector.broadcast %188 : f32 to vector<8x256xf32>
    %190 = arith.mulf %189, %187 : vector<8x256xf32>
    %191 = arith.addf %179, %190 : vector<8x256xf32>
    %c32 = arith.constant 32 : index
    %192 = memref.load %arg4[%c32] : memref<36xf32, #tpu.memory_space<smem>>
    %193 = vector.broadcast %192 : f32 to vector<8x256xf32>
    %194 = arith.mulf %193, %187 : vector<8x256xf32>
    %195 = arith.addf %183, %194 : vector<8x256xf32>
    %c241_i32_51 = arith.constant 241 : i32
    %196 = tpu.dynamic_rotate %124 by %c241_i32_51 dim 1 : vector<8x256xf32>, i32 -> vector<8x256xf32>
    %c6_52 = arith.constant 6 : index
    %c0_53 = arith.constant 0 : index
    %197 = vector.load %arg2[%c6_52, %c0_53] : memref<9x256xf32, #tpu.memory_space<vmem>>, vector<1x256xf32>
    %198 = vector.broadcast %197 : vector<1x256xf32> to vector<8x256xf32>
    %199 = arith.mulf %196, %198 : vector<8x256xf32>
    %c24 = arith.constant 24 : index
    %200 = memref.load %arg4[%c24] : memref<36xf32, #tpu.memory_space<smem>>
    %201 = vector.broadcast %200 : f32 to vector<8x256xf32>
    %202 = arith.mulf %201, %199 : vector<8x256xf32>
    %203 = arith.addf %191, %202 : vector<8x256xf32>
    %c33 = arith.constant 33 : index
    %204 = memref.load %arg4[%c33] : memref<36xf32, #tpu.memory_space<smem>>
    %205 = vector.broadcast %204 : f32 to vector<8x256xf32>
    %206 = arith.mulf %205, %199 : vector<8x256xf32>
    %207 = arith.addf %195, %206 : vector<8x256xf32>
    %c240_i32_54 = arith.constant 240 : i32
    %208 = tpu.dynamic_rotate %124 by %c240_i32_54 dim 1 : vector<8x256xf32>, i32 -> vector<8x256xf32>
    %c7_55 = arith.constant 7 : index
    %c0_56 = arith.constant 0 : index
    %209 = vector.load %arg2[%c7_55, %c0_56] : memref<9x256xf32, #tpu.memory_space<vmem>>, vector<1x256xf32>
    %210 = vector.broadcast %209 : vector<1x256xf32> to vector<8x256xf32>
    %211 = arith.mulf %208, %210 : vector<8x256xf32>
    %c25 = arith.constant 25 : index
    %212 = memref.load %arg4[%c25] : memref<36xf32, #tpu.memory_space<smem>>
    %213 = vector.broadcast %212 : f32 to vector<8x256xf32>
    %214 = arith.mulf %213, %211 : vector<8x256xf32>
    %215 = arith.addf %203, %214 : vector<8x256xf32>
    %c34 = arith.constant 34 : index
    %216 = memref.load %arg4[%c34] : memref<36xf32, #tpu.memory_space<smem>>
    %217 = vector.broadcast %216 : f32 to vector<8x256xf32>
    %218 = arith.mulf %217, %211 : vector<8x256xf32>
    %219 = arith.addf %207, %218 : vector<8x256xf32>
    %c239_i32_57 = arith.constant 239 : i32
    %220 = tpu.dynamic_rotate %124 by %c239_i32_57 dim 1 : vector<8x256xf32>, i32 -> vector<8x256xf32>
    %c8_58 = arith.constant 8 : index
    %c0_59 = arith.constant 0 : index
    %221 = vector.load %arg2[%c8_58, %c0_59] : memref<9x256xf32, #tpu.memory_space<vmem>>, vector<1x256xf32>
    %222 = vector.broadcast %221 : vector<1x256xf32> to vector<8x256xf32>
    %223 = arith.mulf %220, %222 : vector<8x256xf32>
    %c26 = arith.constant 26 : index
    %224 = memref.load %arg4[%c26] : memref<36xf32, #tpu.memory_space<smem>>
    %225 = vector.broadcast %224 : f32 to vector<8x256xf32>
    %226 = arith.mulf %225, %223 : vector<8x256xf32>
    %227 = arith.addf %215, %226 : vector<8x256xf32>
    %c35 = arith.constant 35 : index
    %228 = memref.load %arg4[%c35] : memref<36xf32, #tpu.memory_space<smem>>
    %229 = vector.broadcast %228 : f32 to vector<8x256xf32>
    %230 = arith.mulf %229, %223 : vector<8x256xf32>
    %231 = arith.addf %219, %230 : vector<8x256xf32>
    %c2_60 = arith.constant 2 : index
    %c0_61 = arith.constant 0 : index
    %232 = vector.load %arg6[%c2_60, %c0_61] : memref<4x256xf32, #tpu.memory_space<vmem>>, vector<1x256xf32>
    %233 = vector.broadcast %232 : vector<1x256xf32> to vector<8x256xf32>
    %234 = arith.addf %227, %233 : vector<8x256xf32>
    %cst_62 = arith.constant 0.000000e+00 : f32
    %235 = vector.broadcast %cst_62 : f32 to vector<8x256xf32>
    %236 = arith.maximumf %234, %235 : vector<8x256xf32>
    %c0_63 = arith.constant 0 : index
    %c512 = arith.constant 512 : index
    %237 = vector.load %arg13[%c0_63, %c512] : memref<8x1024xf32, #tpu.memory_space<vmem>>, vector<8x256xf32>
    tpu.vector_store %arg13[%c0_63, %c512], %236 {strides = array<i32>} : memref<8x1024xf32, #tpu.memory_space<vmem>>, vector<8x256xf32>,
    %c3_64 = arith.constant 3 : index
    %c0_65 = arith.constant 0 : index
    %238 = vector.load %arg6[%c3_64, %c0_65] : memref<4x256xf32, #tpu.memory_space<vmem>>, vector<1x256xf32>
    %239 = vector.broadcast %238 : vector<1x256xf32> to vector<8x256xf32>
    %240 = arith.addf %231, %239 : vector<8x256xf32>
    %cst_66 = arith.constant 0.000000e+00 : f32
    %241 = vector.broadcast %cst_66 : f32 to vector<8x256xf32>
    %242 = arith.maximumf %240, %241 : vector<8x256xf32>
    %c0_67 = arith.constant 0 : index
    %c768 = arith.constant 768 : index
    %243 = vector.load %arg13[%c0_67, %c768] : memref<8x1024xf32, #tpu.memory_space<vmem>>, vector<8x256xf32>
    tpu.vector_store %arg13[%c0_67, %c768], %242 {strides = array<i32>} : memref<8x1024xf32, #tpu.memory_space<vmem>>, vector<8x256xf32>,
    %cst_68 = arith.constant 0.000000e+00 : f32
    %244 = vector.broadcast %cst_68 : f32 to vector<8x256xf32>
    %cst_69 = arith.constant 0.000000e+00 : f32
    %245 = vector.broadcast %cst_69 : f32 to vector<8x256xf32>
    %c0_70 = arith.constant 0 : index
    %c0_71 = arith.constant 0 : index
    %246 = vector.load %arg13[%c0_70, %c0_71] : memref<8x1024xf32, #tpu.memory_space<vmem>>, vector<8x256xf32>
    %c17_i32_72 = arith.constant 17 : i32
    %247 = tpu.dynamic_rotate %246 by %c17_i32_72 dim 1 : vector<8x256xf32>, i32 -> vector<8x256xf32>
    %c0_73 = arith.constant 0 : index
    %c0_74 = arith.constant 0 : index
    %248 = vector.load %arg3[%c0_73, %c0_74] : memref<9x256xf32, #tpu.memory_space<vmem>>, vector<1x256xf32>
    %249 = vector.broadcast %248 : vector<1x256xf32> to vector<8x256xf32>
    %250 = arith.mulf %247, %249 : vector<8x256xf32>
    %c0_75 = arith.constant 0 : index
    %251 = memref.load %arg5[%c0_75] : memref<288xf32, #tpu.memory_space<smem>>
    %252 = vector.broadcast %251 : f32 to vector<8x256xf32>
    %253 = arith.mulf %252, %250 : vector<8x256xf32>
    %254 = arith.addf %244, %253 : vector<8x256xf32>
    %c36 = arith.constant 36 : index
    %255 = memref.load %arg5[%c36] : memref<288xf32, #tpu.memory_space<smem>>
    %256 = vector.broadcast %255 : f32 to vector<8x256xf32>
    %257 = arith.mulf %256, %250 : vector<8x256xf32>
    %258 = arith.addf %245, %257 : vector<8x256xf32>
    %c16_i32_76 = arith.constant 16 : i32
    %259 = tpu.dynamic_rotate %246 by %c16_i32_76 dim 1 : vector<8x256xf32>, i32 -> vector<8x256xf32>
    %c1_77 = arith.constant 1 : index
    %c0_78 = arith.constant 0 : index
    %260 = vector.load %arg3[%c1_77, %c0_78] : memref<9x256xf32, #tpu.memory_space<vmem>>, vector<1x256xf32>
    %261 = vector.broadcast %260 : vector<1x256xf32> to vector<8x256xf32>
    %262 = arith.mulf %259, %261 : vector<8x256xf32>
    %c1_79 = arith.constant 1 : index
    %263 = memref.load %arg5[%c1_79] : memref<288xf32, #tpu.memory_space<smem>>
    %264 = vector.broadcast %263 : f32 to vector<8x256xf32>
    %265 = arith.mulf %264, %262 : vector<8x256xf32>
    %266 = arith.addf %254, %265 : vector<8x256xf32>
    %c37 = arith.constant 37 : index
    %267 = memref.load %arg5[%c37] : memref<288xf32, #tpu.memory_space<smem>>
    %268 = vector.broadcast %267 : f32 to vector<8x256xf32>
    %269 = arith.mulf %268, %262 : vector<8x256xf32>
    %270 = arith.addf %258, %269 : vector<8x256xf32>
    %c15_i32_80 = arith.constant 15 : i32
    %271 = tpu.dynamic_rotate %246 by %c15_i32_80 dim 1 : vector<8x256xf32>, i32 -> vector<8x256xf32>
    %c2_81 = arith.constant 2 : index
    %c0_82 = arith.constant 0 : index
    %272 = vector.load %arg3[%c2_81, %c0_82] : memref<9x256xf32, #tpu.memory_space<vmem>>, vector<1x256xf32>
    %273 = vector.broadcast %272 : vector<1x256xf32> to vector<8x256xf32>
    %274 = arith.mulf %271, %273 : vector<8x256xf32>
    %c2_83 = arith.constant 2 : index
    %275 = memref.load %arg5[%c2_83] : memref<288xf32, #tpu.memory_space<smem>>
    %276 = vector.broadcast %275 : f32 to vector<8x256xf32>
    %277 = arith.mulf %276, %274 : vector<8x256xf32>
    %278 = arith.addf %266, %277 : vector<8x256xf32>
    %c38 = arith.constant 38 : index
    %279 = memref.load %arg5[%c38] : memref<288xf32, #tpu.memory_space<smem>>
    %280 = vector.broadcast %279 : f32 to vector<8x256xf32>
    %281 = arith.mulf %280, %274 : vector<8x256xf32>
    %282 = arith.addf %270, %281 : vector<8x256xf32>
    %c1_i32_84 = arith.constant 1 : i32
    %283 = tpu.dynamic_rotate %246 by %c1_i32_84 dim 1 : vector<8x256xf32>, i32 -> vector<8x256xf32>
    %c3_85 = arith.constant 3 : index
    %c0_86 = arith.constant 0 : index
    %284 = vector.load %arg3[%c3_85, %c0_86] : memref<9x256xf32, #tpu.memory_space<vmem>>, vector<1x256xf32>
    %285 = vector.broadcast %284 : vector<1x256xf32> to vector<8x256xf32>
    %286 = arith.mulf %283, %285 : vector<8x256xf32>
    %c3_87 = arith.constant 3 : index
    %287 = memref.load %arg5[%c3_87] : memref<288xf32, #tpu.memory_space<smem>>
    %288 = vector.broadcast %287 : f32 to vector<8x256xf32>
    %289 = arith.mulf %288, %286 : vector<8x256xf32>
    %290 = arith.addf %278, %289 : vector<8x256xf32>
    %c39 = arith.constant 39 : index
    %291 = memref.load %arg5[%c39] : memref<288xf32, #tpu.memory_space<smem>>
    %292 = vector.broadcast %291 : f32 to vector<8x256xf32>
    %293 = arith.mulf %292, %286 : vector<8x256xf32>
    %294 = arith.addf %282, %293 : vector<8x256xf32>
    %c4_88 = arith.constant 4 : index
    %c0_89 = arith.constant 0 : index
    %295 = vector.load %arg3[%c4_88, %c0_89] : memref<9x256xf32, #tpu.memory_space<vmem>>, vector<1x256xf32>
    %296 = vector.broadcast %295 : vector<1x256xf32> to vector<8x256xf32>
    %297 = arith.mulf %246, %296 : vector<8x256xf32>
    %c4_90 = arith.constant 4 : index
    %298 = memref.load %arg5[%c4_90] : memref<288xf32, #tpu.memory_space<smem>>
    %299 = vector.broadcast %298 : f32 to vector<8x256xf32>
    %300 = arith.mulf %299, %297 : vector<8x256xf32>
    %301 = arith.addf %290, %300 : vector<8x256xf32>
    %c40 = arith.constant 40 : index
    %302 = memref.load %arg5[%c40] : memref<288xf32, #tpu.memory_space<smem>>
    %303 = vector.broadcast %302 : f32 to vector<8x256xf32>
    %304 = arith.mulf %303, %297 : vector<8x256xf32>
    %305 = arith.addf %294, %304 : vector<8x256xf32>
    %c255_i32_91 = arith.constant 255 : i32
    %306 = tpu.dynamic_rotate %246 by %c255_i32_91 dim 1 : vector<8x256xf32>, i32 -> vector<8x256xf32>
    %c5_92 = arith.constant 5 : index
    %c0_93 = arith.constant 0 : index
    %307 = vector.load %arg3[%c5_92, %c0_93] : memref<9x256xf32, #tpu.memory_space<vmem>>, vector<1x256xf32>
    %308 = vector.broadcast %307 : vector<1x256xf32> to vector<8x256xf32>
    %309 = arith.mulf %306, %308 : vector<8x256xf32>
    %c5_94 = arith.constant 5 : index
    %310 = memref.load %arg5[%c5_94] : memref<288xf32, #tpu.memory_space<smem>>
    %311 = vector.broadcast %310 : f32 to vector<8x256xf32>
    %312 = arith.mulf %311, %309 : vector<8x256xf32>
    %313 = arith.addf %301, %312 : vector<8x256xf32>
    %c41 = arith.constant 41 : index
    %314 = memref.load %arg5[%c41] : memref<288xf32, #tpu.memory_space<smem>>
    %315 = vector.broadcast %314 : f32 to vector<8x256xf32>
    %316 = arith.mulf %315, %309 : vector<8x256xf32>
    %317 = arith.addf %305, %316 : vector<8x256xf32>
    %c241_i32_95 = arith.constant 241 : i32
    %318 = tpu.dynamic_rotate %246 by %c241_i32_95 dim 1 : vector<8x256xf32>, i32 -> vector<8x256xf32>
    %c6_96 = arith.constant 6 : index
    %c0_97 = arith.constant 0 : index
    %319 = vector.load %arg3[%c6_96, %c0_97] : memref<9x256xf32, #tpu.memory_space<vmem>>, vector<1x256xf32>
    %320 = vector.broadcast %319 : vector<1x256xf32> to vector<8x256xf32>
    %321 = arith.mulf %318, %320 : vector<8x256xf32>
    %c6_98 = arith.constant 6 : index
    %322 = memref.load %arg5[%c6_98] : memref<288xf32, #tpu.memory_space<smem>>
    %323 = vector.broadcast %322 : f32 to vector<8x256xf32>
    %324 = arith.mulf %323, %321 : vector<8x256xf32>
    %325 = arith.addf %313, %324 : vector<8x256xf32>
    %c42 = arith.constant 42 : index
    %326 = memref.load %arg5[%c42] : memref<288xf32, #tpu.memory_space<smem>>
    %327 = vector.broadcast %326 : f32 to vector<8x256xf32>
    %328 = arith.mulf %327, %321 : vector<8x256xf32>
    %329 = arith.addf %317, %328 : vector<8x256xf32>
    %c240_i32_99 = arith.constant 240 : i32
    %330 = tpu.dynamic_rotate %246 by %c240_i32_99 dim 1 : vector<8x256xf32>, i32 -> vector<8x256xf32>
    %c7_100 = arith.constant 7 : index
    %c0_101 = arith.constant 0 : index
    %331 = vector.load %arg3[%c7_100, %c0_101] : memref<9x256xf32, #tpu.memory_space<vmem>>, vector<1x256xf32>
    %332 = vector.broadcast %331 : vector<1x256xf32> to vector<8x256xf32>
    %333 = arith.mulf %330, %332 : vector<8x256xf32>
    %c7_102 = arith.constant 7 : index
    %334 = memref.load %arg5[%c7_102] : memref<288xf32, #tpu.memory_space<smem>>
    %335 = vector.broadcast %334 : f32 to vector<8x256xf32>
    %336 = arith.mulf %335, %333 : vector<8x256xf32>
    %337 = arith.addf %325, %336 : vector<8x256xf32>
    %c43 = arith.constant 43 : index
    %338 = memref.load %arg5[%c43] : memref<288xf32, #tpu.memory_space<smem>>
    %339 = vector.broadcast %338 : f32 to vector<8x256xf32>
    %340 = arith.mulf %339, %333 : vector<8x256xf32>
    %341 = arith.addf %329, %340 : vector<8x256xf32>
    %c239_i32_103 = arith.constant 239 : i32
    %342 = tpu.dynamic_rotate %246 by %c239_i32_103 dim 1 : vector<8x256xf32>, i32 -> vector<8x256xf32>
    %c8_104 = arith.constant 8 : index
    %c0_105 = arith.constant 0 : index
    %343 = vector.load %arg3[%c8_104, %c0_105] : memref<9x256xf32, #tpu.memory_space<vmem>>, vector<1x256xf32>
    %344 = vector.broadcast %343 : vector<1x256xf32> to vector<8x256xf32>
    %345 = arith.mulf %342, %344 : vector<8x256xf32>
    %c8_106 = arith.constant 8 : index
    %346 = memref.load %arg5[%c8_106] : memref<288xf32, #tpu.memory_space<smem>>
    %347 = vector.broadcast %346 : f32 to vector<8x256xf32>
    %348 = arith.mulf %347, %345 : vector<8x256xf32>
    %349 = arith.addf %337, %348 : vector<8x256xf32>
    %c44 = arith.constant 44 : index
    %350 = memref.load %arg5[%c44] : memref<288xf32, #tpu.memory_space<smem>>
    %351 = vector.broadcast %350 : f32 to vector<8x256xf32>
    %352 = arith.mulf %351, %345 : vector<8x256xf32>
    %353 = arith.addf %341, %352 : vector<8x256xf32>
    %c0_107 = arith.constant 0 : index
    %c256_108 = arith.constant 256 : index
    %354 = vector.load %arg13[%c0_107, %c256_108] : memref<8x1024xf32, #tpu.memory_space<vmem>>, vector<8x256xf32>
    %c17_i32_109 = arith.constant 17 : i32
    %355 = tpu.dynamic_rotate %354 by %c17_i32_109 dim 1 : vector<8x256xf32>, i32 -> vector<8x256xf32>
    %c0_110 = arith.constant 0 : index
    %c0_111 = arith.constant 0 : index
    %356 = vector.load %arg3[%c0_110, %c0_111] : memref<9x256xf32, #tpu.memory_space<vmem>>, vector<1x256xf32>
    %357 = vector.broadcast %356 : vector<1x256xf32> to vector<8x256xf32>
    %358 = arith.mulf %355, %357 : vector<8x256xf32>
    %c9_112 = arith.constant 9 : index
    %359 = memref.load %arg5[%c9_112] : memref<288xf32, #tpu.memory_space<smem>>
    %360 = vector.broadcast %359 : f32 to vector<8x256xf32>
    %361 = arith.mulf %360, %358 : vector<8x256xf32>
    %362 = arith.addf %349, %361 : vector<8x256xf32>
    %c45 = arith.constant 45 : index
    %363 = memref.load %arg5[%c45] : memref<288xf32, #tpu.memory_space<smem>>
    %364 = vector.broadcast %363 : f32 to vector<8x256xf32>
    %365 = arith.mulf %364, %358 : vector<8x256xf32>
    %366 = arith.addf %353, %365 : vector<8x256xf32>
    %c16_i32_113 = arith.constant 16 : i32
    %367 = tpu.dynamic_rotate %354 by %c16_i32_113 dim 1 : vector<8x256xf32>, i32 -> vector<8x256xf32>
    %c1_114 = arith.constant 1 : index
    %c0_115 = arith.constant 0 : index
    %368 = vector.load %arg3[%c1_114, %c0_115] : memref<9x256xf32, #tpu.memory_space<vmem>>, vector<1x256xf32>
    %369 = vector.broadcast %368 : vector<1x256xf32> to vector<8x256xf32>
    %370 = arith.mulf %367, %369 : vector<8x256xf32>
    %c10_116 = arith.constant 10 : index
    %371 = memref.load %arg5[%c10_116] : memref<288xf32, #tpu.memory_space<smem>>
    %372 = vector.broadcast %371 : f32 to vector<8x256xf32>
    %373 = arith.mulf %372, %370 : vector<8x256xf32>
    %374 = arith.addf %362, %373 : vector<8x256xf32>
    %c46 = arith.constant 46 : index
    %375 = memref.load %arg5[%c46] : memref<288xf32, #tpu.memory_space<smem>>
    %376 = vector.broadcast %375 : f32 to vector<8x256xf32>
    %377 = arith.mulf %376, %370 : vector<8x256xf32>
    %378 = arith.addf %366, %377 : vector<8x256xf32>
    %c15_i32_117 = arith.constant 15 : i32
    %379 = tpu.dynamic_rotate %354 by %c15_i32_117 dim 1 : vector<8x256xf32>, i32 -> vector<8x256xf32>
    %c2_118 = arith.constant 2 : index
    %c0_119 = arith.constant 0 : index
    %380 = vector.load %arg3[%c2_118, %c0_119] : memref<9x256xf32, #tpu.memory_space<vmem>>, vector<1x256xf32>
    %381 = vector.broadcast %380 : vector<1x256xf32> to vector<8x256xf32>
    %382 = arith.mulf %379, %381 : vector<8x256xf32>
    %c11_120 = arith.constant 11 : index
    %383 = memref.load %arg5[%c11_120] : memref<288xf32, #tpu.memory_space<smem>>
    %384 = vector.broadcast %383 : f32 to vector<8x256xf32>
    %385 = arith.mulf %384, %382 : vector<8x256xf32>
    %386 = arith.addf %374, %385 : vector<8x256xf32>
    %c47 = arith.constant 47 : index
    %387 = memref.load %arg5[%c47] : memref<288xf32, #tpu.memory_space<smem>>
    %388 = vector.broadcast %387 : f32 to vector<8x256xf32>
    %389 = arith.mulf %388, %382 : vector<8x256xf32>
    %390 = arith.addf %378, %389 : vector<8x256xf32>
    %c1_i32_121 = arith.constant 1 : i32
    %391 = tpu.dynamic_rotate %354 by %c1_i32_121 dim 1 : vector<8x256xf32>, i32 -> vector<8x256xf32>
    %c3_122 = arith.constant 3 : index
    %c0_123 = arith.constant 0 : index
    %392 = vector.load %arg3[%c3_122, %c0_123] : memref<9x256xf32, #tpu.memory_space<vmem>>, vector<1x256xf32>
    %393 = vector.broadcast %392 : vector<1x256xf32> to vector<8x256xf32>
    %394 = arith.mulf %391, %393 : vector<8x256xf32>
    %c12_124 = arith.constant 12 : index
    %395 = memref.load %arg5[%c12_124] : memref<288xf32, #tpu.memory_space<smem>>
    %396 = vector.broadcast %395 : f32 to vector<8x256xf32>
    %397 = arith.mulf %396, %394 : vector<8x256xf32>
    %398 = arith.addf %386, %397 : vector<8x256xf32>
    %c48 = arith.constant 48 : index
    %399 = memref.load %arg5[%c48] : memref<288xf32, #tpu.memory_space<smem>>
    %400 = vector.broadcast %399 : f32 to vector<8x256xf32>
    %401 = arith.mulf %400, %394 : vector<8x256xf32>
    %402 = arith.addf %390, %401 : vector<8x256xf32>
    %c4_125 = arith.constant 4 : index
    %c0_126 = arith.constant 0 : index
    %403 = vector.load %arg3[%c4_125, %c0_126] : memref<9x256xf32, #tpu.memory_space<vmem>>, vector<1x256xf32>
    %404 = vector.broadcast %403 : vector<1x256xf32> to vector<8x256xf32>
    %405 = arith.mulf %354, %404 : vector<8x256xf32>
    %c13_127 = arith.constant 13 : index
    %406 = memref.load %arg5[%c13_127] : memref<288xf32, #tpu.memory_space<smem>>
    %407 = vector.broadcast %406 : f32 to vector<8x256xf32>
    %408 = arith.mulf %407, %405 : vector<8x256xf32>
    %409 = arith.addf %398, %408 : vector<8x256xf32>
    %c49 = arith.constant 49 : index
    %410 = memref.load %arg5[%c49] : memref<288xf32, #tpu.memory_space<smem>>
    %411 = vector.broadcast %410 : f32 to vector<8x256xf32>
    %412 = arith.mulf %411, %405 : vector<8x256xf32>
    %413 = arith.addf %402, %412 : vector<8x256xf32>
    %c255_i32_128 = arith.constant 255 : i32
    %414 = tpu.dynamic_rotate %354 by %c255_i32_128 dim 1 : vector<8x256xf32>, i32 -> vector<8x256xf32>
    %c5_129 = arith.constant 5 : index
    %c0_130 = arith.constant 0 : index
    %415 = vector.load %arg3[%c5_129, %c0_130] : memref<9x256xf32, #tpu.memory_space<vmem>>, vector<1x256xf32>
    %416 = vector.broadcast %415 : vector<1x256xf32> to vector<8x256xf32>
    %417 = arith.mulf %414, %416 : vector<8x256xf32>
    %c14_131 = arith.constant 14 : index
    %418 = memref.load %arg5[%c14_131] : memref<288xf32, #tpu.memory_space<smem>>
    %419 = vector.broadcast %418 : f32 to vector<8x256xf32>
    %420 = arith.mulf %419, %417 : vector<8x256xf32>
    %421 = arith.addf %409, %420 : vector<8x256xf32>
    %c50 = arith.constant 50 : index
    %422 = memref.load %arg5[%c50] : memref<288xf32, #tpu.memory_space<smem>>
    %423 = vector.broadcast %422 : f32 to vector<8x256xf32>
    %424 = arith.mulf %423, %417 : vector<8x256xf32>
    %425 = arith.addf %413, %424 : vector<8x256xf32>
    %c241_i32_132 = arith.constant 241 : i32
    %426 = tpu.dynamic_rotate %354 by %c241_i32_132 dim 1 : vector<8x256xf32>, i32 -> vector<8x256xf32>
    %c6_133 = arith.constant 6 : index
    %c0_134 = arith.constant 0 : index
    %427 = vector.load %arg3[%c6_133, %c0_134] : memref<9x256xf32, #tpu.memory_space<vmem>>, vector<1x256xf32>
    %428 = vector.broadcast %427 : vector<1x256xf32> to vector<8x256xf32>
    %429 = arith.mulf %426, %428 : vector<8x256xf32>
    %c15_135 = arith.constant 15 : index
    %430 = memref.load %arg5[%c15_135] : memref<288xf32, #tpu.memory_space<smem>>
    %431 = vector.broadcast %430 : f32 to vector<8x256xf32>
    %432 = arith.mulf %431, %429 : vector<8x256xf32>
    %433 = arith.addf %421, %432 : vector<8x256xf32>
    %c51 = arith.constant 51 : index
    %434 = memref.load %arg5[%c51] : memref<288xf32, #tpu.memory_space<smem>>
    %435 = vector.broadcast %434 : f32 to vector<8x256xf32>
    %436 = arith.mulf %435, %429 : vector<8x256xf32>
    %437 = arith.addf %425, %436 : vector<8x256xf32>
    %c240_i32_136 = arith.constant 240 : i32
    %438 = tpu.dynamic_rotate %354 by %c240_i32_136 dim 1 : vector<8x256xf32>, i32 -> vector<8x256xf32>
    %c7_137 = arith.constant 7 : index
    %c0_138 = arith.constant 0 : index
    %439 = vector.load %arg3[%c7_137, %c0_138] : memref<9x256xf32, #tpu.memory_space<vmem>>, vector<1x256xf32>
    %440 = vector.broadcast %439 : vector<1x256xf32> to vector<8x256xf32>
    %441 = arith.mulf %438, %440 : vector<8x256xf32>
    %c16_139 = arith.constant 16 : index
    %442 = memref.load %arg5[%c16_139] : memref<288xf32, #tpu.memory_space<smem>>
    %443 = vector.broadcast %442 : f32 to vector<8x256xf32>
    %444 = arith.mulf %443, %441 : vector<8x256xf32>
    %445 = arith.addf %433, %444 : vector<8x256xf32>
    %c52 = arith.constant 52 : index
    %446 = memref.load %arg5[%c52] : memref<288xf32, #tpu.memory_space<smem>>
    %447 = vector.broadcast %446 : f32 to vector<8x256xf32>
    %448 = arith.mulf %447, %441 : vector<8x256xf32>
    %449 = arith.addf %437, %448 : vector<8x256xf32>
    %c239_i32_140 = arith.constant 239 : i32
    %450 = tpu.dynamic_rotate %354 by %c239_i32_140 dim 1 : vector<8x256xf32>, i32 -> vector<8x256xf32>
    %c8_141 = arith.constant 8 : index
    %c0_142 = arith.constant 0 : index
    %451 = vector.load %arg3[%c8_141, %c0_142] : memref<9x256xf32, #tpu.memory_space<vmem>>, vector<1x256xf32>
    %452 = vector.broadcast %451 : vector<1x256xf32> to vector<8x256xf32>
    %453 = arith.mulf %450, %452 : vector<8x256xf32>
    %c17_143 = arith.constant 17 : index
    %454 = memref.load %arg5[%c17_143] : memref<288xf32, #tpu.memory_space<smem>>
    %455 = vector.broadcast %454 : f32 to vector<8x256xf32>
    %456 = arith.mulf %455, %453 : vector<8x256xf32>
    %457 = arith.addf %445, %456 : vector<8x256xf32>
    %c53 = arith.constant 53 : index
    %458 = memref.load %arg5[%c53] : memref<288xf32, #tpu.memory_space<smem>>
    %459 = vector.broadcast %458 : f32 to vector<8x256xf32>
    %460 = arith.mulf %459, %453 : vector<8x256xf32>
    %461 = arith.addf %449, %460 : vector<8x256xf32>
    %c0_144 = arith.constant 0 : index
    %c512_145 = arith.constant 512 : index
    %462 = vector.load %arg13[%c0_144, %c512_145] : memref<8x1024xf32, #tpu.memory_space<vmem>>, vector<8x256xf32>
    %c17_i32_146 = arith.constant 17 : i32
    %463 = tpu.dynamic_rotate %462 by %c17_i32_146 dim 1 : vector<8x256xf32>, i32 -> vector<8x256xf32>
    %c0_147 = arith.constant 0 : index
    %c0_148 = arith.constant 0 : index
    %464 = vector.load %arg3[%c0_147, %c0_148] : memref<9x256xf32, #tpu.memory_space<vmem>>, vector<1x256xf32>
    %465 = vector.broadcast %464 : vector<1x256xf32> to vector<8x256xf32>
    %466 = arith.mulf %463, %465 : vector<8x256xf32>
    %c18_149 = arith.constant 18 : index
    %467 = memref.load %arg5[%c18_149] : memref<288xf32, #tpu.memory_space<smem>>
    %468 = vector.broadcast %467 : f32 to vector<8x256xf32>
    %469 = arith.mulf %468, %466 : vector<8x256xf32>
    %470 = arith.addf %457, %469 : vector<8x256xf32>
    %c54 = arith.constant 54 : index
    %471 = memref.load %arg5[%c54] : memref<288xf32, #tpu.memory_space<smem>>
    %472 = vector.broadcast %471 : f32 to vector<8x256xf32>
    %473 = arith.mulf %472, %466 : vector<8x256xf32>
    %474 = arith.addf %461, %473 : vector<8x256xf32>
    %c16_i32_150 = arith.constant 16 : i32
    %475 = tpu.dynamic_rotate %462 by %c16_i32_150 dim 1 : vector<8x256xf32>, i32 -> vector<8x256xf32>
    %c1_151 = arith.constant 1 : index
    %c0_152 = arith.constant 0 : index
    %476 = vector.load %arg3[%c1_151, %c0_152] : memref<9x256xf32, #tpu.memory_space<vmem>>, vector<1x256xf32>
    %477 = vector.broadcast %476 : vector<1x256xf32> to vector<8x256xf32>
    %478 = arith.mulf %475, %477 : vector<8x256xf32>
    %c19_153 = arith.constant 19 : index
    %479 = memref.load %arg5[%c19_153] : memref<288xf32, #tpu.memory_space<smem>>
    %480 = vector.broadcast %479 : f32 to vector<8x256xf32>
    %481 = arith.mulf %480, %478 : vector<8x256xf32>
    %482 = arith.addf %470, %481 : vector<8x256xf32>
    %c55 = arith.constant 55 : index
    %483 = memref.load %arg5[%c55] : memref<288xf32, #tpu.memory_space<smem>>
    %484 = vector.broadcast %483 : f32 to vector<8x256xf32>
    %485 = arith.mulf %484, %478 : vector<8x256xf32>
    %486 = arith.addf %474, %485 : vector<8x256xf32>
    %c15_i32_154 = arith.constant 15 : i32
    %487 = tpu.dynamic_rotate %462 by %c15_i32_154 dim 1 : vector<8x256xf32>, i32 -> vector<8x256xf32>
    %c2_155 = arith.constant 2 : index
    %c0_156 = arith.constant 0 : index
    %488 = vector.load %arg3[%c2_155, %c0_156] : memref<9x256xf32, #tpu.memory_space<vmem>>, vector<1x256xf32>
    %489 = vector.broadcast %488 : vector<1x256xf32> to vector<8x256xf32>
    %490 = arith.mulf %487, %489 : vector<8x256xf32>
    %c20_157 = arith.constant 20 : index
    %491 = memref.load %arg5[%c20_157] : memref<288xf32, #tpu.memory_space<smem>>
    %492 = vector.broadcast %491 : f32 to vector<8x256xf32>
    %493 = arith.mulf %492, %490 : vector<8x256xf32>
    %494 = arith.addf %482, %493 : vector<8x256xf32>
    %c56 = arith.constant 56 : index
    %495 = memref.load %arg5[%c56] : memref<288xf32, #tpu.memory_space<smem>>
    %496 = vector.broadcast %495 : f32 to vector<8x256xf32>
    %497 = arith.mulf %496, %490 : vector<8x256xf32>
    %498 = arith.addf %486, %497 : vector<8x256xf32>
    %c1_i32_158 = arith.constant 1 : i32
    %499 = tpu.dynamic_rotate %462 by %c1_i32_158 dim 1 : vector<8x256xf32>, i32 -> vector<8x256xf32>
    %c3_159 = arith.constant 3 : index
    %c0_160 = arith.constant 0 : index
    %500 = vector.load %arg3[%c3_159, %c0_160] : memref<9x256xf32, #tpu.memory_space<vmem>>, vector<1x256xf32>
    %501 = vector.broadcast %500 : vector<1x256xf32> to vector<8x256xf32>
    %502 = arith.mulf %499, %501 : vector<8x256xf32>
    %c21_161 = arith.constant 21 : index
    %503 = memref.load %arg5[%c21_161] : memref<288xf32, #tpu.memory_space<smem>>
    %504 = vector.broadcast %503 : f32 to vector<8x256xf32>
    %505 = arith.mulf %504, %502 : vector<8x256xf32>
    %506 = arith.addf %494, %505 : vector<8x256xf32>
    %c57 = arith.constant 57 : index
    %507 = memref.load %arg5[%c57] : memref<288xf32, #tpu.memory_space<smem>>
    %508 = vector.broadcast %507 : f32 to vector<8x256xf32>
    %509 = arith.mulf %508, %502 : vector<8x256xf32>
    %510 = arith.addf %498, %509 : vector<8x256xf32>
    %c4_162 = arith.constant 4 : index
    %c0_163 = arith.constant 0 : index
    %511 = vector.load %arg3[%c4_162, %c0_163] : memref<9x256xf32, #tpu.memory_space<vmem>>, vector<1x256xf32>
    %512 = vector.broadcast %511 : vector<1x256xf32> to vector<8x256xf32>
    %513 = arith.mulf %462, %512 : vector<8x256xf32>
    %c22_164 = arith.constant 22 : index
    %514 = memref.load %arg5[%c22_164] : memref<288xf32, #tpu.memory_space<smem>>
    %515 = vector.broadcast %514 : f32 to vector<8x256xf32>
    %516 = arith.mulf %515, %513 : vector<8x256xf32>
    %517 = arith.addf %506, %516 : vector<8x256xf32>
    %c58 = arith.constant 58 : index
    %518 = memref.load %arg5[%c58] : memref<288xf32, #tpu.memory_space<smem>>
    %519 = vector.broadcast %518 : f32 to vector<8x256xf32>
    %520 = arith.mulf %519, %513 : vector<8x256xf32>
    %521 = arith.addf %510, %520 : vector<8x256xf32>
    %c255_i32_165 = arith.constant 255 : i32
    %522 = tpu.dynamic_rotate %462 by %c255_i32_165 dim 1 : vector<8x256xf32>, i32 -> vector<8x256xf32>
    %c5_166 = arith.constant 5 : index
    %c0_167 = arith.constant 0 : index
    %523 = vector.load %arg3[%c5_166, %c0_167] : memref<9x256xf32, #tpu.memory_space<vmem>>, vector<1x256xf32>
    %524 = vector.broadcast %523 : vector<1x256xf32> to vector<8x256xf32>
    %525 = arith.mulf %522, %524 : vector<8x256xf32>
    %c23_168 = arith.constant 23 : index
    %526 = memref.load %arg5[%c23_168] : memref<288xf32, #tpu.memory_space<smem>>
    %527 = vector.broadcast %526 : f32 to vector<8x256xf32>
    %528 = arith.mulf %527, %525 : vector<8x256xf32>
    %529 = arith.addf %517, %528 : vector<8x256xf32>
    %c59 = arith.constant 59 : index
    %530 = memref.load %arg5[%c59] : memref<288xf32, #tpu.memory_space<smem>>
    %531 = vector.broadcast %530 : f32 to vector<8x256xf32>
    %532 = arith.mulf %531, %525 : vector<8x256xf32>
    %533 = arith.addf %521, %532 : vector<8x256xf32>
    %c241_i32_169 = arith.constant 241 : i32
    %534 = tpu.dynamic_rotate %462 by %c241_i32_169 dim 1 : vector<8x256xf32>, i32 -> vector<8x256xf32>
    %c6_170 = arith.constant 6 : index
    %c0_171 = arith.constant 0 : index
    %535 = vector.load %arg3[%c6_170, %c0_171] : memref<9x256xf32, #tpu.memory_space<vmem>>, vector<1x256xf32>
    %536 = vector.broadcast %535 : vector<1x256xf32> to vector<8x256xf32>
    %537 = arith.mulf %534, %536 : vector<8x256xf32>
    %c24_172 = arith.constant 24 : index
    %538 = memref.load %arg5[%c24_172] : memref<288xf32, #tpu.memory_space<smem>>
    %539 = vector.broadcast %538 : f32 to vector<8x256xf32>
    %540 = arith.mulf %539, %537 : vector<8x256xf32>
    %541 = arith.addf %529, %540 : vector<8x256xf32>
    %c60 = arith.constant 60 : index
    %542 = memref.load %arg5[%c60] : memref<288xf32, #tpu.memory_space<smem>>
    %543 = vector.broadcast %542 : f32 to vector<8x256xf32>
    %544 = arith.mulf %543, %537 : vector<8x256xf32>
    %545 = arith.addf %533, %544 : vector<8x256xf32>
    %c240_i32_173 = arith.constant 240 : i32
    %546 = tpu.dynamic_rotate %462 by %c240_i32_173 dim 1 : vector<8x256xf32>, i32 -> vector<8x256xf32>
    %c7_174 = arith.constant 7 : index
    %c0_175 = arith.constant 0 : index
    %547 = vector.load %arg3[%c7_174, %c0_175] : memref<9x256xf32, #tpu.memory_space<vmem>>, vector<1x256xf32>
    %548 = vector.broadcast %547 : vector<1x256xf32> to vector<8x256xf32>
    %549 = arith.mulf %546, %548 : vector<8x256xf32>
    %c25_176 = arith.constant 25 : index
    %550 = memref.load %arg5[%c25_176] : memref<288xf32, #tpu.memory_space<smem>>
    %551 = vector.broadcast %550 : f32 to vector<8x256xf32>
    %552 = arith.mulf %551, %549 : vector<8x256xf32>
    %553 = arith.addf %541, %552 : vector<8x256xf32>
    %c61 = arith.constant 61 : index
    %554 = memref.load %arg5[%c61] : memref<288xf32, #tpu.memory_space<smem>>
    %555 = vector.broadcast %554 : f32 to vector<8x256xf32>
    %556 = arith.mulf %555, %549 : vector<8x256xf32>
    %557 = arith.addf %545, %556 : vector<8x256xf32>
    %c239_i32_177 = arith.constant 239 : i32
    %558 = tpu.dynamic_rotate %462 by %c239_i32_177 dim 1 : vector<8x256xf32>, i32 -> vector<8x256xf32>
    %c8_178 = arith.constant 8 : index
    %c0_179 = arith.constant 0 : index
    %559 = vector.load %arg3[%c8_178, %c0_179] : memref<9x256xf32, #tpu.memory_space<vmem>>, vector<1x256xf32>
    %560 = vector.broadcast %559 : vector<1x256xf32> to vector<8x256xf32>
    %561 = arith.mulf %558, %560 : vector<8x256xf32>
    %c26_180 = arith.constant 26 : index
    %562 = memref.load %arg5[%c26_180] : memref<288xf32, #tpu.memory_space<smem>>
    %563 = vector.broadcast %562 : f32 to vector<8x256xf32>
    %564 = arith.mulf %563, %561 : vector<8x256xf32>
    %565 = arith.addf %553, %564 : vector<8x256xf32>
    %c62 = arith.constant 62 : index
    %566 = memref.load %arg5[%c62] : memref<288xf32, #tpu.memory_space<smem>>
    %567 = vector.broadcast %566 : f32 to vector<8x256xf32>
    %568 = arith.mulf %567, %561 : vector<8x256xf32>
    %569 = arith.addf %557, %568 : vector<8x256xf32>
    %c0_181 = arith.constant 0 : index
    %c768_182 = arith.constant 768 : index
    %570 = vector.load %arg13[%c0_181, %c768_182] : memref<8x1024xf32, #tpu.memory_space<vmem>>, vector<8x256xf32>
    %c17_i32_183 = arith.constant 17 : i32
    %571 = tpu.dynamic_rotate %570 by %c17_i32_183 dim 1 : vector<8x256xf32>, i32 -> vector<8x256xf32>
    %c0_184 = arith.constant 0 : index
    %c0_185 = arith.constant 0 : index
    %572 = vector.load %arg3[%c0_184, %c0_185] : memref<9x256xf32, #tpu.memory_space<vmem>>, vector<1x256xf32>
    %573 = vector.broadcast %572 : vector<1x256xf32> to vector<8x256xf32>
    %574 = arith.mulf %571, %573 : vector<8x256xf32>
    %c27_186 = arith.constant 27 : index
    %575 = memref.load %arg5[%c27_186] : memref<288xf32, #tpu.memory_space<smem>>
    %576 = vector.broadcast %575 : f32 to vector<8x256xf32>
    %577 = arith.mulf %576, %574 : vector<8x256xf32>
    %578 = arith.addf %565, %577 : vector<8x256xf32>
    %c63 = arith.constant 63 : index
    %579 = memref.load %arg5[%c63] : memref<288xf32, #tpu.memory_space<smem>>
    %580 = vector.broadcast %579 : f32 to vector<8x256xf32>
    %581 = arith.mulf %580, %574 : vector<8x256xf32>
    %582 = arith.addf %569, %581 : vector<8x256xf32>
    %c16_i32_187 = arith.constant 16 : i32
    %583 = tpu.dynamic_rotate %570 by %c16_i32_187 dim 1 : vector<8x256xf32>, i32 -> vector<8x256xf32>
    %c1_188 = arith.constant 1 : index
    %c0_189 = arith.constant 0 : index
    %584 = vector.load %arg3[%c1_188, %c0_189] : memref<9x256xf32, #tpu.memory_space<vmem>>, vector<1x256xf32>
    %585 = vector.broadcast %584 : vector<1x256xf32> to vector<8x256xf32>
    %586 = arith.mulf %583, %585 : vector<8x256xf32>
    %c28_190 = arith.constant 28 : index
    %587 = memref.load %arg5[%c28_190] : memref<288xf32, #tpu.memory_space<smem>>
    %588 = vector.broadcast %587 : f32 to vector<8x256xf32>
    %589 = arith.mulf %588, %586 : vector<8x256xf32>
    %590 = arith.addf %578, %589 : vector<8x256xf32>
    %c64 = arith.constant 64 : index
    %591 = memref.load %arg5[%c64] : memref<288xf32, #tpu.memory_space<smem>>
    %592 = vector.broadcast %591 : f32 to vector<8x256xf32>
    %593 = arith.mulf %592, %586 : vector<8x256xf32>
    %594 = arith.addf %582, %593 : vector<8x256xf32>
    %c15_i32_191 = arith.constant 15 : i32
    %595 = tpu.dynamic_rotate %570 by %c15_i32_191 dim 1 : vector<8x256xf32>, i32 -> vector<8x256xf32>
    %c2_192 = arith.constant 2 : index
    %c0_193 = arith.constant 0 : index
    %596 = vector.load %arg3[%c2_192, %c0_193] : memref<9x256xf32, #tpu.memory_space<vmem>>, vector<1x256xf32>
    %597 = vector.broadcast %596 : vector<1x256xf32> to vector<8x256xf32>
    %598 = arith.mulf %595, %597 : vector<8x256xf32>
    %c29_194 = arith.constant 29 : index
    %599 = memref.load %arg5[%c29_194] : memref<288xf32, #tpu.memory_space<smem>>
    %600 = vector.broadcast %599 : f32 to vector<8x256xf32>
    %601 = arith.mulf %600, %598 : vector<8x256xf32>
    %602 = arith.addf %590, %601 : vector<8x256xf32>
    %c65 = arith.constant 65 : index
    %603 = memref.load %arg5[%c65] : memref<288xf32, #tpu.memory_space<smem>>
    %604 = vector.broadcast %603 : f32 to vector<8x256xf32>
    %605 = arith.mulf %604, %598 : vector<8x256xf32>
    %606 = arith.addf %594, %605 : vector<8x256xf32>
    %c1_i32_195 = arith.constant 1 : i32
    %607 = tpu.dynamic_rotate %570 by %c1_i32_195 dim 1 : vector<8x256xf32>, i32 -> vector<8x256xf32>
    %c3_196 = arith.constant 3 : index
    %c0_197 = arith.constant 0 : index
    %608 = vector.load %arg3[%c3_196, %c0_197] : memref<9x256xf32, #tpu.memory_space<vmem>>, vector<1x256xf32>
    %609 = vector.broadcast %608 : vector<1x256xf32> to vector<8x256xf32>
    %610 = arith.mulf %607, %609 : vector<8x256xf32>
    %c30_198 = arith.constant 30 : index
    %611 = memref.load %arg5[%c30_198] : memref<288xf32, #tpu.memory_space<smem>>
    %612 = vector.broadcast %611 : f32 to vector<8x256xf32>
    %613 = arith.mulf %612, %610 : vector<8x256xf32>
    %614 = arith.addf %602, %613 : vector<8x256xf32>
    %c66 = arith.constant 66 : index
    %615 = memref.load %arg5[%c66] : memref<288xf32, #tpu.memory_space<smem>>
    %616 = vector.broadcast %615 : f32 to vector<8x256xf32>
    %617 = arith.mulf %616, %610 : vector<8x256xf32>
    %618 = arith.addf %606, %617 : vector<8x256xf32>
    %c4_199 = arith.constant 4 : index
    %c0_200 = arith.constant 0 : index
    %619 = vector.load %arg3[%c4_199, %c0_200] : memref<9x256xf32, #tpu.memory_space<vmem>>, vector<1x256xf32>
    %620 = vector.broadcast %619 : vector<1x256xf32> to vector<8x256xf32>
    %621 = arith.mulf %570, %620 : vector<8x256xf32>
    %c31_201 = arith.constant 31 : index
    %622 = memref.load %arg5[%c31_201] : memref<288xf32, #tpu.memory_space<smem>>
    %623 = vector.broadcast %622 : f32 to vector<8x256xf32>
    %624 = arith.mulf %623, %621 : vector<8x256xf32>
    %625 = arith.addf %614, %624 : vector<8x256xf32>
    %c67 = arith.constant 67 : index
    %626 = memref.load %arg5[%c67] : memref<288xf32, #tpu.memory_space<smem>>
    %627 = vector.broadcast %626 : f32 to vector<8x256xf32>
    %628 = arith.mulf %627, %621 : vector<8x256xf32>
    %629 = arith.addf %618, %628 : vector<8x256xf32>
    %c255_i32_202 = arith.constant 255 : i32
    %630 = tpu.dynamic_rotate %570 by %c255_i32_202 dim 1 : vector<8x256xf32>, i32 -> vector<8x256xf32>
    %c5_203 = arith.constant 5 : index
    %c0_204 = arith.constant 0 : index
    %631 = vector.load %arg3[%c5_203, %c0_204] : memref<9x256xf32, #tpu.memory_space<vmem>>, vector<1x256xf32>
    %632 = vector.broadcast %631 : vector<1x256xf32> to vector<8x256xf32>
    %633 = arith.mulf %630, %632 : vector<8x256xf32>
    %c32_205 = arith.constant 32 : index
    %634 = memref.load %arg5[%c32_205] : memref<288xf32, #tpu.memory_space<smem>>
    %635 = vector.broadcast %634 : f32 to vector<8x256xf32>
    %636 = arith.mulf %635, %633 : vector<8x256xf32>
    %637 = arith.addf %625, %636 : vector<8x256xf32>
    %c68 = arith.constant 68 : index
    %638 = memref.load %arg5[%c68] : memref<288xf32, #tpu.memory_space<smem>>
    %639 = vector.broadcast %638 : f32 to vector<8x256xf32>
    %640 = arith.mulf %639, %633 : vector<8x256xf32>
    %641 = arith.addf %629, %640 : vector<8x256xf32>
    %c241_i32_206 = arith.constant 241 : i32
    %642 = tpu.dynamic_rotate %570 by %c241_i32_206 dim 1 : vector<8x256xf32>, i32 -> vector<8x256xf32>
    %c6_207 = arith.constant 6 : index
    %c0_208 = arith.constant 0 : index
    %643 = vector.load %arg3[%c6_207, %c0_208] : memref<9x256xf32, #tpu.memory_space<vmem>>, vector<1x256xf32>
    %644 = vector.broadcast %643 : vector<1x256xf32> to vector<8x256xf32>
    %645 = arith.mulf %642, %644 : vector<8x256xf32>
    %c33_209 = arith.constant 33 : index
    %646 = memref.load %arg5[%c33_209] : memref<288xf32, #tpu.memory_space<smem>>
    %647 = vector.broadcast %646 : f32 to vector<8x256xf32>
    %648 = arith.mulf %647, %645 : vector<8x256xf32>
    %649 = arith.addf %637, %648 : vector<8x256xf32>
    %c69 = arith.constant 69 : index
    %650 = memref.load %arg5[%c69] : memref<288xf32, #tpu.memory_space<smem>>
    %651 = vector.broadcast %650 : f32 to vector<8x256xf32>
    %652 = arith.mulf %651, %645 : vector<8x256xf32>
    %653 = arith.addf %641, %652 : vector<8x256xf32>
    %c240_i32_210 = arith.constant 240 : i32
    %654 = tpu.dynamic_rotate %570 by %c240_i32_210 dim 1 : vector<8x256xf32>, i32 -> vector<8x256xf32>
    %c7_211 = arith.constant 7 : index
    %c0_212 = arith.constant 0 : index
    %655 = vector.load %arg3[%c7_211, %c0_212] : memref<9x256xf32, #tpu.memory_space<vmem>>, vector<1x256xf32>
    %656 = vector.broadcast %655 : vector<1x256xf32> to vector<8x256xf32>
    %657 = arith.mulf %654, %656 : vector<8x256xf32>
    %c34_213 = arith.constant 34 : index
    %658 = memref.load %arg5[%c34_213] : memref<288xf32, #tpu.memory_space<smem>>
    %659 = vector.broadcast %658 : f32 to vector<8x256xf32>
    %660 = arith.mulf %659, %657 : vector<8x256xf32>
    %661 = arith.addf %649, %660 : vector<8x256xf32>
    %c70 = arith.constant 70 : index
    %662 = memref.load %arg5[%c70] : memref<288xf32, #tpu.memory_space<smem>>
    %663 = vector.broadcast %662 : f32 to vector<8x256xf32>
    %664 = arith.mulf %663, %657 : vector<8x256xf32>
    %665 = arith.addf %653, %664 : vector<8x256xf32>
    %c239_i32_214 = arith.constant 239 : i32
    %666 = tpu.dynamic_rotate %570 by %c239_i32_214 dim 1 : vector<8x256xf32>, i32 -> vector<8x256xf32>
    %c8_215 = arith.constant 8 : index
    %c0_216 = arith.constant 0 : index
    %667 = vector.load %arg3[%c8_215, %c0_216] : memref<9x256xf32, #tpu.memory_space<vmem>>, vector<1x256xf32>
    %668 = vector.broadcast %667 : vector<1x256xf32> to vector<8x256xf32>
    %669 = arith.mulf %666, %668 : vector<8x256xf32>
    %c35_217 = arith.constant 35 : index
    %670 = memref.load %arg5[%c35_217] : memref<288xf32, #tpu.memory_space<smem>>
    %671 = vector.broadcast %670 : f32 to vector<8x256xf32>
    %672 = arith.mulf %671, %669 : vector<8x256xf32>
    %673 = arith.addf %661, %672 : vector<8x256xf32>
    %c71 = arith.constant 71 : index
    %674 = memref.load %arg5[%c71] : memref<288xf32, #tpu.memory_space<smem>>
    %675 = vector.broadcast %674 : f32 to vector<8x256xf32>
    %676 = arith.mulf %675, %669 : vector<8x256xf32>
    %677 = arith.addf %665, %676 : vector<8x256xf32>
    %c0_218 = arith.constant 0 : index
    %c0_219 = arith.constant 0 : index
    %678 = vector.load %arg7[%c0_218, %c0_219] : memref<8x256xf32, #tpu.memory_space<vmem>>, vector<1x256xf32>
    %679 = vector.broadcast %678 : vector<1x256xf32> to vector<8x256xf32>
    %680 = arith.addf %673, %679 : vector<8x256xf32>
    %cst_220 = arith.constant 0.000000e+00 : f32
    %681 = vector.broadcast %cst_220 : f32 to vector<8x256xf32>
    %682 = arith.maximumf %680, %681 : vector<8x256xf32>
    %c0_221 = arith.constant 0 : index
    %c0_222 = arith.constant 0 : index
    %683 = vector.load %arg14[%c0_221, %c0_222] : memref<8x2048xf32, #tpu.memory_space<vmem>>, vector<8x256xf32>
    tpu.vector_store %arg14[%c0_221, %c0_222], %682 {strides = array<i32>} : memref<8x2048xf32, #tpu.memory_space<vmem>>, vector<8x256xf32>,
    %c1_223 = arith.constant 1 : index
    %c0_224 = arith.constant 0 : index
    %684 = vector.load %arg7[%c1_223, %c0_224] : memref<8x256xf32, #tpu.memory_space<vmem>>, vector<1x256xf32>
    %685 = vector.broadcast %684 : vector<1x256xf32> to vector<8x256xf32>
    %686 = arith.addf %677, %685 : vector<8x256xf32>
    %cst_225 = arith.constant 0.000000e+00 : f32
    %687 = vector.broadcast %cst_225 : f32 to vector<8x256xf32>
    %688 = arith.maximumf %686, %687 : vector<8x256xf32>
    %c0_226 = arith.constant 0 : index
    %c256_227 = arith.constant 256 : index
    %689 = vector.load %arg14[%c0_226, %c256_227] : memref<8x2048xf32, #tpu.memory_space<vmem>>, vector<8x256xf32>
    tpu.vector_store %arg14[%c0_226, %c256_227], %688 {strides = array<i32>} : memref<8x2048xf32, #tpu.memory_space<vmem>>, vector<8x256xf32>,
    %cst_228 = arith.constant 0.000000e+00 : f32
    %690 = vector.broadcast %cst_228 : f32 to vector<8x256xf32>
    %cst_229 = arith.constant 0.000000e+00 : f32
    %691 = vector.broadcast %cst_229 : f32 to vector<8x256xf32>
    %c0_230 = arith.constant 0 : index
    %c0_231 = arith.constant 0 : index
    %692 = vector.load %arg13[%c0_230, %c0_231] : memref<8x1024xf32, #tpu.memory_space<vmem>>, vector<8x256xf32>
    %c17_i32_232 = arith.constant 17 : i32
    %693 = tpu.dynamic_rotate %692 by %c17_i32_232 dim 1 : vector<8x256xf32>, i32 -> vector<8x256xf32>
    %c0_233 = arith.constant 0 : index
    %c0_234 = arith.constant 0 : index
    %694 = vector.load %arg3[%c0_233, %c0_234] : memref<9x256xf32, #tpu.memory_space<vmem>>, vector<1x256xf32>
    %695 = vector.broadcast %694 : vector<1x256xf32> to vector<8x256xf32>
    %696 = arith.mulf %693, %695 : vector<8x256xf32>
    %c72 = arith.constant 72 : index
    %697 = memref.load %arg5[%c72] : memref<288xf32, #tpu.memory_space<smem>>
    %698 = vector.broadcast %697 : f32 to vector<8x256xf32>
    %699 = arith.mulf %698, %696 : vector<8x256xf32>
    %700 = arith.addf %690, %699 : vector<8x256xf32>
    %c108 = arith.constant 108 : index
    %701 = memref.load %arg5[%c108] : memref<288xf32, #tpu.memory_space<smem>>
    %702 = vector.broadcast %701 : f32 to vector<8x256xf32>
    %703 = arith.mulf %702, %696 : vector<8x256xf32>
    %704 = arith.addf %691, %703 : vector<8x256xf32>
    %c16_i32_235 = arith.constant 16 : i32
    %705 = tpu.dynamic_rotate %692 by %c16_i32_235 dim 1 : vector<8x256xf32>, i32 -> vector<8x256xf32>
    %c1_236 = arith.constant 1 : index
    %c0_237 = arith.constant 0 : index
    %706 = vector.load %arg3[%c1_236, %c0_237] : memref<9x256xf32, #tpu.memory_space<vmem>>, vector<1x256xf32>
    %707 = vector.broadcast %706 : vector<1x256xf32> to vector<8x256xf32>
    %708 = arith.mulf %705, %707 : vector<8x256xf32>
    %c73 = arith.constant 73 : index
    %709 = memref.load %arg5[%c73] : memref<288xf32, #tpu.memory_space<smem>>
    %710 = vector.broadcast %709 : f32 to vector<8x256xf32>
    %711 = arith.mulf %710, %708 : vector<8x256xf32>
    %712 = arith.addf %700, %711 : vector<8x256xf32>
    %c109 = arith.constant 109 : index
    %713 = memref.load %arg5[%c109] : memref<288xf32, #tpu.memory_space<smem>>
    %714 = vector.broadcast %713 : f32 to vector<8x256xf32>
    %715 = arith.mulf %714, %708 : vector<8x256xf32>
    %716 = arith.addf %704, %715 : vector<8x256xf32>
    %c15_i32_238 = arith.constant 15 : i32
    %717 = tpu.dynamic_rotate %692 by %c15_i32_238 dim 1 : vector<8x256xf32>, i32 -> vector<8x256xf32>
    %c2_239 = arith.constant 2 : index
    %c0_240 = arith.constant 0 : index
    %718 = vector.load %arg3[%c2_239, %c0_240] : memref<9x256xf32, #tpu.memory_space<vmem>>, vector<1x256xf32>
    %719 = vector.broadcast %718 : vector<1x256xf32> to vector<8x256xf32>
    %720 = arith.mulf %717, %719 : vector<8x256xf32>
    %c74 = arith.constant 74 : index
    %721 = memref.load %arg5[%c74] : memref<288xf32, #tpu.memory_space<smem>>
    %722 = vector.broadcast %721 : f32 to vector<8x256xf32>
    %723 = arith.mulf %722, %720 : vector<8x256xf32>
    %724 = arith.addf %712, %723 : vector<8x256xf32>
    %c110 = arith.constant 110 : index
    %725 = memref.load %arg5[%c110] : memref<288xf32, #tpu.memory_space<smem>>
    %726 = vector.broadcast %725 : f32 to vector<8x256xf32>
    %727 = arith.mulf %726, %720 : vector<8x256xf32>
    %728 = arith.addf %716, %727 : vector<8x256xf32>
    %c1_i32_241 = arith.constant 1 : i32
    %729 = tpu.dynamic_rotate %692 by %c1_i32_241 dim 1 : vector<8x256xf32>, i32 -> vector<8x256xf32>
    %c3_242 = arith.constant 3 : index
    %c0_243 = arith.constant 0 : index
    %730 = vector.load %arg3[%c3_242, %c0_243] : memref<9x256xf32, #tpu.memory_space<vmem>>, vector<1x256xf32>
    %731 = vector.broadcast %730 : vector<1x256xf32> to vector<8x256xf32>
    %732 = arith.mulf %729, %731 : vector<8x256xf32>
    %c75 = arith.constant 75 : index
    %733 = memref.load %arg5[%c75] : memref<288xf32, #tpu.memory_space<smem>>
    %734 = vector.broadcast %733 : f32 to vector<8x256xf32>
    %735 = arith.mulf %734, %732 : vector<8x256xf32>
    %736 = arith.addf %724, %735 : vector<8x256xf32>
    %c111 = arith.constant 111 : index
    %737 = memref.load %arg5[%c111] : memref<288xf32, #tpu.memory_space<smem>>
    %738 = vector.broadcast %737 : f32 to vector<8x256xf32>
    %739 = arith.mulf %738, %732 : vector<8x256xf32>
    %740 = arith.addf %728, %739 : vector<8x256xf32>
    %c4_244 = arith.constant 4 : index
    %c0_245 = arith.constant 0 : index
    %741 = vector.load %arg3[%c4_244, %c0_245] : memref<9x256xf32, #tpu.memory_space<vmem>>, vector<1x256xf32>
    %742 = vector.broadcast %741 : vector<1x256xf32> to vector<8x256xf32>
    %743 = arith.mulf %692, %742 : vector<8x256xf32>
    %c76 = arith.constant 76 : index
    %744 = memref.load %arg5[%c76] : memref<288xf32, #tpu.memory_space<smem>>
    %745 = vector.broadcast %744 : f32 to vector<8x256xf32>
    %746 = arith.mulf %745, %743 : vector<8x256xf32>
    %747 = arith.addf %736, %746 : vector<8x256xf32>
    %c112 = arith.constant 112 : index
    %748 = memref.load %arg5[%c112] : memref<288xf32, #tpu.memory_space<smem>>
    %749 = vector.broadcast %748 : f32 to vector<8x256xf32>
    %750 = arith.mulf %749, %743 : vector<8x256xf32>
    %751 = arith.addf %740, %750 : vector<8x256xf32>
    %c255_i32_246 = arith.constant 255 : i32
    %752 = tpu.dynamic_rotate %692 by %c255_i32_246 dim 1 : vector<8x256xf32>, i32 -> vector<8x256xf32>
    %c5_247 = arith.constant 5 : index
    %c0_248 = arith.constant 0 : index
    %753 = vector.load %arg3[%c5_247, %c0_248] : memref<9x256xf32, #tpu.memory_space<vmem>>, vector<1x256xf32>
    %754 = vector.broadcast %753 : vector<1x256xf32> to vector<8x256xf32>
    %755 = arith.mulf %752, %754 : vector<8x256xf32>
    %c77 = arith.constant 77 : index
    %756 = memref.load %arg5[%c77] : memref<288xf32, #tpu.memory_space<smem>>
    %757 = vector.broadcast %756 : f32 to vector<8x256xf32>
    %758 = arith.mulf %757, %755 : vector<8x256xf32>
    %759 = arith.addf %747, %758 : vector<8x256xf32>
    %c113 = arith.constant 113 : index
    %760 = memref.load %arg5[%c113] : memref<288xf32, #tpu.memory_space<smem>>
    %761 = vector.broadcast %760 : f32 to vector<8x256xf32>
    %762 = arith.mulf %761, %755 : vector<8x256xf32>
    %763 = arith.addf %751, %762 : vector<8x256xf32>
    %c241_i32_249 = arith.constant 241 : i32
    %764 = tpu.dynamic_rotate %692 by %c241_i32_249 dim 1 : vector<8x256xf32>, i32 -> vector<8x256xf32>
    %c6_250 = arith.constant 6 : index
    %c0_251 = arith.constant 0 : index
    %765 = vector.load %arg3[%c6_250, %c0_251] : memref<9x256xf32, #tpu.memory_space<vmem>>, vector<1x256xf32>
    %766 = vector.broadcast %765 : vector<1x256xf32> to vector<8x256xf32>
    %767 = arith.mulf %764, %766 : vector<8x256xf32>
    %c78 = arith.constant 78 : index
    %768 = memref.load %arg5[%c78] : memref<288xf32, #tpu.memory_space<smem>>
    %769 = vector.broadcast %768 : f32 to vector<8x256xf32>
    %770 = arith.mulf %769, %767 : vector<8x256xf32>
    %771 = arith.addf %759, %770 : vector<8x256xf32>
    %c114 = arith.constant 114 : index
    %772 = memref.load %arg5[%c114] : memref<288xf32, #tpu.memory_space<smem>>
    %773 = vector.broadcast %772 : f32 to vector<8x256xf32>
    %774 = arith.mulf %773, %767 : vector<8x256xf32>
    %775 = arith.addf %763, %774 : vector<8x256xf32>
    %c240_i32_252 = arith.constant 240 : i32
    %776 = tpu.dynamic_rotate %692 by %c240_i32_252 dim 1 : vector<8x256xf32>, i32 -> vector<8x256xf32>
    %c7_253 = arith.constant 7 : index
    %c0_254 = arith.constant 0 : index
    %777 = vector.load %arg3[%c7_253, %c0_254] : memref<9x256xf32, #tpu.memory_space<vmem>>, vector<1x256xf32>
    %778 = vector.broadcast %777 : vector<1x256xf32> to vector<8x256xf32>
    %779 = arith.mulf %776, %778 : vector<8x256xf32>
    %c79 = arith.constant 79 : index
    %780 = memref.load %arg5[%c79] : memref<288xf32, #tpu.memory_space<smem>>
    %781 = vector.broadcast %780 : f32 to vector<8x256xf32>
    %782 = arith.mulf %781, %779 : vector<8x256xf32>
    %783 = arith.addf %771, %782 : vector<8x256xf32>
    %c115 = arith.constant 115 : index
    %784 = memref.load %arg5[%c115] : memref<288xf32, #tpu.memory_space<smem>>
    %785 = vector.broadcast %784 : f32 to vector<8x256xf32>
    %786 = arith.mulf %785, %779 : vector<8x256xf32>
    %787 = arith.addf %775, %786 : vector<8x256xf32>
    %c239_i32_255 = arith.constant 239 : i32
    %788 = tpu.dynamic_rotate %692 by %c239_i32_255 dim 1 : vector<8x256xf32>, i32 -> vector<8x256xf32>
    %c8_256 = arith.constant 8 : index
    %c0_257 = arith.constant 0 : index
    %789 = vector.load %arg3[%c8_256, %c0_257] : memref<9x256xf32, #tpu.memory_space<vmem>>, vector<1x256xf32>
    %790 = vector.broadcast %789 : vector<1x256xf32> to vector<8x256xf32>
    %791 = arith.mulf %788, %790 : vector<8x256xf32>
    %c80 = arith.constant 80 : index
    %792 = memref.load %arg5[%c80] : memref<288xf32, #tpu.memory_space<smem>>
    %793 = vector.broadcast %792 : f32 to vector<8x256xf32>
    %794 = arith.mulf %793, %791 : vector<8x256xf32>
    %795 = arith.addf %783, %794 : vector<8x256xf32>
    %c116 = arith.constant 116 : index
    %796 = memref.load %arg5[%c116] : memref<288xf32, #tpu.memory_space<smem>>
    %797 = vector.broadcast %796 : f32 to vector<8x256xf32>
    %798 = arith.mulf %797, %791 : vector<8x256xf32>
    %799 = arith.addf %787, %798 : vector<8x256xf32>
    %c0_258 = arith.constant 0 : index
    %c256_259 = arith.constant 256 : index
    %800 = vector.load %arg13[%c0_258, %c256_259] : memref<8x1024xf32, #tpu.memory_space<vmem>>, vector<8x256xf32>
    %c17_i32_260 = arith.constant 17 : i32
    %801 = tpu.dynamic_rotate %800 by %c17_i32_260 dim 1 : vector<8x256xf32>, i32 -> vector<8x256xf32>
    %c0_261 = arith.constant 0 : index
    %c0_262 = arith.constant 0 : index
    %802 = vector.load %arg3[%c0_261, %c0_262] : memref<9x256xf32, #tpu.memory_space<vmem>>, vector<1x256xf32>
    %803 = vector.broadcast %802 : vector<1x256xf32> to vector<8x256xf32>
    %804 = arith.mulf %801, %803 : vector<8x256xf32>
    %c81 = arith.constant 81 : index
    %805 = memref.load %arg5[%c81] : memref<288xf32, #tpu.memory_space<smem>>
    %806 = vector.broadcast %805 : f32 to vector<8x256xf32>
    %807 = arith.mulf %806, %804 : vector<8x256xf32>
    %808 = arith.addf %795, %807 : vector<8x256xf32>
    %c117 = arith.constant 117 : index
    %809 = memref.load %arg5[%c117] : memref<288xf32, #tpu.memory_space<smem>>
    %810 = vector.broadcast %809 : f32 to vector<8x256xf32>
    %811 = arith.mulf %810, %804 : vector<8x256xf32>
    %812 = arith.addf %799, %811 : vector<8x256xf32>
    %c16_i32_263 = arith.constant 16 : i32
    %813 = tpu.dynamic_rotate %800 by %c16_i32_263 dim 1 : vector<8x256xf32>, i32 -> vector<8x256xf32>
    %c1_264 = arith.constant 1 : index
    %c0_265 = arith.constant 0 : index
    %814 = vector.load %arg3[%c1_264, %c0_265] : memref<9x256xf32, #tpu.memory_space<vmem>>, vector<1x256xf32>
    %815 = vector.broadcast %814 : vector<1x256xf32> to vector<8x256xf32>
    %816 = arith.mulf %813, %815 : vector<8x256xf32>
    %c82 = arith.constant 82 : index
    %817 = memref.load %arg5[%c82] : memref<288xf32, #tpu.memory_space<smem>>
    %818 = vector.broadcast %817 : f32 to vector<8x256xf32>
    %819 = arith.mulf %818, %816 : vector<8x256xf32>
    %820 = arith.addf %808, %819 : vector<8x256xf32>
    %c118 = arith.constant 118 : index
    %821 = memref.load %arg5[%c118] : memref<288xf32, #tpu.memory_space<smem>>
    %822 = vector.broadcast %821 : f32 to vector<8x256xf32>
    %823 = arith.mulf %822, %816 : vector<8x256xf32>
    %824 = arith.addf %812, %823 : vector<8x256xf32>
    %c15_i32_266 = arith.constant 15 : i32
    %825 = tpu.dynamic_rotate %800 by %c15_i32_266 dim 1 : vector<8x256xf32>, i32 -> vector<8x256xf32>
    %c2_267 = arith.constant 2 : index
    %c0_268 = arith.constant 0 : index
    %826 = vector.load %arg3[%c2_267, %c0_268] : memref<9x256xf32, #tpu.memory_space<vmem>>, vector<1x256xf32>
    %827 = vector.broadcast %826 : vector<1x256xf32> to vector<8x256xf32>
    %828 = arith.mulf %825, %827 : vector<8x256xf32>
    %c83 = arith.constant 83 : index
    %829 = memref.load %arg5[%c83] : memref<288xf32, #tpu.memory_space<smem>>
    %830 = vector.broadcast %829 : f32 to vector<8x256xf32>
    %831 = arith.mulf %830, %828 : vector<8x256xf32>
    %832 = arith.addf %820, %831 : vector<8x256xf32>
    %c119 = arith.constant 119 : index
    %833 = memref.load %arg5[%c119] : memref<288xf32, #tpu.memory_space<smem>>
    %834 = vector.broadcast %833 : f32 to vector<8x256xf32>
    %835 = arith.mulf %834, %828 : vector<8x256xf32>
    %836 = arith.addf %824, %835 : vector<8x256xf32>
    %c1_i32_269 = arith.constant 1 : i32
    %837 = tpu.dynamic_rotate %800 by %c1_i32_269 dim 1 : vector<8x256xf32>, i32 -> vector<8x256xf32>
    %c3_270 = arith.constant 3 : index
    %c0_271 = arith.constant 0 : index
    %838 = vector.load %arg3[%c3_270, %c0_271] : memref<9x256xf32, #tpu.memory_space<vmem>>, vector<1x256xf32>
    %839 = vector.broadcast %838 : vector<1x256xf32> to vector<8x256xf32>
    %840 = arith.mulf %837, %839 : vector<8x256xf32>
    %c84 = arith.constant 84 : index
    %841 = memref.load %arg5[%c84] : memref<288xf32, #tpu.memory_space<smem>>
    %842 = vector.broadcast %841 : f32 to vector<8x256xf32>
    %843 = arith.mulf %842, %840 : vector<8x256xf32>
    %844 = arith.addf %832, %843 : vector<8x256xf32>
    %c120 = arith.constant 120 : index
    %845 = memref.load %arg5[%c120] : memref<288xf32, #tpu.memory_space<smem>>
    %846 = vector.broadcast %845 : f32 to vector<8x256xf32>
    %847 = arith.mulf %846, %840 : vector<8x256xf32>
    %848 = arith.addf %836, %847 : vector<8x256xf32>
    %c4_272 = arith.constant 4 : index
    %c0_273 = arith.constant 0 : index
    %849 = vector.load %arg3[%c4_272, %c0_273] : memref<9x256xf32, #tpu.memory_space<vmem>>, vector<1x256xf32>
    %850 = vector.broadcast %849 : vector<1x256xf32> to vector<8x256xf32>
    %851 = arith.mulf %800, %850 : vector<8x256xf32>
    %c85 = arith.constant 85 : index
    %852 = memref.load %arg5[%c85] : memref<288xf32, #tpu.memory_space<smem>>
    %853 = vector.broadcast %852 : f32 to vector<8x256xf32>
    %854 = arith.mulf %853, %851 : vector<8x256xf32>
    %855 = arith.addf %844, %854 : vector<8x256xf32>
    %c121 = arith.constant 121 : index
    %856 = memref.load %arg5[%c121] : memref<288xf32, #tpu.memory_space<smem>>
    %857 = vector.broadcast %856 : f32 to vector<8x256xf32>
    %858 = arith.mulf %857, %851 : vector<8x256xf32>
    %859 = arith.addf %848, %858 : vector<8x256xf32>
    %c255_i32_274 = arith.constant 255 : i32
    %860 = tpu.dynamic_rotate %800 by %c255_i32_274 dim 1 : vector<8x256xf32>, i32 -> vector<8x256xf32>
    %c5_275 = arith.constant 5 : index
    %c0_276 = arith.constant 0 : index
    %861 = vector.load %arg3[%c5_275, %c0_276] : memref<9x256xf32, #tpu.memory_space<vmem>>, vector<1x256xf32>
    %862 = vector.broadcast %861 : vector<1x256xf32> to vector<8x256xf32>
    %863 = arith.mulf %860, %862 : vector<8x256xf32>
    %c86 = arith.constant 86 : index
    %864 = memref.load %arg5[%c86] : memref<288xf32, #tpu.memory_space<smem>>
    %865 = vector.broadcast %864 : f32 to vector<8x256xf32>
    %866 = arith.mulf %865, %863 : vector<8x256xf32>
    %867 = arith.addf %855, %866 : vector<8x256xf32>
    %c122 = arith.constant 122 : index
    %868 = memref.load %arg5[%c122] : memref<288xf32, #tpu.memory_space<smem>>
    %869 = vector.broadcast %868 : f32 to vector<8x256xf32>
    %870 = arith.mulf %869, %863 : vector<8x256xf32>
    %871 = arith.addf %859, %870 : vector<8x256xf32>
    %c241_i32_277 = arith.constant 241 : i32
    %872 = tpu.dynamic_rotate %800 by %c241_i32_277 dim 1 : vector<8x256xf32>, i32 -> vector<8x256xf32>
    %c6_278 = arith.constant 6 : index
    %c0_279 = arith.constant 0 : index
    %873 = vector.load %arg3[%c6_278, %c0_279] : memref<9x256xf32, #tpu.memory_space<vmem>>, vector<1x256xf32>
    %874 = vector.broadcast %873 : vector<1x256xf32> to vector<8x256xf32>
    %875 = arith.mulf %872, %874 : vector<8x256xf32>
    %c87 = arith.constant 87 : index
    %876 = memref.load %arg5[%c87] : memref<288xf32, #tpu.memory_space<smem>>
    %877 = vector.broadcast %876 : f32 to vector<8x256xf32>
    %878 = arith.mulf %877, %875 : vector<8x256xf32>
    %879 = arith.addf %867, %878 : vector<8x256xf32>
    %c123 = arith.constant 123 : index
    %880 = memref.load %arg5[%c123] : memref<288xf32, #tpu.memory_space<smem>>
    %881 = vector.broadcast %880 : f32 to vector<8x256xf32>
    %882 = arith.mulf %881, %875 : vector<8x256xf32>
    %883 = arith.addf %871, %882 : vector<8x256xf32>
    %c240_i32_280 = arith.constant 240 : i32
    %884 = tpu.dynamic_rotate %800 by %c240_i32_280 dim 1 : vector<8x256xf32>, i32 -> vector<8x256xf32>
    %c7_281 = arith.constant 7 : index
    %c0_282 = arith.constant 0 : index
    %885 = vector.load %arg3[%c7_281, %c0_282] : memref<9x256xf32, #tpu.memory_space<vmem>>, vector<1x256xf32>
    %886 = vector.broadcast %885 : vector<1x256xf32> to vector<8x256xf32>
    %887 = arith.mulf %884, %886 : vector<8x256xf32>
    %c88 = arith.constant 88 : index
    %888 = memref.load %arg5[%c88] : memref<288xf32, #tpu.memory_space<smem>>
    %889 = vector.broadcast %888 : f32 to vector<8x256xf32>
    %890 = arith.mulf %889, %887 : vector<8x256xf32>
    %891 = arith.addf %879, %890 : vector<8x256xf32>
    %c124 = arith.constant 124 : index
    %892 = memref.load %arg5[%c124] : memref<288xf32, #tpu.memory_space<smem>>
    %893 = vector.broadcast %892 : f32 to vector<8x256xf32>
    %894 = arith.mulf %893, %887 : vector<8x256xf32>
    %895 = arith.addf %883, %894 : vector<8x256xf32>
    %c239_i32_283 = arith.constant 239 : i32
    %896 = tpu.dynamic_rotate %800 by %c239_i32_283 dim 1 : vector<8x256xf32>, i32 -> vector<8x256xf32>
    %c8_284 = arith.constant 8 : index
    %c0_285 = arith.constant 0 : index
    %897 = vector.load %arg3[%c8_284, %c0_285] : memref<9x256xf32, #tpu.memory_space<vmem>>, vector<1x256xf32>
    %898 = vector.broadcast %897 : vector<1x256xf32> to vector<8x256xf32>
    %899 = arith.mulf %896, %898 : vector<8x256xf32>
    %c89 = arith.constant 89 : index
    %900 = memref.load %arg5[%c89] : memref<288xf32, #tpu.memory_space<smem>>
    %901 = vector.broadcast %900 : f32 to vector<8x256xf32>
    %902 = arith.mulf %901, %899 : vector<8x256xf32>
    %903 = arith.addf %891, %902 : vector<8x256xf32>
    %c125 = arith.constant 125 : index
    %904 = memref.load %arg5[%c125] : memref<288xf32, #tpu.memory_space<smem>>
    %905 = vector.broadcast %904 : f32 to vector<8x256xf32>
    %906 = arith.mulf %905, %899 : vector<8x256xf32>
    %907 = arith.addf %895, %906 : vector<8x256xf32>
    %c0_286 = arith.constant 0 : index
    %c512_287 = arith.constant 512 : index
    %908 = vector.load %arg13[%c0_286, %c512_287] : memref<8x1024xf32, #tpu.memory_space<vmem>>, vector<8x256xf32>
    %c17_i32_288 = arith.constant 17 : i32
    %909 = tpu.dynamic_rotate %908 by %c17_i32_288 dim 1 : vector<8x256xf32>, i32 -> vector<8x256xf32>
    %c0_289 = arith.constant 0 : index
    %c0_290 = arith.constant 0 : index
    %910 = vector.load %arg3[%c0_289, %c0_290] : memref<9x256xf32, #tpu.memory_space<vmem>>, vector<1x256xf32>
    %911 = vector.broadcast %910 : vector<1x256xf32> to vector<8x256xf32>
    %912 = arith.mulf %909, %911 : vector<8x256xf32>
    %c90 = arith.constant 90 : index
    %913 = memref.load %arg5[%c90] : memref<288xf32, #tpu.memory_space<smem>>
    %914 = vector.broadcast %913 : f32 to vector<8x256xf32>
    %915 = arith.mulf %914, %912 : vector<8x256xf32>
    %916 = arith.addf %903, %915 : vector<8x256xf32>
    %c126 = arith.constant 126 : index
    %917 = memref.load %arg5[%c126] : memref<288xf32, #tpu.memory_space<smem>>
    %918 = vector.broadcast %917 : f32 to vector<8x256xf32>
    %919 = arith.mulf %918, %912 : vector<8x256xf32>
    %920 = arith.addf %907, %919 : vector<8x256xf32>
    %c16_i32_291 = arith.constant 16 : i32
    %921 = tpu.dynamic_rotate %908 by %c16_i32_291 dim 1 : vector<8x256xf32>, i32 -> vector<8x256xf32>
    %c1_292 = arith.constant 1 : index
    %c0_293 = arith.constant 0 : index
    %922 = vector.load %arg3[%c1_292, %c0_293] : memref<9x256xf32, #tpu.memory_space<vmem>>, vector<1x256xf32>
    %923 = vector.broadcast %922 : vector<1x256xf32> to vector<8x256xf32>
    %924 = arith.mulf %921, %923 : vector<8x256xf32>
    %c91 = arith.constant 91 : index
    %925 = memref.load %arg5[%c91] : memref<288xf32, #tpu.memory_space<smem>>
    %926 = vector.broadcast %925 : f32 to vector<8x256xf32>
    %927 = arith.mulf %926, %924 : vector<8x256xf32>
    %928 = arith.addf %916, %927 : vector<8x256xf32>
    %c127 = arith.constant 127 : index
    %929 = memref.load %arg5[%c127] : memref<288xf32, #tpu.memory_space<smem>>
    %930 = vector.broadcast %929 : f32 to vector<8x256xf32>
    %931 = arith.mulf %930, %924 : vector<8x256xf32>
    %932 = arith.addf %920, %931 : vector<8x256xf32>
    %c15_i32_294 = arith.constant 15 : i32
    %933 = tpu.dynamic_rotate %908 by %c15_i32_294 dim 1 : vector<8x256xf32>, i32 -> vector<8x256xf32>
    %c2_295 = arith.constant 2 : index
    %c0_296 = arith.constant 0 : index
    %934 = vector.load %arg3[%c2_295, %c0_296] : memref<9x256xf32, #tpu.memory_space<vmem>>, vector<1x256xf32>
    %935 = vector.broadcast %934 : vector<1x256xf32> to vector<8x256xf32>
    %936 = arith.mulf %933, %935 : vector<8x256xf32>
    %c92 = arith.constant 92 : index
    %937 = memref.load %arg5[%c92] : memref<288xf32, #tpu.memory_space<smem>>
    %938 = vector.broadcast %937 : f32 to vector<8x256xf32>
    %939 = arith.mulf %938, %936 : vector<8x256xf32>
    %940 = arith.addf %928, %939 : vector<8x256xf32>
    %c128 = arith.constant 128 : index
    %941 = memref.load %arg5[%c128] : memref<288xf32, #tpu.memory_space<smem>>
    %942 = vector.broadcast %941 : f32 to vector<8x256xf32>
    %943 = arith.mulf %942, %936 : vector<8x256xf32>
    %944 = arith.addf %932, %943 : vector<8x256xf32>
    %c1_i32_297 = arith.constant 1 : i32
    %945 = tpu.dynamic_rotate %908 by %c1_i32_297 dim 1 : vector<8x256xf32>, i32 -> vector<8x256xf32>
    %c3_298 = arith.constant 3 : index
    %c0_299 = arith.constant 0 : index
    %946 = vector.load %arg3[%c3_298, %c0_299] : memref<9x256xf32, #tpu.memory_space<vmem>>, vector<1x256xf32>
    %947 = vector.broadcast %946 : vector<1x256xf32> to vector<8x256xf32>
    %948 = arith.mulf %945, %947 : vector<8x256xf32>
    %c93 = arith.constant 93 : index
    %949 = memref.load %arg5[%c93] : memref<288xf32, #tpu.memory_space<smem>>
    %950 = vector.broadcast %949 : f32 to vector<8x256xf32>
    %951 = arith.mulf %950, %948 : vector<8x256xf32>
    %952 = arith.addf %940, %951 : vector<8x256xf32>
    %c129 = arith.constant 129 : index
    %953 = memref.load %arg5[%c129] : memref<288xf32, #tpu.memory_space<smem>>
    %954 = vector.broadcast %953 : f32 to vector<8x256xf32>
    %955 = arith.mulf %954, %948 : vector<8x256xf32>
    %956 = arith.addf %944, %955 : vector<8x256xf32>
    %c4_300 = arith.constant 4 : index
    %c0_301 = arith.constant 0 : index
    %957 = vector.load %arg3[%c4_300, %c0_301] : memref<9x256xf32, #tpu.memory_space<vmem>>, vector<1x256xf32>
    %958 = vector.broadcast %957 : vector<1x256xf32> to vector<8x256xf32>
    %959 = arith.mulf %908, %958 : vector<8x256xf32>
    %c94 = arith.constant 94 : index
    %960 = memref.load %arg5[%c94] : memref<288xf32, #tpu.memory_space<smem>>
    %961 = vector.broadcast %960 : f32 to vector<8x256xf32>
    %962 = arith.mulf %961, %959 : vector<8x256xf32>
    %963 = arith.addf %952, %962 : vector<8x256xf32>
    %c130 = arith.constant 130 : index
    %964 = memref.load %arg5[%c130] : memref<288xf32, #tpu.memory_space<smem>>
    %965 = vector.broadcast %964 : f32 to vector<8x256xf32>
    %966 = arith.mulf %965, %959 : vector<8x256xf32>
    %967 = arith.addf %956, %966 : vector<8x256xf32>
    %c255_i32_302 = arith.constant 255 : i32
    %968 = tpu.dynamic_rotate %908 by %c255_i32_302 dim 1 : vector<8x256xf32>, i32 -> vector<8x256xf32>
    %c5_303 = arith.constant 5 : index
    %c0_304 = arith.constant 0 : index
    %969 = vector.load %arg3[%c5_303, %c0_304] : memref<9x256xf32, #tpu.memory_space<vmem>>, vector<1x256xf32>
    %970 = vector.broadcast %969 : vector<1x256xf32> to vector<8x256xf32>
    %971 = arith.mulf %968, %970 : vector<8x256xf32>
    %c95 = arith.constant 95 : index
    %972 = memref.load %arg5[%c95] : memref<288xf32, #tpu.memory_space<smem>>
    %973 = vector.broadcast %972 : f32 to vector<8x256xf32>
    %974 = arith.mulf %973, %971 : vector<8x256xf32>
    %975 = arith.addf %963, %974 : vector<8x256xf32>
    %c131 = arith.constant 131 : index
    %976 = memref.load %arg5[%c131] : memref<288xf32, #tpu.memory_space<smem>>
    %977 = vector.broadcast %976 : f32 to vector<8x256xf32>
    %978 = arith.mulf %977, %971 : vector<8x256xf32>
    %979 = arith.addf %967, %978 : vector<8x256xf32>
    %c241_i32_305 = arith.constant 241 : i32
    %980 = tpu.dynamic_rotate %908 by %c241_i32_305 dim 1 : vector<8x256xf32>, i32 -> vector<8x256xf32>
    %c6_306 = arith.constant 6 : index
    %c0_307 = arith.constant 0 : index
    %981 = vector.load %arg3[%c6_306, %c0_307] : memref<9x256xf32, #tpu.memory_space<vmem>>, vector<1x256xf32>
    %982 = vector.broadcast %981 : vector<1x256xf32> to vector<8x256xf32>
    %983 = arith.mulf %980, %982 : vector<8x256xf32>
    %c96 = arith.constant 96 : index
    %984 = memref.load %arg5[%c96] : memref<288xf32, #tpu.memory_space<smem>>
    %985 = vector.broadcast %984 : f32 to vector<8x256xf32>
    %986 = arith.mulf %985, %983 : vector<8x256xf32>
    %987 = arith.addf %975, %986 : vector<8x256xf32>
    %c132 = arith.constant 132 : index
    %988 = memref.load %arg5[%c132] : memref<288xf32, #tpu.memory_space<smem>>
    %989 = vector.broadcast %988 : f32 to vector<8x256xf32>
    %990 = arith.mulf %989, %983 : vector<8x256xf32>
    %991 = arith.addf %979, %990 : vector<8x256xf32>
    %c240_i32_308 = arith.constant 240 : i32
    %992 = tpu.dynamic_rotate %908 by %c240_i32_308 dim 1 : vector<8x256xf32>, i32 -> vector<8x256xf32>
    %c7_309 = arith.constant 7 : index
    %c0_310 = arith.constant 0 : index
    %993 = vector.load %arg3[%c7_309, %c0_310] : memref<9x256xf32, #tpu.memory_space<vmem>>, vector<1x256xf32>
    %994 = vector.broadcast %993 : vector<1x256xf32> to vector<8x256xf32>
    %995 = arith.mulf %992, %994 : vector<8x256xf32>
    %c97 = arith.constant 97 : index
    %996 = memref.load %arg5[%c97] : memref<288xf32, #tpu.memory_space<smem>>
    %997 = vector.broadcast %996 : f32 to vector<8x256xf32>
    %998 = arith.mulf %997, %995 : vector<8x256xf32>
    %999 = arith.addf %987, %998 : vector<8x256xf32>
    %c133 = arith.constant 133 : index
    %1000 = memref.load %arg5[%c133] : memref<288xf32, #tpu.memory_space<smem>>
    %1001 = vector.broadcast %1000 : f32 to vector<8x256xf32>
    %1002 = arith.mulf %1001, %995 : vector<8x256xf32>
    %1003 = arith.addf %991, %1002 : vector<8x256xf32>
    %c239_i32_311 = arith.constant 239 : i32
    %1004 = tpu.dynamic_rotate %908 by %c239_i32_311 dim 1 : vector<8x256xf32>, i32 -> vector<8x256xf32>
    %c8_312 = arith.constant 8 : index
    %c0_313 = arith.constant 0 : index
    %1005 = vector.load %arg3[%c8_312, %c0_313] : memref<9x256xf32, #tpu.memory_space<vmem>>, vector<1x256xf32>
    %1006 = vector.broadcast %1005 : vector<1x256xf32> to vector<8x256xf32>
    %1007 = arith.mulf %1004, %1006 : vector<8x256xf32>
    %c98 = arith.constant 98 : index
    %1008 = memref.load %arg5[%c98] : memref<288xf32, #tpu.memory_space<smem>>
    %1009 = vector.broadcast %1008 : f32 to vector<8x256xf32>
    %1010 = arith.mulf %1009, %1007 : vector<8x256xf32>
    %1011 = arith.addf %999, %1010 : vector<8x256xf32>
    %c134 = arith.constant 134 : index
    %1012 = memref.load %arg5[%c134] : memref<288xf32, #tpu.memory_space<smem>>
    %1013 = vector.broadcast %1012 : f32 to vector<8x256xf32>
    %1014 = arith.mulf %1013, %1007 : vector<8x256xf32>
    %1015 = arith.addf %1003, %1014 : vector<8x256xf32>
    %c0_314 = arith.constant 0 : index
    %c768_315 = arith.constant 768 : index
    %1016 = vector.load %arg13[%c0_314, %c768_315] : memref<8x1024xf32, #tpu.memory_space<vmem>>, vector<8x256xf32>
    %c17_i32_316 = arith.constant 17 : i32
    %1017 = tpu.dynamic_rotate %1016 by %c17_i32_316 dim 1 : vector<8x256xf32>, i32 -> vector<8x256xf32>
    %c0_317 = arith.constant 0 : index
    %c0_318 = arith.constant 0 : index
    %1018 = vector.load %arg3[%c0_317, %c0_318] : memref<9x256xf32, #tpu.memory_space<vmem>>, vector<1x256xf32>
    %1019 = vector.broadcast %1018 : vector<1x256xf32> to vector<8x256xf32>
    %1020 = arith.mulf %1017, %1019 : vector<8x256xf32>
    %c99 = arith.constant 99 : index
    %1021 = memref.load %arg5[%c99] : memref<288xf32, #tpu.memory_space<smem>>
    %1022 = vector.broadcast %1021 : f32 to vector<8x256xf32>
    %1023 = arith.mulf %1022, %1020 : vector<8x256xf32>
    %1024 = arith.addf %1011, %1023 : vector<8x256xf32>
    %c135 = arith.constant 135 : index
    %1025 = memref.load %arg5[%c135] : memref<288xf32, #tpu.memory_space<smem>>
    %1026 = vector.broadcast %1025 : f32 to vector<8x256xf32>
    %1027 = arith.mulf %1026, %1020 : vector<8x256xf32>
    %1028 = arith.addf %1015, %1027 : vector<8x256xf32>
    %c16_i32_319 = arith.constant 16 : i32
    %1029 = tpu.dynamic_rotate %1016 by %c16_i32_319 dim 1 : vector<8x256xf32>, i32 -> vector<8x256xf32>
    %c1_320 = arith.constant 1 : index
    %c0_321 = arith.constant 0 : index
    %1030 = vector.load %arg3[%c1_320, %c0_321] : memref<9x256xf32, #tpu.memory_space<vmem>>, vector<1x256xf32>
    %1031 = vector.broadcast %1030 : vector<1x256xf32> to vector<8x256xf32>
    %1032 = arith.mulf %1029, %1031 : vector<8x256xf32>
    %c100 = arith.constant 100 : index
    %1033 = memref.load %arg5[%c100] : memref<288xf32, #tpu.memory_space<smem>>
    %1034 = vector.broadcast %1033 : f32 to vector<8x256xf32>
    %1035 = arith.mulf %1034, %1032 : vector<8x256xf32>
    %1036 = arith.addf %1024, %1035 : vector<8x256xf32>
    %c136 = arith.constant 136 : index
    %1037 = memref.load %arg5[%c136] : memref<288xf32, #tpu.memory_space<smem>>
    %1038 = vector.broadcast %1037 : f32 to vector<8x256xf32>
    %1039 = arith.mulf %1038, %1032 : vector<8x256xf32>
    %1040 = arith.addf %1028, %1039 : vector<8x256xf32>
    %c15_i32_322 = arith.constant 15 : i32
    %1041 = tpu.dynamic_rotate %1016 by %c15_i32_322 dim 1 : vector<8x256xf32>, i32 -> vector<8x256xf32>
    %c2_323 = arith.constant 2 : index
    %c0_324 = arith.constant 0 : index
    %1042 = vector.load %arg3[%c2_323, %c0_324] : memref<9x256xf32, #tpu.memory_space<vmem>>, vector<1x256xf32>
    %1043 = vector.broadcast %1042 : vector<1x256xf32> to vector<8x256xf32>
    %1044 = arith.mulf %1041, %1043 : vector<8x256xf32>
    %c101 = arith.constant 101 : index
    %1045 = memref.load %arg5[%c101] : memref<288xf32, #tpu.memory_space<smem>>
    %1046 = vector.broadcast %1045 : f32 to vector<8x256xf32>
    %1047 = arith.mulf %1046, %1044 : vector<8x256xf32>
    %1048 = arith.addf %1036, %1047 : vector<8x256xf32>
    %c137 = arith.constant 137 : index
    %1049 = memref.load %arg5[%c137] : memref<288xf32, #tpu.memory_space<smem>>
    %1050 = vector.broadcast %1049 : f32 to vector<8x256xf32>
    %1051 = arith.mulf %1050, %1044 : vector<8x256xf32>
    %1052 = arith.addf %1040, %1051 : vector<8x256xf32>
    %c1_i32_325 = arith.constant 1 : i32
    %1053 = tpu.dynamic_rotate %1016 by %c1_i32_325 dim 1 : vector<8x256xf32>, i32 -> vector<8x256xf32>
    %c3_326 = arith.constant 3 : index
    %c0_327 = arith.constant 0 : index
    %1054 = vector.load %arg3[%c3_326, %c0_327] : memref<9x256xf32, #tpu.memory_space<vmem>>, vector<1x256xf32>
    %1055 = vector.broadcast %1054 : vector<1x256xf32> to vector<8x256xf32>
    %1056 = arith.mulf %1053, %1055 : vector<8x256xf32>
    %c102 = arith.constant 102 : index
    %1057 = memref.load %arg5[%c102] : memref<288xf32, #tpu.memory_space<smem>>
    %1058 = vector.broadcast %1057 : f32 to vector<8x256xf32>
    %1059 = arith.mulf %1058, %1056 : vector<8x256xf32>
    %1060 = arith.addf %1048, %1059 : vector<8x256xf32>
    %c138 = arith.constant 138 : index
    %1061 = memref.load %arg5[%c138] : memref<288xf32, #tpu.memory_space<smem>>
    %1062 = vector.broadcast %1061 : f32 to vector<8x256xf32>
    %1063 = arith.mulf %1062, %1056 : vector<8x256xf32>
    %1064 = arith.addf %1052, %1063 : vector<8x256xf32>
    %c4_328 = arith.constant 4 : index
    %c0_329 = arith.constant 0 : index
    %1065 = vector.load %arg3[%c4_328, %c0_329] : memref<9x256xf32, #tpu.memory_space<vmem>>, vector<1x256xf32>
    %1066 = vector.broadcast %1065 : vector<1x256xf32> to vector<8x256xf32>
    %1067 = arith.mulf %1016, %1066 : vector<8x256xf32>
    %c103 = arith.constant 103 : index
    %1068 = memref.load %arg5[%c103] : memref<288xf32, #tpu.memory_space<smem>>
    %1069 = vector.broadcast %1068 : f32 to vector<8x256xf32>
    %1070 = arith.mulf %1069, %1067 : vector<8x256xf32>
    %1071 = arith.addf %1060, %1070 : vector<8x256xf32>
    %c139 = arith.constant 139 : index
    %1072 = memref.load %arg5[%c139] : memref<288xf32, #tpu.memory_space<smem>>
    %1073 = vector.broadcast %1072 : f32 to vector<8x256xf32>
    %1074 = arith.mulf %1073, %1067 : vector<8x256xf32>
    %1075 = arith.addf %1064, %1074 : vector<8x256xf32>
    %c255_i32_330 = arith.constant 255 : i32
    %1076 = tpu.dynamic_rotate %1016 by %c255_i32_330 dim 1 : vector<8x256xf32>, i32 -> vector<8x256xf32>
    %c5_331 = arith.constant 5 : index
    %c0_332 = arith.constant 0 : index
    %1077 = vector.load %arg3[%c5_331, %c0_332] : memref<9x256xf32, #tpu.memory_space<vmem>>, vector<1x256xf32>
    %1078 = vector.broadcast %1077 : vector<1x256xf32> to vector<8x256xf32>
    %1079 = arith.mulf %1076, %1078 : vector<8x256xf32>
    %c104 = arith.constant 104 : index
    %1080 = memref.load %arg5[%c104] : memref<288xf32, #tpu.memory_space<smem>>
    %1081 = vector.broadcast %1080 : f32 to vector<8x256xf32>
    %1082 = arith.mulf %1081, %1079 : vector<8x256xf32>
    %1083 = arith.addf %1071, %1082 : vector<8x256xf32>
    %c140 = arith.constant 140 : index
    %1084 = memref.load %arg5[%c140] : memref<288xf32, #tpu.memory_space<smem>>
    %1085 = vector.broadcast %1084 : f32 to vector<8x256xf32>
    %1086 = arith.mulf %1085, %1079 : vector<8x256xf32>
    %1087 = arith.addf %1075, %1086 : vector<8x256xf32>
    %c241_i32_333 = arith.constant 241 : i32
    %1088 = tpu.dynamic_rotate %1016 by %c241_i32_333 dim 1 : vector<8x256xf32>, i32 -> vector<8x256xf32>
    %c6_334 = arith.constant 6 : index
    %c0_335 = arith.constant 0 : index
    %1089 = vector.load %arg3[%c6_334, %c0_335] : memref<9x256xf32, #tpu.memory_space<vmem>>, vector<1x256xf32>
    %1090 = vector.broadcast %1089 : vector<1x256xf32> to vector<8x256xf32>
    %1091 = arith.mulf %1088, %1090 : vector<8x256xf32>
    %c105 = arith.constant 105 : index
    %1092 = memref.load %arg5[%c105] : memref<288xf32, #tpu.memory_space<smem>>
    %1093 = vector.broadcast %1092 : f32 to vector<8x256xf32>
    %1094 = arith.mulf %1093, %1091 : vector<8x256xf32>
    %1095 = arith.addf %1083, %1094 : vector<8x256xf32>
    %c141 = arith.constant 141 : index
    %1096 = memref.load %arg5[%c141] : memref<288xf32, #tpu.memory_space<smem>>
    %1097 = vector.broadcast %1096 : f32 to vector<8x256xf32>
    %1098 = arith.mulf %1097, %1091 : vector<8x256xf32>
    %1099 = arith.addf %1087, %1098 : vector<8x256xf32>
    %c240_i32_336 = arith.constant 240 : i32
    %1100 = tpu.dynamic_rotate %1016 by %c240_i32_336 dim 1 : vector<8x256xf32>, i32 -> vector<8x256xf32>
    %c7_337 = arith.constant 7 : index
    %c0_338 = arith.constant 0 : index
    %1101 = vector.load %arg3[%c7_337, %c0_338] : memref<9x256xf32, #tpu.memory_space<vmem>>, vector<1x256xf32>
    %1102 = vector.broadcast %1101 : vector<1x256xf32> to vector<8x256xf32>
    %1103 = arith.mulf %1100, %1102 : vector<8x256xf32>
    %c106 = arith.constant 106 : index
    %1104 = memref.load %arg5[%c106] : memref<288xf32, #tpu.memory_space<smem>>
    %1105 = vector.broadcast %1104 : f32 to vector<8x256xf32>
    %1106 = arith.mulf %1105, %1103 : vector<8x256xf32>
    %1107 = arith.addf %1095, %1106 : vector<8x256xf32>
    %c142 = arith.constant 142 : index
    %1108 = memref.load %arg5[%c142] : memref<288xf32, #tpu.memory_space<smem>>
    %1109 = vector.broadcast %1108 : f32 to vector<8x256xf32>
    %1110 = arith.mulf %1109, %1103 : vector<8x256xf32>
    %1111 = arith.addf %1099, %1110 : vector<8x256xf32>
    %c239_i32_339 = arith.constant 239 : i32
    %1112 = tpu.dynamic_rotate %1016 by %c239_i32_339 dim 1 : vector<8x256xf32>, i32 -> vector<8x256xf32>
    %c8_340 = arith.constant 8 : index
    %c0_341 = arith.constant 0 : index
    %1113 = vector.load %arg3[%c8_340, %c0_341] : memref<9x256xf32, #tpu.memory_space<vmem>>, vector<1x256xf32>
    %1114 = vector.broadcast %1113 : vector<1x256xf32> to vector<8x256xf32>
    %1115 = arith.mulf %1112, %1114 : vector<8x256xf32>
    %c107 = arith.constant 107 : index
    %1116 = memref.load %arg5[%c107] : memref<288xf32, #tpu.memory_space<smem>>
    %1117 = vector.broadcast %1116 : f32 to vector<8x256xf32>
    %1118 = arith.mulf %1117, %1115 : vector<8x256xf32>
    %1119 = arith.addf %1107, %1118 : vector<8x256xf32>
    %c143 = arith.constant 143 : index
    %1120 = memref.load %arg5[%c143] : memref<288xf32, #tpu.memory_space<smem>>
    %1121 = vector.broadcast %1120 : f32 to vector<8x256xf32>
    %1122 = arith.mulf %1121, %1115 : vector<8x256xf32>
    %1123 = arith.addf %1111, %1122 : vector<8x256xf32>
    %c2_342 = arith.constant 2 : index
    %c0_343 = arith.constant 0 : index
    %1124 = vector.load %arg7[%c2_342, %c0_343] : memref<8x256xf32, #tpu.memory_space<vmem>>, vector<1x256xf32>
    %1125 = vector.broadcast %1124 : vector<1x256xf32> to vector<8x256xf32>
    %1126 = arith.addf %1119, %1125 : vector<8x256xf32>
    %cst_344 = arith.constant 0.000000e+00 : f32
    %1127 = vector.broadcast %cst_344 : f32 to vector<8x256xf32>
    %1128 = arith.maximumf %1126, %1127 : vector<8x256xf32>
    %c0_345 = arith.constant 0 : index
    %c512_346 = arith.constant 512 : index
    %1129 = vector.load %arg14[%c0_345, %c512_346] : memref<8x2048xf32, #tpu.memory_space<vmem>>, vector<8x256xf32>
    tpu.vector_store %arg14[%c0_345, %c512_346], %1128 {strides = array<i32>} : memref<8x2048xf32, #tpu.memory_space<vmem>>, vector<8x256xf32>,
    %c3_347 = arith.constant 3 : index
    %c0_348 = arith.constant 0 : index
    %1130 = vector.load %arg7[%c3_347, %c0_348] : memref<8x256xf32, #tpu.memory_space<vmem>>, vector<1x256xf32>
    %1131 = vector.broadcast %1130 : vector<1x256xf32> to vector<8x256xf32>
    %1132 = arith.addf %1123, %1131 : vector<8x256xf32>
    %cst_349 = arith.constant 0.000000e+00 : f32
    %1133 = vector.broadcast %cst_349 : f32 to vector<8x256xf32>
    %1134 = arith.maximumf %1132, %1133 : vector<8x256xf32>
    %c0_350 = arith.constant 0 : index
    %c768_351 = arith.constant 768 : index
    %1135 = vector.load %arg14[%c0_350, %c768_351] : memref<8x2048xf32, #tpu.memory_space<vmem>>, vector<8x256xf32>
    tpu.vector_store %arg14[%c0_350, %c768_351], %1134 {strides = array<i32>} : memref<8x2048xf32, #tpu.memory_space<vmem>>, vector<8x256xf32>,
    %cst_352 = arith.constant 0.000000e+00 : f32
    %1136 = vector.broadcast %cst_352 : f32 to vector<8x256xf32>
    %cst_353 = arith.constant 0.000000e+00 : f32
    %1137 = vector.broadcast %cst_353 : f32 to vector<8x256xf32>
    %c0_354 = arith.constant 0 : index
    %c0_355 = arith.constant 0 : index
    %1138 = vector.load %arg13[%c0_354, %c0_355] : memref<8x1024xf32, #tpu.memory_space<vmem>>, vector<8x256xf32>
    %c17_i32_356 = arith.constant 17 : i32
    %1139 = tpu.dynamic_rotate %1138 by %c17_i32_356 dim 1 : vector<8x256xf32>, i32 -> vector<8x256xf32>
    %c0_357 = arith.constant 0 : index
    %c0_358 = arith.constant 0 : index
    %1140 = vector.load %arg3[%c0_357, %c0_358] : memref<9x256xf32, #tpu.memory_space<vmem>>, vector<1x256xf32>
    %1141 = vector.broadcast %1140 : vector<1x256xf32> to vector<8x256xf32>
    %1142 = arith.mulf %1139, %1141 : vector<8x256xf32>
    %c144 = arith.constant 144 : index
    %1143 = memref.load %arg5[%c144] : memref<288xf32, #tpu.memory_space<smem>>
    %1144 = vector.broadcast %1143 : f32 to vector<8x256xf32>
    %1145 = arith.mulf %1144, %1142 : vector<8x256xf32>
    %1146 = arith.addf %1136, %1145 : vector<8x256xf32>
    %c180 = arith.constant 180 : index
    %1147 = memref.load %arg5[%c180] : memref<288xf32, #tpu.memory_space<smem>>
    %1148 = vector.broadcast %1147 : f32 to vector<8x256xf32>
    %1149 = arith.mulf %1148, %1142 : vector<8x256xf32>
    %1150 = arith.addf %1137, %1149 : vector<8x256xf32>
    %c16_i32_359 = arith.constant 16 : i32
    %1151 = tpu.dynamic_rotate %1138 by %c16_i32_359 dim 1 : vector<8x256xf32>, i32 -> vector<8x256xf32>
    %c1_360 = arith.constant 1 : index
    %c0_361 = arith.constant 0 : index
    %1152 = vector.load %arg3[%c1_360, %c0_361] : memref<9x256xf32, #tpu.memory_space<vmem>>, vector<1x256xf32>
    %1153 = vector.broadcast %1152 : vector<1x256xf32> to vector<8x256xf32>
    %1154 = arith.mulf %1151, %1153 : vector<8x256xf32>
    %c145 = arith.constant 145 : index
    %1155 = memref.load %arg5[%c145] : memref<288xf32, #tpu.memory_space<smem>>
    %1156 = vector.broadcast %1155 : f32 to vector<8x256xf32>
    %1157 = arith.mulf %1156, %1154 : vector<8x256xf32>
    %1158 = arith.addf %1146, %1157 : vector<8x256xf32>
    %c181 = arith.constant 181 : index
    %1159 = memref.load %arg5[%c181] : memref<288xf32, #tpu.memory_space<smem>>
    %1160 = vector.broadcast %1159 : f32 to vector<8x256xf32>
    %1161 = arith.mulf %1160, %1154 : vector<8x256xf32>
    %1162 = arith.addf %1150, %1161 : vector<8x256xf32>
    %c15_i32_362 = arith.constant 15 : i32
    %1163 = tpu.dynamic_rotate %1138 by %c15_i32_362 dim 1 : vector<8x256xf32>, i32 -> vector<8x256xf32>
    %c2_363 = arith.constant 2 : index
    %c0_364 = arith.constant 0 : index
    %1164 = vector.load %arg3[%c2_363, %c0_364] : memref<9x256xf32, #tpu.memory_space<vmem>>, vector<1x256xf32>
    %1165 = vector.broadcast %1164 : vector<1x256xf32> to vector<8x256xf32>
    %1166 = arith.mulf %1163, %1165 : vector<8x256xf32>
    %c146 = arith.constant 146 : index
    %1167 = memref.load %arg5[%c146] : memref<288xf32, #tpu.memory_space<smem>>
    %1168 = vector.broadcast %1167 : f32 to vector<8x256xf32>
    %1169 = arith.mulf %1168, %1166 : vector<8x256xf32>
    %1170 = arith.addf %1158, %1169 : vector<8x256xf32>
    %c182 = arith.constant 182 : index
    %1171 = memref.load %arg5[%c182] : memref<288xf32, #tpu.memory_space<smem>>
    %1172 = vector.broadcast %1171 : f32 to vector<8x256xf32>
    %1173 = arith.mulf %1172, %1166 : vector<8x256xf32>
    %1174 = arith.addf %1162, %1173 : vector<8x256xf32>
    %c1_i32_365 = arith.constant 1 : i32
    %1175 = tpu.dynamic_rotate %1138 by %c1_i32_365 dim 1 : vector<8x256xf32>, i32 -> vector<8x256xf32>
    %c3_366 = arith.constant 3 : index
    %c0_367 = arith.constant 0 : index
    %1176 = vector.load %arg3[%c3_366, %c0_367] : memref<9x256xf32, #tpu.memory_space<vmem>>, vector<1x256xf32>
    %1177 = vector.broadcast %1176 : vector<1x256xf32> to vector<8x256xf32>
    %1178 = arith.mulf %1175, %1177 : vector<8x256xf32>
    %c147 = arith.constant 147 : index
    %1179 = memref.load %arg5[%c147] : memref<288xf32, #tpu.memory_space<smem>>
    %1180 = vector.broadcast %1179 : f32 to vector<8x256xf32>
    %1181 = arith.mulf %1180, %1178 : vector<8x256xf32>
    %1182 = arith.addf %1170, %1181 : vector<8x256xf32>
    %c183 = arith.constant 183 : index
    %1183 = memref.load %arg5[%c183] : memref<288xf32, #tpu.memory_space<smem>>
    %1184 = vector.broadcast %1183 : f32 to vector<8x256xf32>
    %1185 = arith.mulf %1184, %1178 : vector<8x256xf32>
    %1186 = arith.addf %1174, %1185 : vector<8x256xf32>
    %c4_368 = arith.constant 4 : index
    %c0_369 = arith.constant 0 : index
    %1187 = vector.load %arg3[%c4_368, %c0_369] : memref<9x256xf32, #tpu.memory_space<vmem>>, vector<1x256xf32>
    %1188 = vector.broadcast %1187 : vector<1x256xf32> to vector<8x256xf32>
    %1189 = arith.mulf %1138, %1188 : vector<8x256xf32>
    %c148 = arith.constant 148 : index
    %1190 = memref.load %arg5[%c148] : memref<288xf32, #tpu.memory_space<smem>>
    %1191 = vector.broadcast %1190 : f32 to vector<8x256xf32>
    %1192 = arith.mulf %1191, %1189 : vector<8x256xf32>
    %1193 = arith.addf %1182, %1192 : vector<8x256xf32>
    %c184 = arith.constant 184 : index
    %1194 = memref.load %arg5[%c184] : memref<288xf32, #tpu.memory_space<smem>>
    %1195 = vector.broadcast %1194 : f32 to vector<8x256xf32>
    %1196 = arith.mulf %1195, %1189 : vector<8x256xf32>
    %1197 = arith.addf %1186, %1196 : vector<8x256xf32>
    %c255_i32_370 = arith.constant 255 : i32
    %1198 = tpu.dynamic_rotate %1138 by %c255_i32_370 dim 1 : vector<8x256xf32>, i32 -> vector<8x256xf32>
    %c5_371 = arith.constant 5 : index
    %c0_372 = arith.constant 0 : index
    %1199 = vector.load %arg3[%c5_371, %c0_372] : memref<9x256xf32, #tpu.memory_space<vmem>>, vector<1x256xf32>
    %1200 = vector.broadcast %1199 : vector<1x256xf32> to vector<8x256xf32>
    %1201 = arith.mulf %1198, %1200 : vector<8x256xf32>
    %c149 = arith.constant 149 : index
    %1202 = memref.load %arg5[%c149] : memref<288xf32, #tpu.memory_space<smem>>
    %1203 = vector.broadcast %1202 : f32 to vector<8x256xf32>
    %1204 = arith.mulf %1203, %1201 : vector<8x256xf32>
    %1205 = arith.addf %1193, %1204 : vector<8x256xf32>
    %c185 = arith.constant 185 : index
    %1206 = memref.load %arg5[%c185] : memref<288xf32, #tpu.memory_space<smem>>
    %1207 = vector.broadcast %1206 : f32 to vector<8x256xf32>
    %1208 = arith.mulf %1207, %1201 : vector<8x256xf32>
    %1209 = arith.addf %1197, %1208 : vector<8x256xf32>
    %c241_i32_373 = arith.constant 241 : i32
    %1210 = tpu.dynamic_rotate %1138 by %c241_i32_373 dim 1 : vector<8x256xf32>, i32 -> vector<8x256xf32>
    %c6_374 = arith.constant 6 : index
    %c0_375 = arith.constant 0 : index
    %1211 = vector.load %arg3[%c6_374, %c0_375] : memref<9x256xf32, #tpu.memory_space<vmem>>, vector<1x256xf32>
    %1212 = vector.broadcast %1211 : vector<1x256xf32> to vector<8x256xf32>
    %1213 = arith.mulf %1210, %1212 : vector<8x256xf32>
    %c150 = arith.constant 150 : index
    %1214 = memref.load %arg5[%c150] : memref<288xf32, #tpu.memory_space<smem>>
    %1215 = vector.broadcast %1214 : f32 to vector<8x256xf32>
    %1216 = arith.mulf %1215, %1213 : vector<8x256xf32>
    %1217 = arith.addf %1205, %1216 : vector<8x256xf32>
    %c186 = arith.constant 186 : index
    %1218 = memref.load %arg5[%c186] : memref<288xf32, #tpu.memory_space<smem>>
    %1219 = vector.broadcast %1218 : f32 to vector<8x256xf32>
    %1220 = arith.mulf %1219, %1213 : vector<8x256xf32>
    %1221 = arith.addf %1209, %1220 : vector<8x256xf32>
    %c240_i32_376 = arith.constant 240 : i32
    %1222 = tpu.dynamic_rotate %1138 by %c240_i32_376 dim 1 : vector<8x256xf32>, i32 -> vector<8x256xf32>
    %c7_377 = arith.constant 7 : index
    %c0_378 = arith.constant 0 : index
    %1223 = vector.load %arg3[%c7_377, %c0_378] : memref<9x256xf32, #tpu.memory_space<vmem>>, vector<1x256xf32>
    %1224 = vector.broadcast %1223 : vector<1x256xf32> to vector<8x256xf32>
    %1225 = arith.mulf %1222, %1224 : vector<8x256xf32>
    %c151 = arith.constant 151 : index
    %1226 = memref.load %arg5[%c151] : memref<288xf32, #tpu.memory_space<smem>>
    %1227 = vector.broadcast %1226 : f32 to vector<8x256xf32>
    %1228 = arith.mulf %1227, %1225 : vector<8x256xf32>
    %1229 = arith.addf %1217, %1228 : vector<8x256xf32>
    %c187 = arith.constant 187 : index
    %1230 = memref.load %arg5[%c187] : memref<288xf32, #tpu.memory_space<smem>>
    %1231 = vector.broadcast %1230 : f32 to vector<8x256xf32>
    %1232 = arith.mulf %1231, %1225 : vector<8x256xf32>
    %1233 = arith.addf %1221, %1232 : vector<8x256xf32>
    %c239_i32_379 = arith.constant 239 : i32
    %1234 = tpu.dynamic_rotate %1138 by %c239_i32_379 dim 1 : vector<8x256xf32>, i32 -> vector<8x256xf32>
    %c8_380 = arith.constant 8 : index
    %c0_381 = arith.constant 0 : index
    %1235 = vector.load %arg3[%c8_380, %c0_381] : memref<9x256xf32, #tpu.memory_space<vmem>>, vector<1x256xf32>
    %1236 = vector.broadcast %1235 : vector<1x256xf32> to vector<8x256xf32>
    %1237 = arith.mulf %1234, %1236 : vector<8x256xf32>
    %c152 = arith.constant 152 : index
    %1238 = memref.load %arg5[%c152] : memref<288xf32, #tpu.memory_space<smem>>
    %1239 = vector.broadcast %1238 : f32 to vector<8x256xf32>
    %1240 = arith.mulf %1239, %1237 : vector<8x256xf32>
    %1241 = arith.addf %1229, %1240 : vector<8x256xf32>
    %c188 = arith.constant 188 : index
    %1242 = memref.load %arg5[%c188] : memref<288xf32, #tpu.memory_space<smem>>
    %1243 = vector.broadcast %1242 : f32 to vector<8x256xf32>
    %1244 = arith.mulf %1243, %1237 : vector<8x256xf32>
    %1245 = arith.addf %1233, %1244 : vector<8x256xf32>
    %c0_382 = arith.constant 0 : index
    %c256_383 = arith.constant 256 : index
    %1246 = vector.load %arg13[%c0_382, %c256_383] : memref<8x1024xf32, #tpu.memory_space<vmem>>, vector<8x256xf32>
    %c17_i32_384 = arith.constant 17 : i32
    %1247 = tpu.dynamic_rotate %1246 by %c17_i32_384 dim 1 : vector<8x256xf32>, i32 -> vector<8x256xf32>
    %c0_385 = arith.constant 0 : index
    %c0_386 = arith.constant 0 : index
    %1248 = vector.load %arg3[%c0_385, %c0_386] : memref<9x256xf32, #tpu.memory_space<vmem>>, vector<1x256xf32>
    %1249 = vector.broadcast %1248 : vector<1x256xf32> to vector<8x256xf32>
    %1250 = arith.mulf %1247, %1249 : vector<8x256xf32>
    %c153 = arith.constant 153 : index
    %1251 = memref.load %arg5[%c153] : memref<288xf32, #tpu.memory_space<smem>>
    %1252 = vector.broadcast %1251 : f32 to vector<8x256xf32>
    %1253 = arith.mulf %1252, %1250 : vector<8x256xf32>
    %1254 = arith.addf %1241, %1253 : vector<8x256xf32>
    %c189 = arith.constant 189 : index
    %1255 = memref.load %arg5[%c189] : memref<288xf32, #tpu.memory_space<smem>>
    %1256 = vector.broadcast %1255 : f32 to vector<8x256xf32>
    %1257 = arith.mulf %1256, %1250 : vector<8x256xf32>
    %1258 = arith.addf %1245, %1257 : vector<8x256xf32>
    %c16_i32_387 = arith.constant 16 : i32
    %1259 = tpu.dynamic_rotate %1246 by %c16_i32_387 dim 1 : vector<8x256xf32>, i32 -> vector<8x256xf32>
    %c1_388 = arith.constant 1 : index
    %c0_389 = arith.constant 0 : index
    %1260 = vector.load %arg3[%c1_388, %c0_389] : memref<9x256xf32, #tpu.memory_space<vmem>>, vector<1x256xf32>
    %1261 = vector.broadcast %1260 : vector<1x256xf32> to vector<8x256xf32>
    %1262 = arith.mulf %1259, %1261 : vector<8x256xf32>
    %c154 = arith.constant 154 : index
    %1263 = memref.load %arg5[%c154] : memref<288xf32, #tpu.memory_space<smem>>
    %1264 = vector.broadcast %1263 : f32 to vector<8x256xf32>
    %1265 = arith.mulf %1264, %1262 : vector<8x256xf32>
    %1266 = arith.addf %1254, %1265 : vector<8x256xf32>
    %c190 = arith.constant 190 : index
    %1267 = memref.load %arg5[%c190] : memref<288xf32, #tpu.memory_space<smem>>
    %1268 = vector.broadcast %1267 : f32 to vector<8x256xf32>
    %1269 = arith.mulf %1268, %1262 : vector<8x256xf32>
    %1270 = arith.addf %1258, %1269 : vector<8x256xf32>
    %c15_i32_390 = arith.constant 15 : i32
    %1271 = tpu.dynamic_rotate %1246 by %c15_i32_390 dim 1 : vector<8x256xf32>, i32 -> vector<8x256xf32>
    %c2_391 = arith.constant 2 : index
    %c0_392 = arith.constant 0 : index
    %1272 = vector.load %arg3[%c2_391, %c0_392] : memref<9x256xf32, #tpu.memory_space<vmem>>, vector<1x256xf32>
    %1273 = vector.broadcast %1272 : vector<1x256xf32> to vector<8x256xf32>
    %1274 = arith.mulf %1271, %1273 : vector<8x256xf32>
    %c155 = arith.constant 155 : index
    %1275 = memref.load %arg5[%c155] : memref<288xf32, #tpu.memory_space<smem>>
    %1276 = vector.broadcast %1275 : f32 to vector<8x256xf32>
    %1277 = arith.mulf %1276, %1274 : vector<8x256xf32>
    %1278 = arith.addf %1266, %1277 : vector<8x256xf32>
    %c191 = arith.constant 191 : index
    %1279 = memref.load %arg5[%c191] : memref<288xf32, #tpu.memory_space<smem>>
    %1280 = vector.broadcast %1279 : f32 to vector<8x256xf32>
    %1281 = arith.mulf %1280, %1274 : vector<8x256xf32>
    %1282 = arith.addf %1270, %1281 : vector<8x256xf32>
    %c1_i32_393 = arith.constant 1 : i32
    %1283 = tpu.dynamic_rotate %1246 by %c1_i32_393 dim 1 : vector<8x256xf32>, i32 -> vector<8x256xf32>
    %c3_394 = arith.constant 3 : index
    %c0_395 = arith.constant 0 : index
    %1284 = vector.load %arg3[%c3_394, %c0_395] : memref<9x256xf32, #tpu.memory_space<vmem>>, vector<1x256xf32>
    %1285 = vector.broadcast %1284 : vector<1x256xf32> to vector<8x256xf32>
    %1286 = arith.mulf %1283, %1285 : vector<8x256xf32>
    %c156 = arith.constant 156 : index
    %1287 = memref.load %arg5[%c156] : memref<288xf32, #tpu.memory_space<smem>>
    %1288 = vector.broadcast %1287 : f32 to vector<8x256xf32>
    %1289 = arith.mulf %1288, %1286 : vector<8x256xf32>
    %1290 = arith.addf %1278, %1289 : vector<8x256xf32>
    %c192 = arith.constant 192 : index
    %1291 = memref.load %arg5[%c192] : memref<288xf32, #tpu.memory_space<smem>>
    %1292 = vector.broadcast %1291 : f32 to vector<8x256xf32>
    %1293 = arith.mulf %1292, %1286 : vector<8x256xf32>
    %1294 = arith.addf %1282, %1293 : vector<8x256xf32>
    %c4_396 = arith.constant 4 : index
    %c0_397 = arith.constant 0 : index
    %1295 = vector.load %arg3[%c4_396, %c0_397] : memref<9x256xf32, #tpu.memory_space<vmem>>, vector<1x256xf32>
    %1296 = vector.broadcast %1295 : vector<1x256xf32> to vector<8x256xf32>
    %1297 = arith.mulf %1246, %1296 : vector<8x256xf32>
    %c157 = arith.constant 157 : index
    %1298 = memref.load %arg5[%c157] : memref<288xf32, #tpu.memory_space<smem>>
    %1299 = vector.broadcast %1298 : f32 to vector<8x256xf32>
    %1300 = arith.mulf %1299, %1297 : vector<8x256xf32>
    %1301 = arith.addf %1290, %1300 : vector<8x256xf32>
    %c193 = arith.constant 193 : index
    %1302 = memref.load %arg5[%c193] : memref<288xf32, #tpu.memory_space<smem>>
    %1303 = vector.broadcast %1302 : f32 to vector<8x256xf32>
    %1304 = arith.mulf %1303, %1297 : vector<8x256xf32>
    %1305 = arith.addf %1294, %1304 : vector<8x256xf32>
    %c255_i32_398 = arith.constant 255 : i32
    %1306 = tpu.dynamic_rotate %1246 by %c255_i32_398 dim 1 : vector<8x256xf32>, i32 -> vector<8x256xf32>
    %c5_399 = arith.constant 5 : index
    %c0_400 = arith.constant 0 : index
    %1307 = vector.load %arg3[%c5_399, %c0_400] : memref<9x256xf32, #tpu.memory_space<vmem>>, vector<1x256xf32>
    %1308 = vector.broadcast %1307 : vector<1x256xf32> to vector<8x256xf32>
    %1309 = arith.mulf %1306, %1308 : vector<8x256xf32>
    %c158 = arith.constant 158 : index
    %1310 = memref.load %arg5[%c158] : memref<288xf32, #tpu.memory_space<smem>>
    %1311 = vector.broadcast %1310 : f32 to vector<8x256xf32>
    %1312 = arith.mulf %1311, %1309 : vector<8x256xf32>
    %1313 = arith.addf %1301, %1312 : vector<8x256xf32>
    %c194 = arith.constant 194 : index
    %1314 = memref.load %arg5[%c194] : memref<288xf32, #tpu.memory_space<smem>>
    %1315 = vector.broadcast %1314 : f32 to vector<8x256xf32>
    %1316 = arith.mulf %1315, %1309 : vector<8x256xf32>
    %1317 = arith.addf %1305, %1316 : vector<8x256xf32>
    %c241_i32_401 = arith.constant 241 : i32
    %1318 = tpu.dynamic_rotate %1246 by %c241_i32_401 dim 1 : vector<8x256xf32>, i32 -> vector<8x256xf32>
    %c6_402 = arith.constant 6 : index
    %c0_403 = arith.constant 0 : index
    %1319 = vector.load %arg3[%c6_402, %c0_403] : memref<9x256xf32, #tpu.memory_space<vmem>>, vector<1x256xf32>
    %1320 = vector.broadcast %1319 : vector<1x256xf32> to vector<8x256xf32>
    %1321 = arith.mulf %1318, %1320 : vector<8x256xf32>
    %c159 = arith.constant 159 : index
    %1322 = memref.load %arg5[%c159] : memref<288xf32, #tpu.memory_space<smem>>
    %1323 = vector.broadcast %1322 : f32 to vector<8x256xf32>
    %1324 = arith.mulf %1323, %1321 : vector<8x256xf32>
    %1325 = arith.addf %1313, %1324 : vector<8x256xf32>
    %c195 = arith.constant 195 : index
    %1326 = memref.load %arg5[%c195] : memref<288xf32, #tpu.memory_space<smem>>
    %1327 = vector.broadcast %1326 : f32 to vector<8x256xf32>
    %1328 = arith.mulf %1327, %1321 : vector<8x256xf32>
    %1329 = arith.addf %1317, %1328 : vector<8x256xf32>
    %c240_i32_404 = arith.constant 240 : i32
    %1330 = tpu.dynamic_rotate %1246 by %c240_i32_404 dim 1 : vector<8x256xf32>, i32 -> vector<8x256xf32>
    %c7_405 = arith.constant 7 : index
    %c0_406 = arith.constant 0 : index
    %1331 = vector.load %arg3[%c7_405, %c0_406] : memref<9x256xf32, #tpu.memory_space<vmem>>, vector<1x256xf32>
    %1332 = vector.broadcast %1331 : vector<1x256xf32> to vector<8x256xf32>
    %1333 = arith.mulf %1330, %1332 : vector<8x256xf32>
    %c160 = arith.constant 160 : index
    %1334 = memref.load %arg5[%c160] : memref<288xf32, #tpu.memory_space<smem>>
    %1335 = vector.broadcast %1334 : f32 to vector<8x256xf32>
    %1336 = arith.mulf %1335, %1333 : vector<8x256xf32>
    %1337 = arith.addf %1325, %1336 : vector<8x256xf32>
    %c196 = arith.constant 196 : index
    %1338 = memref.load %arg5[%c196] : memref<288xf32, #tpu.memory_space<smem>>
    %1339 = vector.broadcast %1338 : f32 to vector<8x256xf32>
    %1340 = arith.mulf %1339, %1333 : vector<8x256xf32>
    %1341 = arith.addf %1329, %1340 : vector<8x256xf32>
    %c239_i32_407 = arith.constant 239 : i32
    %1342 = tpu.dynamic_rotate %1246 by %c239_i32_407 dim 1 : vector<8x256xf32>, i32 -> vector<8x256xf32>
    %c8_408 = arith.constant 8 : index
    %c0_409 = arith.constant 0 : index
    %1343 = vector.load %arg3[%c8_408, %c0_409] : memref<9x256xf32, #tpu.memory_space<vmem>>, vector<1x256xf32>
    %1344 = vector.broadcast %1343 : vector<1x256xf32> to vector<8x256xf32>
    %1345 = arith.mulf %1342, %1344 : vector<8x256xf32>
    %c161 = arith.constant 161 : index
    %1346 = memref.load %arg5[%c161] : memref<288xf32, #tpu.memory_space<smem>>
    %1347 = vector.broadcast %1346 : f32 to vector<8x256xf32>
    %1348 = arith.mulf %1347, %1345 : vector<8x256xf32>
    %1349 = arith.addf %1337, %1348 : vector<8x256xf32>
    %c197 = arith.constant 197 : index
    %1350 = memref.load %arg5[%c197] : memref<288xf32, #tpu.memory_space<smem>>
    %1351 = vector.broadcast %1350 : f32 to vector<8x256xf32>
    %1352 = arith.mulf %1351, %1345 : vector<8x256xf32>
    %1353 = arith.addf %1341, %1352 : vector<8x256xf32>
    %c0_410 = arith.constant 0 : index
    %c512_411 = arith.constant 512 : index
    %1354 = vector.load %arg13[%c0_410, %c512_411] : memref<8x1024xf32, #tpu.memory_space<vmem>>, vector<8x256xf32>
    %c17_i32_412 = arith.constant 17 : i32
    %1355 = tpu.dynamic_rotate %1354 by %c17_i32_412 dim 1 : vector<8x256xf32>, i32 -> vector<8x256xf32>
    %c0_413 = arith.constant 0 : index
    %c0_414 = arith.constant 0 : index
    %1356 = vector.load %arg3[%c0_413, %c0_414] : memref<9x256xf32, #tpu.memory_space<vmem>>, vector<1x256xf32>
    %1357 = vector.broadcast %1356 : vector<1x256xf32> to vector<8x256xf32>
    %1358 = arith.mulf %1355, %1357 : vector<8x256xf32>
    %c162 = arith.constant 162 : index
    %1359 = memref.load %arg5[%c162] : memref<288xf32, #tpu.memory_space<smem>>
    %1360 = vector.broadcast %1359 : f32 to vector<8x256xf32>
    %1361 = arith.mulf %1360, %1358 : vector<8x256xf32>
    %1362 = arith.addf %1349, %1361 : vector<8x256xf32>
    %c198 = arith.constant 198 : index
    %1363 = memref.load %arg5[%c198] : memref<288xf32, #tpu.memory_space<smem>>
    %1364 = vector.broadcast %1363 : f32 to vector<8x256xf32>
    %1365 = arith.mulf %1364, %1358 : vector<8x256xf32>
    %1366 = arith.addf %1353, %1365 : vector<8x256xf32>
    %c16_i32_415 = arith.constant 16 : i32
    %1367 = tpu.dynamic_rotate %1354 by %c16_i32_415 dim 1 : vector<8x256xf32>, i32 -> vector<8x256xf32>
    %c1_416 = arith.constant 1 : index
    %c0_417 = arith.constant 0 : index
    %1368 = vector.load %arg3[%c1_416, %c0_417] : memref<9x256xf32, #tpu.memory_space<vmem>>, vector<1x256xf32>
    %1369 = vector.broadcast %1368 : vector<1x256xf32> to vector<8x256xf32>
    %1370 = arith.mulf %1367, %1369 : vector<8x256xf32>
    %c163 = arith.constant 163 : index
    %1371 = memref.load %arg5[%c163] : memref<288xf32, #tpu.memory_space<smem>>
    %1372 = vector.broadcast %1371 : f32 to vector<8x256xf32>
    %1373 = arith.mulf %1372, %1370 : vector<8x256xf32>
    %1374 = arith.addf %1362, %1373 : vector<8x256xf32>
    %c199 = arith.constant 199 : index
    %1375 = memref.load %arg5[%c199] : memref<288xf32, #tpu.memory_space<smem>>
    %1376 = vector.broadcast %1375 : f32 to vector<8x256xf32>
    %1377 = arith.mulf %1376, %1370 : vector<8x256xf32>
    %1378 = arith.addf %1366, %1377 : vector<8x256xf32>
    %c15_i32_418 = arith.constant 15 : i32
    %1379 = tpu.dynamic_rotate %1354 by %c15_i32_418 dim 1 : vector<8x256xf32>, i32 -> vector<8x256xf32>
    %c2_419 = arith.constant 2 : index
    %c0_420 = arith.constant 0 : index
    %1380 = vector.load %arg3[%c2_419, %c0_420] : memref<9x256xf32, #tpu.memory_space<vmem>>, vector<1x256xf32>
    %1381 = vector.broadcast %1380 : vector<1x256xf32> to vector<8x256xf32>
    %1382 = arith.mulf %1379, %1381 : vector<8x256xf32>
    %c164 = arith.constant 164 : index
    %1383 = memref.load %arg5[%c164] : memref<288xf32, #tpu.memory_space<smem>>
    %1384 = vector.broadcast %1383 : f32 to vector<8x256xf32>
    %1385 = arith.mulf %1384, %1382 : vector<8x256xf32>
    %1386 = arith.addf %1374, %1385 : vector<8x256xf32>
    %c200 = arith.constant 200 : index
    %1387 = memref.load %arg5[%c200] : memref<288xf32, #tpu.memory_space<smem>>
    %1388 = vector.broadcast %1387 : f32 to vector<8x256xf32>
    %1389 = arith.mulf %1388, %1382 : vector<8x256xf32>
    %1390 = arith.addf %1378, %1389 : vector<8x256xf32>
    %c1_i32_421 = arith.constant 1 : i32
    %1391 = tpu.dynamic_rotate %1354 by %c1_i32_421 dim 1 : vector<8x256xf32>, i32 -> vector<8x256xf32>
    %c3_422 = arith.constant 3 : index
    %c0_423 = arith.constant 0 : index
    %1392 = vector.load %arg3[%c3_422, %c0_423] : memref<9x256xf32, #tpu.memory_space<vmem>>, vector<1x256xf32>
    %1393 = vector.broadcast %1392 : vector<1x256xf32> to vector<8x256xf32>
    %1394 = arith.mulf %1391, %1393 : vector<8x256xf32>
    %c165 = arith.constant 165 : index
    %1395 = memref.load %arg5[%c165] : memref<288xf32, #tpu.memory_space<smem>>
    %1396 = vector.broadcast %1395 : f32 to vector<8x256xf32>
    %1397 = arith.mulf %1396, %1394 : vector<8x256xf32>
    %1398 = arith.addf %1386, %1397 : vector<8x256xf32>
    %c201 = arith.constant 201 : index
    %1399 = memref.load %arg5[%c201] : memref<288xf32, #tpu.memory_space<smem>>
    %1400 = vector.broadcast %1399 : f32 to vector<8x256xf32>
    %1401 = arith.mulf %1400, %1394 : vector<8x256xf32>
    %1402 = arith.addf %1390, %1401 : vector<8x256xf32>
    %c4_424 = arith.constant 4 : index
    %c0_425 = arith.constant 0 : index
    %1403 = vector.load %arg3[%c4_424, %c0_425] : memref<9x256xf32, #tpu.memory_space<vmem>>, vector<1x256xf32>
    %1404 = vector.broadcast %1403 : vector<1x256xf32> to vector<8x256xf32>
    %1405 = arith.mulf %1354, %1404 : vector<8x256xf32>
    %c166 = arith.constant 166 : index
    %1406 = memref.load %arg5[%c166] : memref<288xf32, #tpu.memory_space<smem>>
    %1407 = vector.broadcast %1406 : f32 to vector<8x256xf32>
    %1408 = arith.mulf %1407, %1405 : vector<8x256xf32>
    %1409 = arith.addf %1398, %1408 : vector<8x256xf32>
    %c202 = arith.constant 202 : index
    %1410 = memref.load %arg5[%c202] : memref<288xf32, #tpu.memory_space<smem>>
    %1411 = vector.broadcast %1410 : f32 to vector<8x256xf32>
    %1412 = arith.mulf %1411, %1405 : vector<8x256xf32>
    %1413 = arith.addf %1402, %1412 : vector<8x256xf32>
    %c255_i32_426 = arith.constant 255 : i32
    %1414 = tpu.dynamic_rotate %1354 by %c255_i32_426 dim 1 : vector<8x256xf32>, i32 -> vector<8x256xf32>
    %c5_427 = arith.constant 5 : index
    %c0_428 = arith.constant 0 : index
    %1415 = vector.load %arg3[%c5_427, %c0_428] : memref<9x256xf32, #tpu.memory_space<vmem>>, vector<1x256xf32>
    %1416 = vector.broadcast %1415 : vector<1x256xf32> to vector<8x256xf32>
    %1417 = arith.mulf %1414, %1416 : vector<8x256xf32>
    %c167 = arith.constant 167 : index
    %1418 = memref.load %arg5[%c167] : memref<288xf32, #tpu.memory_space<smem>>
    %1419 = vector.broadcast %1418 : f32 to vector<8x256xf32>
    %1420 = arith.mulf %1419, %1417 : vector<8x256xf32>
    %1421 = arith.addf %1409, %1420 : vector<8x256xf32>
    %c203 = arith.constant 203 : index
    %1422 = memref.load %arg5[%c203] : memref<288xf32, #tpu.memory_space<smem>>
    %1423 = vector.broadcast %1422 : f32 to vector<8x256xf32>
    %1424 = arith.mulf %1423, %1417 : vector<8x256xf32>
    %1425 = arith.addf %1413, %1424 : vector<8x256xf32>
    %c241_i32_429 = arith.constant 241 : i32
    %1426 = tpu.dynamic_rotate %1354 by %c241_i32_429 dim 1 : vector<8x256xf32>, i32 -> vector<8x256xf32>
    %c6_430 = arith.constant 6 : index
    %c0_431 = arith.constant 0 : index
    %1427 = vector.load %arg3[%c6_430, %c0_431] : memref<9x256xf32, #tpu.memory_space<vmem>>, vector<1x256xf32>
    %1428 = vector.broadcast %1427 : vector<1x256xf32> to vector<8x256xf32>
    %1429 = arith.mulf %1426, %1428 : vector<8x256xf32>
    %c168 = arith.constant 168 : index
    %1430 = memref.load %arg5[%c168] : memref<288xf32, #tpu.memory_space<smem>>
    %1431 = vector.broadcast %1430 : f32 to vector<8x256xf32>
    %1432 = arith.mulf %1431, %1429 : vector<8x256xf32>
    %1433 = arith.addf %1421, %1432 : vector<8x256xf32>
    %c204 = arith.constant 204 : index
    %1434 = memref.load %arg5[%c204] : memref<288xf32, #tpu.memory_space<smem>>
    %1435 = vector.broadcast %1434 : f32 to vector<8x256xf32>
    %1436 = arith.mulf %1435, %1429 : vector<8x256xf32>
    %1437 = arith.addf %1425, %1436 : vector<8x256xf32>
    %c240_i32_432 = arith.constant 240 : i32
    %1438 = tpu.dynamic_rotate %1354 by %c240_i32_432 dim 1 : vector<8x256xf32>, i32 -> vector<8x256xf32>
    %c7_433 = arith.constant 7 : index
    %c0_434 = arith.constant 0 : index
    %1439 = vector.load %arg3[%c7_433, %c0_434] : memref<9x256xf32, #tpu.memory_space<vmem>>, vector<1x256xf32>
    %1440 = vector.broadcast %1439 : vector<1x256xf32> to vector<8x256xf32>
    %1441 = arith.mulf %1438, %1440 : vector<8x256xf32>
    %c169 = arith.constant 169 : index
    %1442 = memref.load %arg5[%c169] : memref<288xf32, #tpu.memory_space<smem>>
    %1443 = vector.broadcast %1442 : f32 to vector<8x256xf32>
    %1444 = arith.mulf %1443, %1441 : vector<8x256xf32>
    %1445 = arith.addf %1433, %1444 : vector<8x256xf32>
    %c205 = arith.constant 205 : index
    %1446 = memref.load %arg5[%c205] : memref<288xf32, #tpu.memory_space<smem>>
    %1447 = vector.broadcast %1446 : f32 to vector<8x256xf32>
    %1448 = arith.mulf %1447, %1441 : vector<8x256xf32>
    %1449 = arith.addf %1437, %1448 : vector<8x256xf32>
    %c239_i32_435 = arith.constant 239 : i32
    %1450 = tpu.dynamic_rotate %1354 by %c239_i32_435 dim 1 : vector<8x256xf32>, i32 -> vector<8x256xf32>
    %c8_436 = arith.constant 8 : index
    %c0_437 = arith.constant 0 : index
    %1451 = vector.load %arg3[%c8_436, %c0_437] : memref<9x256xf32, #tpu.memory_space<vmem>>, vector<1x256xf32>
    %1452 = vector.broadcast %1451 : vector<1x256xf32> to vector<8x256xf32>
    %1453 = arith.mulf %1450, %1452 : vector<8x256xf32>
    %c170 = arith.constant 170 : index
    %1454 = memref.load %arg5[%c170] : memref<288xf32, #tpu.memory_space<smem>>
    %1455 = vector.broadcast %1454 : f32 to vector<8x256xf32>
    %1456 = arith.mulf %1455, %1453 : vector<8x256xf32>
    %1457 = arith.addf %1445, %1456 : vector<8x256xf32>
    %c206 = arith.constant 206 : index
    %1458 = memref.load %arg5[%c206] : memref<288xf32, #tpu.memory_space<smem>>
    %1459 = vector.broadcast %1458 : f32 to vector<8x256xf32>
    %1460 = arith.mulf %1459, %1453 : vector<8x256xf32>
    %1461 = arith.addf %1449, %1460 : vector<8x256xf32>
    %c0_438 = arith.constant 0 : index
    %c768_439 = arith.constant 768 : index
    %1462 = vector.load %arg13[%c0_438, %c768_439] : memref<8x1024xf32, #tpu.memory_space<vmem>>, vector<8x256xf32>
    %c17_i32_440 = arith.constant 17 : i32
    %1463 = tpu.dynamic_rotate %1462 by %c17_i32_440 dim 1 : vector<8x256xf32>, i32 -> vector<8x256xf32>
    %c0_441 = arith.constant 0 : index
    %c0_442 = arith.constant 0 : index
    %1464 = vector.load %arg3[%c0_441, %c0_442] : memref<9x256xf32, #tpu.memory_space<vmem>>, vector<1x256xf32>
    %1465 = vector.broadcast %1464 : vector<1x256xf32> to vector<8x256xf32>
    %1466 = arith.mulf %1463, %1465 : vector<8x256xf32>
    %c171 = arith.constant 171 : index
    %1467 = memref.load %arg5[%c171] : memref<288xf32, #tpu.memory_space<smem>>
    %1468 = vector.broadcast %1467 : f32 to vector<8x256xf32>
    %1469 = arith.mulf %1468, %1466 : vector<8x256xf32>
    %1470 = arith.addf %1457, %1469 : vector<8x256xf32>
    %c207 = arith.constant 207 : index
    %1471 = memref.load %arg5[%c207] : memref<288xf32, #tpu.memory_space<smem>>
    %1472 = vector.broadcast %1471 : f32 to vector<8x256xf32>
    %1473 = arith.mulf %1472, %1466 : vector<8x256xf32>
    %1474 = arith.addf %1461, %1473 : vector<8x256xf32>
    %c16_i32_443 = arith.constant 16 : i32
    %1475 = tpu.dynamic_rotate %1462 by %c16_i32_443 dim 1 : vector<8x256xf32>, i32 -> vector<8x256xf32>
    %c1_444 = arith.constant 1 : index
    %c0_445 = arith.constant 0 : index
    %1476 = vector.load %arg3[%c1_444, %c0_445] : memref<9x256xf32, #tpu.memory_space<vmem>>, vector<1x256xf32>
    %1477 = vector.broadcast %1476 : vector<1x256xf32> to vector<8x256xf32>
    %1478 = arith.mulf %1475, %1477 : vector<8x256xf32>
    %c172 = arith.constant 172 : index
    %1479 = memref.load %arg5[%c172] : memref<288xf32, #tpu.memory_space<smem>>
    %1480 = vector.broadcast %1479 : f32 to vector<8x256xf32>
    %1481 = arith.mulf %1480, %1478 : vector<8x256xf32>
    %1482 = arith.addf %1470, %1481 : vector<8x256xf32>
    %c208 = arith.constant 208 : index
    %1483 = memref.load %arg5[%c208] : memref<288xf32, #tpu.memory_space<smem>>
    %1484 = vector.broadcast %1483 : f32 to vector<8x256xf32>
    %1485 = arith.mulf %1484, %1478 : vector<8x256xf32>
    %1486 = arith.addf %1474, %1485 : vector<8x256xf32>
    %c15_i32_446 = arith.constant 15 : i32
    %1487 = tpu.dynamic_rotate %1462 by %c15_i32_446 dim 1 : vector<8x256xf32>, i32 -> vector<8x256xf32>
    %c2_447 = arith.constant 2 : index
    %c0_448 = arith.constant 0 : index
    %1488 = vector.load %arg3[%c2_447, %c0_448] : memref<9x256xf32, #tpu.memory_space<vmem>>, vector<1x256xf32>
    %1489 = vector.broadcast %1488 : vector<1x256xf32> to vector<8x256xf32>
    %1490 = arith.mulf %1487, %1489 : vector<8x256xf32>
    %c173 = arith.constant 173 : index
    %1491 = memref.load %arg5[%c173] : memref<288xf32, #tpu.memory_space<smem>>
    %1492 = vector.broadcast %1491 : f32 to vector<8x256xf32>
    %1493 = arith.mulf %1492, %1490 : vector<8x256xf32>
    %1494 = arith.addf %1482, %1493 : vector<8x256xf32>
    %c209 = arith.constant 209 : index
    %1495 = memref.load %arg5[%c209] : memref<288xf32, #tpu.memory_space<smem>>
    %1496 = vector.broadcast %1495 : f32 to vector<8x256xf32>
    %1497 = arith.mulf %1496, %1490 : vector<8x256xf32>
    %1498 = arith.addf %1486, %1497 : vector<8x256xf32>
    %c1_i32_449 = arith.constant 1 : i32
    %1499 = tpu.dynamic_rotate %1462 by %c1_i32_449 dim 1 : vector<8x256xf32>, i32 -> vector<8x256xf32>
    %c3_450 = arith.constant 3 : index
    %c0_451 = arith.constant 0 : index
    %1500 = vector.load %arg3[%c3_450, %c0_451] : memref<9x256xf32, #tpu.memory_space<vmem>>, vector<1x256xf32>
    %1501 = vector.broadcast %1500 : vector<1x256xf32> to vector<8x256xf32>
    %1502 = arith.mulf %1499, %1501 : vector<8x256xf32>
    %c174 = arith.constant 174 : index
    %1503 = memref.load %arg5[%c174] : memref<288xf32, #tpu.memory_space<smem>>
    %1504 = vector.broadcast %1503 : f32 to vector<8x256xf32>
    %1505 = arith.mulf %1504, %1502 : vector<8x256xf32>
    %1506 = arith.addf %1494, %1505 : vector<8x256xf32>
    %c210 = arith.constant 210 : index
    %1507 = memref.load %arg5[%c210] : memref<288xf32, #tpu.memory_space<smem>>
    %1508 = vector.broadcast %1507 : f32 to vector<8x256xf32>
    %1509 = arith.mulf %1508, %1502 : vector<8x256xf32>
    %1510 = arith.addf %1498, %1509 : vector<8x256xf32>
    %c4_452 = arith.constant 4 : index
    %c0_453 = arith.constant 0 : index
    %1511 = vector.load %arg3[%c4_452, %c0_453] : memref<9x256xf32, #tpu.memory_space<vmem>>, vector<1x256xf32>
    %1512 = vector.broadcast %1511 : vector<1x256xf32> to vector<8x256xf32>
    %1513 = arith.mulf %1462, %1512 : vector<8x256xf32>
    %c175 = arith.constant 175 : index
    %1514 = memref.load %arg5[%c175] : memref<288xf32, #tpu.memory_space<smem>>
    %1515 = vector.broadcast %1514 : f32 to vector<8x256xf32>
    %1516 = arith.mulf %1515, %1513 : vector<8x256xf32>
    %1517 = arith.addf %1506, %1516 : vector<8x256xf32>
    %c211 = arith.constant 211 : index
    %1518 = memref.load %arg5[%c211] : memref<288xf32, #tpu.memory_space<smem>>
    %1519 = vector.broadcast %1518 : f32 to vector<8x256xf32>
    %1520 = arith.mulf %1519, %1513 : vector<8x256xf32>
    %1521 = arith.addf %1510, %1520 : vector<8x256xf32>
    %c255_i32_454 = arith.constant 255 : i32
    %1522 = tpu.dynamic_rotate %1462 by %c255_i32_454 dim 1 : vector<8x256xf32>, i32 -> vector<8x256xf32>
    %c5_455 = arith.constant 5 : index
    %c0_456 = arith.constant 0 : index
    %1523 = vector.load %arg3[%c5_455, %c0_456] : memref<9x256xf32, #tpu.memory_space<vmem>>, vector<1x256xf32>
    %1524 = vector.broadcast %1523 : vector<1x256xf32> to vector<8x256xf32>
    %1525 = arith.mulf %1522, %1524 : vector<8x256xf32>
    %c176 = arith.constant 176 : index
    %1526 = memref.load %arg5[%c176] : memref<288xf32, #tpu.memory_space<smem>>
    %1527 = vector.broadcast %1526 : f32 to vector<8x256xf32>
    %1528 = arith.mulf %1527, %1525 : vector<8x256xf32>
    %1529 = arith.addf %1517, %1528 : vector<8x256xf32>
    %c212 = arith.constant 212 : index
    %1530 = memref.load %arg5[%c212] : memref<288xf32, #tpu.memory_space<smem>>
    %1531 = vector.broadcast %1530 : f32 to vector<8x256xf32>
    %1532 = arith.mulf %1531, %1525 : vector<8x256xf32>
    %1533 = arith.addf %1521, %1532 : vector<8x256xf32>
    %c241_i32_457 = arith.constant 241 : i32
    %1534 = tpu.dynamic_rotate %1462 by %c241_i32_457 dim 1 : vector<8x256xf32>, i32 -> vector<8x256xf32>
    %c6_458 = arith.constant 6 : index
    %c0_459 = arith.constant 0 : index
    %1535 = vector.load %arg3[%c6_458, %c0_459] : memref<9x256xf32, #tpu.memory_space<vmem>>, vector<1x256xf32>
    %1536 = vector.broadcast %1535 : vector<1x256xf32> to vector<8x256xf32>
    %1537 = arith.mulf %1534, %1536 : vector<8x256xf32>
    %c177 = arith.constant 177 : index
    %1538 = memref.load %arg5[%c177] : memref<288xf32, #tpu.memory_space<smem>>
    %1539 = vector.broadcast %1538 : f32 to vector<8x256xf32>
    %1540 = arith.mulf %1539, %1537 : vector<8x256xf32>
    %1541 = arith.addf %1529, %1540 : vector<8x256xf32>
    %c213 = arith.constant 213 : index
    %1542 = memref.load %arg5[%c213] : memref<288xf32, #tpu.memory_space<smem>>
    %1543 = vector.broadcast %1542 : f32 to vector<8x256xf32>
    %1544 = arith.mulf %1543, %1537 : vector<8x256xf32>
    %1545 = arith.addf %1533, %1544 : vector<8x256xf32>
    %c240_i32_460 = arith.constant 240 : i32
    %1546 = tpu.dynamic_rotate %1462 by %c240_i32_460 dim 1 : vector<8x256xf32>, i32 -> vector<8x256xf32>
    %c7_461 = arith.constant 7 : index
    %c0_462 = arith.constant 0 : index
    %1547 = vector.load %arg3[%c7_461, %c0_462] : memref<9x256xf32, #tpu.memory_space<vmem>>, vector<1x256xf32>
    %1548 = vector.broadcast %1547 : vector<1x256xf32> to vector<8x256xf32>
    %1549 = arith.mulf %1546, %1548 : vector<8x256xf32>
    %c178 = arith.constant 178 : index
    %1550 = memref.load %arg5[%c178] : memref<288xf32, #tpu.memory_space<smem>>
    %1551 = vector.broadcast %1550 : f32 to vector<8x256xf32>
    %1552 = arith.mulf %1551, %1549 : vector<8x256xf32>
    %1553 = arith.addf %1541, %1552 : vector<8x256xf32>
    %c214 = arith.constant 214 : index
    %1554 = memref.load %arg5[%c214] : memref<288xf32, #tpu.memory_space<smem>>
    %1555 = vector.broadcast %1554 : f32 to vector<8x256xf32>
    %1556 = arith.mulf %1555, %1549 : vector<8x256xf32>
    %1557 = arith.addf %1545, %1556 : vector<8x256xf32>
    %c239_i32_463 = arith.constant 239 : i32
    %1558 = tpu.dynamic_rotate %1462 by %c239_i32_463 dim 1 : vector<8x256xf32>, i32 -> vector<8x256xf32>
    %c8_464 = arith.constant 8 : index
    %c0_465 = arith.constant 0 : index
    %1559 = vector.load %arg3[%c8_464, %c0_465] : memref<9x256xf32, #tpu.memory_space<vmem>>, vector<1x256xf32>
    %1560 = vector.broadcast %1559 : vector<1x256xf32> to vector<8x256xf32>
    %1561 = arith.mulf %1558, %1560 : vector<8x256xf32>
    %c179 = arith.constant 179 : index
    %1562 = memref.load %arg5[%c179] : memref<288xf32, #tpu.memory_space<smem>>
    %1563 = vector.broadcast %1562 : f32 to vector<8x256xf32>
    %1564 = arith.mulf %1563, %1561 : vector<8x256xf32>
    %1565 = arith.addf %1553, %1564 : vector<8x256xf32>
    %c215 = arith.constant 215 : index
    %1566 = memref.load %arg5[%c215] : memref<288xf32, #tpu.memory_space<smem>>
    %1567 = vector.broadcast %1566 : f32 to vector<8x256xf32>
    %1568 = arith.mulf %1567, %1561 : vector<8x256xf32>
    %1569 = arith.addf %1557, %1568 : vector<8x256xf32>
    %c4_466 = arith.constant 4 : index
    %c0_467 = arith.constant 0 : index
    %1570 = vector.load %arg7[%c4_466, %c0_467] : memref<8x256xf32, #tpu.memory_space<vmem>>, vector<1x256xf32>
    %1571 = vector.broadcast %1570 : vector<1x256xf32> to vector<8x256xf32>
    %1572 = arith.addf %1565, %1571 : vector<8x256xf32>
    %cst_468 = arith.constant 0.000000e+00 : f32
    %1573 = vector.broadcast %cst_468 : f32 to vector<8x256xf32>
    %1574 = arith.maximumf %1572, %1573 : vector<8x256xf32>
    %c0_469 = arith.constant 0 : index
    %c1024 = arith.constant 1024 : index
    %1575 = vector.load %arg14[%c0_469, %c1024] : memref<8x2048xf32, #tpu.memory_space<vmem>>, vector<8x256xf32>
    tpu.vector_store %arg14[%c0_469, %c1024], %1574 {strides = array<i32>} : memref<8x2048xf32, #tpu.memory_space<vmem>>, vector<8x256xf32>,
    %c5_470 = arith.constant 5 : index
    %c0_471 = arith.constant 0 : index
    %1576 = vector.load %arg7[%c5_470, %c0_471] : memref<8x256xf32, #tpu.memory_space<vmem>>, vector<1x256xf32>
    %1577 = vector.broadcast %1576 : vector<1x256xf32> to vector<8x256xf32>
    %1578 = arith.addf %1569, %1577 : vector<8x256xf32>
    %cst_472 = arith.constant 0.000000e+00 : f32
    %1579 = vector.broadcast %cst_472 : f32 to vector<8x256xf32>
    %1580 = arith.maximumf %1578, %1579 : vector<8x256xf32>
    %c0_473 = arith.constant 0 : index
    %c1280 = arith.constant 1280 : index
    %1581 = vector.load %arg14[%c0_473, %c1280] : memref<8x2048xf32, #tpu.memory_space<vmem>>, vector<8x256xf32>
    tpu.vector_store %arg14[%c0_473, %c1280], %1580 {strides = array<i32>} : memref<8x2048xf32, #tpu.memory_space<vmem>>, vector<8x256xf32>,
    %cst_474 = arith.constant 0.000000e+00 : f32
    %1582 = vector.broadcast %cst_474 : f32 to vector<8x256xf32>
    %cst_475 = arith.constant 0.000000e+00 : f32
    %1583 = vector.broadcast %cst_475 : f32 to vector<8x256xf32>
    %c0_476 = arith.constant 0 : index
    %c0_477 = arith.constant 0 : index
    %1584 = vector.load %arg13[%c0_476, %c0_477] : memref<8x1024xf32, #tpu.memory_space<vmem>>, vector<8x256xf32>
    %c17_i32_478 = arith.constant 17 : i32
    %1585 = tpu.dynamic_rotate %1584 by %c17_i32_478 dim 1 : vector<8x256xf32>, i32 -> vector<8x256xf32>
    %c0_479 = arith.constant 0 : index
    %c0_480 = arith.constant 0 : index
    %1586 = vector.load %arg3[%c0_479, %c0_480] : memref<9x256xf32, #tpu.memory_space<vmem>>, vector<1x256xf32>
    %1587 = vector.broadcast %1586 : vector<1x256xf32> to vector<8x256xf32>
    %1588 = arith.mulf %1585, %1587 : vector<8x256xf32>
    %c216 = arith.constant 216 : index
    %1589 = memref.load %arg5[%c216] : memref<288xf32, #tpu.memory_space<smem>>
    %1590 = vector.broadcast %1589 : f32 to vector<8x256xf32>
    %1591 = arith.mulf %1590, %1588 : vector<8x256xf32>
    %1592 = arith.addf %1582, %1591 : vector<8x256xf32>
    %c252 = arith.constant 252 : index
    %1593 = memref.load %arg5[%c252] : memref<288xf32, #tpu.memory_space<smem>>
    %1594 = vector.broadcast %1593 : f32 to vector<8x256xf32>
    %1595 = arith.mulf %1594, %1588 : vector<8x256xf32>
    %1596 = arith.addf %1583, %1595 : vector<8x256xf32>
    %c16_i32_481 = arith.constant 16 : i32
    %1597 = tpu.dynamic_rotate %1584 by %c16_i32_481 dim 1 : vector<8x256xf32>, i32 -> vector<8x256xf32>
    %c1_482 = arith.constant 1 : index
    %c0_483 = arith.constant 0 : index
    %1598 = vector.load %arg3[%c1_482, %c0_483] : memref<9x256xf32, #tpu.memory_space<vmem>>, vector<1x256xf32>
    %1599 = vector.broadcast %1598 : vector<1x256xf32> to vector<8x256xf32>
    %1600 = arith.mulf %1597, %1599 : vector<8x256xf32>
    %c217 = arith.constant 217 : index
    %1601 = memref.load %arg5[%c217] : memref<288xf32, #tpu.memory_space<smem>>
    %1602 = vector.broadcast %1601 : f32 to vector<8x256xf32>
    %1603 = arith.mulf %1602, %1600 : vector<8x256xf32>
    %1604 = arith.addf %1592, %1603 : vector<8x256xf32>
    %c253 = arith.constant 253 : index
    %1605 = memref.load %arg5[%c253] : memref<288xf32, #tpu.memory_space<smem>>
    %1606 = vector.broadcast %1605 : f32 to vector<8x256xf32>
    %1607 = arith.mulf %1606, %1600 : vector<8x256xf32>
    %1608 = arith.addf %1596, %1607 : vector<8x256xf32>
    %c15_i32_484 = arith.constant 15 : i32
    %1609 = tpu.dynamic_rotate %1584 by %c15_i32_484 dim 1 : vector<8x256xf32>, i32 -> vector<8x256xf32>
    %c2_485 = arith.constant 2 : index
    %c0_486 = arith.constant 0 : index
    %1610 = vector.load %arg3[%c2_485, %c0_486] : memref<9x256xf32, #tpu.memory_space<vmem>>, vector<1x256xf32>
    %1611 = vector.broadcast %1610 : vector<1x256xf32> to vector<8x256xf32>
    %1612 = arith.mulf %1609, %1611 : vector<8x256xf32>
    %c218 = arith.constant 218 : index
    %1613 = memref.load %arg5[%c218] : memref<288xf32, #tpu.memory_space<smem>>
    %1614 = vector.broadcast %1613 : f32 to vector<8x256xf32>
    %1615 = arith.mulf %1614, %1612 : vector<8x256xf32>
    %1616 = arith.addf %1604, %1615 : vector<8x256xf32>
    %c254 = arith.constant 254 : index
    %1617 = memref.load %arg5[%c254] : memref<288xf32, #tpu.memory_space<smem>>
    %1618 = vector.broadcast %1617 : f32 to vector<8x256xf32>
    %1619 = arith.mulf %1618, %1612 : vector<8x256xf32>
    %1620 = arith.addf %1608, %1619 : vector<8x256xf32>
    %c1_i32_487 = arith.constant 1 : i32
    %1621 = tpu.dynamic_rotate %1584 by %c1_i32_487 dim 1 : vector<8x256xf32>, i32 -> vector<8x256xf32>
    %c3_488 = arith.constant 3 : index
    %c0_489 = arith.constant 0 : index
    %1622 = vector.load %arg3[%c3_488, %c0_489] : memref<9x256xf32, #tpu.memory_space<vmem>>, vector<1x256xf32>
    %1623 = vector.broadcast %1622 : vector<1x256xf32> to vector<8x256xf32>
    %1624 = arith.mulf %1621, %1623 : vector<8x256xf32>
    %c219 = arith.constant 219 : index
    %1625 = memref.load %arg5[%c219] : memref<288xf32, #tpu.memory_space<smem>>
    %1626 = vector.broadcast %1625 : f32 to vector<8x256xf32>
    %1627 = arith.mulf %1626, %1624 : vector<8x256xf32>
    %1628 = arith.addf %1616, %1627 : vector<8x256xf32>
    %c255 = arith.constant 255 : index
    %1629 = memref.load %arg5[%c255] : memref<288xf32, #tpu.memory_space<smem>>
    %1630 = vector.broadcast %1629 : f32 to vector<8x256xf32>
    %1631 = arith.mulf %1630, %1624 : vector<8x256xf32>
    %1632 = arith.addf %1620, %1631 : vector<8x256xf32>
    %c4_490 = arith.constant 4 : index
    %c0_491 = arith.constant 0 : index
    %1633 = vector.load %arg3[%c4_490, %c0_491] : memref<9x256xf32, #tpu.memory_space<vmem>>, vector<1x256xf32>
    %1634 = vector.broadcast %1633 : vector<1x256xf32> to vector<8x256xf32>
    %1635 = arith.mulf %1584, %1634 : vector<8x256xf32>
    %c220 = arith.constant 220 : index
    %1636 = memref.load %arg5[%c220] : memref<288xf32, #tpu.memory_space<smem>>
    %1637 = vector.broadcast %1636 : f32 to vector<8x256xf32>
    %1638 = arith.mulf %1637, %1635 : vector<8x256xf32>
    %1639 = arith.addf %1628, %1638 : vector<8x256xf32>
    %c256_492 = arith.constant 256 : index
    %1640 = memref.load %arg5[%c256_492] : memref<288xf32, #tpu.memory_space<smem>>
    %1641 = vector.broadcast %1640 : f32 to vector<8x256xf32>
    %1642 = arith.mulf %1641, %1635 : vector<8x256xf32>
    %1643 = arith.addf %1632, %1642 : vector<8x256xf32>
    %c255_i32_493 = arith.constant 255 : i32
    %1644 = tpu.dynamic_rotate %1584 by %c255_i32_493 dim 1 : vector<8x256xf32>, i32 -> vector<8x256xf32>
    %c5_494 = arith.constant 5 : index
    %c0_495 = arith.constant 0 : index
    %1645 = vector.load %arg3[%c5_494, %c0_495] : memref<9x256xf32, #tpu.memory_space<vmem>>, vector<1x256xf32>
    %1646 = vector.broadcast %1645 : vector<1x256xf32> to vector<8x256xf32>
    %1647 = arith.mulf %1644, %1646 : vector<8x256xf32>
    %c221 = arith.constant 221 : index
    %1648 = memref.load %arg5[%c221] : memref<288xf32, #tpu.memory_space<smem>>
    %1649 = vector.broadcast %1648 : f32 to vector<8x256xf32>
    %1650 = arith.mulf %1649, %1647 : vector<8x256xf32>
    %1651 = arith.addf %1639, %1650 : vector<8x256xf32>
    %c257 = arith.constant 257 : index
    %1652 = memref.load %arg5[%c257] : memref<288xf32, #tpu.memory_space<smem>>
    %1653 = vector.broadcast %1652 : f32 to vector<8x256xf32>
    %1654 = arith.mulf %1653, %1647 : vector<8x256xf32>
    %1655 = arith.addf %1643, %1654 : vector<8x256xf32>
    %c241_i32_496 = arith.constant 241 : i32
    %1656 = tpu.dynamic_rotate %1584 by %c241_i32_496 dim 1 : vector<8x256xf32>, i32 -> vector<8x256xf32>
    %c6_497 = arith.constant 6 : index
    %c0_498 = arith.constant 0 : index
    %1657 = vector.load %arg3[%c6_497, %c0_498] : memref<9x256xf32, #tpu.memory_space<vmem>>, vector<1x256xf32>
    %1658 = vector.broadcast %1657 : vector<1x256xf32> to vector<8x256xf32>
    %1659 = arith.mulf %1656, %1658 : vector<8x256xf32>
    %c222 = arith.constant 222 : index
    %1660 = memref.load %arg5[%c222] : memref<288xf32, #tpu.memory_space<smem>>
    %1661 = vector.broadcast %1660 : f32 to vector<8x256xf32>
    %1662 = arith.mulf %1661, %1659 : vector<8x256xf32>
    %1663 = arith.addf %1651, %1662 : vector<8x256xf32>
    %c258 = arith.constant 258 : index
    %1664 = memref.load %arg5[%c258] : memref<288xf32, #tpu.memory_space<smem>>
    %1665 = vector.broadcast %1664 : f32 to vector<8x256xf32>
    %1666 = arith.mulf %1665, %1659 : vector<8x256xf32>
    %1667 = arith.addf %1655, %1666 : vector<8x256xf32>
    %c240_i32_499 = arith.constant 240 : i32
    %1668 = tpu.dynamic_rotate %1584 by %c240_i32_499 dim 1 : vector<8x256xf32>, i32 -> vector<8x256xf32>
    %c7_500 = arith.constant 7 : index
    %c0_501 = arith.constant 0 : index
    %1669 = vector.load %arg3[%c7_500, %c0_501] : memref<9x256xf32, #tpu.memory_space<vmem>>, vector<1x256xf32>
    %1670 = vector.broadcast %1669 : vector<1x256xf32> to vector<8x256xf32>
    %1671 = arith.mulf %1668, %1670 : vector<8x256xf32>
    %c223 = arith.constant 223 : index
    %1672 = memref.load %arg5[%c223] : memref<288xf32, #tpu.memory_space<smem>>
    %1673 = vector.broadcast %1672 : f32 to vector<8x256xf32>
    %1674 = arith.mulf %1673, %1671 : vector<8x256xf32>
    %1675 = arith.addf %1663, %1674 : vector<8x256xf32>
    %c259 = arith.constant 259 : index
    %1676 = memref.load %arg5[%c259] : memref<288xf32, #tpu.memory_space<smem>>
    %1677 = vector.broadcast %1676 : f32 to vector<8x256xf32>
    %1678 = arith.mulf %1677, %1671 : vector<8x256xf32>
    %1679 = arith.addf %1667, %1678 : vector<8x256xf32>
    %c239_i32_502 = arith.constant 239 : i32
    %1680 = tpu.dynamic_rotate %1584 by %c239_i32_502 dim 1 : vector<8x256xf32>, i32 -> vector<8x256xf32>
    %c8_503 = arith.constant 8 : index
    %c0_504 = arith.constant 0 : index
    %1681 = vector.load %arg3[%c8_503, %c0_504] : memref<9x256xf32, #tpu.memory_space<vmem>>, vector<1x256xf32>
    %1682 = vector.broadcast %1681 : vector<1x256xf32> to vector<8x256xf32>
    %1683 = arith.mulf %1680, %1682 : vector<8x256xf32>
    %c224 = arith.constant 224 : index
    %1684 = memref.load %arg5[%c224] : memref<288xf32, #tpu.memory_space<smem>>
    %1685 = vector.broadcast %1684 : f32 to vector<8x256xf32>
    %1686 = arith.mulf %1685, %1683 : vector<8x256xf32>
    %1687 = arith.addf %1675, %1686 : vector<8x256xf32>
    %c260 = arith.constant 260 : index
    %1688 = memref.load %arg5[%c260] : memref<288xf32, #tpu.memory_space<smem>>
    %1689 = vector.broadcast %1688 : f32 to vector<8x256xf32>
    %1690 = arith.mulf %1689, %1683 : vector<8x256xf32>
    %1691 = arith.addf %1679, %1690 : vector<8x256xf32>
    %c0_505 = arith.constant 0 : index
    %c256_506 = arith.constant 256 : index
    %1692 = vector.load %arg13[%c0_505, %c256_506] : memref<8x1024xf32, #tpu.memory_space<vmem>>, vector<8x256xf32>
    %c17_i32_507 = arith.constant 17 : i32
    %1693 = tpu.dynamic_rotate %1692 by %c17_i32_507 dim 1 : vector<8x256xf32>, i32 -> vector<8x256xf32>
    %c0_508 = arith.constant 0 : index
    %c0_509 = arith.constant 0 : index
    %1694 = vector.load %arg3[%c0_508, %c0_509] : memref<9x256xf32, #tpu.memory_space<vmem>>, vector<1x256xf32>
    %1695 = vector.broadcast %1694 : vector<1x256xf32> to vector<8x256xf32>
    %1696 = arith.mulf %1693, %1695 : vector<8x256xf32>
    %c225 = arith.constant 225 : index
    %1697 = memref.load %arg5[%c225] : memref<288xf32, #tpu.memory_space<smem>>
    %1698 = vector.broadcast %1697 : f32 to vector<8x256xf32>
    %1699 = arith.mulf %1698, %1696 : vector<8x256xf32>
    %1700 = arith.addf %1687, %1699 : vector<8x256xf32>
    %c261 = arith.constant 261 : index
    %1701 = memref.load %arg5[%c261] : memref<288xf32, #tpu.memory_space<smem>>
    %1702 = vector.broadcast %1701 : f32 to vector<8x256xf32>
    %1703 = arith.mulf %1702, %1696 : vector<8x256xf32>
    %1704 = arith.addf %1691, %1703 : vector<8x256xf32>
    %c16_i32_510 = arith.constant 16 : i32
    %1705 = tpu.dynamic_rotate %1692 by %c16_i32_510 dim 1 : vector<8x256xf32>, i32 -> vector<8x256xf32>
    %c1_511 = arith.constant 1 : index
    %c0_512 = arith.constant 0 : index
    %1706 = vector.load %arg3[%c1_511, %c0_512] : memref<9x256xf32, #tpu.memory_space<vmem>>, vector<1x256xf32>
    %1707 = vector.broadcast %1706 : vector<1x256xf32> to vector<8x256xf32>
    %1708 = arith.mulf %1705, %1707 : vector<8x256xf32>
    %c226 = arith.constant 226 : index
    %1709 = memref.load %arg5[%c226] : memref<288xf32, #tpu.memory_space<smem>>
    %1710 = vector.broadcast %1709 : f32 to vector<8x256xf32>
    %1711 = arith.mulf %1710, %1708 : vector<8x256xf32>
    %1712 = arith.addf %1700, %1711 : vector<8x256xf32>
    %c262 = arith.constant 262 : index
    %1713 = memref.load %arg5[%c262] : memref<288xf32, #tpu.memory_space<smem>>
    %1714 = vector.broadcast %1713 : f32 to vector<8x256xf32>
    %1715 = arith.mulf %1714, %1708 : vector<8x256xf32>
    %1716 = arith.addf %1704, %1715 : vector<8x256xf32>
    %c15_i32_513 = arith.constant 15 : i32
    %1717 = tpu.dynamic_rotate %1692 by %c15_i32_513 dim 1 : vector<8x256xf32>, i32 -> vector<8x256xf32>
    %c2_514 = arith.constant 2 : index
    %c0_515 = arith.constant 0 : index
    %1718 = vector.load %arg3[%c2_514, %c0_515] : memref<9x256xf32, #tpu.memory_space<vmem>>, vector<1x256xf32>
    %1719 = vector.broadcast %1718 : vector<1x256xf32> to vector<8x256xf32>
    %1720 = arith.mulf %1717, %1719 : vector<8x256xf32>
    %c227 = arith.constant 227 : index
    %1721 = memref.load %arg5[%c227] : memref<288xf32, #tpu.memory_space<smem>>
    %1722 = vector.broadcast %1721 : f32 to vector<8x256xf32>
    %1723 = arith.mulf %1722, %1720 : vector<8x256xf32>
    %1724 = arith.addf %1712, %1723 : vector<8x256xf32>
    %c263 = arith.constant 263 : index
    %1725 = memref.load %arg5[%c263] : memref<288xf32, #tpu.memory_space<smem>>
    %1726 = vector.broadcast %1725 : f32 to vector<8x256xf32>
    %1727 = arith.mulf %1726, %1720 : vector<8x256xf32>
    %1728 = arith.addf %1716, %1727 : vector<8x256xf32>
    %c1_i32_516 = arith.constant 1 : i32
    %1729 = tpu.dynamic_rotate %1692 by %c1_i32_516 dim 1 : vector<8x256xf32>, i32 -> vector<8x256xf32>
    %c3_517 = arith.constant 3 : index
    %c0_518 = arith.constant 0 : index
    %1730 = vector.load %arg3[%c3_517, %c0_518] : memref<9x256xf32, #tpu.memory_space<vmem>>, vector<1x256xf32>
    %1731 = vector.broadcast %1730 : vector<1x256xf32> to vector<8x256xf32>
    %1732 = arith.mulf %1729, %1731 : vector<8x256xf32>
    %c228 = arith.constant 228 : index
    %1733 = memref.load %arg5[%c228] : memref<288xf32, #tpu.memory_space<smem>>
    %1734 = vector.broadcast %1733 : f32 to vector<8x256xf32>
    %1735 = arith.mulf %1734, %1732 : vector<8x256xf32>
    %1736 = arith.addf %1724, %1735 : vector<8x256xf32>
    %c264 = arith.constant 264 : index
    %1737 = memref.load %arg5[%c264] : memref<288xf32, #tpu.memory_space<smem>>
    %1738 = vector.broadcast %1737 : f32 to vector<8x256xf32>
    %1739 = arith.mulf %1738, %1732 : vector<8x256xf32>
    %1740 = arith.addf %1728, %1739 : vector<8x256xf32>
    %c4_519 = arith.constant 4 : index
    %c0_520 = arith.constant 0 : index
    %1741 = vector.load %arg3[%c4_519, %c0_520] : memref<9x256xf32, #tpu.memory_space<vmem>>, vector<1x256xf32>
    %1742 = vector.broadcast %1741 : vector<1x256xf32> to vector<8x256xf32>
    %1743 = arith.mulf %1692, %1742 : vector<8x256xf32>
    %c229 = arith.constant 229 : index
    %1744 = memref.load %arg5[%c229] : memref<288xf32, #tpu.memory_space<smem>>
    %1745 = vector.broadcast %1744 : f32 to vector<8x256xf32>
    %1746 = arith.mulf %1745, %1743 : vector<8x256xf32>
    %1747 = arith.addf %1736, %1746 : vector<8x256xf32>
    %c265 = arith.constant 265 : index
    %1748 = memref.load %arg5[%c265] : memref<288xf32, #tpu.memory_space<smem>>
    %1749 = vector.broadcast %1748 : f32 to vector<8x256xf32>
    %1750 = arith.mulf %1749, %1743 : vector<8x256xf32>
    %1751 = arith.addf %1740, %1750 : vector<8x256xf32>
    %c255_i32_521 = arith.constant 255 : i32
    %1752 = tpu.dynamic_rotate %1692 by %c255_i32_521 dim 1 : vector<8x256xf32>, i32 -> vector<8x256xf32>
    %c5_522 = arith.constant 5 : index
    %c0_523 = arith.constant 0 : index
    %1753 = vector.load %arg3[%c5_522, %c0_523] : memref<9x256xf32, #tpu.memory_space<vmem>>, vector<1x256xf32>
    %1754 = vector.broadcast %1753 : vector<1x256xf32> to vector<8x256xf32>
    %1755 = arith.mulf %1752, %1754 : vector<8x256xf32>
    %c230 = arith.constant 230 : index
    %1756 = memref.load %arg5[%c230] : memref<288xf32, #tpu.memory_space<smem>>
    %1757 = vector.broadcast %1756 : f32 to vector<8x256xf32>
    %1758 = arith.mulf %1757, %1755 : vector<8x256xf32>
    %1759 = arith.addf %1747, %1758 : vector<8x256xf32>
    %c266 = arith.constant 266 : index
    %1760 = memref.load %arg5[%c266] : memref<288xf32, #tpu.memory_space<smem>>
    %1761 = vector.broadcast %1760 : f32 to vector<8x256xf32>
    %1762 = arith.mulf %1761, %1755 : vector<8x256xf32>
    %1763 = arith.addf %1751, %1762 : vector<8x256xf32>
    %c241_i32_524 = arith.constant 241 : i32
    %1764 = tpu.dynamic_rotate %1692 by %c241_i32_524 dim 1 : vector<8x256xf32>, i32 -> vector<8x256xf32>
    %c6_525 = arith.constant 6 : index
    %c0_526 = arith.constant 0 : index
    %1765 = vector.load %arg3[%c6_525, %c0_526] : memref<9x256xf32, #tpu.memory_space<vmem>>, vector<1x256xf32>
    %1766 = vector.broadcast %1765 : vector<1x256xf32> to vector<8x256xf32>
    %1767 = arith.mulf %1764, %1766 : vector<8x256xf32>
    %c231 = arith.constant 231 : index
    %1768 = memref.load %arg5[%c231] : memref<288xf32, #tpu.memory_space<smem>>
    %1769 = vector.broadcast %1768 : f32 to vector<8x256xf32>
    %1770 = arith.mulf %1769, %1767 : vector<8x256xf32>
    %1771 = arith.addf %1759, %1770 : vector<8x256xf32>
    %c267 = arith.constant 267 : index
    %1772 = memref.load %arg5[%c267] : memref<288xf32, #tpu.memory_space<smem>>
    %1773 = vector.broadcast %1772 : f32 to vector<8x256xf32>
    %1774 = arith.mulf %1773, %1767 : vector<8x256xf32>
    %1775 = arith.addf %1763, %1774 : vector<8x256xf32>
    %c240_i32_527 = arith.constant 240 : i32
    %1776 = tpu.dynamic_rotate %1692 by %c240_i32_527 dim 1 : vector<8x256xf32>, i32 -> vector<8x256xf32>
    %c7_528 = arith.constant 7 : index
    %c0_529 = arith.constant 0 : index
    %1777 = vector.load %arg3[%c7_528, %c0_529] : memref<9x256xf32, #tpu.memory_space<vmem>>, vector<1x256xf32>
    %1778 = vector.broadcast %1777 : vector<1x256xf32> to vector<8x256xf32>
    %1779 = arith.mulf %1776, %1778 : vector<8x256xf32>
    %c232 = arith.constant 232 : index
    %1780 = memref.load %arg5[%c232] : memref<288xf32, #tpu.memory_space<smem>>
    %1781 = vector.broadcast %1780 : f32 to vector<8x256xf32>
    %1782 = arith.mulf %1781, %1779 : vector<8x256xf32>
    %1783 = arith.addf %1771, %1782 : vector<8x256xf32>
    %c268 = arith.constant 268 : index
    %1784 = memref.load %arg5[%c268] : memref<288xf32, #tpu.memory_space<smem>>
    %1785 = vector.broadcast %1784 : f32 to vector<8x256xf32>
    %1786 = arith.mulf %1785, %1779 : vector<8x256xf32>
    %1787 = arith.addf %1775, %1786 : vector<8x256xf32>
    %c239_i32_530 = arith.constant 239 : i32
    %1788 = tpu.dynamic_rotate %1692 by %c239_i32_530 dim 1 : vector<8x256xf32>, i32 -> vector<8x256xf32>
    %c8_531 = arith.constant 8 : index
    %c0_532 = arith.constant 0 : index
    %1789 = vector.load %arg3[%c8_531, %c0_532] : memref<9x256xf32, #tpu.memory_space<vmem>>, vector<1x256xf32>
    %1790 = vector.broadcast %1789 : vector<1x256xf32> to vector<8x256xf32>
    %1791 = arith.mulf %1788, %1790 : vector<8x256xf32>
    %c233 = arith.constant 233 : index
    %1792 = memref.load %arg5[%c233] : memref<288xf32, #tpu.memory_space<smem>>
    %1793 = vector.broadcast %1792 : f32 to vector<8x256xf32>
    %1794 = arith.mulf %1793, %1791 : vector<8x256xf32>
    %1795 = arith.addf %1783, %1794 : vector<8x256xf32>
    %c269 = arith.constant 269 : index
    %1796 = memref.load %arg5[%c269] : memref<288xf32, #tpu.memory_space<smem>>
    %1797 = vector.broadcast %1796 : f32 to vector<8x256xf32>
    %1798 = arith.mulf %1797, %1791 : vector<8x256xf32>
    %1799 = arith.addf %1787, %1798 : vector<8x256xf32>
    %c0_533 = arith.constant 0 : index
    %c512_534 = arith.constant 512 : index
    %1800 = vector.load %arg13[%c0_533, %c512_534] : memref<8x1024xf32, #tpu.memory_space<vmem>>, vector<8x256xf32>
    %c17_i32_535 = arith.constant 17 : i32
    %1801 = tpu.dynamic_rotate %1800 by %c17_i32_535 dim 1 : vector<8x256xf32>, i32 -> vector<8x256xf32>
    %c0_536 = arith.constant 0 : index
    %c0_537 = arith.constant 0 : index
    %1802 = vector.load %arg3[%c0_536, %c0_537] : memref<9x256xf32, #tpu.memory_space<vmem>>, vector<1x256xf32>
    %1803 = vector.broadcast %1802 : vector<1x256xf32> to vector<8x256xf32>
    %1804 = arith.mulf %1801, %1803 : vector<8x256xf32>
    %c234 = arith.constant 234 : index
    %1805 = memref.load %arg5[%c234] : memref<288xf32, #tpu.memory_space<smem>>
    %1806 = vector.broadcast %1805 : f32 to vector<8x256xf32>
    %1807 = arith.mulf %1806, %1804 : vector<8x256xf32>
    %1808 = arith.addf %1795, %1807 : vector<8x256xf32>
    %c270 = arith.constant 270 : index
    %1809 = memref.load %arg5[%c270] : memref<288xf32, #tpu.memory_space<smem>>
    %1810 = vector.broadcast %1809 : f32 to vector<8x256xf32>
    %1811 = arith.mulf %1810, %1804 : vector<8x256xf32>
    %1812 = arith.addf %1799, %1811 : vector<8x256xf32>
    %c16_i32_538 = arith.constant 16 : i32
    %1813 = tpu.dynamic_rotate %1800 by %c16_i32_538 dim 1 : vector<8x256xf32>, i32 -> vector<8x256xf32>
    %c1_539 = arith.constant 1 : index
    %c0_540 = arith.constant 0 : index
    %1814 = vector.load %arg3[%c1_539, %c0_540] : memref<9x256xf32, #tpu.memory_space<vmem>>, vector<1x256xf32>
    %1815 = vector.broadcast %1814 : vector<1x256xf32> to vector<8x256xf32>
    %1816 = arith.mulf %1813, %1815 : vector<8x256xf32>
    %c235 = arith.constant 235 : index
    %1817 = memref.load %arg5[%c235] : memref<288xf32, #tpu.memory_space<smem>>
    %1818 = vector.broadcast %1817 : f32 to vector<8x256xf32>
    %1819 = arith.mulf %1818, %1816 : vector<8x256xf32>
    %1820 = arith.addf %1808, %1819 : vector<8x256xf32>
    %c271 = arith.constant 271 : index
    %1821 = memref.load %arg5[%c271] : memref<288xf32, #tpu.memory_space<smem>>
    %1822 = vector.broadcast %1821 : f32 to vector<8x256xf32>
    %1823 = arith.mulf %1822, %1816 : vector<8x256xf32>
    %1824 = arith.addf %1812, %1823 : vector<8x256xf32>
    %c15_i32_541 = arith.constant 15 : i32
    %1825 = tpu.dynamic_rotate %1800 by %c15_i32_541 dim 1 : vector<8x256xf32>, i32 -> vector<8x256xf32>
    %c2_542 = arith.constant 2 : index
    %c0_543 = arith.constant 0 : index
    %1826 = vector.load %arg3[%c2_542, %c0_543] : memref<9x256xf32, #tpu.memory_space<vmem>>, vector<1x256xf32>
    %1827 = vector.broadcast %1826 : vector<1x256xf32> to vector<8x256xf32>
    %1828 = arith.mulf %1825, %1827 : vector<8x256xf32>
    %c236 = arith.constant 236 : index
    %1829 = memref.load %arg5[%c236] : memref<288xf32, #tpu.memory_space<smem>>
    %1830 = vector.broadcast %1829 : f32 to vector<8x256xf32>
    %1831 = arith.mulf %1830, %1828 : vector<8x256xf32>
    %1832 = arith.addf %1820, %1831 : vector<8x256xf32>
    %c272 = arith.constant 272 : index
    %1833 = memref.load %arg5[%c272] : memref<288xf32, #tpu.memory_space<smem>>
    %1834 = vector.broadcast %1833 : f32 to vector<8x256xf32>
    %1835 = arith.mulf %1834, %1828 : vector<8x256xf32>
    %1836 = arith.addf %1824, %1835 : vector<8x256xf32>
    %c1_i32_544 = arith.constant 1 : i32
    %1837 = tpu.dynamic_rotate %1800 by %c1_i32_544 dim 1 : vector<8x256xf32>, i32 -> vector<8x256xf32>
    %c3_545 = arith.constant 3 : index
    %c0_546 = arith.constant 0 : index
    %1838 = vector.load %arg3[%c3_545, %c0_546] : memref<9x256xf32, #tpu.memory_space<vmem>>, vector<1x256xf32>
    %1839 = vector.broadcast %1838 : vector<1x256xf32> to vector<8x256xf32>
    %1840 = arith.mulf %1837, %1839 : vector<8x256xf32>
    %c237 = arith.constant 237 : index
    %1841 = memref.load %arg5[%c237] : memref<288xf32, #tpu.memory_space<smem>>
    %1842 = vector.broadcast %1841 : f32 to vector<8x256xf32>
    %1843 = arith.mulf %1842, %1840 : vector<8x256xf32>
    %1844 = arith.addf %1832, %1843 : vector<8x256xf32>
    %c273 = arith.constant 273 : index
    %1845 = memref.load %arg5[%c273] : memref<288xf32, #tpu.memory_space<smem>>
    %1846 = vector.broadcast %1845 : f32 to vector<8x256xf32>
    %1847 = arith.mulf %1846, %1840 : vector<8x256xf32>
    %1848 = arith.addf %1836, %1847 : vector<8x256xf32>
    %c4_547 = arith.constant 4 : index
    %c0_548 = arith.constant 0 : index
    %1849 = vector.load %arg3[%c4_547, %c0_548] : memref<9x256xf32, #tpu.memory_space<vmem>>, vector<1x256xf32>
    %1850 = vector.broadcast %1849 : vector<1x256xf32> to vector<8x256xf32>
    %1851 = arith.mulf %1800, %1850 : vector<8x256xf32>
    %c238 = arith.constant 238 : index
    %1852 = memref.load %arg5[%c238] : memref<288xf32, #tpu.memory_space<smem>>
    %1853 = vector.broadcast %1852 : f32 to vector<8x256xf32>
    %1854 = arith.mulf %1853, %1851 : vector<8x256xf32>
    %1855 = arith.addf %1844, %1854 : vector<8x256xf32>
    %c274 = arith.constant 274 : index
    %1856 = memref.load %arg5[%c274] : memref<288xf32, #tpu.memory_space<smem>>
    %1857 = vector.broadcast %1856 : f32 to vector<8x256xf32>
    %1858 = arith.mulf %1857, %1851 : vector<8x256xf32>
    %1859 = arith.addf %1848, %1858 : vector<8x256xf32>
    %c255_i32_549 = arith.constant 255 : i32
    %1860 = tpu.dynamic_rotate %1800 by %c255_i32_549 dim 1 : vector<8x256xf32>, i32 -> vector<8x256xf32>
    %c5_550 = arith.constant 5 : index
    %c0_551 = arith.constant 0 : index
    %1861 = vector.load %arg3[%c5_550, %c0_551] : memref<9x256xf32, #tpu.memory_space<vmem>>, vector<1x256xf32>
    %1862 = vector.broadcast %1861 : vector<1x256xf32> to vector<8x256xf32>
    %1863 = arith.mulf %1860, %1862 : vector<8x256xf32>
    %c239 = arith.constant 239 : index
    %1864 = memref.load %arg5[%c239] : memref<288xf32, #tpu.memory_space<smem>>
    %1865 = vector.broadcast %1864 : f32 to vector<8x256xf32>
    %1866 = arith.mulf %1865, %1863 : vector<8x256xf32>
    %1867 = arith.addf %1855, %1866 : vector<8x256xf32>
    %c275 = arith.constant 275 : index
    %1868 = memref.load %arg5[%c275] : memref<288xf32, #tpu.memory_space<smem>>
    %1869 = vector.broadcast %1868 : f32 to vector<8x256xf32>
    %1870 = arith.mulf %1869, %1863 : vector<8x256xf32>
    %1871 = arith.addf %1859, %1870 : vector<8x256xf32>
    %c241_i32_552 = arith.constant 241 : i32
    %1872 = tpu.dynamic_rotate %1800 by %c241_i32_552 dim 1 : vector<8x256xf32>, i32 -> vector<8x256xf32>
    %c6_553 = arith.constant 6 : index
    %c0_554 = arith.constant 0 : index
    %1873 = vector.load %arg3[%c6_553, %c0_554] : memref<9x256xf32, #tpu.memory_space<vmem>>, vector<1x256xf32>
    %1874 = vector.broadcast %1873 : vector<1x256xf32> to vector<8x256xf32>
    %1875 = arith.mulf %1872, %1874 : vector<8x256xf32>
    %c240 = arith.constant 240 : index
    %1876 = memref.load %arg5[%c240] : memref<288xf32, #tpu.memory_space<smem>>
    %1877 = vector.broadcast %1876 : f32 to vector<8x256xf32>
    %1878 = arith.mulf %1877, %1875 : vector<8x256xf32>
    %1879 = arith.addf %1867, %1878 : vector<8x256xf32>
    %c276 = arith.constant 276 : index
    %1880 = memref.load %arg5[%c276] : memref<288xf32, #tpu.memory_space<smem>>
    %1881 = vector.broadcast %1880 : f32 to vector<8x256xf32>
    %1882 = arith.mulf %1881, %1875 : vector<8x256xf32>
    %1883 = arith.addf %1871, %1882 : vector<8x256xf32>
    %c240_i32_555 = arith.constant 240 : i32
    %1884 = tpu.dynamic_rotate %1800 by %c240_i32_555 dim 1 : vector<8x256xf32>, i32 -> vector<8x256xf32>
    %c7_556 = arith.constant 7 : index
    %c0_557 = arith.constant 0 : index
    %1885 = vector.load %arg3[%c7_556, %c0_557] : memref<9x256xf32, #tpu.memory_space<vmem>>, vector<1x256xf32>
    %1886 = vector.broadcast %1885 : vector<1x256xf32> to vector<8x256xf32>
    %1887 = arith.mulf %1884, %1886 : vector<8x256xf32>
    %c241 = arith.constant 241 : index
    %1888 = memref.load %arg5[%c241] : memref<288xf32, #tpu.memory_space<smem>>
    %1889 = vector.broadcast %1888 : f32 to vector<8x256xf32>
    %1890 = arith.mulf %1889, %1887 : vector<8x256xf32>
    %1891 = arith.addf %1879, %1890 : vector<8x256xf32>
    %c277 = arith.constant 277 : index
    %1892 = memref.load %arg5[%c277] : memref<288xf32, #tpu.memory_space<smem>>
    %1893 = vector.broadcast %1892 : f32 to vector<8x256xf32>
    %1894 = arith.mulf %1893, %1887 : vector<8x256xf32>
    %1895 = arith.addf %1883, %1894 : vector<8x256xf32>
    %c239_i32_558 = arith.constant 239 : i32
    %1896 = tpu.dynamic_rotate %1800 by %c239_i32_558 dim 1 : vector<8x256xf32>, i32 -> vector<8x256xf32>
    %c8_559 = arith.constant 8 : index
    %c0_560 = arith.constant 0 : index
    %1897 = vector.load %arg3[%c8_559, %c0_560] : memref<9x256xf32, #tpu.memory_space<vmem>>, vector<1x256xf32>
    %1898 = vector.broadcast %1897 : vector<1x256xf32> to vector<8x256xf32>
    %1899 = arith.mulf %1896, %1898 : vector<8x256xf32>
    %c242 = arith.constant 242 : index
    %1900 = memref.load %arg5[%c242] : memref<288xf32, #tpu.memory_space<smem>>
    %1901 = vector.broadcast %1900 : f32 to vector<8x256xf32>
    %1902 = arith.mulf %1901, %1899 : vector<8x256xf32>
    %1903 = arith.addf %1891, %1902 : vector<8x256xf32>
    %c278 = arith.constant 278 : index
    %1904 = memref.load %arg5[%c278] : memref<288xf32, #tpu.memory_space<smem>>
    %1905 = vector.broadcast %1904 : f32 to vector<8x256xf32>
    %1906 = arith.mulf %1905, %1899 : vector<8x256xf32>
    %1907 = arith.addf %1895, %1906 : vector<8x256xf32>
    %c0_561 = arith.constant 0 : index
    %c768_562 = arith.constant 768 : index
    %1908 = vector.load %arg13[%c0_561, %c768_562] : memref<8x1024xf32, #tpu.memory_space<vmem>>, vector<8x256xf32>
    %c17_i32_563 = arith.constant 17 : i32
    %1909 = tpu.dynamic_rotate %1908 by %c17_i32_563 dim 1 : vector<8x256xf32>, i32 -> vector<8x256xf32>
    %c0_564 = arith.constant 0 : index
    %c0_565 = arith.constant 0 : index
    %1910 = vector.load %arg3[%c0_564, %c0_565] : memref<9x256xf32, #tpu.memory_space<vmem>>, vector<1x256xf32>
    %1911 = vector.broadcast %1910 : vector<1x256xf32> to vector<8x256xf32>
    %1912 = arith.mulf %1909, %1911 : vector<8x256xf32>
    %c243 = arith.constant 243 : index
    %1913 = memref.load %arg5[%c243] : memref<288xf32, #tpu.memory_space<smem>>
    %1914 = vector.broadcast %1913 : f32 to vector<8x256xf32>
    %1915 = arith.mulf %1914, %1912 : vector<8x256xf32>
    %1916 = arith.addf %1903, %1915 : vector<8x256xf32>
    %c279 = arith.constant 279 : index
    %1917 = memref.load %arg5[%c279] : memref<288xf32, #tpu.memory_space<smem>>
    %1918 = vector.broadcast %1917 : f32 to vector<8x256xf32>
    %1919 = arith.mulf %1918, %1912 : vector<8x256xf32>
    %1920 = arith.addf %1907, %1919 : vector<8x256xf32>
    %c16_i32_566 = arith.constant 16 : i32
    %1921 = tpu.dynamic_rotate %1908 by %c16_i32_566 dim 1 : vector<8x256xf32>, i32 -> vector<8x256xf32>
    %c1_567 = arith.constant 1 : index
    %c0_568 = arith.constant 0 : index
    %1922 = vector.load %arg3[%c1_567, %c0_568] : memref<9x256xf32, #tpu.memory_space<vmem>>, vector<1x256xf32>
    %1923 = vector.broadcast %1922 : vector<1x256xf32> to vector<8x256xf32>
    %1924 = arith.mulf %1921, %1923 : vector<8x256xf32>
    %c244 = arith.constant 244 : index
    %1925 = memref.load %arg5[%c244] : memref<288xf32, #tpu.memory_space<smem>>
    %1926 = vector.broadcast %1925 : f32 to vector<8x256xf32>
    %1927 = arith.mulf %1926, %1924 : vector<8x256xf32>
    %1928 = arith.addf %1916, %1927 : vector<8x256xf32>
    %c280 = arith.constant 280 : index
    %1929 = memref.load %arg5[%c280] : memref<288xf32, #tpu.memory_space<smem>>
    %1930 = vector.broadcast %1929 : f32 to vector<8x256xf32>
    %1931 = arith.mulf %1930, %1924 : vector<8x256xf32>
    %1932 = arith.addf %1920, %1931 : vector<8x256xf32>
    %c15_i32_569 = arith.constant 15 : i32
    %1933 = tpu.dynamic_rotate %1908 by %c15_i32_569 dim 1 : vector<8x256xf32>, i32 -> vector<8x256xf32>
    %c2_570 = arith.constant 2 : index
    %c0_571 = arith.constant 0 : index
    %1934 = vector.load %arg3[%c2_570, %c0_571] : memref<9x256xf32, #tpu.memory_space<vmem>>, vector<1x256xf32>
    %1935 = vector.broadcast %1934 : vector<1x256xf32> to vector<8x256xf32>
    %1936 = arith.mulf %1933, %1935 : vector<8x256xf32>
    %c245 = arith.constant 245 : index
    %1937 = memref.load %arg5[%c245] : memref<288xf32, #tpu.memory_space<smem>>
    %1938 = vector.broadcast %1937 : f32 to vector<8x256xf32>
    %1939 = arith.mulf %1938, %1936 : vector<8x256xf32>
    %1940 = arith.addf %1928, %1939 : vector<8x256xf32>
    %c281 = arith.constant 281 : index
    %1941 = memref.load %arg5[%c281] : memref<288xf32, #tpu.memory_space<smem>>
    %1942 = vector.broadcast %1941 : f32 to vector<8x256xf32>
    %1943 = arith.mulf %1942, %1936 : vector<8x256xf32>
    %1944 = arith.addf %1932, %1943 : vector<8x256xf32>
    %c1_i32_572 = arith.constant 1 : i32
    %1945 = tpu.dynamic_rotate %1908 by %c1_i32_572 dim 1 : vector<8x256xf32>, i32 -> vector<8x256xf32>
    %c3_573 = arith.constant 3 : index
    %c0_574 = arith.constant 0 : index
    %1946 = vector.load %arg3[%c3_573, %c0_574] : memref<9x256xf32, #tpu.memory_space<vmem>>, vector<1x256xf32>
    %1947 = vector.broadcast %1946 : vector<1x256xf32> to vector<8x256xf32>
    %1948 = arith.mulf %1945, %1947 : vector<8x256xf32>
    %c246 = arith.constant 246 : index
    %1949 = memref.load %arg5[%c246] : memref<288xf32, #tpu.memory_space<smem>>
    %1950 = vector.broadcast %1949 : f32 to vector<8x256xf32>
    %1951 = arith.mulf %1950, %1948 : vector<8x256xf32>
    %1952 = arith.addf %1940, %1951 : vector<8x256xf32>
    %c282 = arith.constant 282 : index
    %1953 = memref.load %arg5[%c282] : memref<288xf32, #tpu.memory_space<smem>>
    %1954 = vector.broadcast %1953 : f32 to vector<8x256xf32>
    %1955 = arith.mulf %1954, %1948 : vector<8x256xf32>
    %1956 = arith.addf %1944, %1955 : vector<8x256xf32>
    %c4_575 = arith.constant 4 : index
    %c0_576 = arith.constant 0 : index
    %1957 = vector.load %arg3[%c4_575, %c0_576] : memref<9x256xf32, #tpu.memory_space<vmem>>, vector<1x256xf32>
    %1958 = vector.broadcast %1957 : vector<1x256xf32> to vector<8x256xf32>
    %1959 = arith.mulf %1908, %1958 : vector<8x256xf32>
    %c247 = arith.constant 247 : index
    %1960 = memref.load %arg5[%c247] : memref<288xf32, #tpu.memory_space<smem>>
    %1961 = vector.broadcast %1960 : f32 to vector<8x256xf32>
    %1962 = arith.mulf %1961, %1959 : vector<8x256xf32>
    %1963 = arith.addf %1952, %1962 : vector<8x256xf32>
    %c283 = arith.constant 283 : index
    %1964 = memref.load %arg5[%c283] : memref<288xf32, #tpu.memory_space<smem>>
    %1965 = vector.broadcast %1964 : f32 to vector<8x256xf32>
    %1966 = arith.mulf %1965, %1959 : vector<8x256xf32>
    %1967 = arith.addf %1956, %1966 : vector<8x256xf32>
    %c255_i32_577 = arith.constant 255 : i32
    %1968 = tpu.dynamic_rotate %1908 by %c255_i32_577 dim 1 : vector<8x256xf32>, i32 -> vector<8x256xf32>
    %c5_578 = arith.constant 5 : index
    %c0_579 = arith.constant 0 : index
    %1969 = vector.load %arg3[%c5_578, %c0_579] : memref<9x256xf32, #tpu.memory_space<vmem>>, vector<1x256xf32>
    %1970 = vector.broadcast %1969 : vector<1x256xf32> to vector<8x256xf32>
    %1971 = arith.mulf %1968, %1970 : vector<8x256xf32>
    %c248 = arith.constant 248 : index
    %1972 = memref.load %arg5[%c248] : memref<288xf32, #tpu.memory_space<smem>>
    %1973 = vector.broadcast %1972 : f32 to vector<8x256xf32>
    %1974 = arith.mulf %1973, %1971 : vector<8x256xf32>
    %1975 = arith.addf %1963, %1974 : vector<8x256xf32>
    %c284 = arith.constant 284 : index
    %1976 = memref.load %arg5[%c284] : memref<288xf32, #tpu.memory_space<smem>>
    %1977 = vector.broadcast %1976 : f32 to vector<8x256xf32>
    %1978 = arith.mulf %1977, %1971 : vector<8x256xf32>
    %1979 = arith.addf %1967, %1978 : vector<8x256xf32>
    %c241_i32_580 = arith.constant 241 : i32
    %1980 = tpu.dynamic_rotate %1908 by %c241_i32_580 dim 1 : vector<8x256xf32>, i32 -> vector<8x256xf32>
    %c6_581 = arith.constant 6 : index
    %c0_582 = arith.constant 0 : index
    %1981 = vector.load %arg3[%c6_581, %c0_582] : memref<9x256xf32, #tpu.memory_space<vmem>>, vector<1x256xf32>
    %1982 = vector.broadcast %1981 : vector<1x256xf32> to vector<8x256xf32>
    %1983 = arith.mulf %1980, %1982 : vector<8x256xf32>
    %c249 = arith.constant 249 : index
    %1984 = memref.load %arg5[%c249] : memref<288xf32, #tpu.memory_space<smem>>
    %1985 = vector.broadcast %1984 : f32 to vector<8x256xf32>
    %1986 = arith.mulf %1985, %1983 : vector<8x256xf32>
    %1987 = arith.addf %1975, %1986 : vector<8x256xf32>
    %c285 = arith.constant 285 : index
    %1988 = memref.load %arg5[%c285] : memref<288xf32, #tpu.memory_space<smem>>
    %1989 = vector.broadcast %1988 : f32 to vector<8x256xf32>
    %1990 = arith.mulf %1989, %1983 : vector<8x256xf32>
    %1991 = arith.addf %1979, %1990 : vector<8x256xf32>
    %c240_i32_583 = arith.constant 240 : i32
    %1992 = tpu.dynamic_rotate %1908 by %c240_i32_583 dim 1 : vector<8x256xf32>, i32 -> vector<8x256xf32>
    %c7_584 = arith.constant 7 : index
    %c0_585 = arith.constant 0 : index
    %1993 = vector.load %arg3[%c7_584, %c0_585] : memref<9x256xf32, #tpu.memory_space<vmem>>, vector<1x256xf32>
    %1994 = vector.broadcast %1993 : vector<1x256xf32> to vector<8x256xf32>
    %1995 = arith.mulf %1992, %1994 : vector<8x256xf32>
    %c250 = arith.constant 250 : index
    %1996 = memref.load %arg5[%c250] : memref<288xf32, #tpu.memory_space<smem>>
    %1997 = vector.broadcast %1996 : f32 to vector<8x256xf32>
    %1998 = arith.mulf %1997, %1995 : vector<8x256xf32>
    %1999 = arith.addf %1987, %1998 : vector<8x256xf32>
    %c286 = arith.constant 286 : index
    %2000 = memref.load %arg5[%c286] : memref<288xf32, #tpu.memory_space<smem>>
    %2001 = vector.broadcast %2000 : f32 to vector<8x256xf32>
    %2002 = arith.mulf %2001, %1995 : vector<8x256xf32>
    %2003 = arith.addf %1991, %2002 : vector<8x256xf32>
    %c239_i32_586 = arith.constant 239 : i32
    %2004 = tpu.dynamic_rotate %1908 by %c239_i32_586 dim 1 : vector<8x256xf32>, i32 -> vector<8x256xf32>
    %c8_587 = arith.constant 8 : index
    %c0_588 = arith.constant 0 : index
    %2005 = vector.load %arg3[%c8_587, %c0_588] : memref<9x256xf32, #tpu.memory_space<vmem>>, vector<1x256xf32>
    %2006 = vector.broadcast %2005 : vector<1x256xf32> to vector<8x256xf32>
    %2007 = arith.mulf %2004, %2006 : vector<8x256xf32>
    %c251 = arith.constant 251 : index
    %2008 = memref.load %arg5[%c251] : memref<288xf32, #tpu.memory_space<smem>>
    %2009 = vector.broadcast %2008 : f32 to vector<8x256xf32>
    %2010 = arith.mulf %2009, %2007 : vector<8x256xf32>
    %2011 = arith.addf %1999, %2010 : vector<8x256xf32>
    %c287 = arith.constant 287 : index
    %2012 = memref.load %arg5[%c287] : memref<288xf32, #tpu.memory_space<smem>>
    %2013 = vector.broadcast %2012 : f32 to vector<8x256xf32>
    %2014 = arith.mulf %2013, %2007 : vector<8x256xf32>
    %2015 = arith.addf %2003, %2014 : vector<8x256xf32>
    %c6_589 = arith.constant 6 : index
    %c0_590 = arith.constant 0 : index
    %2016 = vector.load %arg7[%c6_589, %c0_590] : memref<8x256xf32, #tpu.memory_space<vmem>>, vector<1x256xf32>
    %2017 = vector.broadcast %2016 : vector<1x256xf32> to vector<8x256xf32>
    %2018 = arith.addf %2011, %2017 : vector<8x256xf32>
    %cst_591 = arith.constant 0.000000e+00 : f32
    %2019 = vector.broadcast %cst_591 : f32 to vector<8x256xf32>
    %2020 = arith.maximumf %2018, %2019 : vector<8x256xf32>
    %c0_592 = arith.constant 0 : index
    %c1536 = arith.constant 1536 : index
    %2021 = vector.load %arg14[%c0_592, %c1536] : memref<8x2048xf32, #tpu.memory_space<vmem>>, vector<8x256xf32>
    tpu.vector_store %arg14[%c0_592, %c1536], %2020 {strides = array<i32>} : memref<8x2048xf32, #tpu.memory_space<vmem>>, vector<8x256xf32>,
    %c7_593 = arith.constant 7 : index
    %c0_594 = arith.constant 0 : index
    %2022 = vector.load %arg7[%c7_593, %c0_594] : memref<8x256xf32, #tpu.memory_space<vmem>>, vector<1x256xf32>
    %2023 = vector.broadcast %2022 : vector<1x256xf32> to vector<8x256xf32>
    %2024 = arith.addf %2015, %2023 : vector<8x256xf32>
    %cst_595 = arith.constant 0.000000e+00 : f32
    %2025 = vector.broadcast %cst_595 : f32 to vector<8x256xf32>
    %2026 = arith.maximumf %2024, %2025 : vector<8x256xf32>
    %c0_596 = arith.constant 0 : index
    %c1792 = arith.constant 1792 : index
    %2027 = vector.load %arg14[%c0_596, %c1792] : memref<8x2048xf32, #tpu.memory_space<vmem>>, vector<8x256xf32>
    tpu.vector_store %arg14[%c0_596, %c1792], %2026 {strides = array<i32>} : memref<8x2048xf32, #tpu.memory_space<vmem>>, vector<8x256xf32>,
    %c0_597 = arith.constant 0 : index
    %c0_598 = arith.constant 0 : index
    %2028 = vector.load %arg14[%c0_597, %c0_598] : memref<8x2048xf32, #tpu.memory_space<vmem>>, vector<8x2048xf32>
    %c0_599 = arith.constant 0 : index
    %c0_600 = arith.constant 0 : index
    %2029 = vector.load %arg8[%c0_599, %c0_600] : memref<2048x32xf32, #tpu.memory_space<vmem>>, vector<2048x32xf32>
    %cst_601 = arith.constant dense<0.000000e+00> : vector<8x32xf32>
    %2030 = tpu.matmul %2028, %2029, %cst_601 {dimension_numbers = #tpu.dot_dimension_numbers<[1], [0], [0], [1], [0, 0, 1, 1], [], []>} : vector<8x2048xf32>, vector<2048x32xf32>, vector<8x32xf32> -> vector<8x32xf32>
    %c0_602 = arith.constant 0 : index
    %c0_603 = arith.constant 0 : index
    %2031 = vector.load %arg10[%c0_602, %c0_603] : memref<1x32xf32, #tpu.memory_space<vmem>>, vector<1x32xf32>
    %2032 = vector.broadcast %2031 : vector<1x32xf32> to vector<8x32xf32>
    %2033 = arith.addf %2030, %2032 : vector<8x32xf32>
    %cst_604 = arith.constant 0.000000e+00 : f32
    %2034 = vector.broadcast %cst_604 : f32 to vector<8x32xf32>
    %2035 = arith.maximumf %2033, %2034 : vector<8x32xf32>
    %c0_605 = arith.constant 0 : index
    %c0_606 = arith.constant 0 : index
    %2036 = vector.load %arg9[%c0_605, %c0_606] : memref<32x128xf32, #tpu.memory_space<vmem>>, vector<32x128xf32>
    %cst_607 = arith.constant dense<0.000000e+00> : vector<8x128xf32>
    %2037 = tpu.matmul %2035, %2036, %cst_607 {dimension_numbers = #tpu.dot_dimension_numbers<[1], [0], [0], [1], [0, 0, 1, 1], [], []>} : vector<8x32xf32>, vector<32x128xf32>, vector<8x128xf32> -> vector<8x128xf32>
    %c0_608 = arith.constant 0 : index
    %c0_609 = arith.constant 0 : index
    %2038 = vector.load %arg11[%c0_608, %c0_609] : memref<1x128xf32, #tpu.memory_space<vmem>>, vector<1x128xf32>
    %2039 = vector.broadcast %2038 : vector<1x128xf32> to vector<8x128xf32>
    %2040 = arith.addf %2037, %2039 : vector<8x128xf32>
    %c0_610 = arith.constant 0 : index
    %c0_611 = arith.constant 0 : index
    %2041 = vector.load %arg12[%c0_610, %c0_611] : memref<8x128xf32, #tpu.memory_space<vmem>>, vector<8x128xf32>
    tpu.vector_store %arg12[%c0_610, %c0_611], %2040 {strides = array<i32>} : memref<8x128xf32, #tpu.memory_space<vmem>>, vector<8x128xf32>,
    return
  }
  func.func @transform_0(%arg0: i32) -> (i32, i32) {
    %c0_i32 = arith.constant 0 : i32
    %c0_i32_0 = arith.constant 0 : i32
    return %arg0, %c0_i32 : i32, i32
  }
  func.func @transform_1(%arg0: i32) -> (i32, i32) {
    %c0_i32 = arith.constant 0 : i32
    %c0_i32_0 = arith.constant 0 : i32
    %c0_i32_1 = arith.constant 0 : i32
    return %c0_i32, %c0_i32_0 : i32, i32
  }
  func.func @transform_2(%arg0: i32) -> (i32, i32) {
    %c0_i32 = arith.constant 0 : i32
    %c0_i32_0 = arith.constant 0 : i32
    %c0_i32_1 = arith.constant 0 : i32
    return %c0_i32, %c0_i32_0 : i32, i32
  }
  func.func @transform_3(%arg0: i32) -> i32 {
    %c0_i32 = arith.constant 0 : i32
    %c0_i32_0 = arith.constant 0 : i32
    return %c0_i32 : i32
  }
  func.func @transform_4(%arg0: i32) -> i32 {
    %c0_i32 = arith.constant 0 : i32
    %c0_i32_0 = arith.constant 0 : i32
    return %c0_i32 : i32
  }
  func.func @transform_5(%arg0: i32) -> (i32, i32) {
    %c0_i32 = arith.constant 0 : i32
    %c0_i32_0 = arith.constant 0 : i32
    %c0_i32_1 = arith.constant 0 : i32
    return %c0_i32, %c0_i32_0 : i32, i32
  }
  func.func @transform_6(%arg0: i32) -> (i32, i32) {
    %c0_i32 = arith.constant 0 : i32
    %c0_i32_0 = arith.constant 0 : i32
    %c0_i32_1 = arith.constant 0 : i32
    return %c0_i32, %c0_i32_0 : i32, i32
  }
  func.func @transform_7(%arg0: i32) -> (i32, i32) {
    %c0_i32 = arith.constant 0 : i32
    %c0_i32_0 = arith.constant 0 : i32
    %c0_i32_1 = arith.constant 0 : i32
    return %c0_i32, %c0_i32_0 : i32, i32
  }
  func.func @transform_8(%arg0: i32) -> (i32, i32) {
    %c0_i32 = arith.constant 0 : i32
    %c0_i32_0 = arith.constant 0 : i32
    %c0_i32_1 = arith.constant 0 : i32
    return %c0_i32, %c0_i32_0 : i32, i32
  }
  func.func @transform_9(%arg0: i32) -> (i32, i32) {
    %c0_i32 = arith.constant 0 : i32
    %c0_i32_0 = arith.constant 0 : i32
    %c0_i32_1 = arith.constant 0 : i32
    return %c0_i32, %c0_i32_0 : i32, i32
  }
  func.func @transform_10(%arg0: i32) -> (i32, i32) {
    %c0_i32 = arith.constant 0 : i32
    %c0_i32_0 = arith.constant 0 : i32
    %c0_i32_1 = arith.constant 0 : i32
    return %c0_i32, %c0_i32_0 : i32, i32
  }
  func.func @transform_11(%arg0: i32) -> (i32, i32) {
    %c0_i32 = arith.constant 0 : i32
    %c0_i32_0 = arith.constant 0 : i32
    return %arg0, %c0_i32 : i32, i32
  }
}

</mosaic_0001>

<llo_original>
// kernel: forward.1
$region0: #{forward.1}
  #allocation0 [shape = 'u32[]', space=smem, size = 0x4, offset = 0x4, fixed_abs, tag = 'smem constant byte address 0x4 - core index']
  #allocation1 [shape = 'u32[144,128]{1,0:T(1,128)}', space=vmem, size = 0x12000, scoped, tag = 'internal scratch']
  #allocation2 [shape = 'f32[8,1024]{1,0:T(8,128)}', space=vmem, size = 0x8000, scoped, tag = 'scratch operand']
  #allocation3 [shape = 'f32[8,2048]{1,0:T(8,128)}', space=vmem, size = 0x10000, scoped, tag = 'scratch operand']
  %s0 = inlined_call_operand.vmem [shape: f32[8,256], index: 0, kind: input, shape index: {}]
  %s1 = inlined_call_operand.vmem [shape: f32[9,256], index: 1, kind: input, shape index: {}, may-alias: {1,2}]
  %s2 = inlined_call_operand.vmem [shape: f32[9,256], index: 2, kind: input, shape index: {}, may-alias: {1,2}]
  %s3 = inlined_call_operand.vmem [shape: f32[36], index: 3, kind: input, shape index: {}]
  %s4 = inlined_call_operand.vmem [shape: f32[288], index: 4, kind: input, shape index: {}]
  %s5 = inlined_call_operand.vmem [shape: f32[4,256], index: 5, kind: input, shape index: {}]
  %s6 = inlined_call_operand.vmem [shape: f32[8,256], index: 6, kind: input, shape index: {}]
  %s7 = inlined_call_operand.vmem [shape: f32[2048,32], index: 7, kind: input, shape index: {}]
  %s8 = inlined_call_operand.vmem [shape: f32[32,128], index: 8, kind: input, shape index: {}]
  %s9 = inlined_call_operand.vmem [shape: f32[1,32], index: 9, kind: input, shape index: {}]
  %s10 = inlined_call_operand.vmem [shape: f32[1,128], index: 10, kind: input, shape index: {}]
  %s11 = inlined_call_operand.vmem [shape: f32[8,128], index: 11, kind: output, shape index: {}]
  %s12 = sld [smem:[#allocation0]]
  $region62: #{forward.1} parent=0
    _
  %s14 = ssub.s32 1, %s12
  %s15 = scalar_select 0, %s14, %s12
  $region1: #{forward.1} parent=0
    #allocation4 [shape = 'u8[512]{0}', space=smem, size = 0x200, scoped, tag = 'input window, operand 3, single buffered']
    #allocation5 [shape = 's32[1]{0}', space=sflag, size = 0x4, scoped, tag = 'scoped memory for forward.1']
    #allocation6 [shape = 'u8[1536]{0}', space=smem, size = 0x600, scoped, tag = 'input window, operand 4, single buffered']
    #allocation7 [shape = 's32[1]{0}', space=sflag, size = 0x4, scoped, tag = 'scoped memory for forward.1']
    %16 = vsyncpa [#allocation5], 0
    %17 = vsyncpa [#allocation7], 0
    // Predicated region
    $region2: #{forward.1} parent=1 // pred_check
      _
    $region3: #{forward.1} parent=1 // pred_check_branch
      %19 = sbr.rel (0) target = $region5
    $region4: #{forward.1} parent=1 // pred_region
      _
    $region5: #{forward.1} parent=1 // pred_fallthru
      _
    // Predicated region
    $region6: #{forward.1} parent=1 // pred_check
      _
    $region7: #{forward.1} parent=1 // pred_check_branch
      %21 = sbr.rel (0) target = $region9
    $region8: #{forward.1} parent=1 // pred_region
      _
    $region9: #{forward.1} parent=1 // pred_fallthru
      _
    // Predicated region
    $region10: #{forward.1} parent=1 // pred_check
      _
    $region11: #{forward.1} parent=1 // pred_check_branch
      %23 = sbr.rel (0) target = $region13
    $region12: #{forward.1} parent=1 // pred_region
      _
    $region13: #{forward.1} parent=1 // pred_fallthru
      _
    // Predicated region
    $region14: #{forward.1} parent=1 // pred_check
      _
    $region15: #{forward.1} parent=1 // pred_check_branch
      %25 = sbr.rel (0) target = $region17
    $region16: #{forward.1} parent=1 // pred_region
      %s27 = ssub.s32 16, 16
      %28 = vsyncadd [#allocation5], %s27
      %s30 = sshll.u32 %s3, 4
      %s31 = int_to_ptr.vmem [resolvable:$true] %s30
      %33 = dma.vmem_to_smem %s31, 16, [#allocation4], [#allocation5]
    $region17: #{forward.1} parent=1 // pred_fallthru
      _
    // Predicated region
    $region18: #{forward.1} parent=1 // pred_check
      _
    $region19: #{forward.1} parent=1 // pred_check_branch
      %35 = sbr.rel (0) target = $region21
    $region20: #{forward.1} parent=1 // pred_region
      %s37 = ssub.s32 48, 48
      %38 = vsyncadd [#allocation7], %s37
      %s40 = sshll.u32 %s4, 4
      %s41 = int_to_ptr.vmem [resolvable:$true] %s40
      %43 = dma.vmem_to_smem %s41, 48, [#allocation6], [#allocation7]
    $region21: #{forward.1} parent=1 // pred_fallthru
      _
    // Predicated region
    $region22: #{forward.1} parent=1 // pred_check
      _
    $region23: #{forward.1} parent=1 // pred_check_branch
      %45 = sbr.rel (0) target = $region25
    $region24: #{forward.1} parent=1 // pred_region
      _
    $region25: #{forward.1} parent=1 // pred_fallthru
      _
    // Predicated region
    $region26: #{forward.1} parent=1 // pred_check
      _
    $region27: #{forward.1} parent=1 // pred_check_branch
      %47 = sbr.rel (0) target = $region29
    $region28: #{forward.1} parent=1 // pred_region
      _
    $region29: #{forward.1} parent=1 // pred_fallthru
      _
    // Predicated region
    $region30: #{forward.1} parent=1 // pred_check
      _
    $region31: #{forward.1} parent=1 // pred_check_branch
      %49 = sbr.rel (0) target = $region33
    $region32: #{forward.1} parent=1 // pred_region
      _
    $region33: #{forward.1} parent=1 // pred_fallthru
      _
    // Predicated region
    $region34: #{forward.1} parent=1 // pred_check
      _
    $region35: #{forward.1} parent=1 // pred_check_branch
      %51 = sbr.rel (0) target = $region37
    $region36: #{forward.1} parent=1 // pred_region
      _
    $region37: #{forward.1} parent=1 // pred_fallthru
      _
    // Predicated region
    $region38: #{forward.1} parent=1 // pred_check
      _
    $region39: #{forward.1} parent=1 // pred_check_branch
      %53 = sbr.rel (0) target = $region41
    $region40: #{forward.1} parent=1 // pred_region
      _
    $region41: #{forward.1} parent=1 // pred_fallthru
      _
    // Predicated region
    $region42: #{forward.1} parent=1 // pred_check
      _
    $region43: #{forward.1} parent=1 // pred_check_branch
      %55 = sbr.rel (0) target = $region45
    $region44: #{forward.1} parent=1 // pred_region
      _
    $region45: #{forward.1} parent=1 // pred_fallthru
      _
    // Predicated region
    $region46: #{forward.1} parent=1 // pred_check
      _
    $region47: #{forward.1} parent=1 // pred_check_branch
      %57 = sbr.rel (0) target = $region49
    $region48: #{forward.1} parent=1 // pred_region
      %58 = dma.done [#allocation5], 16
    $region49: #{forward.1} parent=1 // pred_fallthru
      _
    // Predicated region
    $region50: #{forward.1} parent=1 // pred_check
      _
    $region51: #{forward.1} parent=1 // pred_check_branch
      %60 = sbr.rel (0) target = $region53
    $region52: #{forward.1} parent=1 // pred_region
      %61 = dma.done [#allocation7], 48
    $region53: #{forward.1} parent=1 // pred_fallthru
      _
    %62 = sfence
    %v63 = vld [vmem:[%s0] sm:$0xff]
    %v64 = vld [vmem:[%s0 + $0x8] sm:$0xff]
    %65 = vrot.lane.b32.xlu0 %v63, 17
    %v66 = vpop.permute.xlu0 %65
    %67 = vrot.lane.b32.xlu0 %v64, 17
    %v68 = vpop.permute.xlu0 %67
    %v69 = vlaneseq
    %v70 = vand.u32 %v69, 127
    %vm71 = vcmp.lt.s32.totalorder %v70, 17
    %v72 = vsel %vm71, %v66, %v68
    %v73 = vsel %vm71, %v68, %v66
    %v74 = vld [vmem:[%s1] ss:$8 sm:$0x3]
    %v76 = vlaneseq
    %v77 = vshrl.u32 %v76, 7
    %v78 = vsub.s32 0, %v77
    %v79 = vrot.slane %v74, %v78
    %v80 = vlaneseq
    %v81 = vshrl.u32 %v80, 7
    %v82 = vsub.s32 1, %v81
    %v83 = vrot.slane %v74, %v82
    %v86 = vmul.f32 %v73, %v79
    %v87 = vmul.f32 %v72, %v83
    %s88 = sld [smem:[#allocation4]]
    %v89 = vstv %s88
    %v90 = vmul.f32 %v89, %v86
    %v91 = vmul.f32 %v89, %v87
    %v92 = vadd.f32 %v90, 0.0
    %v93 = vadd.f32 %v91, 0.0
    %s94 = sld [smem:[#allocation4 + $0x9]]
    %v95 = vstv %s94
    %v96 = vmul.f32 %v95, %v86
    %v97 = vmul.f32 %v95, %v87
    %v98 = vadd.f32 %v96, 0.0
    %v99 = vadd.f32 %v97, 0.0
    %100 = vrot.lane.b32.xlu0 %v63, 16
    %v101 = vpop.permute.xlu0 %100
    %102 = vrot.lane.b32.xlu0 %v64, 16
    %v103 = vpop.permute.xlu0 %102
    %vm104 = vcmp.lt.s32.totalorder %v70, 16
    %v105 = vsel %vm104, %v101, %v103
    %v106 = vsel %vm104, %v103, %v101
    %s107 = scalar_lea.vmem %s1, 1
    %v108 = vld [vmem:[%s107] ss:$8 sm:$0x3]
    %v110 = vlaneseq
    %v111 = vshrl.u32 %v110, 7
    %v112 = vsub.s32 0, %v111
    %v113 = vrot.slane %v108, %v112
    %v114 = vlaneseq
    %v115 = vshrl.u32 %v114, 7
    %v116 = vsub.s32 1, %v115
    %v117 = vrot.slane %v108, %v116
    %v120 = vmul.f32 %v106, %v113
    %v121 = vmul.f32 %v105, %v117
    %s122 = sld [smem:[#allocation4 + $0x1]]
    %v123 = vstv %s122
    %v124 = vmul.f32 %v123, %v120
    %v125 = vmul.f32 %v123, %v121
    %v126 = vadd.f32 %v92, %v124
    %v127 = vadd.f32 %v93, %v125
    %s128 = sld [smem:[#allocation4 + $0xa]]
    %v129 = vstv %s128
    %v130 = vmul.f32 %v129, %v120
    %v131 = vmul.f32 %v129, %v121
    %v132 = vadd.f32 %v98, %v130
    %v133 = vadd.f32 %v99, %v131
    %134 = vrot.lane.b32.xlu0 %v63, 15
    %v135 = vpop.permute.xlu0 %134
    %136 = vrot.lane.b32.xlu0 %v64, 15
    %v137 = vpop.permute.xlu0 %136
    %vm138 = vcmp.lt.s32.totalorder %v70, 15
    %v139 = vsel %vm138, %v135, %v137
    %v140 = vsel %vm138, %v137, %v135
    %s141 = scalar_lea.vmem %s1, 2
    %v142 = vld [vmem:[%s141] ss:$8 sm:$0x3]
    %v144 = vlaneseq
    %v145 = vshrl.u32 %v144, 7
    %v146 = vsub.s32 0, %v145
    %v147 = vrot.slane %v142, %v146
    %v148 = vlaneseq
    %v149 = vshrl.u32 %v148, 7
    %v150 = vsub.s32 1, %v149
    %v151 = vrot.slane %v142, %v150
    %v154 = vmul.f32 %v140, %v147
    %v155 = vmul.f32 %v139, %v151
    %s156 = sld [smem:[#allocation4 + $0x2]]
    %v157 = vstv %s156
    %v158 = vmul.f32 %v157, %v154
    %v159 = vmul.f32 %v157, %v155
    %v160 = vadd.f32 %v126, %v158
    %v161 = vadd.f32 %v127, %v159
    %s162 = sld [smem:[#allocation4 + $0xb]]
    %v163 = vstv %s162
    %v164 = vmul.f32 %v163, %v154
    %v165 = vmul.f32 %v163, %v155
    %v166 = vadd.f32 %v132, %v164
    %v167 = vadd.f32 %v133, %v165
    %168 = vrot.lane.b32.xlu0 %v63, 1
    %v169 = vpop.permute.xlu0 %168
    %170 = vrot.lane.b32.xlu0 %v64, 1
    %v171 = vpop.permute.xlu0 %170
    %vm172 = vcmp.lt.s32.totalorder %v70, 1
    %v173 = vsel %vm172, %v169, %v171
    %v174 = vsel %vm172, %v171, %v169
    %s175 = scalar_lea.vmem %s1, 3
    %v176 = vld [vmem:[%s175] ss:$8 sm:$0x3]
    %v178 = vlaneseq
    %v179 = vshrl.u32 %v178, 7
    %v180 = vsub.s32 0, %v179
    %v181 = vrot.slane %v176, %v180
    %v182 = vlaneseq
    %v183 = vshrl.u32 %v182, 7
    %v184 = vsub.s32 1, %v183
    %v185 = vrot.slane %v176, %v184
    %v188 = vmul.f32 %v174, %v181
    %v189 = vmul.f32 %v173, %v185
    %s190 = sld [smem:[#allocation4 + $0x3]]
    %v191 = vstv %s190
    %v192 = vmul.f32 %v191, %v188
    %v193 = vmul.f32 %v191, %v189
    %v194 = vadd.f32 %v160, %v192
    %v195 = vadd.f32 %v161, %v193
    %s196 = sld [smem:[#allocation4 + $0xc]]
    %v197 = vstv %s196
    %v198 = vmul.f32 %v197, %v188
    %v199 = vmul.f32 %v197, %v189
    %v200 = vadd.f32 %v166, %v198
    %v201 = vadd.f32 %v167, %v199
    %s202 = scalar_lea.vmem %s1, 4
    %v203 = vld [vmem:[%s202] ss:$8 sm:$0x3]
    %v205 = vlaneseq
    %v206 = vshrl.u32 %v205, 7
    %v207 = vsub.s32 0, %v206
    %v208 = vrot.slane %v203, %v207
    %v209 = vlaneseq
    %v210 = vshrl.u32 %v209, 7
    %v211 = vsub.s32 1, %v210
    %v212 = vrot.slane %v203, %v211
    %v215 = vmul.f32 %v63, %v208
    %v216 = vmul.f32 %v64, %v212
    %s217 = sld [smem:[#allocation4 + $0x4]]
    %v218 = vstv %s217
    %v219 = vmul.f32 %v218, %v215
    %v220 = vmul.f32 %v218, %v216
    %v221 = vadd.f32 %v194, %v219
    %v222 = vadd.f32 %v195, %v220
    %s223 = sld [smem:[#allocation4 + $0xd]]
    %v224 = vstv %s223
    %v225 = vmul.f32 %v224, %v215
    %v226 = vmul.f32 %v224, %v216
    %v227 = vadd.f32 %v200, %v225
    %v228 = vadd.f32 %v201, %v226
    %229 = vrot.lane.b32.xlu0 %v63, 127
    %v230 = vpop.permute.xlu0 %229
    %231 = vrot.lane.b32.xlu0 %v64, 127
    %v232 = vpop.permute.xlu0 %231
    %vm233 = vcmp.lt.s32.totalorder %v70, 127
    %v234 = vsel %vm233, %v230, %v232
    %v235 = vsel %vm233, %v232, %v230
    %s236 = scalar_lea.vmem %s1, 5
    %v237 = vld [vmem:[%s236] ss:$8 sm:$0x3]
    %v239 = vlaneseq
    %v240 = vshrl.u32 %v239, 7
    %v241 = vsub.s32 0, %v240
    %v242 = vrot.slane %v237, %v241
    %v243 = vlaneseq
    %v244 = vshrl.u32 %v243, 7
    %v245 = vsub.s32 1, %v244
    %v246 = vrot.slane %v237, %v245
    %v249 = vmul.f32 %v234, %v242
    %v250 = vmul.f32 %v235, %v246
    %s251 = sld [smem:[#allocation4 + $0x5]]
    %v252 = vstv %s251
    %v253 = vmul.f32 %v252, %v249
    %v254 = vmul.f32 %v252, %v250
    %v255 = vadd.f32 %v221, %v253
    %v256 = vadd.f32 %v222, %v254
    %s257 = sld [smem:[#allocation4 + $0xe]]
    %v258 = vstv %s257
    %v259 = vmul.f32 %v258, %v249
    %v260 = vmul.f32 %v258, %v250
    %v261 = vadd.f32 %v227, %v259
    %v262 = vadd.f32 %v228, %v260
    %263 = vrot.lane.b32.xlu0 %v63, 113
    %v264 = vpop.permute.xlu0 %263
    %265 = vrot.lane.b32.xlu0 %v64, 113
    %v266 = vpop.permute.xlu0 %265
    %vm267 = vcmp.lt.s32.totalorder %v70, 113
    %v268 = vsel %vm267, %v264, %v266
    %v269 = vsel %vm267, %v266, %v264
    %s270 = scalar_lea.vmem %s1, 6
    %v271 = vld [vmem:[%s270] ss:$8 sm:$0x3]
    %v273 = vlaneseq
    %v274 = vshrl.u32 %v273, 7
    %v275 = vsub.s32 0, %v274
    %v276 = vrot.slane %v271, %v275
    %v277 = vlaneseq
    %v278 = vshrl.u32 %v277, 7
    %v279 = vsub.s32 1, %v278
    %v280 = vrot.slane %v271, %v279
    %v283 = vmul.f32 %v268, %v276
    %v284 = vmul.f32 %v269, %v280
    %s285 = sld [smem:[#allocation4 + $0x6]]
    %v286 = vstv %s285
    %v287 = vmul.f32 %v286, %v283
    %v288 = vmul.f32 %v286, %v284
    %v289 = vadd.f32 %v255, %v287
    %v290 = vadd.f32 %v256, %v288
    %s291 = sld [smem:[#allocation4 + $0xf]]
    %v292 = vstv %s291
    %v293 = vmul.f32 %v292, %v283
    %v294 = vmul.f32 %v292, %v284
    %v295 = vadd.f32 %v261, %v293
    %v296 = vadd.f32 %v262, %v294
    %297 = vrot.lane.b32.xlu0 %v63, 112
    %v298 = vpop.permute.xlu0 %297
    %299 = vrot.lane.b32.xlu0 %v64, 112
    %v300 = vpop.permute.xlu0 %299
    %vm301 = vcmp.lt.s32.totalorder %v70, 112
    %v302 = vsel %vm301, %v298, %v300
    %v303 = vsel %vm301, %v300, %v298
    %s304 = scalar_lea.vmem %s1, 7
    %v305 = vld [vmem:[%s304] ss:$8 sm:$0x3]
    %v307 = vlaneseq
    %v308 = vshrl.u32 %v307, 7
    %v309 = vsub.s32 0, %v308
    %v310 = vrot.slane %v305, %v309
    %v311 = vlaneseq
    %v312 = vshrl.u32 %v311, 7
    %v313 = vsub.s32 1, %v312
    %v314 = vrot.slane %v305, %v313
    %v317 = vmul.f32 %v302, %v310
    %v318 = vmul.f32 %v303, %v314
    %s319 = sld [smem:[#allocation4 + $0x7]]
    %v320 = vstv %s319
    %v321 = vmul.f32 %v320, %v317
    %v322 = vmul.f32 %v320, %v318
    %v323 = vadd.f32 %v289, %v321
    %v324 = vadd.f32 %v290, %v322
    %s325 = sld [smem:[#allocation4 + $0x10]]
    %v326 = vstv %s325
    %v327 = vmul.f32 %v326, %v317
    %v328 = vmul.f32 %v326, %v318
    %v329 = vadd.f32 %v295, %v327
    %v330 = vadd.f32 %v296, %v328
    %331 = vrot.lane.b32.xlu0 %v63, 111
    %v332 = vpop.permute.xlu0 %331
    %333 = vrot.lane.b32.xlu0 %v64, 111
    %v334 = vpop.permute.xlu0 %333
    %vm335 = vcmp.lt.s32.totalorder %v70, 111
    %v336 = vsel %vm335, %v332, %v334
    %v337 = vsel %vm335, %v334, %v332
    %s338 = scalar_lea.vmem %s1, 16
    %v339 = vld [vmem:[%s338] ss:$8 sm:$0x3]
    %v341 = vlaneseq
    %v342 = vshrl.u32 %v341, 7
    %v343 = vsub.s32 0, %v342
    %v344 = vrot.slane %v339, %v343
    %v345 = vlaneseq
    %v346 = vshrl.u32 %v345, 7
    %v347 = vsub.s32 1, %v346
    %v348 = vrot.slane %v339, %v347
    %v351 = vmul.f32 %v336, %v344
    %v352 = vmul.f32 %v337, %v348
    %s353 = sld [smem:[#allocation4 + $0x8]]
    %v354 = vstv %s353
    %v355 = vmul.f32 %v354, %v351
    %v356 = vmul.f32 %v354, %v352
    %v357 = vadd.f32 %v323, %v355
    %v358 = vadd.f32 %v324, %v356
    %s359 = sld [smem:[#allocation4 + $0x11]]
    %v360 = vstv %s359
    %v361 = vmul.f32 %v360, %v351
    %v362 = vmul.f32 %v360, %v352
    %v363 = vadd.f32 %v329, %v361
    %v364 = vadd.f32 %v330, %v362
    %v365 = vld [vmem:[%s5] ss:$4 sm:$0x3]
    %v367 = vlaneseq
    %v368 = vshrl.u32 %v367, 7
    %v369 = vsub.s32 0, %v368
    %v370 = vrot.slane %v365, %v369
    %v371 = vlaneseq
    %v372 = vshrl.u32 %v371, 7
    %v373 = vsub.s32 1, %v372
    %v374 = vrot.slane %v365, %v373
    %v377 = vadd.f32 %v357, %v370
    %v378 = vadd.f32 %v358, %v374
    %v379 = vmax.f32 %v377, 0.0
    %v380 = vmax.f32 %v378, 0.0
    %381 = vst [vmem:[#allocation2] sm:$0xff] %v379
    %382 = vst [vmem:[#allocation2 + $0x8] sm:$0xff] %v380
    %s383 = scalar_lea.vmem %s5, 1
    %v384 = vld [vmem:[%s383] ss:$4 sm:$0x3]
    %v386 = vlaneseq
    %v387 = vshrl.u32 %v386, 7
    %v388 = vsub.s32 0, %v387
    %v389 = vrot.slane %v384, %v388
    %v390 = vlaneseq
    %v391 = vshrl.u32 %v390, 7
    %v392 = vsub.s32 1, %v391
    %v393 = vrot.slane %v384, %v392
    %v396 = vadd.f32 %v363, %v389
    %v397 = vadd.f32 %v364, %v393
    %v398 = vmax.f32 %v396, 0.0
    %v399 = vmax.f32 %v397, 0.0
    %400 = vst [vmem:[#allocation2 + $0x10] sm:$0xff] %v398
    %401 = vst [vmem:[#allocation2 + $0x18] sm:$0xff] %v399
    %v402 = vld [vmem:[%s0] sm:$0xff]
    %v403 = vld [vmem:[%s0 + $0x8] sm:$0xff]
    %404 = vrot.lane.b32.xlu0 %v402, 17
    %v405 = vpop.permute.xlu0 %404
    %406 = vrot.lane.b32.xlu0 %v403, 17
    %v407 = vpop.permute.xlu0 %406
    %v408 = vsel %vm71, %v405, %v407
    %v409 = vsel %vm71, %v407, %v405
    %v410 = vld [vmem:[%s1] ss:$8 sm:$0x3]
    %v412 = vlaneseq
    %v413 = vshrl.u32 %v412, 7
    %v414 = vsub.s32 0, %v413
    %v415 = vrot.slane %v410, %v414
    %v416 = vlaneseq
    %v417 = vshrl.u32 %v416, 7
    %v418 = vsub.s32 1, %v417
    %v419 = vrot.slane %v410, %v418
    %v422 = vmul.f32 %v409, %v415
    %v423 = vmul.f32 %v408, %v419
    %s424 = sld [smem:[#allocation4 + $0x12]]
    %v425 = vstv %s424
    %v426 = vmul.f32 %v425, %v422
    %v427 = vmul.f32 %v425, %v423
    %v428 = vadd.f32 %v426, 0.0
    %v429 = vadd.f32 %v427, 0.0
    %s430 = sld [smem:[#allocation4 + $0x1b]]
    %v431 = vstv %s430
    %v432 = vmul.f32 %v431, %v422
    %v433 = vmul.f32 %v431, %v423
    %v434 = vadd.f32 %v432, 0.0
    %v435 = vadd.f32 %v433, 0.0
    %436 = vrot.lane.b32.xlu0 %v402, 16
    %v437 = vpop.permute.xlu0 %436
    %438 = vrot.lane.b32.xlu0 %v403, 16
    %v439 = vpop.permute.xlu0 %438
    %v440 = vsel %vm104, %v437, %v439
    %v441 = vsel %vm104, %v439, %v437
    %v442 = vld [vmem:[%s107] ss:$8 sm:$0x3]
    %v444 = vlaneseq
    %v445 = vshrl.u32 %v444, 7
    %v446 = vsub.s32 0, %v445
    %v447 = vrot.slane %v442, %v446
    %v448 = vlaneseq
    %v449 = vshrl.u32 %v448, 7
    %v450 = vsub.s32 1, %v449
    %v451 = vrot.slane %v442, %v450
    %v454 = vmul.f32 %v441, %v447
    %v455 = vmul.f32 %v440, %v451
    %s456 = sld [smem:[#allocation4 + $0x13]]
    %v457 = vstv %s456
    %v458 = vmul.f32 %v457, %v454
    %v459 = vmul.f32 %v457, %v455
    %v460 = vadd.f32 %v428, %v458
    %v461 = vadd.f32 %v429, %v459
    %s462 = sld [smem:[#allocation4 + $0x1c]]
    %v463 = vstv %s462
    %v464 = vmul.f32 %v463, %v454
    %v465 = vmul.f32 %v463, %v455
    %v466 = vadd.f32 %v434, %v464
    %v467 = vadd.f32 %v435, %v465
    %468 = vrot.lane.b32.xlu0 %v402, 15
    %v469 = vpop.permute.xlu0 %468
    %470 = vrot.lane.b32.xlu0 %v403, 15
    %v471 = vpop.permute.xlu0 %470
    %v472 = vsel %vm138, %v469, %v471
    %v473 = vsel %vm138, %v471, %v469
    %v474 = vld [vmem:[%s141] ss:$8 sm:$0x3]
    %v476 = vlaneseq
    %v477 = vshrl.u32 %v476, 7
    %v478 = vsub.s32 0, %v477
    %v479 = vrot.slane %v474, %v478
    %v480 = vlaneseq
    %v481 = vshrl.u32 %v480, 7
    %v482 = vsub.s32 1, %v481
    %v483 = vrot.slane %v474, %v482
    %v486 = vmul.f32 %v473, %v479
    %v487 = vmul.f32 %v472, %v483
    %s488 = sld [smem:[#allocation4 + $0x14]]
    %v489 = vstv %s488
    %v490 = vmul.f32 %v489, %v486
    %v491 = vmul.f32 %v489, %v487
    %v492 = vadd.f32 %v460, %v490
    %v493 = vadd.f32 %v461, %v491
    %s494 = sld [smem:[#allocation4 + $0x1d]]
    %v495 = vstv %s494
    %v496 = vmul.f32 %v495, %v486
    %v497 = vmul.f32 %v495, %v487
    %v498 = vadd.f32 %v466, %v496
    %v499 = vadd.f32 %v467, %v497
    %500 = vrot.lane.b32.xlu0 %v402, 1
    %v501 = vpop.permute.xlu0 %500
    %502 = vrot.lane.b32.xlu0 %v403, 1
    %v503 = vpop.permute.xlu0 %502
    %v504 = vsel %vm172, %v501, %v503
    %v505 = vsel %vm172, %v503, %v501
    %v506 = vld [vmem:[%s175] ss:$8 sm:$0x3]
    %v508 = vlaneseq
    %v509 = vshrl.u32 %v508, 7
    %v510 = vsub.s32 0, %v509
    %v511 = vrot.slane %v506, %v510
    %v512 = vlaneseq
    %v513 = vshrl.u32 %v512, 7
    %v514 = vsub.s32 1, %v513
    %v515 = vrot.slane %v506, %v514
    %v518 = vmul.f32 %v505, %v511
    %v519 = vmul.f32 %v504, %v515
    %s520 = sld [smem:[#allocation4 + $0x15]]
    %v521 = vstv %s520
    %v522 = vmul.f32 %v521, %v518
    %v523 = vmul.f32 %v521, %v519
    %v524 = vadd.f32 %v492, %v522
    %v525 = vadd.f32 %v493, %v523
    %s526 = sld [smem:[#allocation4 + $0x1e]]
    %v527 = vstv %s526
    %v528 = vmul.f32 %v527, %v518
    %v529 = vmul.f32 %v527, %v519
    %v530 = vadd.f32 %v498, %v528
    %v531 = vadd.f32 %v499, %v529
    %v532 = vld [vmem:[%s202] ss:$8 sm:$0x3]
    %v534 = vlaneseq
    %v535 = vshrl.u32 %v534, 7
    %v536 = vsub.s32 0, %v535
    %v537 = vrot.slane %v532, %v536
    %v538 = vlaneseq
    %v539 = vshrl.u32 %v538, 7
    %v540 = vsub.s32 1, %v539
    %v541 = vrot.slane %v532, %v540
    %v544 = vmul.f32 %v402, %v537
    %v545 = vmul.f32 %v403, %v541
    %s546 = sld [smem:[#allocation4 + $0x16]]
    %v547 = vstv %s546
    %v548 = vmul.f32 %v547, %v544
    %v549 = vmul.f32 %v547, %v545
    %v550 = vadd.f32 %v524, %v548
    %v551 = vadd.f32 %v525, %v549
    %s552 = sld [smem:[#allocation4 + $0x1f]]
    %v553 = vstv %s552
    %v554 = vmul.f32 %v553, %v544
    %v555 = vmul.f32 %v553, %v545
    %v556 = vadd.f32 %v530, %v554
    %v557 = vadd.f32 %v531, %v555
    %558 = vrot.lane.b32.xlu0 %v402, 127
    %v559 = vpop.permute.xlu0 %558
    %560 = vrot.lane.b32.xlu0 %v403, 127
    %v561 = vpop.permute.xlu0 %560
    %v562 = vsel %vm233, %v559, %v561
    %v563 = vsel %vm233, %v561, %v559
    %v564 = vld [vmem:[%s236] ss:$8 sm:$0x3]
    %v566 = vlaneseq
    %v567 = vshrl.u32 %v566, 7
    %v568 = vsub.s32 0, %v567
    %v569 = vrot.slane %v564, %v568
    %v570 = vlaneseq
    %v571 = vshrl.u32 %v570, 7
    %v572 = vsub.s32 1, %v571
    %v573 = vrot.slane %v564, %v572
    %v576 = vmul.f32 %v562, %v569
    %v577 = vmul.f32 %v563, %v573
    %s578 = sld [smem:[#allocation4 + $0x17]]
    %v579 = vstv %s578
    %v580 = vmul.f32 %v579, %v576
    %v581 = vmul.f32 %v579, %v577
    %v582 = vadd.f32 %v550, %v580
    %v583 = vadd.f32 %v551, %v581
    %s584 = sld [smem:[#allocation4 + $0x20]]
    %v585 = vstv %s584
    %v586 = vmul.f32 %v585, %v576
    %v587 = vmul.f32 %v585, %v577
    %v588 = vadd.f32 %v556, %v586
    %v589 = vadd.f32 %v557, %v587
    %590 = vrot.lane.b32.xlu0 %v402, 113
    %v591 = vpop.permute.xlu0 %590
    %592 = vrot.lane.b32.xlu0 %v403, 113
    %v593 = vpop.permute.xlu0 %592
    %v594 = vsel %vm267, %v591, %v593
    %v595 = vsel %vm267, %v593, %v591
    %v596 = vld [vmem:[%s270] ss:$8 sm:$0x3]
    %v598 = vlaneseq
    %v599 = vshrl.u32 %v598, 7
    %v600 = vsub.s32 0, %v599
    %v601 = vrot.slane %v596, %v600
    %v602 = vlaneseq
    %v603 = vshrl.u32 %v602, 7
    %v604 = vsub.s32 1, %v603
    %v605 = vrot.slane %v596, %v604
    %v608 = vmul.f32 %v594, %v601
    %v609 = vmul.f32 %v595, %v605
    %s610 = sld [smem:[#allocation4 + $0x18]]
    %v611 = vstv %s610
    %v612 = vmul.f32 %v611, %v608
    %v613 = vmul.f32 %v611, %v609
    %v614 = vadd.f32 %v582, %v612
    %v615 = vadd.f32 %v583, %v613
    %s616 = sld [smem:[#allocation4 + $0x21]]
    %v617 = vstv %s616
    %v618 = vmul.f32 %v617, %v608
    %v619 = vmul.f32 %v617, %v609
    %v620 = vadd.f32 %v588, %v618
    %v621 = vadd.f32 %v589, %v619
    %622 = vrot.lane.b32.xlu0 %v402, 112
    %v623 = vpop.permute.xlu0 %622
    %624 = vrot.lane.b32.xlu0 %v403, 112
    %v625 = vpop.permute.xlu0 %624
    %v626 = vsel %vm301, %v623, %v625
    %v627 = vsel %vm301, %v625, %v623
    %v628 = vld [vmem:[%s304] ss:$8 sm:$0x3]
    %v630 = vlaneseq
    %v631 = vshrl.u32 %v630, 7
    %v632 = vsub.s32 0, %v631
    %v633 = vrot.slane %v628, %v632
    %v634 = vlaneseq
    %v635 = vshrl.u32 %v634, 7
    %v636 = vsub.s32 1, %v635
    %v637 = vrot.slane %v628, %v636
    %v640 = vmul.f32 %v626, %v633
    %v641 = vmul.f32 %v627, %v637
    %s642 = sld [smem:[#allocation4 + $0x19]]
    %v643 = vstv %s642
    %v644 = vmul.f32 %v643, %v640
    %v645 = vmul.f32 %v643, %v641
    %v646 = vadd.f32 %v614, %v644
    %v647 = vadd.f32 %v615, %v645
    %s648 = sld [smem:[#allocation4 + $0x22]]
    %v649 = vstv %s648
    %v650 = vmul.f32 %v649, %v640
    %v651 = vmul.f32 %v649, %v641
    %v652 = vadd.f32 %v620, %v650
    %v653 = vadd.f32 %v621, %v651
    %654 = vrot.lane.b32.xlu0 %v402, 111
    %v655 = vpop.permute.xlu0 %654
    %656 = vrot.lane.b32.xlu0 %v403, 111
    %v657 = vpop.permute.xlu0 %656
    %v658 = vsel %vm335, %v655, %v657
    %v659 = vsel %vm335, %v657, %v655
    %v660 = vld [vmem:[%s338] ss:$8 sm:$0x3]
    %v662 = vlaneseq
    %v663 = vshrl.u32 %v662, 7
    %v664 = vsub.s32 0, %v663
    %v665 = vrot.slane %v660, %v664
    %v666 = vlaneseq
    %v667 = vshrl.u32 %v666, 7
    %v668 = vsub.s32 1, %v667
    %v669 = vrot.slane %v660, %v668
    %v672 = vmul.f32 %v658, %v665
    %v673 = vmul.f32 %v659, %v669
    %s674 = sld [smem:[#allocation4 + $0x1a]]
    %v675 = vstv %s674
    %v676 = vmul.f32 %v675, %v672
    %v677 = vmul.f32 %v675, %v673
    %v678 = vadd.f32 %v646, %v676
    %v679 = vadd.f32 %v647, %v677
    %s680 = sld [smem:[#allocation4 + $0x23]]
    %v681 = vstv %s680
    %v682 = vmul.f32 %v681, %v672
    %v683 = vmul.f32 %v681, %v673
    %v684 = vadd.f32 %v652, %v682
    %v685 = vadd.f32 %v653, %v683
    %s686 = scalar_lea.vmem %s5, 2
    %v687 = vld [vmem:[%s686] ss:$4 sm:$0x3]
    %v689 = vlaneseq
    %v690 = vshrl.u32 %v689, 7
    %v691 = vsub.s32 0, %v690
    %v692 = vrot.slane %v687, %v691
    %v693 = vlaneseq
    %v694 = vshrl.u32 %v693, 7
    %v695 = vsub.s32 1, %v694
    %v696 = vrot.slane %v687, %v695
    %v699 = vadd.f32 %v678, %v692
    %v700 = vadd.f32 %v679, %v696
    %v701 = vmax.f32 %v699, 0.0
    %v702 = vmax.f32 %v700, 0.0
    %703 = vst [vmem:[#allocation2 + $0x20] sm:$0xff] %v701
    %704 = vst [vmem:[#allocation2 + $0x28] sm:$0xff] %v702
    %s705 = scalar_lea.vmem %s5, 3
    %v706 = vld [vmem:[%s705] ss:$4 sm:$0x3]
    %v708 = vlaneseq
    %v709 = vshrl.u32 %v708, 7
    %v710 = vsub.s32 0, %v709
    %v711 = vrot.slane %v706, %v710
    %v712 = vlaneseq
    %v713 = vshrl.u32 %v712, 7
    %v714 = vsub.s32 1, %v713
    %v715 = vrot.slane %v706, %v714
    %v718 = vadd.f32 %v684, %v711
    %v719 = vadd.f32 %v685, %v715
    %v720 = vmax.f32 %v718, 0.0
    %v721 = vmax.f32 %v719, 0.0
    %722 = vst [vmem:[#allocation2 + $0x30] sm:$0xff] %v720
    %723 = vst [vmem:[#allocation2 + $0x38] sm:$0xff] %v721
    %v724 = vld [vmem:[#allocation2] sm:$0xff]
    %v725 = vld [vmem:[#allocation2 + $0x8] sm:$0xff]
    %726 = vrot.lane.b32.xlu0 %v724, 17
    %v727 = vpop.permute.xlu0 %726
    %728 = vrot.lane.b32.xlu0 %v725, 17
    %v729 = vpop.permute.xlu0 %728
    %v730 = vsel %vm71, %v727, %v729
    %v731 = vsel %vm71, %v729, %v727
    %v732 = vld [vmem:[%s2] ss:$8 sm:$0x3]
    %v734 = vlaneseq
    %v735 = vshrl.u32 %v734, 7
    %v736 = vsub.s32 0, %v735
    %v737 = vrot.slane %v732, %v736
    %v738 = vlaneseq
    %v739 = vshrl.u32 %v738, 7
    %v740 = vsub.s32 1, %v739
    %v741 = vrot.slane %v732, %v740
    %v744 = vmul.f32 %v731, %v737
    %v745 = vmul.f32 %v730, %v741
    %s746 = sld [smem:[#allocation6]]
    %v747 = vstv %s746
    %v748 = vmul.f32 %v747, %v744
    %v749 = vmul.f32 %v747, %v745
    %v750 = vadd.f32 %v748, 0.0
    %v751 = vadd.f32 %v749, 0.0
    %s752 = sld [smem:[#allocation6 + $0x24]]
    %v753 = vstv %s752
    %v754 = vmul.f32 %v753, %v744
    %v755 = vmul.f32 %v753, %v745
    %v756 = vadd.f32 %v754, 0.0
    %v757 = vadd.f32 %v755, 0.0
    %758 = vrot.lane.b32.xlu0 %v724, 16
    %v759 = vpop.permute.xlu0 %758
    %760 = vrot.lane.b32.xlu0 %v725, 16
    %v761 = vpop.permute.xlu0 %760
    %v762 = vsel %vm104, %v759, %v761
    %v763 = vsel %vm104, %v761, %v759
    %s764 = scalar_lea.vmem %s2, 1
    %v765 = vld [vmem:[%s764] ss:$8 sm:$0x3]
    %v767 = vlaneseq
    %v768 = vshrl.u32 %v767, 7
    %v769 = vsub.s32 0, %v768
    %v770 = vrot.slane %v765, %v769
    %v771 = vlaneseq
    %v772 = vshrl.u32 %v771, 7
    %v773 = vsub.s32 1, %v772
    %v774 = vrot.slane %v765, %v773
    %v777 = vmul.f32 %v763, %v770
    %v778 = vmul.f32 %v762, %v774
    %s779 = sld [smem:[#allocation6 + $0x1]]
    %v780 = vstv %s779
    %v781 = vmul.f32 %v780, %v777
    %v782 = vmul.f32 %v780, %v778
    %v783 = vadd.f32 %v750, %v781
    %v784 = vadd.f32 %v751, %v782
    %s785 = sld [smem:[#allocation6 + $0x25]]
    %v786 = vstv %s785
    %v787 = vmul.f32 %v786, %v777
    %v788 = vmul.f32 %v786, %v778
    %v789 = vadd.f32 %v756, %v787
    %v790 = vadd.f32 %v757, %v788
    %791 = vrot.lane.b32.xlu0 %v724, 15
    %v792 = vpop.permute.xlu0 %791
    %793 = vrot.lane.b32.xlu0 %v725, 15
    %v794 = vpop.permute.xlu0 %793
    %v795 = vsel %vm138, %v792, %v794
    %v796 = vsel %vm138, %v794, %v792
    %s797 = scalar_lea.vmem %s2, 2
    %v798 = vld [vmem:[%s797] ss:$8 sm:$0x3]
    %v800 = vlaneseq
    %v801 = vshrl.u32 %v800, 7
    %v802 = vsub.s32 0, %v801
    %v803 = vrot.slane %v798, %v802
    %v804 = vlaneseq
    %v805 = vshrl.u32 %v804, 7
    %v806 = vsub.s32 1, %v805
    %v807 = vrot.slane %v798, %v806
    %v810 = vmul.f32 %v796, %v803
    %v811 = vmul.f32 %v795, %v807
    %s812 = sld [smem:[#allocation6 + $0x2]]
    %v813 = vstv %s812
    %v814 = vmul.f32 %v813, %v810
    %v815 = vmul.f32 %v813, %v811
    %v816 = vadd.f32 %v783, %v814
    %v817 = vadd.f32 %v784, %v815
    %s818 = sld [smem:[#allocation6 + $0x26]]
    %v819 = vstv %s818
    %v820 = vmul.f32 %v819, %v810
    %v821 = vmul.f32 %v819, %v811
    %v822 = vadd.f32 %v789, %v820
    %v823 = vadd.f32 %v790, %v821
    %824 = vrot.lane.b32.xlu0 %v724, 1
    %v825 = vpop.permute.xlu0 %824
    %826 = vrot.lane.b32.xlu0 %v725, 1
    %v827 = vpop.permute.xlu0 %826
    %v828 = vsel %vm172, %v825, %v827
    %v829 = vsel %vm172, %v827, %v825
    %s830 = scalar_lea.vmem %s2, 3
    %v831 = vld [vmem:[%s830] ss:$8 sm:$0x3]
    %v833 = vlaneseq
    %v834 = vshrl.u32 %v833, 7
    %v835 = vsub.s32 0, %v834
    %v836 = vrot.slane %v831, %v835
    %v837 = vlaneseq
    %v838 = vshrl.u32 %v837, 7
    %v839 = vsub.s32 1, %v838
    %v840 = vrot.slane %v831, %v839
    %v843 = vmul.f32 %v829, %v836
    %v844 = vmul.f32 %v828, %v840
    %s845 = sld [smem:[#allocation6 + $0x3]]
    %v846 = vstv %s845
    %v847 = vmul.f32 %v846, %v843
    %v848 = vmul.f32 %v846, %v844
    %v849 = vadd.f32 %v816, %v847
    %v850 = vadd.f32 %v817, %v848
    %s851 = sld [smem:[#allocation6 + $0x27]]
    %v852 = vstv %s851
    %v853 = vmul.f32 %v852, %v843
    %v854 = vmul.f32 %v852, %v844
    %v855 = vadd.f32 %v822, %v853
    %v856 = vadd.f32 %v823, %v854
    %s857 = scalar_lea.vmem %s2, 4
    %v858 = vld [vmem:[%s857] ss:$8 sm:$0x3]
    %v860 = vlaneseq
    %v861 = vshrl.u32 %v860, 7
    %v862 = vsub.s32 0, %v861
    %v863 = vrot.slane %v858, %v862
    %v864 = vlaneseq
    %v865 = vshrl.u32 %v864, 7
    %v866 = vsub.s32 1, %v865
    %v867 = vrot.slane %v858, %v866
    %v870 = vmul.f32 %v724, %v863
    %v871 = vmul.f32 %v725, %v867
    %s872 = sld [smem:[#allocation6 + $0x4]]
    %v873 = vstv %s872
    %v874 = vmul.f32 %v873, %v870
    %v875 = vmul.f32 %v873, %v871
    %v876 = vadd.f32 %v849, %v874
    %v877 = vadd.f32 %v850, %v875
    %s878 = sld [smem:[#allocation6 + $0x28]]
    %v879 = vstv %s878
    %v880 = vmul.f32 %v879, %v870
    %v881 = vmul.f32 %v879, %v871
    %v882 = vadd.f32 %v855, %v880
    %v883 = vadd.f32 %v856, %v881
    %884 = vrot.lane.b32.xlu0 %v724, 127
    %v885 = vpop.permute.xlu0 %884
    %886 = vrot.lane.b32.xlu0 %v725, 127
    %v887 = vpop.permute.xlu0 %886
    %v888 = vsel %vm233, %v885, %v887
    %v889 = vsel %vm233, %v887, %v885
    %s890 = scalar_lea.vmem %s2, 5
    %v891 = vld [vmem:[%s890] ss:$8 sm:$0x3]
    %v893 = vlaneseq
    %v894 = vshrl.u32 %v893, 7
    %v895 = vsub.s32 0, %v894
    %v896 = vrot.slane %v891, %v895
    %v897 = vlaneseq
    %v898 = vshrl.u32 %v897, 7
    %v899 = vsub.s32 1, %v898
    %v900 = vrot.slane %v891, %v899
    %v903 = vmul.f32 %v888, %v896
    %v904 = vmul.f32 %v889, %v900
    %s905 = sld [smem:[#allocation6 + $0x5]]
    %v906 = vstv %s905
    %v907 = vmul.f32 %v906, %v903
    %v908 = vmul.f32 %v906, %v904
    %v909 = vadd.f32 %v876, %v907
    %v910 = vadd.f32 %v877, %v908
    %s911 = sld [smem:[#allocation6 + $0x29]]
    %v912 = vstv %s911
    %v913 = vmul.f32 %v912, %v903
    %v914 = vmul.f32 %v912, %v904
    %v915 = vadd.f32 %v882, %v913
    %v916 = vadd.f32 %v883, %v914
    %917 = vrot.lane.b32.xlu0 %v724, 113
    %v918 = vpop.permute.xlu0 %917
    %919 = vrot.lane.b32.xlu0 %v725, 113
    %v920 = vpop.permute.xlu0 %919
    %v921 = vsel %vm267, %v918, %v920
    %v922 = vsel %vm267, %v920, %v918
    %s923 = scalar_lea.vmem %s2, 6
    %v924 = vld [vmem:[%s923] ss:$8 sm:$0x3]
    %v926 = vlaneseq
    %v927 = vshrl.u32 %v926, 7
    %v928 = vsub.s32 0, %v927
    %v929 = vrot.slane %v924, %v928
    %v930 = vlaneseq
    %v931 = vshrl.u32 %v930, 7
    %v932 = vsub.s32 1, %v931
    %v933 = vrot.slane %v924, %v932
    %v936 = vmul.f32 %v921, %v929
    %v937 = vmul.f32 %v922, %v933
    %s938 = sld [smem:[#allocation6 + $0x6]]
    %v939 = vstv %s938
    %v940 = vmul.f32 %v939, %v936
    %v941 = vmul.f32 %v939, %v937
    %v942 = vadd.f32 %v909, %v940
    %v943 = vadd.f32 %v910, %v941
    %s944 = sld [smem:[#allocation6 + $0x2a]]
    %v945 = vstv %s944
    %v946 = vmul.f32 %v945, %v936
    %v947 = vmul.f32 %v945, %v937
    %v948 = vadd.f32 %v915, %v946
    %v949 = vadd.f32 %v916, %v947
    %950 = vrot.lane.b32.xlu0 %v724, 112
    %v951 = vpop.permute.xlu0 %950
    %952 = vrot.lane.b32.xlu0 %v725, 112
    %v953 = vpop.permute.xlu0 %952
    %v954 = vsel %vm301, %v951, %v953
    %v955 = vsel %vm301, %v953, %v951
    %s956 = scalar_lea.vmem %s2, 7
    %v957 = vld [vmem:[%s956] ss:$8 sm:$0x3]
    %v959 = vlaneseq
    %v960 = vshrl.u32 %v959, 7
    %v961 = vsub.s32 0, %v960
    %v962 = vrot.slane %v957, %v961
    %v963 = vlaneseq
    %v964 = vshrl.u32 %v963, 7
    %v965 = vsub.s32 1, %v964
    %v966 = vrot.slane %v957, %v965
    %v969 = vmul.f32 %v954, %v962
    %v970 = vmul.f32 %v955, %v966
    %s971 = sld [smem:[#allocation6 + $0x7]]
    %v972 = vstv %s971
    %v973 = vmul.f32 %v972, %v969
    %v974 = vmul.f32 %v972, %v970
    %v975 = vadd.f32 %v942, %v973
    %v976 = vadd.f32 %v943, %v974
    %s977 = sld [smem:[#allocation6 + $0x2b]]
    %v978 = vstv %s977
    %v979 = vmul.f32 %v978, %v969
    %v980 = vmul.f32 %v978, %v970
    %v981 = vadd.f32 %v948, %v979
    %v982 = vadd.f32 %v949, %v980
    %983 = vrot.lane.b32.xlu0 %v724, 111
    %v984 = vpop.permute.xlu0 %983
    %985 = vrot.lane.b32.xlu0 %v725, 111
    %v986 = vpop.permute.xlu0 %985
    %v987 = vsel %vm335, %v984, %v986
    %v988 = vsel %vm335, %v986, %v984
    %s989 = scalar_lea.vmem %s2, 16
    %v990 = vld [vmem:[%s989] ss:$8 sm:$0x3]
    %v992 = vlaneseq
    %v993 = vshrl.u32 %v992, 7
    %v994 = vsub.s32 0, %v993
    %v995 = vrot.slane %v990, %v994
    %v996 = vlaneseq
    %v997 = vshrl.u32 %v996, 7
    %v998 = vsub.s32 1, %v997
    %v999 = vrot.slane %v990, %v998
    %v1002 = vmul.f32 %v987, %v995
    %v1003 = vmul.f32 %v988, %v999
    %s1004 = sld [smem:[#allocation6 + $0x8]]
    %v1005 = vstv %s1004
    %v1006 = vmul.f32 %v1005, %v1002
    %v1007 = vmul.f32 %v1005, %v1003
    %v1008 = vadd.f32 %v975, %v1006
    %v1009 = vadd.f32 %v976, %v1007
    %s1010 = sld [smem:[#allocation6 + $0x2c]]
    %v1011 = vstv %s1010
    %v1012 = vmul.f32 %v1011, %v1002
    %v1013 = vmul.f32 %v1011, %v1003
    %v1014 = vadd.f32 %v981, %v1012
    %v1015 = vadd.f32 %v982, %v1013
    %v1016 = vld [vmem:[#allocation2 + $0x10] sm:$0xff]
    %v1017 = vld [vmem:[#allocation2 + $0x18] sm:$0xff]
    %1018 = vrot.lane.b32.xlu0 %v1016, 17
    %v1019 = vpop.permute.xlu0 %1018
    %1020 = vrot.lane.b32.xlu0 %v1017, 17
    %v1021 = vpop.permute.xlu0 %1020
    %v1022 = vsel %vm71, %v1019, %v1021
    %v1023 = vsel %vm71, %v1021, %v1019
    %v1024 = vmul.f32 %v1023, %v737
    %v1025 = vmul.f32 %v1022, %v741
    %s1026 = sld [smem:[#allocation6 + $0x9]]
    %v1027 = vstv %s1026
    %v1028 = vmul.f32 %v1027, %v1024
    %v1029 = vmul.f32 %v1027, %v1025
    %v1030 = vadd.f32 %v1008, %v1028
    %v1031 = vadd.f32 %v1009, %v1029
    %s1032 = sld [smem:[#allocation6 + $0x2d]]
    %v1033 = vstv %s1032
    %v1034 = vmul.f32 %v1033, %v1024
    %v1035 = vmul.f32 %v1033, %v1025
    %v1036 = vadd.f32 %v1014, %v1034
    %v1037 = vadd.f32 %v1015, %v1035
    %1038 = vrot.lane.b32.xlu0 %v1016, 16
    %v1039 = vpop.permute.xlu0 %1038
    %1040 = vrot.lane.b32.xlu0 %v1017, 16
    %v1041 = vpop.permute.xlu0 %1040
    %v1042 = vsel %vm104, %v1039, %v1041
    %v1043 = vsel %vm104, %v1041, %v1039
    %v1044 = vmul.f32 %v1043, %v770
    %v1045 = vmul.f32 %v1042, %v774
    %s1046 = sld [smem:[#allocation6 + $0xa]]
    %v1047 = vstv %s1046
    %v1048 = vmul.f32 %v1047, %v1044
    %v1049 = vmul.f32 %v1047, %v1045
    %v1050 = vadd.f32 %v1030, %v1048
    %v1051 = vadd.f32 %v1031, %v1049
    %s1052 = sld [smem:[#allocation6 + $0x2e]]
    %v1053 = vstv %s1052
    %v1054 = vmul.f32 %v1053, %v1044
    %v1055 = vmul.f32 %v1053, %v1045
    %v1056 = vadd.f32 %v1036, %v1054
    %v1057 = vadd.f32 %v1037, %v1055
    %1058 = vrot.lane.b32.xlu0 %v1016, 15
    %v1059 = vpop.permute.xlu0 %1058
    %1060 = vrot.lane.b32.xlu0 %v1017, 15
    %v1061 = vpop.permute.xlu0 %1060
    %v1062 = vsel %vm138, %v1059, %v1061
    %v1063 = vsel %vm138, %v1061, %v1059
    %v1064 = vmul.f32 %v1063, %v803
    %v1065 = vmul.f32 %v1062, %v807
    %s1066 = sld [smem:[#allocation6 + $0xb]]
    %v1067 = vstv %s1066
    %v1068 = vmul.f32 %v1067, %v1064
    %v1069 = vmul.f32 %v1067, %v1065
    %v1070 = vadd.f32 %v1050, %v1068
    %v1071 = vadd.f32 %v1051, %v1069
    %s1072 = sld [smem:[#allocation6 + $0x2f]]
    %v1073 = vstv %s1072
    %v1074 = vmul.f32 %v1073, %v1064
    %v1075 = vmul.f32 %v1073, %v1065
    %v1076 = vadd.f32 %v1056, %v1074
    %v1077 = vadd.f32 %v1057, %v1075
    %1078 = vrot.lane.b32.xlu0 %v1016, 1
    %v1079 = vpop.permute.xlu0 %1078
    %1080 = vrot.lane.b32.xlu0 %v1017, 1
    %v1081 = vpop.permute.xlu0 %1080
    %v1082 = vsel %vm172, %v1079, %v1081
    %v1083 = vsel %vm172, %v1081, %v1079
    %v1084 = vmul.f32 %v1083, %v836
    %v1085 = vmul.f32 %v1082, %v840
    %s1086 = sld [smem:[#allocation6 + $0xc]]
    %v1087 = vstv %s1086
    %v1088 = vmul.f32 %v1087, %v1084
    %v1089 = vmul.f32 %v1087, %v1085
    %v1090 = vadd.f32 %v1070, %v1088
    %v1091 = vadd.f32 %v1071, %v1089
    %s1092 = sld [smem:[#allocation6 + $0x30]]
    %v1093 = vstv %s1092
    %v1094 = vmul.f32 %v1093, %v1084
    %v1095 = vmul.f32 %v1093, %v1085
    %v1096 = vadd.f32 %v1076, %v1094
    %v1097 = vadd.f32 %v1077, %v1095
    %v1098 = vmul.f32 %v1016, %v863
    %v1099 = vmul.f32 %v1017, %v867
    %s1100 = sld [smem:[#allocation6 + $0xd]]
    %v1101 = vstv %s1100
    %v1102 = vmul.f32 %v1101, %v1098
    %v1103 = vmul.f32 %v1101, %v1099
    %v1104 = vadd.f32 %v1090, %v1102
    %v1105 = vadd.f32 %v1091, %v1103
    %s1106 = sld [smem:[#allocation6 + $0x31]]
    %v1107 = vstv %s1106
    %v1108 = vmul.f32 %v1107, %v1098
    %v1109 = vmul.f32 %v1107, %v1099
    %v1110 = vadd.f32 %v1096, %v1108
    %v1111 = vadd.f32 %v1097, %v1109
    %1112 = vrot.lane.b32.xlu0 %v1016, 127
    %v1113 = vpop.permute.xlu0 %1112
    %1114 = vrot.lane.b32.xlu0 %v1017, 127
    %v1115 = vpop.permute.xlu0 %1114
    %v1116 = vsel %vm233, %v1113, %v1115
    %v1117 = vsel %vm233, %v1115, %v1113
    %v1118 = vmul.f32 %v1116, %v896
    %v1119 = vmul.f32 %v1117, %v900
    %s1120 = sld [smem:[#allocation6 + $0xe]]
    %v1121 = vstv %s1120
    %v1122 = vmul.f32 %v1121, %v1118
    %v1123 = vmul.f32 %v1121, %v1119
    %v1124 = vadd.f32 %v1104, %v1122
    %v1125 = vadd.f32 %v1105, %v1123
    %s1126 = sld [smem:[#allocation6 + $0x32]]
    %v1127 = vstv %s1126
    %v1128 = vmul.f32 %v1127, %v1118
    %v1129 = vmul.f32 %v1127, %v1119
    %v1130 = vadd.f32 %v1110, %v1128
    %v1131 = vadd.f32 %v1111, %v1129
    %1132 = vrot.lane.b32.xlu0 %v1016, 113
    %v1133 = vpop.permute.xlu0 %1132
    %1134 = vrot.lane.b32.xlu0 %v1017, 113
    %v1135 = vpop.permute.xlu0 %1134
    %v1136 = vsel %vm267, %v1133, %v1135
    %v1137 = vsel %vm267, %v1135, %v1133
    %v1138 = vmul.f32 %v1136, %v929
    %v1139 = vmul.f32 %v1137, %v933
    %s1140 = sld [smem:[#allocation6 + $0xf]]
    %v1141 = vstv %s1140
    %v1142 = vmul.f32 %v1141, %v1138
    %v1143 = vmul.f32 %v1141, %v1139
    %v1144 = vadd.f32 %v1124, %v1142
    %v1145 = vadd.f32 %v1125, %v1143
    %s1146 = sld [smem:[#allocation6 + $0x33]]
    %v1147 = vstv %s1146
    %v1148 = vmul.f32 %v1147, %v1138
    %v1149 = vmul.f32 %v1147, %v1139
    %v1150 = vadd.f32 %v1130, %v1148
    %v1151 = vadd.f32 %v1131, %v1149
    %1152 = vrot.lane.b32.xlu0 %v1016, 112
    %v1153 = vpop.permute.xlu0 %1152
    %1154 = vrot.lane.b32.xlu0 %v1017, 112
    %v1155 = vpop.permute.xlu0 %1154
    %v1156 = vsel %vm301, %v1153, %v1155
    %v1157 = vsel %vm301, %v1155, %v1153
    %v1158 = vmul.f32 %v1156, %v962
    %v1159 = vmul.f32 %v1157, %v966
    %s1160 = sld [smem:[#allocation6 + $0x10]]
    %v1161 = vstv %s1160
    %v1162 = vmul.f32 %v1161, %v1158
    %v1163 = vmul.f32 %v1161, %v1159
    %v1164 = vadd.f32 %v1144, %v1162
    %v1165 = vadd.f32 %v1145, %v1163
    %s1166 = sld [smem:[#allocation6 + $0x34]]
    %v1167 = vstv %s1166
    %v1168 = vmul.f32 %v1167, %v1158
    %v1169 = vmul.f32 %v1167, %v1159
    %v1170 = vadd.f32 %v1150, %v1168
    %v1171 = vadd.f32 %v1151, %v1169
    %1172 = vrot.lane.b32.xlu0 %v1016, 111
    %v1173 = vpop.permute.xlu0 %1172
    %1174 = vrot.lane.b32.xlu0 %v1017, 111
    %v1175 = vpop.permute.xlu0 %1174
    %v1176 = vsel %vm335, %v1173, %v1175
    %v1177 = vsel %vm335, %v1175, %v1173
    %v1178 = vmul.f32 %v1176, %v995
    %v1179 = vmul.f32 %v1177, %v999
    %s1180 = sld [smem:[#allocation6 + $0x11]]
    %v1181 = vstv %s1180
    %v1182 = vmul.f32 %v1181, %v1178
    %v1183 = vmul.f32 %v1181, %v1179
    %v1184 = vadd.f32 %v1164, %v1182
    %v1185 = vadd.f32 %v1165, %v1183
    %s1186 = sld [smem:[#allocation6 + $0x35]]
    %v1187 = vstv %s1186
    %v1188 = vmul.f32 %v1187, %v1178
    %v1189 = vmul.f32 %v1187, %v1179
    %v1190 = vadd.f32 %v1170, %v1188
    %v1191 = vadd.f32 %v1171, %v1189
    %v1192 = vld [vmem:[#allocation2 + $0x20] sm:$0xff]
    %v1193 = vld [vmem:[#allocation2 + $0x28] sm:$0xff]
    %1194 = vrot.lane.b32.xlu0 %v1192, 17
    %v1195 = vpop.permute.xlu0 %1194
    %1196 = vrot.lane.b32.xlu0 %v1193, 17
    %v1197 = vpop.permute.xlu0 %1196
    %v1198 = vsel %vm71, %v1195, %v1197
    %v1199 = vsel %vm71, %v1197, %v1195
    %v1200 = vmul.f32 %v1199, %v737
    %v1201 = vmul.f32 %v1198, %v741
    %s1202 = sld [smem:[#allocation6 + $0x12]]
    %v1203 = vstv %s1202
    %v1204 = vmul.f32 %v1203, %v1200
    %v1205 = vmul.f32 %v1203, %v1201
    %v1206 = vadd.f32 %v1184, %v1204
    %v1207 = vadd.f32 %v1185, %v1205
    %s1208 = sld [smem:[#allocation6 + $0x36]]
    %v1209 = vstv %s1208
    %v1210 = vmul.f32 %v1209, %v1200
    %v1211 = vmul.f32 %v1209, %v1201
    %v1212 = vadd.f32 %v1190, %v1210
    %v1213 = vadd.f32 %v1191, %v1211
    %1214 = vrot.lane.b32.xlu0 %v1192, 16
    %v1215 = vpop.permute.xlu0 %1214
    %1216 = vrot.lane.b32.xlu0 %v1193, 16
    %v1217 = vpop.permute.xlu0 %1216
    %v1218 = vsel %vm104, %v1215, %v1217
    %v1219 = vsel %vm104, %v1217, %v1215
    %v1220 = vmul.f32 %v1219, %v770
    %v1221 = vmul.f32 %v1218, %v774
    %s1222 = sld [smem:[#allocation6 + $0x13]]
    %v1223 = vstv %s1222
    %v1224 = vmul.f32 %v1223, %v1220
    %v1225 = vmul.f32 %v1223, %v1221
    %v1226 = vadd.f32 %v1206, %v1224
    %v1227 = vadd.f32 %v1207, %v1225
    %s1228 = sld [smem:[#allocation6 + $0x37]]
    %v1229 = vstv %s1228
    %v1230 = vmul.f32 %v1229, %v1220
    %v1231 = vmul.f32 %v1229, %v1221
    %v1232 = vadd.f32 %v1212, %v1230
    %v1233 = vadd.f32 %v1213, %v1231
    %1234 = vrot.lane.b32.xlu0 %v1192, 15
    %v1235 = vpop.permute.xlu0 %1234
    %1236 = vrot.lane.b32.xlu0 %v1193, 15
    %v1237 = vpop.permute.xlu0 %1236
    %v1238 = vsel %vm138, %v1235, %v1237
    %v1239 = vsel %vm138, %v1237, %v1235
    %v1240 = vmul.f32 %v1239, %v803
    %v1241 = vmul.f32 %v1238, %v807
    %s1242 = sld [smem:[#allocation6 + $0x14]]
    %v1243 = vstv %s1242
    %v1244 = vmul.f32 %v1243, %v1240
    %v1245 = vmul.f32 %v1243, %v1241
    %v1246 = vadd.f32 %v1226, %v1244
    %v1247 = vadd.f32 %v1227, %v1245
    %s1248 = sld [smem:[#allocation6 + $0x38]]
    %v1249 = vstv %s1248
    %v1250 = vmul.f32 %v1249, %v1240
    %v1251 = vmul.f32 %v1249, %v1241
    %v1252 = vadd.f32 %v1232, %v1250
    %v1253 = vadd.f32 %v1233, %v1251
    %1254 = vrot.lane.b32.xlu0 %v1192, 1
    %v1255 = vpop.permute.xlu0 %1254
    %1256 = vrot.lane.b32.xlu0 %v1193, 1
    %v1257 = vpop.permute.xlu0 %1256
    %v1258 = vsel %vm172, %v1255, %v1257
    %v1259 = vsel %vm172, %v1257, %v1255
    %v1260 = vmul.f32 %v1259, %v836
    %v1261 = vmul.f32 %v1258, %v840
    %s1262 = sld [smem:[#allocation6 + $0x15]]
    %v1263 = vstv %s1262
    %v1264 = vmul.f32 %v1263, %v1260
    %v1265 = vmul.f32 %v1263, %v1261
    %v1266 = vadd.f32 %v1246, %v1264
    %v1267 = vadd.f32 %v1247, %v1265
    %s1268 = sld [smem:[#allocation6 + $0x39]]
    %v1269 = vstv %s1268
    %v1270 = vmul.f32 %v1269, %v1260
    %v1271 = vmul.f32 %v1269, %v1261
    %v1272 = vadd.f32 %v1252, %v1270
    %v1273 = vadd.f32 %v1253, %v1271
    %v1274 = vmul.f32 %v1192, %v863
    %v1275 = vmul.f32 %v1193, %v867
    %s1276 = sld [smem:[#allocation6 + $0x16]]
    %v1277 = vstv %s1276
    %v1278 = vmul.f32 %v1277, %v1274
    %v1279 = vmul.f32 %v1277, %v1275
    %v1280 = vadd.f32 %v1266, %v1278
    %v1281 = vadd.f32 %v1267, %v1279
    %s1282 = sld [smem:[#allocation6 + $0x3a]]
    %v1283 = vstv %s1282
    %v1284 = vmul.f32 %v1283, %v1274
    %v1285 = vmul.f32 %v1283, %v1275
    %v1286 = vadd.f32 %v1272, %v1284
    %v1287 = vadd.f32 %v1273, %v1285
    %1288 = vrot.lane.b32.xlu0 %v1192, 127
    %v1289 = vpop.permute.xlu0 %1288
    %1290 = vrot.lane.b32.xlu0 %v1193, 127
    %v1291 = vpop.permute.xlu0 %1290
    %v1292 = vsel %vm233, %v1289, %v1291
    %v1293 = vsel %vm233, %v1291, %v1289
    %v1294 = vmul.f32 %v1292, %v896
    %v1295 = vmul.f32 %v1293, %v900
    %s1296 = sld [smem:[#allocation6 + $0x17]]
    %v1297 = vstv %s1296
    %v1298 = vmul.f32 %v1297, %v1294
    %v1299 = vmul.f32 %v1297, %v1295
    %v1300 = vadd.f32 %v1280, %v1298
    %v1301 = vadd.f32 %v1281, %v1299
    %s1302 = sld [smem:[#allocation6 + $0x3b]]
    %v1303 = vstv %s1302
    %v1304 = vmul.f32 %v1303, %v1294
    %v1305 = vmul.f32 %v1303, %v1295
    %v1306 = vadd.f32 %v1286, %v1304
    %v1307 = vadd.f32 %v1287, %v1305
    %1308 = vrot.lane.b32.xlu0 %v1192, 113
    %v1309 = vpop.permute.xlu0 %1308
    %1310 = vrot.lane.b32.xlu0 %v1193, 113
    %v1311 = vpop.permute.xlu0 %1310
    %v1312 = vsel %vm267, %v1309, %v1311
    %v1313 = vsel %vm267, %v1311, %v1309
    %v1314 = vmul.f32 %v1312, %v929
    %v1315 = vmul.f32 %v1313, %v933
    %s1316 = sld [smem:[#allocation6 + $0x18]]
    %v1317 = vstv %s1316
    %v1318 = vmul.f32 %v1317, %v1314
    %v1319 = vmul.f32 %v1317, %v1315
    %v1320 = vadd.f32 %v1300, %v1318
    %v1321 = vadd.f32 %v1301, %v1319
    %s1322 = sld [smem:[#allocation6 + $0x3c]]
    %v1323 = vstv %s1322
    %v1324 = vmul.f32 %v1323, %v1314
    %v1325 = vmul.f32 %v1323, %v1315
    %v1326 = vadd.f32 %v1306, %v1324
    %v1327 = vadd.f32 %v1307, %v1325
    %1328 = vrot.lane.b32.xlu0 %v1192, 112
    %v1329 = vpop.permute.xlu0 %1328
    %1330 = vrot.lane.b32.xlu0 %v1193, 112
    %v1331 = vpop.permute.xlu0 %1330
    %v1332 = vsel %vm301, %v1329, %v1331
    %v1333 = vsel %vm301, %v1331, %v1329
    %v1334 = vmul.f32 %v1332, %v962
    %v1335 = vmul.f32 %v1333, %v966
    %s1336 = sld [smem:[#allocation6 + $0x19]]
    %v1337 = vstv %s1336
    %v1338 = vmul.f32 %v1337, %v1334
    %v1339 = vmul.f32 %v1337, %v1335
    %v1340 = vadd.f32 %v1320, %v1338
    %v1341 = vadd.f32 %v1321, %v1339
    %s1342 = sld [smem:[#allocation6 + $0x3d]]
    %v1343 = vstv %s1342
    %v1344 = vmul.f32 %v1343, %v1334
    %v1345 = vmul.f32 %v1343, %v1335
    %v1346 = vadd.f32 %v1326, %v1344
    %v1347 = vadd.f32 %v1327, %v1345
    %1348 = vrot.lane.b32.xlu0 %v1192, 111
    %v1349 = vpop.permute.xlu0 %1348
    %1350 = vrot.lane.b32.xlu0 %v1193, 111
    %v1351 = vpop.permute.xlu0 %1350
    %v1352 = vsel %vm335, %v1349, %v1351
    %v1353 = vsel %vm335, %v1351, %v1349
    %v1354 = vmul.f32 %v1352, %v995
    %v1355 = vmul.f32 %v1353, %v999
    %s1356 = sld [smem:[#allocation6 + $0x1a]]
    %v1357 = vstv %s1356
    %v1358 = vmul.f32 %v1357, %v1354
    %v1359 = vmul.f32 %v1357, %v1355
    %v1360 = vadd.f32 %v1340, %v1358
    %v1361 = vadd.f32 %v1341, %v1359
    %s1362 = sld [smem:[#allocation6 + $0x3e]]
    %v1363 = vstv %s1362
    %v1364 = vmul.f32 %v1363, %v1354
    %v1365 = vmul.f32 %v1363, %v1355
    %v1366 = vadd.f32 %v1346, %v1364
    %v1367 = vadd.f32 %v1347, %v1365
    %v1368 = vld [vmem:[#allocation2 + $0x30] sm:$0xff]
    %v1369 = vld [vmem:[#allocation2 + $0x38] sm:$0xff]
    %1370 = vrot.lane.b32.xlu0 %v1368, 17
    %v1371 = vpop.permute.xlu0 %1370
    %1372 = vrot.lane.b32.xlu0 %v1369, 17
    %v1373 = vpop.permute.xlu0 %1372
    %v1374 = vsel %vm71, %v1371, %v1373
    %v1375 = vsel %vm71, %v1373, %v1371
    %v1376 = vmul.f32 %v1375, %v737
    %v1377 = vmul.f32 %v1374, %v741
    %s1378 = sld [smem:[#allocation6 + $0x1b]]
    %v1379 = vstv %s1378
    %v1380 = vmul.f32 %v1379, %v1376
    %v1381 = vmul.f32 %v1379, %v1377
    %v1382 = vadd.f32 %v1360, %v1380
    %v1383 = vadd.f32 %v1361, %v1381
    %s1384 = sld [smem:[#allocation6 + $0x3f]]
    %v1385 = vstv %s1384
    %v1386 = vmul.f32 %v1385, %v1376
    %v1387 = vmul.f32 %v1385, %v1377
    %v1388 = vadd.f32 %v1366, %v1386
    %v1389 = vadd.f32 %v1367, %v1387
    %1390 = vrot.lane.b32.xlu0 %v1368, 16
    %v1391 = vpop.permute.xlu0 %1390
    %1392 = vrot.lane.b32.xlu0 %v1369, 16
    %v1393 = vpop.permute.xlu0 %1392
    %v1394 = vsel %vm104, %v1391, %v1393
    %v1395 = vsel %vm104, %v1393, %v1391
    %v1396 = vmul.f32 %v1395, %v770
    %v1397 = vmul.f32 %v1394, %v774
    %s1398 = sld [smem:[#allocation6 + $0x1c]]
    %v1399 = vstv %s1398
    %v1400 = vmul.f32 %v1399, %v1396
    %v1401 = vmul.f32 %v1399, %v1397
    %v1402 = vadd.f32 %v1382, %v1400
    %v1403 = vadd.f32 %v1383, %v1401
    %s1404 = sld [smem:[#allocation6 + $0x40]]
    %v1405 = vstv %s1404
    %v1406 = vmul.f32 %v1405, %v1396
    %v1407 = vmul.f32 %v1405, %v1397
    %v1408 = vadd.f32 %v1388, %v1406
    %v1409 = vadd.f32 %v1389, %v1407
    %1410 = vrot.lane.b32.xlu0 %v1368, 15
    %v1411 = vpop.permute.xlu0 %1410
    %1412 = vrot.lane.b32.xlu0 %v1369, 15
    %v1413 = vpop.permute.xlu0 %1412
    %v1414 = vsel %vm138, %v1411, %v1413
    %v1415 = vsel %vm138, %v1413, %v1411
    %v1416 = vmul.f32 %v1415, %v803
    %v1417 = vmul.f32 %v1414, %v807
    %s1418 = sld [smem:[#allocation6 + $0x1d]]
    %v1419 = vstv %s1418
    %v1420 = vmul.f32 %v1419, %v1416
    %v1421 = vmul.f32 %v1419, %v1417
    %v1422 = vadd.f32 %v1402, %v1420
    %v1423 = vadd.f32 %v1403, %v1421
    %s1424 = sld [smem:[#allocation6 + $0x41]]
    %v1425 = vstv %s1424
    %v1426 = vmul.f32 %v1425, %v1416
    %v1427 = vmul.f32 %v1425, %v1417
    %v1428 = vadd.f32 %v1408, %v1426
    %v1429 = vadd.f32 %v1409, %v1427
    %1430 = vrot.lane.b32.xlu0 %v1368, 1
    %v1431 = vpop.permute.xlu0 %1430
    %1432 = vrot.lane.b32.xlu0 %v1369, 1
    %v1433 = vpop.permute.xlu0 %1432
    %v1434 = vsel %vm172, %v1431, %v1433
    %v1435 = vsel %vm172, %v1433, %v1431
    %v1436 = vmul.f32 %v1435, %v836
    %v1437 = vmul.f32 %v1434, %v840
    %s1438 = sld [smem:[#allocation6 + $0x1e]]
    %v1439 = vstv %s1438
    %v1440 = vmul.f32 %v1439, %v1436
    %v1441 = vmul.f32 %v1439, %v1437
    %v1442 = vadd.f32 %v1422, %v1440
    %v1443 = vadd.f32 %v1423, %v1441
    %s1444 = sld [smem:[#allocation6 + $0x42]]
    %v1445 = vstv %s1444
    %v1446 = vmul.f32 %v1445, %v1436
    %v1447 = vmul.f32 %v1445, %v1437
    %v1448 = vadd.f32 %v1428, %v1446
    %v1449 = vadd.f32 %v1429, %v1447
    %v1450 = vmul.f32 %v1368, %v863
    %v1451 = vmul.f32 %v1369, %v867
    %s1452 = sld [smem:[#allocation6 + $0x1f]]
    %v1453 = vstv %s1452
    %v1454 = vmul.f32 %v1453, %v1450
    %v1455 = vmul.f32 %v1453, %v1451
    %v1456 = vadd.f32 %v1442, %v1454
    %v1457 = vadd.f32 %v1443, %v1455
    %s1458 = sld [smem:[#allocation6 + $0x43]]
    %v1459 = vstv %s1458
    %v1460 = vmul.f32 %v1459, %v1450
    %v1461 = vmul.f32 %v1459, %v1451
    %v1462 = vadd.f32 %v1448, %v1460
    %v1463 = vadd.f32 %v1449, %v1461
    %1464 = vrot.lane.b32.xlu0 %v1368, 127
    %v1465 = vpop.permute.xlu0 %1464
    %1466 = vrot.lane.b32.xlu0 %v1369, 127
    %v1467 = vpop.permute.xlu0 %1466
    %v1468 = vsel %vm233, %v1465, %v1467
    %v1469 = vsel %vm233, %v1467, %v1465
    %v1470 = vmul.f32 %v1468, %v896
    %v1471 = vmul.f32 %v1469, %v900
    %s1472 = sld [smem:[#allocation6 + $0x20]]
    %v1473 = vstv %s1472
    %v1474 = vmul.f32 %v1473, %v1470
    %v1475 = vmul.f32 %v1473, %v1471
    %v1476 = vadd.f32 %v1456, %v1474
    %v1477 = vadd.f32 %v1457, %v1475
    %s1478 = sld [smem:[#allocation6 + $0x44]]
    %v1479 = vstv %s1478
    %v1480 = vmul.f32 %v1479, %v1470
    %v1481 = vmul.f32 %v1479, %v1471
    %v1482 = vadd.f32 %v1462, %v1480
    %v1483 = vadd.f32 %v1463, %v1481
    %1484 = vrot.lane.b32.xlu0 %v1368, 113
    %v1485 = vpop.permute.xlu0 %1484
    %1486 = vrot.lane.b32.xlu0 %v1369, 113
    %v1487 = vpop.permute.xlu0 %1486
    %v1488 = vsel %vm267, %v1485, %v1487
    %v1489 = vsel %vm267, %v1487, %v1485
    %v1490 = vmul.f32 %v1488, %v929
    %v1491 = vmul.f32 %v1489, %v933
    %s1492 = sld [smem:[#allocation6 + $0x21]]
    %v1493 = vstv %s1492
    %v1494 = vmul.f32 %v1493, %v1490
    %v1495 = vmul.f32 %v1493, %v1491
    %v1496 = vadd.f32 %v1476, %v1494
    %v1497 = vadd.f32 %v1477, %v1495
    %s1498 = sld [smem:[#allocation6 + $0x45]]
    %v1499 = vstv %s1498
    %v1500 = vmul.f32 %v1499, %v1490
    %v1501 = vmul.f32 %v1499, %v1491
    %v1502 = vadd.f32 %v1482, %v1500
    %v1503 = vadd.f32 %v1483, %v1501
    %1504 = vrot.lane.b32.xlu0 %v1368, 112
    %v1505 = vpop.permute.xlu0 %1504
    %1506 = vrot.lane.b32.xlu0 %v1369, 112
    %v1507 = vpop.permute.xlu0 %1506
    %v1508 = vsel %vm301, %v1505, %v1507
    %v1509 = vsel %vm301, %v1507, %v1505
    %v1510 = vmul.f32 %v1508, %v962
    %v1511 = vmul.f32 %v1509, %v966
    %s1512 = sld [smem:[#allocation6 + $0x22]]
    %v1513 = vstv %s1512
    %v1514 = vmul.f32 %v1513, %v1510
    %v1515 = vmul.f32 %v1513, %v1511
    %v1516 = vadd.f32 %v1496, %v1514
    %v1517 = vadd.f32 %v1497, %v1515
    %s1518 = sld [smem:[#allocation6 + $0x46]]
    %v1519 = vstv %s1518
    %v1520 = vmul.f32 %v1519, %v1510
    %v1521 = vmul.f32 %v1519, %v1511
    %v1522 = vadd.f32 %v1502, %v1520
    %v1523 = vadd.f32 %v1503, %v1521
    %1524 = vrot.lane.b32.xlu0 %v1368, 111
    %v1525 = vpop.permute.xlu0 %1524
    %1526 = vrot.lane.b32.xlu0 %v1369, 111
    %v1527 = vpop.permute.xlu0 %1526
    %v1528 = vsel %vm335, %v1525, %v1527
    %v1529 = vsel %vm335, %v1527, %v1525
    %v1530 = vmul.f32 %v1528, %v995
    %v1531 = vmul.f32 %v1529, %v999
    %s1532 = sld [smem:[#allocation6 + $0x23]]
    %v1533 = vstv %s1532
    %v1534 = vmul.f32 %v1533, %v1530
    %v1535 = vmul.f32 %v1533, %v1531
    %v1536 = vadd.f32 %v1516, %v1534
    %v1537 = vadd.f32 %v1517, %v1535
    %s1538 = sld [smem:[#allocation6 + $0x47]]
    %v1539 = vstv %s1538
    %v1540 = vmul.f32 %v1539, %v1530
    %v1541 = vmul.f32 %v1539, %v1531
    %v1542 = vadd.f32 %v1522, %v1540
    %v1543 = vadd.f32 %v1523, %v1541
    %v1544 = vld [vmem:[%s6] ss:$8 sm:$0x3]
    %v1546 = vlaneseq
    %v1547 = vshrl.u32 %v1546, 7
    %v1548 = vsub.s32 0, %v1547
    %v1549 = vrot.slane %v1544, %v1548
    %v1550 = vlaneseq
    %v1551 = vshrl.u32 %v1550, 7
    %v1552 = vsub.s32 1, %v1551
    %v1553 = vrot.slane %v1544, %v1552
    %v1556 = vadd.f32 %v1536, %v1549
    %v1557 = vadd.f32 %v1537, %v1553
    %v1558 = vmax.f32 %v1556, 0.0
    %v1559 = vmax.f32 %v1557, 0.0
    %1560 = vst [vmem:[#allocation3] sm:$0xff] %v1558
    %1561 = vst [vmem:[#allocation3 + $0x8] sm:$0xff] %v1559
    %s1562 = scalar_lea.vmem %s6, 1
    %v1563 = vld [vmem:[%s1562] ss:$8 sm:$0x3]
    %v1565 = vlaneseq
    %v1566 = vshrl.u32 %v1565, 7
    %v1567 = vsub.s32 0, %v1566
    %v1568 = vrot.slane %v1563, %v1567
    %v1569 = vlaneseq
    %v1570 = vshrl.u32 %v1569, 7
    %v1571 = vsub.s32 1, %v1570
    %v1572 = vrot.slane %v1563, %v1571
    %v1575 = vadd.f32 %v1542, %v1568
    %v1576 = vadd.f32 %v1543, %v1572
    %v1577 = vmax.f32 %v1575, 0.0
    %v1578 = vmax.f32 %v1576, 0.0
    %1579 = vst [vmem:[#allocation3 + $0x10] sm:$0xff] %v1577
    %1580 = vst [vmem:[#allocation3 + $0x18] sm:$0xff] %v1578
    %v1581 = vld [vmem:[#allocation2] sm:$0xff]
    %v1582 = vld [vmem:[#allocation2 + $0x8] sm:$0xff]
    %1583 = vrot.lane.b32.xlu0 %v1581, 17
    %v1584 = vpop.permute.xlu0 %1583
    %1585 = vrot.lane.b32.xlu0 %v1582, 17
    %v1586 = vpop.permute.xlu0 %1585
    %v1587 = vsel %vm71, %v1584, %v1586
    %v1588 = vsel %vm71, %v1586, %v1584
    %v1589 = vld [vmem:[%s2] ss:$8 sm:$0x3]
    %v1591 = vlaneseq
    %v1592 = vshrl.u32 %v1591, 7
    %v1593 = vsub.s32 0, %v1592
    %v1594 = vrot.slane %v1589, %v1593
    %v1595 = vlaneseq
    %v1596 = vshrl.u32 %v1595, 7
    %v1597 = vsub.s32 1, %v1596
    %v1598 = vrot.slane %v1589, %v1597
    %v1601 = vmul.f32 %v1588, %v1594
    %v1602 = vmul.f32 %v1587, %v1598
    %s1603 = sld [smem:[#allocation6 + $0x48]]
    %v1604 = vstv %s1603
    %v1605 = vmul.f32 %v1604, %v1601
    %v1606 = vmul.f32 %v1604, %v1602
    %v1607 = vadd.f32 %v1605, 0.0
    %v1608 = vadd.f32 %v1606, 0.0
    %s1609 = sld [smem:[#allocation6 + $0x6c]]
    %v1610 = vstv %s1609
    %v1611 = vmul.f32 %v1610, %v1601
    %v1612 = vmul.f32 %v1610, %v1602
    %v1613 = vadd.f32 %v1611, 0.0
    %v1614 = vadd.f32 %v1612, 0.0
    %1615 = vrot.lane.b32.xlu0 %v1581, 16
    %v1616 = vpop.permute.xlu0 %1615
    %1617 = vrot.lane.b32.xlu0 %v1582, 16
    %v1618 = vpop.permute.xlu0 %1617
    %v1619 = vsel %vm104, %v1616, %v1618
    %v1620 = vsel %vm104, %v1618, %v1616
    %v1621 = vld [vmem:[%s764] ss:$8 sm:$0x3]
    %v1623 = vlaneseq
    %v1624 = vshrl.u32 %v1623, 7
    %v1625 = vsub.s32 0, %v1624
    %v1626 = vrot.slane %v1621, %v1625
    %v1627 = vlaneseq
    %v1628 = vshrl.u32 %v1627, 7
    %v1629 = vsub.s32 1, %v1628
    %v1630 = vrot.slane %v1621, %v1629
    %v1633 = vmul.f32 %v1620, %v1626
    %v1634 = vmul.f32 %v1619, %v1630
    %s1635 = sld [smem:[#allocation6 + $0x49]]
    %v1636 = vstv %s1635
    %v1637 = vmul.f32 %v1636, %v1633
    %v1638 = vmul.f32 %v1636, %v1634
    %v1639 = vadd.f32 %v1607, %v1637
    %v1640 = vadd.f32 %v1608, %v1638
    %s1641 = sld [smem:[#allocation6 + $0x6d]]
    %v1642 = vstv %s1641
    %v1643 = vmul.f32 %v1642, %v1633
    %v1644 = vmul.f32 %v1642, %v1634
    %v1645 = vadd.f32 %v1613, %v1643
    %v1646 = vadd.f32 %v1614, %v1644
    %1647 = vrot.lane.b32.xlu0 %v1581, 15
    %v1648 = vpop.permute.xlu0 %1647
    %1649 = vrot.lane.b32.xlu0 %v1582, 15
    %v1650 = vpop.permute.xlu0 %1649
    %v1651 = vsel %vm138, %v1648, %v1650
    %v1652 = vsel %vm138, %v1650, %v1648
    %v1653 = vld [vmem:[%s797] ss:$8 sm:$0x3]
    %v1655 = vlaneseq
    %v1656 = vshrl.u32 %v1655, 7
    %v1657 = vsub.s32 0, %v1656
    %v1658 = vrot.slane %v1653, %v1657
    %v1659 = vlaneseq
    %v1660 = vshrl.u32 %v1659, 7
    %v1661 = vsub.s32 1, %v1660
    %v1662 = vrot.slane %v1653, %v1661
    %v1665 = vmul.f32 %v1652, %v1658
    %v1666 = vmul.f32 %v1651, %v1662
    %s1667 = sld [smem:[#allocation6 + $0x4a]]
    %v1668 = vstv %s1667
    %v1669 = vmul.f32 %v1668, %v1665
    %v1670 = vmul.f32 %v1668, %v1666
    %v1671 = vadd.f32 %v1639, %v1669
    %v1672 = vadd.f32 %v1640, %v1670
    %s1673 = sld [smem:[#allocation6 + $0x6e]]
    %v1674 = vstv %s1673
    %v1675 = vmul.f32 %v1674, %v1665
    %v1676 = vmul.f32 %v1674, %v1666
    %v1677 = vadd.f32 %v1645, %v1675
    %v1678 = vadd.f32 %v1646, %v1676
    %1679 = vrot.lane.b32.xlu0 %v1581, 1
    %v1680 = vpop.permute.xlu0 %1679
    %1681 = vrot.lane.b32.xlu0 %v1582, 1
    %v1682 = vpop.permute.xlu0 %1681
    %v1683 = vsel %vm172, %v1680, %v1682
    %v1684 = vsel %vm172, %v1682, %v1680
    %v1685 = vld [vmem:[%s830] ss:$8 sm:$0x3]
    %v1687 = vlaneseq
    %v1688 = vshrl.u32 %v1687, 7
    %v1689 = vsub.s32 0, %v1688
    %v1690 = vrot.slane %v1685, %v1689
    %v1691 = vlaneseq
    %v1692 = vshrl.u32 %v1691, 7
    %v1693 = vsub.s32 1, %v1692
    %v1694 = vrot.slane %v1685, %v1693
    %v1697 = vmul.f32 %v1684, %v1690
    %v1698 = vmul.f32 %v1683, %v1694
    %s1699 = sld [smem:[#allocation6 + $0x4b]]
    %v1700 = vstv %s1699
    %v1701 = vmul.f32 %v1700, %v1697
    %v1702 = vmul.f32 %v1700, %v1698
    %v1703 = vadd.f32 %v1671, %v1701
    %v1704 = vadd.f32 %v1672, %v1702
    %s1705 = sld [smem:[#allocation6 + $0x6f]]
    %v1706 = vstv %s1705
    %v1707 = vmul.f32 %v1706, %v1697
    %v1708 = vmul.f32 %v1706, %v1698
    %v1709 = vadd.f32 %v1677, %v1707
    %v1710 = vadd.f32 %v1678, %v1708
    %v1711 = vld [vmem:[%s857] ss:$8 sm:$0x3]
    %v1713 = vlaneseq
    %v1714 = vshrl.u32 %v1713, 7
    %v1715 = vsub.s32 0, %v1714
    %v1716 = vrot.slane %v1711, %v1715
    %v1717 = vlaneseq
    %v1718 = vshrl.u32 %v1717, 7
    %v1719 = vsub.s32 1, %v1718
    %v1720 = vrot.slane %v1711, %v1719
    %v1723 = vmul.f32 %v1581, %v1716
    %v1724 = vmul.f32 %v1582, %v1720
    %s1725 = sld [smem:[#allocation6 + $0x4c]]
    %v1726 = vstv %s1725
    %v1727 = vmul.f32 %v1726, %v1723
    %v1728 = vmul.f32 %v1726, %v1724
    %v1729 = vadd.f32 %v1703, %v1727
    %v1730 = vadd.f32 %v1704, %v1728
    %s1731 = sld [smem:[#allocation6 + $0x70]]
    %v1732 = vstv %s1731
    %v1733 = vmul.f32 %v1732, %v1723
    %v1734 = vmul.f32 %v1732, %v1724
    %v1735 = vadd.f32 %v1709, %v1733
    %v1736 = vadd.f32 %v1710, %v1734
    %1737 = vrot.lane.b32.xlu0 %v1581, 127
    %v1738 = vpop.permute.xlu0 %1737
    %1739 = vrot.lane.b32.xlu0 %v1582, 127
    %v1740 = vpop.permute.xlu0 %1739
    %v1741 = vsel %vm233, %v1738, %v1740
    %v1742 = vsel %vm233, %v1740, %v1738
    %v1743 = vld [vmem:[%s890] ss:$8 sm:$0x3]
    %v1745 = vlaneseq
    %v1746 = vshrl.u32 %v1745, 7
    %v1747 = vsub.s32 0, %v1746
    %v1748 = vrot.slane %v1743, %v1747
    %v1749 = vlaneseq
    %v1750 = vshrl.u32 %v1749, 7
    %v1751 = vsub.s32 1, %v1750
    %v1752 = vrot.slane %v1743, %v1751
    %v1755 = vmul.f32 %v1741, %v1748
    %v1756 = vmul.f32 %v1742, %v1752
    %s1757 = sld [smem:[#allocation6 + $0x4d]]
    %v1758 = vstv %s1757
    %v1759 = vmul.f32 %v1758, %v1755
    %v1760 = vmul.f32 %v1758, %v1756
    %v1761 = vadd.f32 %v1729, %v1759
    %v1762 = vadd.f32 %v1730, %v1760
    %s1763 = sld [smem:[#allocation6 + $0x71]]
    %v1764 = vstv %s1763
    %v1765 = vmul.f32 %v1764, %v1755
    %v1766 = vmul.f32 %v1764, %v1756
    %v1767 = vadd.f32 %v1735, %v1765
    %v1768 = vadd.f32 %v1736, %v1766
    %1769 = vrot.lane.b32.xlu0 %v1581, 113
    %v1770 = vpop.permute.xlu0 %1769
    %1771 = vrot.lane.b32.xlu0 %v1582, 113
    %v1772 = vpop.permute.xlu0 %1771
    %v1773 = vsel %vm267, %v1770, %v1772
    %v1774 = vsel %vm267, %v1772, %v1770
    %v1775 = vld [vmem:[%s923] ss:$8 sm:$0x3]
    %v1777 = vlaneseq
    %v1778 = vshrl.u32 %v1777, 7
    %v1779 = vsub.s32 0, %v1778
    %v1780 = vrot.slane %v1775, %v1779
    %v1781 = vlaneseq
    %v1782 = vshrl.u32 %v1781, 7
    %v1783 = vsub.s32 1, %v1782
    %v1784 = vrot.slane %v1775, %v1783
    %v1787 = vmul.f32 %v1773, %v1780
    %v1788 = vmul.f32 %v1774, %v1784
    %s1789 = sld [smem:[#allocation6 + $0x4e]]
    %v1790 = vstv %s1789
    %v1791 = vmul.f32 %v1790, %v1787
    %v1792 = vmul.f32 %v1790, %v1788
    %v1793 = vadd.f32 %v1761, %v1791
    %v1794 = vadd.f32 %v1762, %v1792
    %s1795 = sld [smem:[#allocation6 + $0x72]]
    %v1796 = vstv %s1795
    %v1797 = vmul.f32 %v1796, %v1787
    %v1798 = vmul.f32 %v1796, %v1788
    %v1799 = vadd.f32 %v1767, %v1797
    %v1800 = vadd.f32 %v1768, %v1798
    %1801 = vrot.lane.b32.xlu0 %v1581, 112
    %v1802 = vpop.permute.xlu0 %1801
    %1803 = vrot.lane.b32.xlu0 %v1582, 112
    %v1804 = vpop.permute.xlu0 %1803
    %v1805 = vsel %vm301, %v1802, %v1804
    %v1806 = vsel %vm301, %v1804, %v1802
    %v1807 = vld [vmem:[%s956] ss:$8 sm:$0x3]
    %v1809 = vlaneseq
    %v1810 = vshrl.u32 %v1809, 7
    %v1811 = vsub.s32 0, %v1810
    %v1812 = vrot.slane %v1807, %v1811
    %v1813 = vlaneseq
    %v1814 = vshrl.u32 %v1813, 7
    %v1815 = vsub.s32 1, %v1814
    %v1816 = vrot.slane %v1807, %v1815
    %v1819 = vmul.f32 %v1805, %v1812
    %v1820 = vmul.f32 %v1806, %v1816
    %s1821 = sld [smem:[#allocation6 + $0x4f]]
    %v1822 = vstv %s1821
    %v1823 = vmul.f32 %v1822, %v1819
    %v1824 = vmul.f32 %v1822, %v1820
    %v1825 = vadd.f32 %v1793, %v1823
    %v1826 = vadd.f32 %v1794, %v1824
    %s1827 = sld [smem:[#allocation6 + $0x73]]
    %v1828 = vstv %s1827
    %v1829 = vmul.f32 %v1828, %v1819
    %v1830 = vmul.f32 %v1828, %v1820
    %v1831 = vadd.f32 %v1799, %v1829
    %v1832 = vadd.f32 %v1800, %v1830
    %1833 = vrot.lane.b32.xlu0 %v1581, 111
    %v1834 = vpop.permute.xlu0 %1833
    %1835 = vrot.lane.b32.xlu0 %v1582, 111
    %v1836 = vpop.permute.xlu0 %1835
    %v1837 = vsel %vm335, %v1834, %v1836
    %v1838 = vsel %vm335, %v1836, %v1834
    %v1839 = vld [vmem:[%s989] ss:$8 sm:$0x3]
    %v1841 = vlaneseq
    %v1842 = vshrl.u32 %v1841, 7
    %v1843 = vsub.s32 0, %v1842
    %v1844 = vrot.slane %v1839, %v1843
    %v1845 = vlaneseq
    %v1846 = vshrl.u32 %v1845, 7
    %v1847 = vsub.s32 1, %v1846
    %v1848 = vrot.slane %v1839, %v1847
    %v1851 = vmul.f32 %v1837, %v1844
    %v1852 = vmul.f32 %v1838, %v1848
    %s1853 = sld [smem:[#allocation6 + $0x50]]
    %v1854 = vstv %s1853
    %v1855 = vmul.f32 %v1854, %v1851
    %v1856 = vmul.f32 %v1854, %v1852
    %v1857 = vadd.f32 %v1825, %v1855
    %v1858 = vadd.f32 %v1826, %v1856
    %s1859 = sld [smem:[#allocation6 + $0x74]]
    %v1860 = vstv %s1859
    %v1861 = vmul.f32 %v1860, %v1851
    %v1862 = vmul.f32 %v1860, %v1852
    %v1863 = vadd.f32 %v1831, %v1861
    %v1864 = vadd.f32 %v1832, %v1862
    %v1865 = vld [vmem:[#allocation2 + $0x10] sm:$0xff]
    %v1866 = vld [vmem:[#allocation2 + $0x18] sm:$0xff]
    %1867 = vrot.lane.b32.xlu0 %v1865, 17
    %v1868 = vpop.permute.xlu0 %1867
    %1869 = vrot.lane.b32.xlu0 %v1866, 17
    %v1870 = vpop.permute.xlu0 %1869
    %v1871 = vsel %vm71, %v1868, %v1870
    %v1872 = vsel %vm71, %v1870, %v1868
    %v1873 = vmul.f32 %v1872, %v1594
    %v1874 = vmul.f32 %v1871, %v1598
    %s1875 = sld [smem:[#allocation6 + $0x51]]
    %v1876 = vstv %s1875
    %v1877 = vmul.f32 %v1876, %v1873
    %v1878 = vmul.f32 %v1876, %v1874
    %v1879 = vadd.f32 %v1857, %v1877
    %v1880 = vadd.f32 %v1858, %v1878
    %s1881 = sld [smem:[#allocation6 + $0x75]]
    %v1882 = vstv %s1881
    %v1883 = vmul.f32 %v1882, %v1873
    %v1884 = vmul.f32 %v1882, %v1874
    %v1885 = vadd.f32 %v1863, %v1883
    %v1886 = vadd.f32 %v1864, %v1884
    %1887 = vrot.lane.b32.xlu0 %v1865, 16
    %v1888 = vpop.permute.xlu0 %1887
    %1889 = vrot.lane.b32.xlu0 %v1866, 16
    %v1890 = vpop.permute.xlu0 %1889
    %v1891 = vsel %vm104, %v1888, %v1890
    %v1892 = vsel %vm104, %v1890, %v1888
    %v1893 = vmul.f32 %v1892, %v1626
    %v1894 = vmul.f32 %v1891, %v1630
    %s1895 = sld [smem:[#allocation6 + $0x52]]
    %v1896 = vstv %s1895
    %v1897 = vmul.f32 %v1896, %v1893
    %v1898 = vmul.f32 %v1896, %v1894
    %v1899 = vadd.f32 %v1879, %v1897
    %v1900 = vadd.f32 %v1880, %v1898
    %s1901 = sld [smem:[#allocation6 + $0x76]]
    %v1902 = vstv %s1901
    %v1903 = vmul.f32 %v1902, %v1893
    %v1904 = vmul.f32 %v1902, %v1894
    %v1905 = vadd.f32 %v1885, %v1903
    %v1906 = vadd.f32 %v1886, %v1904
    %1907 = vrot.lane.b32.xlu0 %v1865, 15
    %v1908 = vpop.permute.xlu0 %1907
    %1909 = vrot.lane.b32.xlu0 %v1866, 15
    %v1910 = vpop.permute.xlu0 %1909
    %v1911 = vsel %vm138, %v1908, %v1910
    %v1912 = vsel %vm138, %v1910, %v1908
    %v1913 = vmul.f32 %v1912, %v1658
    %v1914 = vmul.f32 %v1911, %v1662
    %s1915 = sld [smem:[#allocation6 + $0x53]]
    %v1916 = vstv %s1915
    %v1917 = vmul.f32 %v1916, %v1913
    %v1918 = vmul.f32 %v1916, %v1914
    %v1919 = vadd.f32 %v1899, %v1917
    %v1920 = vadd.f32 %v1900, %v1918
    %s1921 = sld [smem:[#allocation6 + $0x77]]
    %v1922 = vstv %s1921
    %v1923 = vmul.f32 %v1922, %v1913
    %v1924 = vmul.f32 %v1922, %v1914
    %v1925 = vadd.f32 %v1905, %v1923
    %v1926 = vadd.f32 %v1906, %v1924
    %1927 = vrot.lane.b32.xlu0 %v1865, 1
    %v1928 = vpop.permute.xlu0 %1927
    %1929 = vrot.lane.b32.xlu0 %v1866, 1
    %v1930 = vpop.permute.xlu0 %1929
    %v1931 = vsel %vm172, %v1928, %v1930
    %v1932 = vsel %vm172, %v1930, %v1928
    %v1933 = vmul.f32 %v1932, %v1690
    %v1934 = vmul.f32 %v1931, %v1694
    %s1935 = sld [smem:[#allocation6 + $0x54]]
    %v1936 = vstv %s1935
    %v1937 = vmul.f32 %v1936, %v1933
    %v1938 = vmul.f32 %v1936, %v1934
    %v1939 = vadd.f32 %v1919, %v1937
    %v1940 = vadd.f32 %v1920, %v1938
    %s1941 = sld [smem:[#allocation6 + $0x78]]
    %v1942 = vstv %s1941
    %v1943 = vmul.f32 %v1942, %v1933
    %v1944 = vmul.f32 %v1942, %v1934
    %v1945 = vadd.f32 %v1925, %v1943
    %v1946 = vadd.f32 %v1926, %v1944
    %v1947 = vmul.f32 %v1865, %v1716
    %v1948 = vmul.f32 %v1866, %v1720
    %s1949 = sld [smem:[#allocation6 + $0x55]]
    %v1950 = vstv %s1949
    %v1951 = vmul.f32 %v1950, %v1947
    %v1952 = vmul.f32 %v1950, %v1948
    %v1953 = vadd.f32 %v1939, %v1951
    %v1954 = vadd.f32 %v1940, %v1952
    %s1955 = sld [smem:[#allocation6 + $0x79]]
    %v1956 = vstv %s1955
    %v1957 = vmul.f32 %v1956, %v1947
    %v1958 = vmul.f32 %v1956, %v1948
    %v1959 = vadd.f32 %v1945, %v1957
    %v1960 = vadd.f32 %v1946, %v1958
    %1961 = vrot.lane.b32.xlu0 %v1865, 127
    %v1962 = vpop.permute.xlu0 %1961
    %1963 = vrot.lane.b32.xlu0 %v1866, 127
    %v1964 = vpop.permute.xlu0 %1963
    %v1965 = vsel %vm233, %v1962, %v1964
    %v1966 = vsel %vm233, %v1964, %v1962
    %v1967 = vmul.f32 %v1965, %v1748
    %v1968 = vmul.f32 %v1966, %v1752
    %s1969 = sld [smem:[#allocation6 + $0x56]]
    %v1970 = vstv %s1969
    %v1971 = vmul.f32 %v1970, %v1967
    %v1972 = vmul.f32 %v1970, %v1968
    %v1973 = vadd.f32 %v1953, %v1971
    %v1974 = vadd.f32 %v1954, %v1972
    %s1975 = sld [smem:[#allocation6 + $0x7a]]
    %v1976 = vstv %s1975
    %v1977 = vmul.f32 %v1976, %v1967
    %v1978 = vmul.f32 %v1976, %v1968
    %v1979 = vadd.f32 %v1959, %v1977
    %v1980 = vadd.f32 %v1960, %v1978
    %1981 = vrot.lane.b32.xlu0 %v1865, 113
    %v1982 = vpop.permute.xlu0 %1981
    %1983 = vrot.lane.b32.xlu0 %v1866, 113
    %v1984 = vpop.permute.xlu0 %1983
    %v1985 = vsel %vm267, %v1982, %v1984
    %v1986 = vsel %vm267, %v1984, %v1982
    %v1987 = vmul.f32 %v1985, %v1780
    %v1988 = vmul.f32 %v1986, %v1784
    %s1989 = sld [smem:[#allocation6 + $0x57]]
    %v1990 = vstv %s1989
    %v1991 = vmul.f32 %v1990, %v1987
    %v1992 = vmul.f32 %v1990, %v1988
    %v1993 = vadd.f32 %v1973, %v1991
    %v1994 = vadd.f32 %v1974, %v1992
    %s1995 = sld [smem:[#allocation6 + $0x7b]]
    %v1996 = vstv %s1995
    %v1997 = vmul.f32 %v1996, %v1987
    %v1998 = vmul.f32 %v1996, %v1988
    %v1999 = vadd.f32 %v1979, %v1997
    %v2000 = vadd.f32 %v1980, %v1998
    %2001 = vrot.lane.b32.xlu0 %v1865, 112
    %v2002 = vpop.permute.xlu0 %2001
    %2003 = vrot.lane.b32.xlu0 %v1866, 112
    %v2004 = vpop.permute.xlu0 %2003
    %v2005 = vsel %vm301, %v2002, %v2004
    %v2006 = vsel %vm301, %v2004, %v2002
    %v2007 = vmul.f32 %v2005, %v1812
    %v2008 = vmul.f32 %v2006, %v1816
    %s2009 = sld [smem:[#allocation6 + $0x58]]
    %v2010 = vstv %s2009
    %v2011 = vmul.f32 %v2010, %v2007
    %v2012 = vmul.f32 %v2010, %v2008
    %v2013 = vadd.f32 %v1993, %v2011
    %v2014 = vadd.f32 %v1994, %v2012
    %s2015 = sld [smem:[#allocation6 + $0x7c]]
    %v2016 = vstv %s2015
    %v2017 = vmul.f32 %v2016, %v2007
    %v2018 = vmul.f32 %v2016, %v2008
    %v2019 = vadd.f32 %v1999, %v2017
    %v2020 = vadd.f32 %v2000, %v2018
    %2021 = vrot.lane.b32.xlu0 %v1865, 111
    %v2022 = vpop.permute.xlu0 %2021
    %2023 = vrot.lane.b32.xlu0 %v1866, 111
    %v2024 = vpop.permute.xlu0 %2023
    %v2025 = vsel %vm335, %v2022, %v2024
    %v2026 = vsel %vm335, %v2024, %v2022
    %v2027 = vmul.f32 %v2025, %v1844
    %v2028 = vmul.f32 %v2026, %v1848
    %s2029 = sld [smem:[#allocation6 + $0x59]]
    %v2030 = vstv %s2029
    %v2031 = vmul.f32 %v2030, %v2027
    %v2032 = vmul.f32 %v2030, %v2028
    %v2033 = vadd.f32 %v2013, %v2031
    %v2034 = vadd.f32 %v2014, %v2032
    %s2035 = sld [smem:[#allocation6 + $0x7d]]
    %v2036 = vstv %s2035
    %v2037 = vmul.f32 %v2036, %v2027
    %v2038 = vmul.f32 %v2036, %v2028
    %v2039 = vadd.f32 %v2019, %v2037
    %v2040 = vadd.f32 %v2020, %v2038
    %v2041 = vld [vmem:[#allocation2 + $0x20] sm:$0xff]
    %v2042 = vld [vmem:[#allocation2 + $0x28] sm:$0xff]
    %2043 = vrot.lane.b32.xlu0 %v2041, 17
    %v2044 = vpop.permute.xlu0 %2043
    %2045 = vrot.lane.b32.xlu0 %v2042, 17
    %v2046 = vpop.permute.xlu0 %2045
    %v2047 = vsel %vm71, %v2044, %v2046
    %v2048 = vsel %vm71, %v2046, %v2044
    %v2049 = vmul.f32 %v2048, %v1594
    %v2050 = vmul.f32 %v2047, %v1598
    %s2051 = sld [smem:[#allocation6 + $0x5a]]
    %v2052 = vstv %s2051
    %v2053 = vmul.f32 %v2052, %v2049
    %v2054 = vmul.f32 %v2052, %v2050
    %v2055 = vadd.f32 %v2033, %v2053
    %v2056 = vadd.f32 %v2034, %v2054
    %s2057 = sld [smem:[#allocation6 + $0x7e]]
    %v2058 = vstv %s2057
    %v2059 = vmul.f32 %v2058, %v2049
    %v2060 = vmul.f32 %v2058, %v2050
    %v2061 = vadd.f32 %v2039, %v2059
    %v2062 = vadd.f32 %v2040, %v2060
    %2063 = vrot.lane.b32.xlu0 %v2041, 16
    %v2064 = vpop.permute.xlu0 %2063
    %2065 = vrot.lane.b32.xlu0 %v2042, 16
    %v2066 = vpop.permute.xlu0 %2065
    %v2067 = vsel %vm104, %v2064, %v2066
    %v2068 = vsel %vm104, %v2066, %v2064
    %v2069 = vmul.f32 %v2068, %v1626
    %v2070 = vmul.f32 %v2067, %v1630
    %s2071 = sld [smem:[#allocation6 + $0x5b]]
    %v2072 = vstv %s2071
    %v2073 = vmul.f32 %v2072, %v2069
    %v2074 = vmul.f32 %v2072, %v2070
    %v2075 = vadd.f32 %v2055, %v2073
    %v2076 = vadd.f32 %v2056, %v2074
    %s2077 = sld [smem:[#allocation6 + $0x7f]]
    %v2078 = vstv %s2077
    %v2079 = vmul.f32 %v2078, %v2069
    %v2080 = vmul.f32 %v2078, %v2070
    %v2081 = vadd.f32 %v2061, %v2079
    %v2082 = vadd.f32 %v2062, %v2080
    %2083 = vrot.lane.b32.xlu0 %v2041, 15
    %v2084 = vpop.permute.xlu0 %2083
    %2085 = vrot.lane.b32.xlu0 %v2042, 15
    %v2086 = vpop.permute.xlu0 %2085
    %v2087 = vsel %vm138, %v2084, %v2086
    %v2088 = vsel %vm138, %v2086, %v2084
    %v2089 = vmul.f32 %v2088, %v1658
    %v2090 = vmul.f32 %v2087, %v1662
    %s2091 = sld [smem:[#allocation6 + $0x5c]]
    %v2092 = vstv %s2091
    %v2093 = vmul.f32 %v2092, %v2089
    %v2094 = vmul.f32 %v2092, %v2090
    %v2095 = vadd.f32 %v2075, %v2093
    %v2096 = vadd.f32 %v2076, %v2094
    %s2097 = sld [smem:[#allocation6 + $0x80]]
    %v2098 = vstv %s2097
    %v2099 = vmul.f32 %v2098, %v2089
    %v2100 = vmul.f32 %v2098, %v2090
    %v2101 = vadd.f32 %v2081, %v2099
    %v2102 = vadd.f32 %v2082, %v2100
    %2103 = vrot.lane.b32.xlu0 %v2041, 1
    %v2104 = vpop.permute.xlu0 %2103
    %2105 = vrot.lane.b32.xlu0 %v2042, 1
    %v2106 = vpop.permute.xlu0 %2105
    %v2107 = vsel %vm172, %v2104, %v2106
    %v2108 = vsel %vm172, %v2106, %v2104
    %v2109 = vmul.f32 %v2108, %v1690
    %v2110 = vmul.f32 %v2107, %v1694
    %s2111 = sld [smem:[#allocation6 + $0x5d]]
    %v2112 = vstv %s2111
    %v2113 = vmul.f32 %v2112, %v2109
    %v2114 = vmul.f32 %v2112, %v2110
    %v2115 = vadd.f32 %v2095, %v2113
    %v2116 = vadd.f32 %v2096, %v2114
    %s2117 = sld [smem:[#allocation6 + $0x81]]
    %v2118 = vstv %s2117
    %v2119 = vmul.f32 %v2118, %v2109
    %v2120 = vmul.f32 %v2118, %v2110
    %v2121 = vadd.f32 %v2101, %v2119
    %v2122 = vadd.f32 %v2102, %v2120
    %v2123 = vmul.f32 %v2041, %v1716
    %v2124 = vmul.f32 %v2042, %v1720
    %s2125 = sld [smem:[#allocation6 + $0x5e]]
    %v2126 = vstv %s2125
    %v2127 = vmul.f32 %v2126, %v2123
    %v2128 = vmul.f32 %v2126, %v2124
    %v2129 = vadd.f32 %v2115, %v2127
    %v2130 = vadd.f32 %v2116, %v2128
    %s2131 = sld [smem:[#allocation6 + $0x82]]
    %v2132 = vstv %s2131
    %v2133 = vmul.f32 %v2132, %v2123
    %v2134 = vmul.f32 %v2132, %v2124
    %v2135 = vadd.f32 %v2121, %v2133
    %v2136 = vadd.f32 %v2122, %v2134
    %2137 = vrot.lane.b32.xlu0 %v2041, 127
    %v2138 = vpop.permute.xlu0 %2137
    %2139 = vrot.lane.b32.xlu0 %v2042, 127
    %v2140 = vpop.permute.xlu0 %2139
    %v2141 = vsel %vm233, %v2138, %v2140
    %v2142 = vsel %vm233, %v2140, %v2138
    %v2143 = vmul.f32 %v2141, %v1748
    %v2144 = vmul.f32 %v2142, %v1752
    %s2145 = sld [smem:[#allocation6 + $0x5f]]
    %v2146 = vstv %s2145
    %v2147 = vmul.f32 %v2146, %v2143
    %v2148 = vmul.f32 %v2146, %v2144
    %v2149 = vadd.f32 %v2129, %v2147
    %v2150 = vadd.f32 %v2130, %v2148
    %s2151 = sld [smem:[#allocation6 + $0x83]]
    %v2152 = vstv %s2151
    %v2153 = vmul.f32 %v2152, %v2143
    %v2154 = vmul.f32 %v2152, %v2144
    %v2155 = vadd.f32 %v2135, %v2153
    %v2156 = vadd.f32 %v2136, %v2154
    %2157 = vrot.lane.b32.xlu0 %v2041, 113
    %v2158 = vpop.permute.xlu0 %2157
    %2159 = vrot.lane.b32.xlu0 %v2042, 113
    %v2160 = vpop.permute.xlu0 %2159
    %v2161 = vsel %vm267, %v2158, %v2160
    %v2162 = vsel %vm267, %v2160, %v2158
    %v2163 = vmul.f32 %v2161, %v1780
    %v2164 = vmul.f32 %v2162, %v1784
    %s2165 = sld [smem:[#allocation6 + $0x60]]
    %v2166 = vstv %s2165
    %v2167 = vmul.f32 %v2166, %v2163
    %v2168 = vmul.f32 %v2166, %v2164
    %v2169 = vadd.f32 %v2149, %v2167
    %v2170 = vadd.f32 %v2150, %v2168
    %s2171 = sld [smem:[#allocation6 + $0x84]]
    %v2172 = vstv %s2171
    %v2173 = vmul.f32 %v2172, %v2163
    %v2174 = vmul.f32 %v2172, %v2164
    %v2175 = vadd.f32 %v2155, %v2173
    %v2176 = vadd.f32 %v2156, %v2174
    %2177 = vrot.lane.b32.xlu0 %v2041, 112
    %v2178 = vpop.permute.xlu0 %2177
    %2179 = vrot.lane.b32.xlu0 %v2042, 112
    %v2180 = vpop.permute.xlu0 %2179
    %v2181 = vsel %vm301, %v2178, %v2180
    %v2182 = vsel %vm301, %v2180, %v2178
    %v2183 = vmul.f32 %v2181, %v1812
    %v2184 = vmul.f32 %v2182, %v1816
    %s2185 = sld [smem:[#allocation6 + $0x61]]
    %v2186 = vstv %s2185
    %v2187 = vmul.f32 %v2186, %v2183
    %v2188 = vmul.f32 %v2186, %v2184
    %v2189 = vadd.f32 %v2169, %v2187
    %v2190 = vadd.f32 %v2170, %v2188
    %s2191 = sld [smem:[#allocation6 + $0x85]]
    %v2192 = vstv %s2191
    %v2193 = vmul.f32 %v2192, %v2183
    %v2194 = vmul.f32 %v2192, %v2184
    %v2195 = vadd.f32 %v2175, %v2193
    %v2196 = vadd.f32 %v2176, %v2194
    %2197 = vrot.lane.b32.xlu0 %v2041, 111
    %v2198 = vpop.permute.xlu0 %2197
    %2199 = vrot.lane.b32.xlu0 %v2042, 111
    %v2200 = vpop.permute.xlu0 %2199
    %v2201 = vsel %vm335, %v2198, %v2200
    %v2202 = vsel %vm335, %v2200, %v2198
    %v2203 = vmul.f32 %v2201, %v1844
    %v2204 = vmul.f32 %v2202, %v1848
    %s2205 = sld [smem:[#allocation6 + $0x62]]
    %v2206 = vstv %s2205
    %v2207 = vmul.f32 %v2206, %v2203
    %v2208 = vmul.f32 %v2206, %v2204
    %v2209 = vadd.f32 %v2189, %v2207
    %v2210 = vadd.f32 %v2190, %v2208
    %s2211 = sld [smem:[#allocation6 + $0x86]]
    %v2212 = vstv %s2211
    %v2213 = vmul.f32 %v2212, %v2203
    %v2214 = vmul.f32 %v2212, %v2204
    %v2215 = vadd.f32 %v2195, %v2213
    %v2216 = vadd.f32 %v2196, %v2214
    %v2217 = vld [vmem:[#allocation2 + $0x30] sm:$0xff]
    %v2218 = vld [vmem:[#allocation2 + $0x38] sm:$0xff]
    %2219 = vrot.lane.b32.xlu0 %v2217, 17
    %v2220 = vpop.permute.xlu0 %2219
    %2221 = vrot.lane.b32.xlu0 %v2218, 17
    %v2222 = vpop.permute.xlu0 %2221
    %v2223 = vsel %vm71, %v2220, %v2222
    %v2224 = vsel %vm71, %v2222, %v2220
    %v2225 = vmul.f32 %v2224, %v1594
    %v2226 = vmul.f32 %v2223, %v1598
    %s2227 = sld [smem:[#allocation6 + $0x63]]
    %v2228 = vstv %s2227
    %v2229 = vmul.f32 %v2228, %v2225
    %v2230 = vmul.f32 %v2228, %v2226
    %v2231 = vadd.f32 %v2209, %v2229
    %v2232 = vadd.f32 %v2210, %v2230
    %s2233 = sld [smem:[#allocation6 + $0x87]]
    %v2234 = vstv %s2233
    %v2235 = vmul.f32 %v2234, %v2225
    %v2236 = vmul.f32 %v2234, %v2226
    %v2237 = vadd.f32 %v2215, %v2235
    %v2238 = vadd.f32 %v2216, %v2236
    %2239 = vrot.lane.b32.xlu0 %v2217, 16
    %v2240 = vpop.permute.xlu0 %2239
    %2241 = vrot.lane.b32.xlu0 %v2218, 16
    %v2242 = vpop.permute.xlu0 %2241
    %v2243 = vsel %vm104, %v2240, %v2242
    %v2244 = vsel %vm104, %v2242, %v2240
    %v2245 = vmul.f32 %v2244, %v1626
    %v2246 = vmul.f32 %v2243, %v1630
    %s2247 = sld [smem:[#allocation6 + $0x64]]
    %v2248 = vstv %s2247
    %v2249 = vmul.f32 %v2248, %v2245
    %v2250 = vmul.f32 %v2248, %v2246
    %v2251 = vadd.f32 %v2231, %v2249
    %v2252 = vadd.f32 %v2232, %v2250
    %s2253 = sld [smem:[#allocation6 + $0x88]]
    %v2254 = vstv %s2253
    %v2255 = vmul.f32 %v2254, %v2245
    %v2256 = vmul.f32 %v2254, %v2246
    %v2257 = vadd.f32 %v2237, %v2255
    %v2258 = vadd.f32 %v2238, %v2256
    %2259 = vrot.lane.b32.xlu0 %v2217, 15
    %v2260 = vpop.permute.xlu0 %2259
    %2261 = vrot.lane.b32.xlu0 %v2218, 15
    %v2262 = vpop.permute.xlu0 %2261
    %v2263 = vsel %vm138, %v2260, %v2262
    %v2264 = vsel %vm138, %v2262, %v2260
    %v2265 = vmul.f32 %v2264, %v1658
    %v2266 = vmul.f32 %v2263, %v1662
    %s2267 = sld [smem:[#allocation6 + $0x65]]
    %v2268 = vstv %s2267
    %v2269 = vmul.f32 %v2268, %v2265
    %v2270 = vmul.f32 %v2268, %v2266
    %v2271 = vadd.f32 %v2251, %v2269
    %v2272 = vadd.f32 %v2252, %v2270
    %s2273 = sld [smem:[#allocation6 + $0x89]]
    %v2274 = vstv %s2273
    %v2275 = vmul.f32 %v2274, %v2265
    %v2276 = vmul.f32 %v2274, %v2266
    %v2277 = vadd.f32 %v2257, %v2275
    %v2278 = vadd.f32 %v2258, %v2276
    %2279 = vrot.lane.b32.xlu0 %v2217, 1
    %v2280 = vpop.permute.xlu0 %2279
    %2281 = vrot.lane.b32.xlu0 %v2218, 1
    %v2282 = vpop.permute.xlu0 %2281
    %v2283 = vsel %vm172, %v2280, %v2282
    %v2284 = vsel %vm172, %v2282, %v2280
    %v2285 = vmul.f32 %v2284, %v1690
    %v2286 = vmul.f32 %v2283, %v1694
    %s2287 = sld [smem:[#allocation6 + $0x66]]
    %v2288 = vstv %s2287
    %v2289 = vmul.f32 %v2288, %v2285
    %v2290 = vmul.f32 %v2288, %v2286
    %v2291 = vadd.f32 %v2271, %v2289
    %v2292 = vadd.f32 %v2272, %v2290
    %s2293 = sld [smem:[#allocation6 + $0x8a]]
    %v2294 = vstv %s2293
    %v2295 = vmul.f32 %v2294, %v2285
    %v2296 = vmul.f32 %v2294, %v2286
    %v2297 = vadd.f32 %v2277, %v2295
    %v2298 = vadd.f32 %v2278, %v2296
    %v2299 = vmul.f32 %v2217, %v1716
    %v2300 = vmul.f32 %v2218, %v1720
    %s2301 = sld [smem:[#allocation6 + $0x67]]
    %v2302 = vstv %s2301
    %v2303 = vmul.f32 %v2302, %v2299
    %v2304 = vmul.f32 %v2302, %v2300
    %v2305 = vadd.f32 %v2291, %v2303
    %v2306 = vadd.f32 %v2292, %v2304
    %s2307 = sld [smem:[#allocation6 + $0x8b]]
    %v2308 = vstv %s2307
    %v2309 = vmul.f32 %v2308, %v2299
    %v2310 = vmul.f32 %v2308, %v2300
    %v2311 = vadd.f32 %v2297, %v2309
    %v2312 = vadd.f32 %v2298, %v2310
    %2313 = vrot.lane.b32.xlu0 %v2217, 127
    %v2314 = vpop.permute.xlu0 %2313
    %2315 = vrot.lane.b32.xlu0 %v2218, 127
    %v2316 = vpop.permute.xlu0 %2315
    %v2317 = vsel %vm233, %v2314, %v2316
    %v2318 = vsel %vm233, %v2316, %v2314
    %v2319 = vmul.f32 %v2317, %v1748
    %v2320 = vmul.f32 %v2318, %v1752
    %s2321 = sld [smem:[#allocation6 + $0x68]]
    %v2322 = vstv %s2321
    %v2323 = vmul.f32 %v2322, %v2319
    %v2324 = vmul.f32 %v2322, %v2320
    %v2325 = vadd.f32 %v2305, %v2323
    %v2326 = vadd.f32 %v2306, %v2324
    %s2327 = sld [smem:[#allocation6 + $0x8c]]
    %v2328 = vstv %s2327
    %v2329 = vmul.f32 %v2328, %v2319
    %v2330 = vmul.f32 %v2328, %v2320
    %v2331 = vadd.f32 %v2311, %v2329
    %v2332 = vadd.f32 %v2312, %v2330
    %2333 = vrot.lane.b32.xlu0 %v2217, 113
    %v2334 = vpop.permute.xlu0 %2333
    %2335 = vrot.lane.b32.xlu0 %v2218, 113
    %v2336 = vpop.permute.xlu0 %2335
    %v2337 = vsel %vm267, %v2334, %v2336
    %v2338 = vsel %vm267, %v2336, %v2334
    %v2339 = vmul.f32 %v2337, %v1780
    %v2340 = vmul.f32 %v2338, %v1784
    %s2341 = sld [smem:[#allocation6 + $0x69]]
    %v2342 = vstv %s2341
    %v2343 = vmul.f32 %v2342, %v2339
    %v2344 = vmul.f32 %v2342, %v2340
    %v2345 = vadd.f32 %v2325, %v2343
    %v2346 = vadd.f32 %v2326, %v2344
    %s2347 = sld [smem:[#allocation6 + $0x8d]]
    %v2348 = vstv %s2347
    %v2349 = vmul.f32 %v2348, %v2339
    %v2350 = vmul.f32 %v2348, %v2340
    %v2351 = vadd.f32 %v2331, %v2349
    %v2352 = vadd.f32 %v2332, %v2350
    %2353 = vrot.lane.b32.xlu0 %v2217, 112
    %v2354 = vpop.permute.xlu0 %2353
    %2355 = vrot.lane.b32.xlu0 %v2218, 112
    %v2356 = vpop.permute.xlu0 %2355
    %v2357 = vsel %vm301, %v2354, %v2356
    %v2358 = vsel %vm301, %v2356, %v2354
    %v2359 = vmul.f32 %v2357, %v1812
    %v2360 = vmul.f32 %v2358, %v1816
    %s2361 = sld [smem:[#allocation6 + $0x6a]]
    %v2362 = vstv %s2361
    %v2363 = vmul.f32 %v2362, %v2359
    %v2364 = vmul.f32 %v2362, %v2360
    %v2365 = vadd.f32 %v2345, %v2363
    %v2366 = vadd.f32 %v2346, %v2364
    %s2367 = sld [smem:[#allocation6 + $0x8e]]
    %v2368 = vstv %s2367
    %v2369 = vmul.f32 %v2368, %v2359
    %v2370 = vmul.f32 %v2368, %v2360
    %v2371 = vadd.f32 %v2351, %v2369
    %v2372 = vadd.f32 %v2352, %v2370
    %2373 = vrot.lane.b32.xlu0 %v2217, 111
    %v2374 = vpop.permute.xlu0 %2373
    %2375 = vrot.lane.b32.xlu0 %v2218, 111
    %v2376 = vpop.permute.xlu0 %2375
    %v2377 = vsel %vm335, %v2374, %v2376
    %v2378 = vsel %vm335, %v2376, %v2374
    %v2379 = vmul.f32 %v2377, %v1844
    %v2380 = vmul.f32 %v2378, %v1848
    %s2381 = sld [smem:[#allocation6 + $0x6b]]
    %v2382 = vstv %s2381
    %v2383 = vmul.f32 %v2382, %v2379
    %v2384 = vmul.f32 %v2382, %v2380
    %v2385 = vadd.f32 %v2365, %v2383
    %v2386 = vadd.f32 %v2366, %v2384
    %s2387 = sld [smem:[#allocation6 + $0x8f]]
    %v2388 = vstv %s2387
    %v2389 = vmul.f32 %v2388, %v2379
    %v2390 = vmul.f32 %v2388, %v2380
    %v2391 = vadd.f32 %v2371, %v2389
    %v2392 = vadd.f32 %v2372, %v2390
    %s2393 = scalar_lea.vmem %s6, 2
    %v2394 = vld [vmem:[%s2393] ss:$8 sm:$0x3]
    %v2396 = vlaneseq
    %v2397 = vshrl.u32 %v2396, 7
    %v2398 = vsub.s32 0, %v2397
    %v2399 = vrot.slane %v2394, %v2398
    %v2400 = vlaneseq
    %v2401 = vshrl.u32 %v2400, 7
    %v2402 = vsub.s32 1, %v2401
    %v2403 = vrot.slane %v2394, %v2402
    %v2406 = vadd.f32 %v2385, %v2399
    %v2407 = vadd.f32 %v2386, %v2403
    %v2408 = vmax.f32 %v2406, 0.0
    %v2409 = vmax.f32 %v2407, 0.0
    %2410 = vst [vmem:[#allocation3 + $0x20] sm:$0xff] %v2408
    %2411 = vst [vmem:[#allocation3 + $0x28] sm:$0xff] %v2409
    %s2412 = scalar_lea.vmem %s6, 3
    %v2413 = vld [vmem:[%s2412] ss:$8 sm:$0x3]
    %v2415 = vlaneseq
    %v2416 = vshrl.u32 %v2415, 7
    %v2417 = vsub.s32 0, %v2416
    %v2418 = vrot.slane %v2413, %v2417
    %v2419 = vlaneseq
    %v2420 = vshrl.u32 %v2419, 7
    %v2421 = vsub.s32 1, %v2420
    %v2422 = vrot.slane %v2413, %v2421
    %v2425 = vadd.f32 %v2391, %v2418
    %v2426 = vadd.f32 %v2392, %v2422
    %v2427 = vmax.f32 %v2425, 0.0
    %v2428 = vmax.f32 %v2426, 0.0
    %2429 = vst [vmem:[#allocation3 + $0x30] sm:$0xff] %v2427
    %2430 = vst [vmem:[#allocation3 + $0x38] sm:$0xff] %v2428
    %v2431 = vld [vmem:[#allocation2] sm:$0xff]
    %v2432 = vld [vmem:[#allocation2 + $0x8] sm:$0xff]
    %2433 = vrot.lane.b32.xlu0 %v2431, 17
    %v2434 = vpop.permute.xlu0 %2433
    %2435 = vrot.lane.b32.xlu0 %v2432, 17
    %v2436 = vpop.permute.xlu0 %2435
    %v2437 = vsel %vm71, %v2434, %v2436
    %v2438 = vsel %vm71, %v2436, %v2434
    %v2439 = vld [vmem:[%s2] ss:$8 sm:$0x3]
    %v2441 = vlaneseq
    %v2442 = vshrl.u32 %v2441, 7
    %v2443 = vsub.s32 0, %v2442
    %v2444 = vrot.slane %v2439, %v2443
    %v2445 = vlaneseq
    %v2446 = vshrl.u32 %v2445, 7
    %v2447 = vsub.s32 1, %v2446
    %v2448 = vrot.slane %v2439, %v2447
    %v2451 = vmul.f32 %v2438, %v2444
    %v2452 = vmul.f32 %v2437, %v2448
    %s2453 = sld [smem:[#allocation6 + $0x90]]
    %v2454 = vstv %s2453
    %v2455 = vmul.f32 %v2454, %v2451
    %v2456 = vmul.f32 %v2454, %v2452
    %v2457 = vadd.f32 %v2455, 0.0
    %v2458 = vadd.f32 %v2456, 0.0
    %s2459 = sld [smem:[#allocation6 + $0xb4]]
    %v2460 = vstv %s2459
    %v2461 = vmul.f32 %v2460, %v2451
    %v2462 = vmul.f32 %v2460, %v2452
    %v2463 = vadd.f32 %v2461, 0.0
    %v2464 = vadd.f32 %v2462, 0.0
    %2465 = vrot.lane.b32.xlu0 %v2431, 16
    %v2466 = vpop.permute.xlu0 %2465
    %2467 = vrot.lane.b32.xlu0 %v2432, 16
    %v2468 = vpop.permute.xlu0 %2467
    %v2469 = vsel %vm104, %v2466, %v2468
    %v2470 = vsel %vm104, %v2468, %v2466
    %v2471 = vld [vmem:[%s764] ss:$8 sm:$0x3]
    %v2473 = vlaneseq
    %v2474 = vshrl.u32 %v2473, 7
    %v2475 = vsub.s32 0, %v2474
    %v2476 = vrot.slane %v2471, %v2475
    %v2477 = vlaneseq
    %v2478 = vshrl.u32 %v2477, 7
    %v2479 = vsub.s32 1, %v2478
    %v2480 = vrot.slane %v2471, %v2479
    %v2483 = vmul.f32 %v2470, %v2476
    %v2484 = vmul.f32 %v2469, %v2480
    %s2485 = sld [smem:[#allocation6 + $0x91]]
    %v2486 = vstv %s2485
    %v2487 = vmul.f32 %v2486, %v2483
    %v2488 = vmul.f32 %v2486, %v2484
    %v2489 = vadd.f32 %v2457, %v2487
    %v2490 = vadd.f32 %v2458, %v2488
    %s2491 = sld [smem:[#allocation6 + $0xb5]]
    %v2492 = vstv %s2491
    %v2493 = vmul.f32 %v2492, %v2483
    %v2494 = vmul.f32 %v2492, %v2484
    %v2495 = vadd.f32 %v2463, %v2493
    %v2496 = vadd.f32 %v2464, %v2494
    %2497 = vrot.lane.b32.xlu0 %v2431, 15
    %v2498 = vpop.permute.xlu0 %2497
    %2499 = vrot.lane.b32.xlu0 %v2432, 15
    %v2500 = vpop.permute.xlu0 %2499
    %v2501 = vsel %vm138, %v2498, %v2500
    %v2502 = vsel %vm138, %v2500, %v2498
    %v2503 = vld [vmem:[%s797] ss:$8 sm:$0x3]
    %v2505 = vlaneseq
    %v2506 = vshrl.u32 %v2505, 7
    %v2507 = vsub.s32 0, %v2506
    %v2508 = vrot.slane %v2503, %v2507
    %v2509 = vlaneseq
    %v2510 = vshrl.u32 %v2509, 7
    %v2511 = vsub.s32 1, %v2510
    %v2512 = vrot.slane %v2503, %v2511
    %v2515 = vmul.f32 %v2502, %v2508
    %v2516 = vmul.f32 %v2501, %v2512
    %s2517 = sld [smem:[#allocation6 + $0x92]]
    %v2518 = vstv %s2517
    %v2519 = vmul.f32 %v2518, %v2515
    %v2520 = vmul.f32 %v2518, %v2516
    %v2521 = vadd.f32 %v2489, %v2519
    %v2522 = vadd.f32 %v2490, %v2520
    %s2523 = sld [smem:[#allocation6 + $0xb6]]
    %v2524 = vstv %s2523
    %v2525 = vmul.f32 %v2524, %v2515
    %v2526 = vmul.f32 %v2524, %v2516
    %v2527 = vadd.f32 %v2495, %v2525
    %v2528 = vadd.f32 %v2496, %v2526
    %2529 = vrot.lane.b32.xlu0 %v2431, 1
    %v2530 = vpop.permute.xlu0 %2529
    %2531 = vrot.lane.b32.xlu0 %v2432, 1
    %v2532 = vpop.permute.xlu0 %2531
    %v2533 = vsel %vm172, %v2530, %v2532
    %v2534 = vsel %vm172, %v2532, %v2530
    %v2535 = vld [vmem:[%s830] ss:$8 sm:$0x3]
    %v2537 = vlaneseq
    %v2538 = vshrl.u32 %v2537, 7
    %v2539 = vsub.s32 0, %v2538
    %v2540 = vrot.slane %v2535, %v2539
    %v2541 = vlaneseq
    %v2542 = vshrl.u32 %v2541, 7
    %v2543 = vsub.s32 1, %v2542
    %v2544 = vrot.slane %v2535, %v2543
    %v2547 = vmul.f32 %v2534, %v2540
    %v2548 = vmul.f32 %v2533, %v2544
    %s2549 = sld [smem:[#allocation6 + $0x93]]
    %v2550 = vstv %s2549
    %v2551 = vmul.f32 %v2550, %v2547
    %v2552 = vmul.f32 %v2550, %v2548
    %v2553 = vadd.f32 %v2521, %v2551
    %v2554 = vadd.f32 %v2522, %v2552
    %s2555 = sld [smem:[#allocation6 + $0xb7]]
    %v2556 = vstv %s2555
    %v2557 = vmul.f32 %v2556, %v2547
    %v2558 = vmul.f32 %v2556, %v2548
    %v2559 = vadd.f32 %v2527, %v2557
    %v2560 = vadd.f32 %v2528, %v2558
    %v2561 = vld [vmem:[%s857] ss:$8 sm:$0x3]
    %v2563 = vlaneseq
    %v2564 = vshrl.u32 %v2563, 7
    %v2565 = vsub.s32 0, %v2564
    %v2566 = vrot.slane %v2561, %v2565
    %v2567 = vlaneseq
    %v2568 = vshrl.u32 %v2567, 7
    %v2569 = vsub.s32 1, %v2568
    %v2570 = vrot.slane %v2561, %v2569
    %v2573 = vmul.f32 %v2431, %v2566
    %v2574 = vmul.f32 %v2432, %v2570
    %s2575 = sld [smem:[#allocation6 + $0x94]]
    %v2576 = vstv %s2575
    %v2577 = vmul.f32 %v2576, %v2573
    %v2578 = vmul.f32 %v2576, %v2574
    %v2579 = vadd.f32 %v2553, %v2577
    %v2580 = vadd.f32 %v2554, %v2578
    %s2581 = sld [smem:[#allocation6 + $0xb8]]
    %v2582 = vstv %s2581
    %v2583 = vmul.f32 %v2582, %v2573
    %v2584 = vmul.f32 %v2582, %v2574
    %v2585 = vadd.f32 %v2559, %v2583
    %v2586 = vadd.f32 %v2560, %v2584
    %2587 = vrot.lane.b32.xlu0 %v2431, 127
    %v2588 = vpop.permute.xlu0 %2587
    %2589 = vrot.lane.b32.xlu0 %v2432, 127
    %v2590 = vpop.permute.xlu0 %2589
    %v2591 = vsel %vm233, %v2588, %v2590
    %v2592 = vsel %vm233, %v2590, %v2588
    %v2593 = vld [vmem:[%s890] ss:$8 sm:$0x3]
    %v2595 = vlaneseq
    %v2596 = vshrl.u32 %v2595, 7
    %v2597 = vsub.s32 0, %v2596
    %v2598 = vrot.slane %v2593, %v2597
    %v2599 = vlaneseq
    %v2600 = vshrl.u32 %v2599, 7
    %v2601 = vsub.s32 1, %v2600
    %v2602 = vrot.slane %v2593, %v2601
    %v2605 = vmul.f32 %v2591, %v2598
    %v2606 = vmul.f32 %v2592, %v2602
    %s2607 = sld [smem:[#allocation6 + $0x95]]
    %v2608 = vstv %s2607
    %v2609 = vmul.f32 %v2608, %v2605
    %v2610 = vmul.f32 %v2608, %v2606
    %v2611 = vadd.f32 %v2579, %v2609
    %v2612 = vadd.f32 %v2580, %v2610
    %s2613 = sld [smem:[#allocation6 + $0xb9]]
    %v2614 = vstv %s2613
    %v2615 = vmul.f32 %v2614, %v2605
    %v2616 = vmul.f32 %v2614, %v2606
    %v2617 = vadd.f32 %v2585, %v2615
    %v2618 = vadd.f32 %v2586, %v2616
    %2619 = vrot.lane.b32.xlu0 %v2431, 113
    %v2620 = vpop.permute.xlu0 %2619
    %2621 = vrot.lane.b32.xlu0 %v2432, 113
    %v2622 = vpop.permute.xlu0 %2621
    %v2623 = vsel %vm267, %v2620, %v2622
    %v2624 = vsel %vm267, %v2622, %v2620
    %v2625 = vld [vmem:[%s923] ss:$8 sm:$0x3]
    %v2627 = vlaneseq
    %v2628 = vshrl.u32 %v2627, 7
    %v2629 = vsub.s32 0, %v2628
    %v2630 = vrot.slane %v2625, %v2629
    %v2631 = vlaneseq
    %v2632 = vshrl.u32 %v2631, 7
    %v2633 = vsub.s32 1, %v2632
    %v2634 = vrot.slane %v2625, %v2633
    %v2637 = vmul.f32 %v2623, %v2630
    %v2638 = vmul.f32 %v2624, %v2634
    %s2639 = sld [smem:[#allocation6 + $0x96]]
    %v2640 = vstv %s2639
    %v2641 = vmul.f32 %v2640, %v2637
    %v2642 = vmul.f32 %v2640, %v2638
    %v2643 = vadd.f32 %v2611, %v2641
    %v2644 = vadd.f32 %v2612, %v2642
    %s2645 = sld [smem:[#allocation6 + $0xba]]
    %v2646 = vstv %s2645
    %v2647 = vmul.f32 %v2646, %v2637
    %v2648 = vmul.f32 %v2646, %v2638
    %v2649 = vadd.f32 %v2617, %v2647
    %v2650 = vadd.f32 %v2618, %v2648
    %2651 = vrot.lane.b32.xlu0 %v2431, 112
    %v2652 = vpop.permute.xlu0 %2651
    %2653 = vrot.lane.b32.xlu0 %v2432, 112
    %v2654 = vpop.permute.xlu0 %2653
    %v2655 = vsel %vm301, %v2652, %v2654
    %v2656 = vsel %vm301, %v2654, %v2652
    %v2657 = vld [vmem:[%s956] ss:$8 sm:$0x3]
    %v2659 = vlaneseq
    %v2660 = vshrl.u32 %v2659, 7
    %v2661 = vsub.s32 0, %v2660
    %v2662 = vrot.slane %v2657, %v2661
    %v2663 = vlaneseq
    %v2664 = vshrl.u32 %v2663, 7
    %v2665 = vsub.s32 1, %v2664
    %v2666 = vrot.slane %v2657, %v2665
    %v2669 = vmul.f32 %v2655, %v2662
    %v2670 = vmul.f32 %v2656, %v2666
    %s2671 = sld [smem:[#allocation6 + $0x97]]
    %v2672 = vstv %s2671
    %v2673 = vmul.f32 %v2672, %v2669
    %v2674 = vmul.f32 %v2672, %v2670
    %v2675 = vadd.f32 %v2643, %v2673
    %v2676 = vadd.f32 %v2644, %v2674
    %s2677 = sld [smem:[#allocation6 + $0xbb]]
    %v2678 = vstv %s2677
    %v2679 = vmul.f32 %v2678, %v2669
    %v2680 = vmul.f32 %v2678, %v2670
    %v2681 = vadd.f32 %v2649, %v2679
    %v2682 = vadd.f32 %v2650, %v2680
    %2683 = vrot.lane.b32.xlu0 %v2431, 111
    %v2684 = vpop.permute.xlu0 %2683
    %2685 = vrot.lane.b32.xlu0 %v2432, 111
    %v2686 = vpop.permute.xlu0 %2685
    %v2687 = vsel %vm335, %v2684, %v2686
    %v2688 = vsel %vm335, %v2686, %v2684
    %v2689 = vld [vmem:[%s989] ss:$8 sm:$0x3]
    %v2691 = vlaneseq
    %v2692 = vshrl.u32 %v2691, 7
    %v2693 = vsub.s32 0, %v2692
    %v2694 = vrot.slane %v2689, %v2693
    %v2695 = vlaneseq
    %v2696 = vshrl.u32 %v2695, 7
    %v2697 = vsub.s32 1, %v2696
    %v2698 = vrot.slane %v2689, %v2697
    %v2701 = vmul.f32 %v2687, %v2694
    %v2702 = vmul.f32 %v2688, %v2698
    %s2703 = sld [smem:[#allocation6 + $0x98]]
    %v2704 = vstv %s2703
    %v2705 = vmul.f32 %v2704, %v2701
    %v2706 = vmul.f32 %v2704, %v2702
    %v2707 = vadd.f32 %v2675, %v2705
    %v2708 = vadd.f32 %v2676, %v2706
    %s2709 = sld [smem:[#allocation6 + $0xbc]]
    %v2710 = vstv %s2709
    %v2711 = vmul.f32 %v2710, %v2701
    %v2712 = vmul.f32 %v2710, %v2702
    %v2713 = vadd.f32 %v2681, %v2711
    %v2714 = vadd.f32 %v2682, %v2712
    %v2715 = vld [vmem:[#allocation2 + $0x10] sm:$0xff]
    %v2716 = vld [vmem:[#allocation2 + $0x18] sm:$0xff]
    %2717 = vrot.lane.b32.xlu0 %v2715, 17
    %v2718 = vpop.permute.xlu0 %2717
    %2719 = vrot.lane.b32.xlu0 %v2716, 17
    %v2720 = vpop.permute.xlu0 %2719
    %v2721 = vsel %vm71, %v2718, %v2720
    %v2722 = vsel %vm71, %v2720, %v2718
    %v2723 = vmul.f32 %v2722, %v2444
    %v2724 = vmul.f32 %v2721, %v2448
    %s2725 = sld [smem:[#allocation6 + $0x99]]
    %v2726 = vstv %s2725
    %v2727 = vmul.f32 %v2726, %v2723
    %v2728 = vmul.f32 %v2726, %v2724
    %v2729 = vadd.f32 %v2707, %v2727
    %v2730 = vadd.f32 %v2708, %v2728
    %s2731 = sld [smem:[#allocation6 + $0xbd]]
    %v2732 = vstv %s2731
    %v2733 = vmul.f32 %v2732, %v2723
    %v2734 = vmul.f32 %v2732, %v2724
    %v2735 = vadd.f32 %v2713, %v2733
    %v2736 = vadd.f32 %v2714, %v2734
    %2737 = vrot.lane.b32.xlu0 %v2715, 16
    %v2738 = vpop.permute.xlu0 %2737
    %2739 = vrot.lane.b32.xlu0 %v2716, 16
    %v2740 = vpop.permute.xlu0 %2739
    %v2741 = vsel %vm104, %v2738, %v2740
    %v2742 = vsel %vm104, %v2740, %v2738
    %v2743 = vmul.f32 %v2742, %v2476
    %v2744 = vmul.f32 %v2741, %v2480
    %s2745 = sld [smem:[#allocation6 + $0x9a]]
    %v2746 = vstv %s2745
    %v2747 = vmul.f32 %v2746, %v2743
    %v2748 = vmul.f32 %v2746, %v2744
    %v2749 = vadd.f32 %v2729, %v2747
    %v2750 = vadd.f32 %v2730, %v2748
    %s2751 = sld [smem:[#allocation6 + $0xbe]]
    %v2752 = vstv %s2751
    %v2753 = vmul.f32 %v2752, %v2743
    %v2754 = vmul.f32 %v2752, %v2744
    %v2755 = vadd.f32 %v2735, %v2753
    %v2756 = vadd.f32 %v2736, %v2754
    %2757 = vrot.lane.b32.xlu0 %v2715, 15
    %v2758 = vpop.permute.xlu0 %2757
    %2759 = vrot.lane.b32.xlu0 %v2716, 15
    %v2760 = vpop.permute.xlu0 %2759
    %v2761 = vsel %vm138, %v2758, %v2760
    %v2762 = vsel %vm138, %v2760, %v2758
    %v2763 = vmul.f32 %v2762, %v2508
    %v2764 = vmul.f32 %v2761, %v2512
    %s2765 = sld [smem:[#allocation6 + $0x9b]]
    %v2766 = vstv %s2765
    %v2767 = vmul.f32 %v2766, %v2763
    %v2768 = vmul.f32 %v2766, %v2764
    %v2769 = vadd.f32 %v2749, %v2767
    %v2770 = vadd.f32 %v2750, %v2768
    %s2771 = sld [smem:[#allocation6 + $0xbf]]
    %v2772 = vstv %s2771
    %v2773 = vmul.f32 %v2772, %v2763
    %v2774 = vmul.f32 %v2772, %v2764
    %v2775 = vadd.f32 %v2755, %v2773
    %v2776 = vadd.f32 %v2756, %v2774
    %2777 = vrot.lane.b32.xlu0 %v2715, 1
    %v2778 = vpop.permute.xlu0 %2777
    %2779 = vrot.lane.b32.xlu0 %v2716, 1
    %v2780 = vpop.permute.xlu0 %2779
    %v2781 = vsel %vm172, %v2778, %v2780
    %v2782 = vsel %vm172, %v2780, %v2778
    %v2783 = vmul.f32 %v2782, %v2540
    %v2784 = vmul.f32 %v2781, %v2544
    %s2785 = sld [smem:[#allocation6 + $0x9c]]
    %v2786 = vstv %s2785
    %v2787 = vmul.f32 %v2786, %v2783
    %v2788 = vmul.f32 %v2786, %v2784
    %v2789 = vadd.f32 %v2769, %v2787
    %v2790 = vadd.f32 %v2770, %v2788
    %s2791 = sld [smem:[#allocation6 + $0xc0]]
    %v2792 = vstv %s2791
    %v2793 = vmul.f32 %v2792, %v2783
    %v2794 = vmul.f32 %v2792, %v2784
    %v2795 = vadd.f32 %v2775, %v2793
    %v2796 = vadd.f32 %v2776, %v2794
    %v2797 = vmul.f32 %v2715, %v2566
    %v2798 = vmul.f32 %v2716, %v2570
    %s2799 = sld [smem:[#allocation6 + $0x9d]]
    %v2800 = vstv %s2799
    %v2801 = vmul.f32 %v2800, %v2797
    %v2802 = vmul.f32 %v2800, %v2798
    %v2803 = vadd.f32 %v2789, %v2801
    %v2804 = vadd.f32 %v2790, %v2802
    %s2805 = sld [smem:[#allocation6 + $0xc1]]
    %v2806 = vstv %s2805
    %v2807 = vmul.f32 %v2806, %v2797
    %v2808 = vmul.f32 %v2806, %v2798
    %v2809 = vadd.f32 %v2795, %v2807
    %v2810 = vadd.f32 %v2796, %v2808
    %2811 = vrot.lane.b32.xlu0 %v2715, 127
    %v2812 = vpop.permute.xlu0 %2811
    %2813 = vrot.lane.b32.xlu0 %v2716, 127
    %v2814 = vpop.permute.xlu0 %2813
    %v2815 = vsel %vm233, %v2812, %v2814
    %v2816 = vsel %vm233, %v2814, %v2812
    %v2817 = vmul.f32 %v2815, %v2598
    %v2818 = vmul.f32 %v2816, %v2602
    %s2819 = sld [smem:[#allocation6 + $0x9e]]
    %v2820 = vstv %s2819
    %v2821 = vmul.f32 %v2820, %v2817
    %v2822 = vmul.f32 %v2820, %v2818
    %v2823 = vadd.f32 %v2803, %v2821
    %v2824 = vadd.f32 %v2804, %v2822
    %s2825 = sld [smem:[#allocation6 + $0xc2]]
    %v2826 = vstv %s2825
    %v2827 = vmul.f32 %v2826, %v2817
    %v2828 = vmul.f32 %v2826, %v2818
    %v2829 = vadd.f32 %v2809, %v2827
    %v2830 = vadd.f32 %v2810, %v2828
    %2831 = vrot.lane.b32.xlu0 %v2715, 113
    %v2832 = vpop.permute.xlu0 %2831
    %2833 = vrot.lane.b32.xlu0 %v2716, 113
    %v2834 = vpop.permute.xlu0 %2833
    %v2835 = vsel %vm267, %v2832, %v2834
    %v2836 = vsel %vm267, %v2834, %v2832
    %v2837 = vmul.f32 %v2835, %v2630
    %v2838 = vmul.f32 %v2836, %v2634
    %s2839 = sld [smem:[#allocation6 + $0x9f]]
    %v2840 = vstv %s2839
    %v2841 = vmul.f32 %v2840, %v2837
    %v2842 = vmul.f32 %v2840, %v2838
    %v2843 = vadd.f32 %v2823, %v2841
    %v2844 = vadd.f32 %v2824, %v2842
    %s2845 = sld [smem:[#allocation6 + $0xc3]]
    %v2846 = vstv %s2845
    %v2847 = vmul.f32 %v2846, %v2837
    %v2848 = vmul.f32 %v2846, %v2838
    %v2849 = vadd.f32 %v2829, %v2847
    %v2850 = vadd.f32 %v2830, %v2848
    %2851 = vrot.lane.b32.xlu0 %v2715, 112
    %v2852 = vpop.permute.xlu0 %2851
    %2853 = vrot.lane.b32.xlu0 %v2716, 112
    %v2854 = vpop.permute.xlu0 %2853
    %v2855 = vsel %vm301, %v2852, %v2854
    %v2856 = vsel %vm301, %v2854, %v2852
    %v2857 = vmul.f32 %v2855, %v2662
    %v2858 = vmul.f32 %v2856, %v2666
    %s2859 = sld [smem:[#allocation6 + $0xa0]]
    %v2860 = vstv %s2859
    %v2861 = vmul.f32 %v2860, %v2857
    %v2862 = vmul.f32 %v2860, %v2858
    %v2863 = vadd.f32 %v2843, %v2861
    %v2864 = vadd.f32 %v2844, %v2862
    %s2865 = sld [smem:[#allocation6 + $0xc4]]
    %v2866 = vstv %s2865
    %v2867 = vmul.f32 %v2866, %v2857
    %v2868 = vmul.f32 %v2866, %v2858
    %v2869 = vadd.f32 %v2849, %v2867
    %v2870 = vadd.f32 %v2850, %v2868
    %2871 = vrot.lane.b32.xlu0 %v2715, 111
    %v2872 = vpop.permute.xlu0 %2871
    %2873 = vrot.lane.b32.xlu0 %v2716, 111
    %v2874 = vpop.permute.xlu0 %2873
    %v2875 = vsel %vm335, %v2872, %v2874
    %v2876 = vsel %vm335, %v2874, %v2872
    %v2877 = vmul.f32 %v2875, %v2694
    %v2878 = vmul.f32 %v2876, %v2698
    %s2879 = sld [smem:[#allocation6 + $0xa1]]
    %v2880 = vstv %s2879
    %v2881 = vmul.f32 %v2880, %v2877
    %v2882 = vmul.f32 %v2880, %v2878
    %v2883 = vadd.f32 %v2863, %v2881
    %v2884 = vadd.f32 %v2864, %v2882
    %s2885 = sld [smem:[#allocation6 + $0xc5]]
    %v2886 = vstv %s2885
    %v2887 = vmul.f32 %v2886, %v2877
    %v2888 = vmul.f32 %v2886, %v2878
    %v2889 = vadd.f32 %v2869, %v2887
    %v2890 = vadd.f32 %v2870, %v2888
    %v2891 = vld [vmem:[#allocation2 + $0x20] sm:$0xff]
    %v2892 = vld [vmem:[#allocation2 + $0x28] sm:$0xff]
    %2893 = vrot.lane.b32.xlu0 %v2891, 17
    %v2894 = vpop.permute.xlu0 %2893
    %2895 = vrot.lane.b32.xlu0 %v2892, 17
    %v2896 = vpop.permute.xlu0 %2895
    %v2897 = vsel %vm71, %v2894, %v2896
    %v2898 = vsel %vm71, %v2896, %v2894
    %v2899 = vmul.f32 %v2898, %v2444
    %v2900 = vmul.f32 %v2897, %v2448
    %s2901 = sld [smem:[#allocation6 + $0xa2]]
    %v2902 = vstv %s2901
    %v2903 = vmul.f32 %v2902, %v2899
    %v2904 = vmul.f32 %v2902, %v2900
    %v2905 = vadd.f32 %v2883, %v2903
    %v2906 = vadd.f32 %v2884, %v2904
    %s2907 = sld [smem:[#allocation6 + $0xc6]]
    %v2908 = vstv %s2907
    %v2909 = vmul.f32 %v2908, %v2899
    %v2910 = vmul.f32 %v2908, %v2900
    %v2911 = vadd.f32 %v2889, %v2909
    %v2912 = vadd.f32 %v2890, %v2910
    %2913 = vrot.lane.b32.xlu0 %v2891, 16
    %v2914 = vpop.permute.xlu0 %2913
    %2915 = vrot.lane.b32.xlu0 %v2892, 16
    %v2916 = vpop.permute.xlu0 %2915
    %v2917 = vsel %vm104, %v2914, %v2916
    %v2918 = vsel %vm104, %v2916, %v2914
    %v2919 = vmul.f32 %v2918, %v2476
    %v2920 = vmul.f32 %v2917, %v2480
    %s2921 = sld [smem:[#allocation6 + $0xa3]]
    %v2922 = vstv %s2921
    %v2923 = vmul.f32 %v2922, %v2919
    %v2924 = vmul.f32 %v2922, %v2920
    %v2925 = vadd.f32 %v2905, %v2923
    %v2926 = vadd.f32 %v2906, %v2924
    %s2927 = sld [smem:[#allocation6 + $0xc7]]
    %v2928 = vstv %s2927
    %v2929 = vmul.f32 %v2928, %v2919
    %v2930 = vmul.f32 %v2928, %v2920
    %v2931 = vadd.f32 %v2911, %v2929
    %v2932 = vadd.f32 %v2912, %v2930
    %2933 = vrot.lane.b32.xlu0 %v2891, 15
    %v2934 = vpop.permute.xlu0 %2933
    %2935 = vrot.lane.b32.xlu0 %v2892, 15
    %v2936 = vpop.permute.xlu0 %2935
    %v2937 = vsel %vm138, %v2934, %v2936
    %v2938 = vsel %vm138, %v2936, %v2934
    %v2939 = vmul.f32 %v2938, %v2508
    %v2940 = vmul.f32 %v2937, %v2512
    %s2941 = sld [smem:[#allocation6 + $0xa4]]
    %v2942 = vstv %s2941
    %v2943 = vmul.f32 %v2942, %v2939
    %v2944 = vmul.f32 %v2942, %v2940
    %v2945 = vadd.f32 %v2925, %v2943
    %v2946 = vadd.f32 %v2926, %v2944
    %s2947 = sld [smem:[#allocation6 + $0xc8]]
    %v2948 = vstv %s2947
    %v2949 = vmul.f32 %v2948, %v2939
    %v2950 = vmul.f32 %v2948, %v2940
    %v2951 = vadd.f32 %v2931, %v2949
    %v2952 = vadd.f32 %v2932, %v2950
    %2953 = vrot.lane.b32.xlu0 %v2891, 1
    %v2954 = vpop.permute.xlu0 %2953
    %2955 = vrot.lane.b32.xlu0 %v2892, 1
    %v2956 = vpop.permute.xlu0 %2955
    %v2957 = vsel %vm172, %v2954, %v2956
    %v2958 = vsel %vm172, %v2956, %v2954
    %v2959 = vmul.f32 %v2958, %v2540
    %v2960 = vmul.f32 %v2957, %v2544
    %s2961 = sld [smem:[#allocation6 + $0xa5]]
    %v2962 = vstv %s2961
    %v2963 = vmul.f32 %v2962, %v2959
    %v2964 = vmul.f32 %v2962, %v2960
    %v2965 = vadd.f32 %v2945, %v2963
    %v2966 = vadd.f32 %v2946, %v2964
    %s2967 = sld [smem:[#allocation6 + $0xc9]]
    %v2968 = vstv %s2967
    %v2969 = vmul.f32 %v2968, %v2959
    %v2970 = vmul.f32 %v2968, %v2960
    %v2971 = vadd.f32 %v2951, %v2969
    %v2972 = vadd.f32 %v2952, %v2970
    %v2973 = vmul.f32 %v2891, %v2566
    %v2974 = vmul.f32 %v2892, %v2570
    %s2975 = sld [smem:[#allocation6 + $0xa6]]
    %v2976 = vstv %s2975
    %v2977 = vmul.f32 %v2976, %v2973
    %v2978 = vmul.f32 %v2976, %v2974
    %v2979 = vadd.f32 %v2965, %v2977
    %v2980 = vadd.f32 %v2966, %v2978
    %s2981 = sld [smem:[#allocation6 + $0xca]]
    %v2982 = vstv %s2981
    %v2983 = vmul.f32 %v2982, %v2973
    %v2984 = vmul.f32 %v2982, %v2974
    %v2985 = vadd.f32 %v2971, %v2983
    %v2986 = vadd.f32 %v2972, %v2984
    %2987 = vrot.lane.b32.xlu0 %v2891, 127
    %v2988 = vpop.permute.xlu0 %2987
    %2989 = vrot.lane.b32.xlu0 %v2892, 127
    %v2990 = vpop.permute.xlu0 %2989
    %v2991 = vsel %vm233, %v2988, %v2990
    %v2992 = vsel %vm233, %v2990, %v2988
    %v2993 = vmul.f32 %v2991, %v2598
    %v2994 = vmul.f32 %v2992, %v2602
    %s2995 = sld [smem:[#allocation6 + $0xa7]]
    %v2996 = vstv %s2995
    %v2997 = vmul.f32 %v2996, %v2993
    %v2998 = vmul.f32 %v2996, %v2994
    %v2999 = vadd.f32 %v2979, %v2997
    %v3000 = vadd.f32 %v2980, %v2998
    %s3001 = sld [smem:[#allocation6 + $0xcb]]
    %v3002 = vstv %s3001
    %v3003 = vmul.f32 %v3002, %v2993
    %v3004 = vmul.f32 %v3002, %v2994
    %v3005 = vadd.f32 %v2985, %v3003
    %v3006 = vadd.f32 %v2986, %v3004
    %3007 = vrot.lane.b32.xlu0 %v2891, 113
    %v3008 = vpop.permute.xlu0 %3007
    %3009 = vrot.lane.b32.xlu0 %v2892, 113
    %v3010 = vpop.permute.xlu0 %3009
    %v3011 = vsel %vm267, %v3008, %v3010
    %v3012 = vsel %vm267, %v3010, %v3008
    %v3013 = vmul.f32 %v3011, %v2630
    %v3014 = vmul.f32 %v3012, %v2634
    %s3015 = sld [smem:[#allocation6 + $0xa8]]
    %v3016 = vstv %s3015
    %v3017 = vmul.f32 %v3016, %v3013
    %v3018 = vmul.f32 %v3016, %v3014
    %v3019 = vadd.f32 %v2999, %v3017
    %v3020 = vadd.f32 %v3000, %v3018
    %s3021 = sld [smem:[#allocation6 + $0xcc]]
    %v3022 = vstv %s3021
    %v3023 = vmul.f32 %v3022, %v3013
    %v3024 = vmul.f32 %v3022, %v3014
    %v3025 = vadd.f32 %v3005, %v3023
    %v3026 = vadd.f32 %v3006, %v3024
    %3027 = vrot.lane.b32.xlu0 %v2891, 112
    %v3028 = vpop.permute.xlu0 %3027
    %3029 = vrot.lane.b32.xlu0 %v2892, 112
    %v3030 = vpop.permute.xlu0 %3029
    %v3031 = vsel %vm301, %v3028, %v3030
    %v3032 = vsel %vm301, %v3030, %v3028
    %v3033 = vmul.f32 %v3031, %v2662
    %v3034 = vmul.f32 %v3032, %v2666
    %s3035 = sld [smem:[#allocation6 + $0xa9]]
    %v3036 = vstv %s3035
    %v3037 = vmul.f32 %v3036, %v3033
    %v3038 = vmul.f32 %v3036, %v3034
    %v3039 = vadd.f32 %v3019, %v3037
    %v3040 = vadd.f32 %v3020, %v3038
    %s3041 = sld [smem:[#allocation6 + $0xcd]]
    %v3042 = vstv %s3041
    %v3043 = vmul.f32 %v3042, %v3033
    %v3044 = vmul.f32 %v3042, %v3034
    %v3045 = vadd.f32 %v3025, %v3043
    %v3046 = vadd.f32 %v3026, %v3044
    %3047 = vrot.lane.b32.xlu0 %v2891, 111
    %v3048 = vpop.permute.xlu0 %3047
    %3049 = vrot.lane.b32.xlu0 %v2892, 111
    %v3050 = vpop.permute.xlu0 %3049
    %v3051 = vsel %vm335, %v3048, %v3050
    %v3052 = vsel %vm335, %v3050, %v3048
    %v3053 = vmul.f32 %v3051, %v2694
    %v3054 = vmul.f32 %v3052, %v2698
    %s3055 = sld [smem:[#allocation6 + $0xaa]]
    %v3056 = vstv %s3055
    %v3057 = vmul.f32 %v3056, %v3053
    %v3058 = vmul.f32 %v3056, %v3054
    %v3059 = vadd.f32 %v3039, %v3057
    %v3060 = vadd.f32 %v3040, %v3058
    %s3061 = sld [smem:[#allocation6 + $0xce]]
    %v3062 = vstv %s3061
    %v3063 = vmul.f32 %v3062, %v3053
    %v3064 = vmul.f32 %v3062, %v3054
    %v3065 = vadd.f32 %v3045, %v3063
    %v3066 = vadd.f32 %v3046, %v3064
    %v3067 = vld [vmem:[#allocation2 + $0x30] sm:$0xff]
    %v3068 = vld [vmem:[#allocation2 + $0x38] sm:$0xff]
    %3069 = vrot.lane.b32.xlu0 %v3067, 17
    %v3070 = vpop.permute.xlu0 %3069
    %3071 = vrot.lane.b32.xlu0 %v3068, 17
    %v3072 = vpop.permute.xlu0 %3071
    %v3073 = vsel %vm71, %v3070, %v3072
    %v3074 = vsel %vm71, %v3072, %v3070
    %v3075 = vmul.f32 %v3074, %v2444
    %v3076 = vmul.f32 %v3073, %v2448
    %s3077 = sld [smem:[#allocation6 + $0xab]]
    %v3078 = vstv %s3077
    %v3079 = vmul.f32 %v3078, %v3075
    %v3080 = vmul.f32 %v3078, %v3076
    %v3081 = vadd.f32 %v3059, %v3079
    %v3082 = vadd.f32 %v3060, %v3080
    %s3083 = sld [smem:[#allocation6 + $0xcf]]
    %v3084 = vstv %s3083
    %v3085 = vmul.f32 %v3084, %v3075
    %v3086 = vmul.f32 %v3084, %v3076
    %v3087 = vadd.f32 %v3065, %v3085
    %v3088 = vadd.f32 %v3066, %v3086
    %3089 = vrot.lane.b32.xlu0 %v3067, 16
    %v3090 = vpop.permute.xlu0 %3089
    %3091 = vrot.lane.b32.xlu0 %v3068, 16
    %v3092 = vpop.permute.xlu0 %3091
    %v3093 = vsel %vm104, %v3090, %v3092
    %v3094 = vsel %vm104, %v3092, %v3090
    %v3095 = vmul.f32 %v3094, %v2476
    %v3096 = vmul.f32 %v3093, %v2480
    %s3097 = sld [smem:[#allocation6 + $0xac]]
    %v3098 = vstv %s3097
    %v3099 = vmul.f32 %v3098, %v3095
    %v3100 = vmul.f32 %v3098, %v3096
    %v3101 = vadd.f32 %v3081, %v3099
    %v3102 = vadd.f32 %v3082, %v3100
    %s3103 = sld [smem:[#allocation6 + $0xd0]]
    %v3104 = vstv %s3103
    %v3105 = vmul.f32 %v3104, %v3095
    %v3106 = vmul.f32 %v3104, %v3096
    %v3107 = vadd.f32 %v3087, %v3105
    %v3108 = vadd.f32 %v3088, %v3106
    %3109 = vrot.lane.b32.xlu0 %v3067, 15
    %v3110 = vpop.permute.xlu0 %3109
    %3111 = vrot.lane.b32.xlu0 %v3068, 15
    %v3112 = vpop.permute.xlu0 %3111
    %v3113 = vsel %vm138, %v3110, %v3112
    %v3114 = vsel %vm138, %v3112, %v3110
    %v3115 = vmul.f32 %v3114, %v2508
    %v3116 = vmul.f32 %v3113, %v2512
    %s3117 = sld [smem:[#allocation6 + $0xad]]
    %v3118 = vstv %s3117
    %v3119 = vmul.f32 %v3118, %v3115
    %v3120 = vmul.f32 %v3118, %v3116
    %v3121 = vadd.f32 %v3101, %v3119
    %v3122 = vadd.f32 %v3102, %v3120
    %s3123 = sld [smem:[#allocation6 + $0xd1]]
    %v3124 = vstv %s3123
    %v3125 = vmul.f32 %v3124, %v3115
    %v3126 = vmul.f32 %v3124, %v3116
    %v3127 = vadd.f32 %v3107, %v3125
    %v3128 = vadd.f32 %v3108, %v3126
    %3129 = vrot.lane.b32.xlu0 %v3067, 1
    %v3130 = vpop.permute.xlu0 %3129
    %3131 = vrot.lane.b32.xlu0 %v3068, 1
    %v3132 = vpop.permute.xlu0 %3131
    %v3133 = vsel %vm172, %v3130, %v3132
    %v3134 = vsel %vm172, %v3132, %v3130
    %v3135 = vmul.f32 %v3134, %v2540
    %v3136 = vmul.f32 %v3133, %v2544
    %s3137 = sld [smem:[#allocation6 + $0xae]]
    %v3138 = vstv %s3137
    %v3139 = vmul.f32 %v3138, %v3135
    %v3140 = vmul.f32 %v3138, %v3136
    %v3141 = vadd.f32 %v3121, %v3139
    %v3142 = vadd.f32 %v3122, %v3140
    %s3143 = sld [smem:[#allocation6 + $0xd2]]
    %v3144 = vstv %s3143
    %v3145 = vmul.f32 %v3144, %v3135
    %v3146 = vmul.f32 %v3144, %v3136
    %v3147 = vadd.f32 %v3127, %v3145
    %v3148 = vadd.f32 %v3128, %v3146
    %v3149 = vmul.f32 %v3067, %v2566
    %v3150 = vmul.f32 %v3068, %v2570
    %s3151 = sld [smem:[#allocation6 + $0xaf]]
    %v3152 = vstv %s3151
    %v3153 = vmul.f32 %v3152, %v3149
    %v3154 = vmul.f32 %v3152, %v3150
    %v3155 = vadd.f32 %v3141, %v3153
    %v3156 = vadd.f32 %v3142, %v3154
    %s3157 = sld [smem:[#allocation6 + $0xd3]]
    %v3158 = vstv %s3157
    %v3159 = vmul.f32 %v3158, %v3149
    %v3160 = vmul.f32 %v3158, %v3150
    %v3161 = vadd.f32 %v3147, %v3159
    %v3162 = vadd.f32 %v3148, %v3160
    %3163 = vrot.lane.b32.xlu0 %v3067, 127
    %v3164 = vpop.permute.xlu0 %3163
    %3165 = vrot.lane.b32.xlu0 %v3068, 127
    %v3166 = vpop.permute.xlu0 %3165
    %v3167 = vsel %vm233, %v3164, %v3166
    %v3168 = vsel %vm233, %v3166, %v3164
    %v3169 = vmul.f32 %v3167, %v2598
    %v3170 = vmul.f32 %v3168, %v2602
    %s3171 = sld [smem:[#allocation6 + $0xb0]]
    %v3172 = vstv %s3171
    %v3173 = vmul.f32 %v3172, %v3169
    %v3174 = vmul.f32 %v3172, %v3170
    %v3175 = vadd.f32 %v3155, %v3173
    %v3176 = vadd.f32 %v3156, %v3174
    %s3177 = sld [smem:[#allocation6 + $0xd4]]
    %v3178 = vstv %s3177
    %v3179 = vmul.f32 %v3178, %v3169
    %v3180 = vmul.f32 %v3178, %v3170
    %v3181 = vadd.f32 %v3161, %v3179
    %v3182 = vadd.f32 %v3162, %v3180
    %3183 = vrot.lane.b32.xlu0 %v3067, 113
    %v3184 = vpop.permute.xlu0 %3183
    %3185 = vrot.lane.b32.xlu0 %v3068, 113
    %v3186 = vpop.permute.xlu0 %3185
    %v3187 = vsel %vm267, %v3184, %v3186
    %v3188 = vsel %vm267, %v3186, %v3184
    %v3189 = vmul.f32 %v3187, %v2630
    %v3190 = vmul.f32 %v3188, %v2634
    %s3191 = sld [smem:[#allocation6 + $0xb1]]
    %v3192 = vstv %s3191
    %v3193 = vmul.f32 %v3192, %v3189
    %v3194 = vmul.f32 %v3192, %v3190
    %v3195 = vadd.f32 %v3175, %v3193
    %v3196 = vadd.f32 %v3176, %v3194
    %s3197 = sld [smem:[#allocation6 + $0xd5]]
    %v3198 = vstv %s3197
    %v3199 = vmul.f32 %v3198, %v3189
    %v3200 = vmul.f32 %v3198, %v3190
    %v3201 = vadd.f32 %v3181, %v3199
    %v3202 = vadd.f32 %v3182, %v3200
    %3203 = vrot.lane.b32.xlu0 %v3067, 112
    %v3204 = vpop.permute.xlu0 %3203
    %3205 = vrot.lane.b32.xlu0 %v3068, 112
    %v3206 = vpop.permute.xlu0 %3205
    %v3207 = vsel %vm301, %v3204, %v3206
    %v3208 = vsel %vm301, %v3206, %v3204
    %v3209 = vmul.f32 %v3207, %v2662
    %v3210 = vmul.f32 %v3208, %v2666
    %s3211 = sld [smem:[#allocation6 + $0xb2]]
    %v3212 = vstv %s3211
    %v3213 = vmul.f32 %v3212, %v3209
    %v3214 = vmul.f32 %v3212, %v3210
    %v3215 = vadd.f32 %v3195, %v3213
    %v3216 = vadd.f32 %v3196, %v3214
    %s3217 = sld [smem:[#allocation6 + $0xd6]]
    %v3218 = vstv %s3217
    %v3219 = vmul.f32 %v3218, %v3209
    %v3220 = vmul.f32 %v3218, %v3210
    %v3221 = vadd.f32 %v3201, %v3219
    %v3222 = vadd.f32 %v3202, %v3220
    %3223 = vrot.lane.b32.xlu0 %v3067, 111
    %v3224 = vpop.permute.xlu0 %3223
    %3225 = vrot.lane.b32.xlu0 %v3068, 111
    %v3226 = vpop.permute.xlu0 %3225
    %v3227 = vsel %vm335, %v3224, %v3226
    %v3228 = vsel %vm335, %v3226, %v3224
    %v3229 = vmul.f32 %v3227, %v2694
    %v3230 = vmul.f32 %v3228, %v2698
    %s3231 = sld [smem:[#allocation6 + $0xb3]]
    %v3232 = vstv %s3231
    %v3233 = vmul.f32 %v3232, %v3229
    %v3234 = vmul.f32 %v3232, %v3230
    %v3235 = vadd.f32 %v3215, %v3233
    %v3236 = vadd.f32 %v3216, %v3234
    %s3237 = sld [smem:[#allocation6 + $0xd7]]
    %v3238 = vstv %s3237
    %v3239 = vmul.f32 %v3238, %v3229
    %v3240 = vmul.f32 %v3238, %v3230
    %v3241 = vadd.f32 %v3221, %v3239
    %v3242 = vadd.f32 %v3222, %v3240
    %s3243 = scalar_lea.vmem %s6, 4
    %v3244 = vld [vmem:[%s3243] ss:$8 sm:$0x3]
    %v3246 = vlaneseq
    %v3247 = vshrl.u32 %v3246, 7
    %v3248 = vsub.s32 0, %v3247
    %v3249 = vrot.slane %v3244, %v3248
    %v3250 = vlaneseq
    %v3251 = vshrl.u32 %v3250, 7
    %v3252 = vsub.s32 1, %v3251
    %v3253 = vrot.slane %v3244, %v3252
    %v3256 = vadd.f32 %v3235, %v3249
    %v3257 = vadd.f32 %v3236, %v3253
    %v3258 = vmax.f32 %v3256, 0.0
    %v3259 = vmax.f32 %v3257, 0.0
    %3260 = vst [vmem:[#allocation3 + $0x40] sm:$0xff] %v3258
    %3261 = vst [vmem:[#allocation3 + $0x48] sm:$0xff] %v3259
    %s3262 = scalar_lea.vmem %s6, 5
    %v3263 = vld [vmem:[%s3262] ss:$8 sm:$0x3]
    %v3265 = vlaneseq
    %v3266 = vshrl.u32 %v3265, 7
    %v3267 = vsub.s32 0, %v3266
    %v3268 = vrot.slane %v3263, %v3267
    %v3269 = vlaneseq
    %v3270 = vshrl.u32 %v3269, 7
    %v3271 = vsub.s32 1, %v3270
    %v3272 = vrot.slane %v3263, %v3271
    %v3275 = vadd.f32 %v3241, %v3268
    %v3276 = vadd.f32 %v3242, %v3272
    %v3277 = vmax.f32 %v3275, 0.0
    %v3278 = vmax.f32 %v3276, 0.0
    %3279 = vst [vmem:[#allocation3 + $0x50] sm:$0xff] %v3277
    %3280 = vst [vmem:[#allocation3 + $0x58] sm:$0xff] %v3278
    %v3281 = vld [vmem:[#allocation2] sm:$0xff]
    %v3282 = vld [vmem:[#allocation2 + $0x8] sm:$0xff]
    %3283 = vrot.lane.b32.xlu0 %v3281, 17
    %v3284 = vpop.permute.xlu0 %3283
    %3285 = vrot.lane.b32.xlu0 %v3282, 17
    %v3286 = vpop.permute.xlu0 %3285
    %v3287 = vsel %vm71, %v3284, %v3286
    %v3288 = vsel %vm71, %v3286, %v3284
    %v3289 = vld [vmem:[%s2] ss:$8 sm:$0x3]
    %v3291 = vlaneseq
    %v3292 = vshrl.u32 %v3291, 7
    %v3293 = vsub.s32 0, %v3292
    %v3294 = vrot.slane %v3289, %v3293
    %v3295 = vlaneseq
    %v3296 = vshrl.u32 %v3295, 7
    %v3297 = vsub.s32 1, %v3296
    %v3298 = vrot.slane %v3289, %v3297
    %v3301 = vmul.f32 %v3288, %v3294
    %v3302 = vmul.f32 %v3287, %v3298
    %s3303 = sld [smem:[#allocation6 + $0xd8]]
    %v3304 = vstv %s3303
    %v3305 = vmul.f32 %v3304, %v3301
    %v3306 = vmul.f32 %v3304, %v3302
    %v3307 = vadd.f32 %v3305, 0.0
    %v3308 = vadd.f32 %v3306, 0.0
    %s3309 = sld [smem:[#allocation6 + $0xfc]]
    %v3310 = vstv %s3309
    %v3311 = vmul.f32 %v3310, %v3301
    %v3312 = vmul.f32 %v3310, %v3302
    %v3313 = vadd.f32 %v3311, 0.0
    %v3314 = vadd.f32 %v3312, 0.0
    %3315 = vrot.lane.b32.xlu0 %v3281, 16
    %v3316 = vpop.permute.xlu0 %3315
    %3317 = vrot.lane.b32.xlu0 %v3282, 16
    %v3318 = vpop.permute.xlu0 %3317
    %v3319 = vsel %vm104, %v3316, %v3318
    %v3320 = vsel %vm104, %v3318, %v3316
    %v3321 = vld [vmem:[%s764] ss:$8 sm:$0x3]
    %v3323 = vlaneseq
    %v3324 = vshrl.u32 %v3323, 7
    %v3325 = vsub.s32 0, %v3324
    %v3326 = vrot.slane %v3321, %v3325
    %v3327 = vlaneseq
    %v3328 = vshrl.u32 %v3327, 7
    %v3329 = vsub.s32 1, %v3328
    %v3330 = vrot.slane %v3321, %v3329
    %v3333 = vmul.f32 %v3320, %v3326
    %v3334 = vmul.f32 %v3319, %v3330
    %s3335 = sld [smem:[#allocation6 + $0xd9]]
    %v3336 = vstv %s3335
    %v3337 = vmul.f32 %v3336, %v3333
    %v3338 = vmul.f32 %v3336, %v3334
    %v3339 = vadd.f32 %v3307, %v3337
    %v3340 = vadd.f32 %v3308, %v3338
    %s3341 = sld [smem:[#allocation6 + $0xfd]]
    %v3342 = vstv %s3341
    %v3343 = vmul.f32 %v3342, %v3333
    %v3344 = vmul.f32 %v3342, %v3334
    %v3345 = vadd.f32 %v3313, %v3343
    %v3346 = vadd.f32 %v3314, %v3344
    %3347 = vrot.lane.b32.xlu0 %v3281, 15
    %v3348 = vpop.permute.xlu0 %3347
    %3349 = vrot.lane.b32.xlu0 %v3282, 15
    %v3350 = vpop.permute.xlu0 %3349
    %v3351 = vsel %vm138, %v3348, %v3350
    %v3352 = vsel %vm138, %v3350, %v3348
    %v3353 = vld [vmem:[%s797] ss:$8 sm:$0x3]
    %v3355 = vlaneseq
    %v3356 = vshrl.u32 %v3355, 7
    %v3357 = vsub.s32 0, %v3356
    %v3358 = vrot.slane %v3353, %v3357
    %v3359 = vlaneseq
    %v3360 = vshrl.u32 %v3359, 7
    %v3361 = vsub.s32 1, %v3360
    %v3362 = vrot.slane %v3353, %v3361
    %v3365 = vmul.f32 %v3352, %v3358
    %v3366 = vmul.f32 %v3351, %v3362
    %s3367 = sld [smem:[#allocation6 + $0xda]]
    %v3368 = vstv %s3367
    %v3369 = vmul.f32 %v3368, %v3365
    %v3370 = vmul.f32 %v3368, %v3366
    %v3371 = vadd.f32 %v3339, %v3369
    %v3372 = vadd.f32 %v3340, %v3370
    %s3373 = sld [smem:[#allocation6 + $0xfe]]
    %v3374 = vstv %s3373
    %v3375 = vmul.f32 %v3374, %v3365
    %v3376 = vmul.f32 %v3374, %v3366
    %v3377 = vadd.f32 %v3345, %v3375
    %v3378 = vadd.f32 %v3346, %v3376
    %3379 = vrot.lane.b32.xlu0 %v3281, 1
    %v3380 = vpop.permute.xlu0 %3379
    %3381 = vrot.lane.b32.xlu0 %v3282, 1
    %v3382 = vpop.permute.xlu0 %3381
    %v3383 = vsel %vm172, %v3380, %v3382
    %v3384 = vsel %vm172, %v3382, %v3380
    %v3385 = vld [vmem:[%s830] ss:$8 sm:$0x3]
    %v3387 = vlaneseq
    %v3388 = vshrl.u32 %v3387, 7
    %v3389 = vsub.s32 0, %v3388
    %v3390 = vrot.slane %v3385, %v3389
    %v3391 = vlaneseq
    %v3392 = vshrl.u32 %v3391, 7
    %v3393 = vsub.s32 1, %v3392
    %v3394 = vrot.slane %v3385, %v3393
    %v3397 = vmul.f32 %v3384, %v3390
    %v3398 = vmul.f32 %v3383, %v3394
    %s3399 = sld [smem:[#allocation6 + $0xdb]]
    %v3400 = vstv %s3399
    %v3401 = vmul.f32 %v3400, %v3397
    %v3402 = vmul.f32 %v3400, %v3398
    %v3403 = vadd.f32 %v3371, %v3401
    %v3404 = vadd.f32 %v3372, %v3402
    %s3405 = sld [smem:[#allocation6 + $0xff]]
    %v3406 = vstv %s3405
    %v3407 = vmul.f32 %v3406, %v3397
    %v3408 = vmul.f32 %v3406, %v3398
    %v3409 = vadd.f32 %v3377, %v3407
    %v3410 = vadd.f32 %v3378, %v3408
    %v3411 = vld [vmem:[%s857] ss:$8 sm:$0x3]
    %v3413 = vlaneseq
    %v3414 = vshrl.u32 %v3413, 7
    %v3415 = vsub.s32 0, %v3414
    %v3416 = vrot.slane %v3411, %v3415
    %v3417 = vlaneseq
    %v3418 = vshrl.u32 %v3417, 7
    %v3419 = vsub.s32 1, %v3418
    %v3420 = vrot.slane %v3411, %v3419
    %v3423 = vmul.f32 %v3281, %v3416
    %v3424 = vmul.f32 %v3282, %v3420
    %s3425 = sld [smem:[#allocation6 + $0xdc]]
    %v3426 = vstv %s3425
    %v3427 = vmul.f32 %v3426, %v3423
    %v3428 = vmul.f32 %v3426, %v3424
    %v3429 = vadd.f32 %v3403, %v3427
    %v3430 = vadd.f32 %v3404, %v3428
    %s3431 = sld [smem:[#allocation6 + $0x100]]
    %v3432 = vstv %s3431
    %v3433 = vmul.f32 %v3432, %v3423
    %v3434 = vmul.f32 %v3432, %v3424
    %v3435 = vadd.f32 %v3409, %v3433
    %v3436 = vadd.f32 %v3410, %v3434
    %3437 = vrot.lane.b32.xlu0 %v3281, 127
    %v3438 = vpop.permute.xlu0 %3437
    %3439 = vrot.lane.b32.xlu0 %v3282, 127
    %v3440 = vpop.permute.xlu0 %3439
    %v3441 = vsel %vm233, %v3438, %v3440
    %v3442 = vsel %vm233, %v3440, %v3438
    %v3443 = vld [vmem:[%s890] ss:$8 sm:$0x3]
    %v3445 = vlaneseq
    %v3446 = vshrl.u32 %v3445, 7
    %v3447 = vsub.s32 0, %v3446
    %v3448 = vrot.slane %v3443, %v3447
    %v3449 = vlaneseq
    %v3450 = vshrl.u32 %v3449, 7
    %v3451 = vsub.s32 1, %v3450
    %v3452 = vrot.slane %v3443, %v3451
    %v3455 = vmul.f32 %v3441, %v3448
    %v3456 = vmul.f32 %v3442, %v3452
    %s3457 = sld [smem:[#allocation6 + $0xdd]]
    %v3458 = vstv %s3457
    %v3459 = vmul.f32 %v3458, %v3455
    %v3460 = vmul.f32 %v3458, %v3456
    %v3461 = vadd.f32 %v3429, %v3459
    %v3462 = vadd.f32 %v3430, %v3460
    %s3463 = sld [smem:[#allocation6 + $0x101]]
    %v3464 = vstv %s3463
    %v3465 = vmul.f32 %v3464, %v3455
    %v3466 = vmul.f32 %v3464, %v3456
    %v3467 = vadd.f32 %v3435, %v3465
    %v3468 = vadd.f32 %v3436, %v3466
    %3469 = vrot.lane.b32.xlu0 %v3281, 113
    %v3470 = vpop.permute.xlu0 %3469
    %3471 = vrot.lane.b32.xlu0 %v3282, 113
    %v3472 = vpop.permute.xlu0 %3471
    %v3473 = vsel %vm267, %v3470, %v3472
    %v3474 = vsel %vm267, %v3472, %v3470
    %v3475 = vld [vmem:[%s923] ss:$8 sm:$0x3]
    %v3477 = vlaneseq
    %v3478 = vshrl.u32 %v3477, 7
    %v3479 = vsub.s32 0, %v3478
    %v3480 = vrot.slane %v3475, %v3479
    %v3481 = vlaneseq
    %v3482 = vshrl.u32 %v3481, 7
    %v3483 = vsub.s32 1, %v3482
    %v3484 = vrot.slane %v3475, %v3483
    %v3487 = vmul.f32 %v3473, %v3480
    %v3488 = vmul.f32 %v3474, %v3484
    %s3489 = sld [smem:[#allocation6 + $0xde]]
    %v3490 = vstv %s3489
    %v3491 = vmul.f32 %v3490, %v3487
    %v3492 = vmul.f32 %v3490, %v3488
    %v3493 = vadd.f32 %v3461, %v3491
    %v3494 = vadd.f32 %v3462, %v3492
    %s3495 = sld [smem:[#allocation6 + $0x102]]
    %v3496 = vstv %s3495
    %v3497 = vmul.f32 %v3496, %v3487
    %v3498 = vmul.f32 %v3496, %v3488
    %v3499 = vadd.f32 %v3467, %v3497
    %v3500 = vadd.f32 %v3468, %v3498
    %3501 = vrot.lane.b32.xlu0 %v3281, 112
    %v3502 = vpop.permute.xlu0 %3501
    %3503 = vrot.lane.b32.xlu0 %v3282, 112
    %v3504 = vpop.permute.xlu0 %3503
    %v3505 = vsel %vm301, %v3502, %v3504
    %v3506 = vsel %vm301, %v3504, %v3502
    %v3507 = vld [vmem:[%s956] ss:$8 sm:$0x3]
    %v3509 = vlaneseq
    %v3510 = vshrl.u32 %v3509, 7
    %v3511 = vsub.s32 0, %v3510
    %v3512 = vrot.slane %v3507, %v3511
    %v3513 = vlaneseq
    %v3514 = vshrl.u32 %v3513, 7
    %v3515 = vsub.s32 1, %v3514
    %v3516 = vrot.slane %v3507, %v3515
    %v3519 = vmul.f32 %v3505, %v3512
    %v3520 = vmul.f32 %v3506, %v3516
    %s3521 = sld [smem:[#allocation6 + $0xdf]]
    %v3522 = vstv %s3521
    %v3523 = vmul.f32 %v3522, %v3519
    %v3524 = vmul.f32 %v3522, %v3520
    %v3525 = vadd.f32 %v3493, %v3523
    %v3526 = vadd.f32 %v3494, %v3524
    %s3527 = sld [smem:[#allocation6 + $0x103]]
    %v3528 = vstv %s3527
    %v3529 = vmul.f32 %v3528, %v3519
    %v3530 = vmul.f32 %v3528, %v3520
    %v3531 = vadd.f32 %v3499, %v3529
    %v3532 = vadd.f32 %v3500, %v3530
    %3533 = vrot.lane.b32.xlu0 %v3281, 111
    %v3534 = vpop.permute.xlu0 %3533
    %3535 = vrot.lane.b32.xlu0 %v3282, 111
    %v3536 = vpop.permute.xlu0 %3535
    %v3537 = vsel %vm335, %v3534, %v3536
    %v3538 = vsel %vm335, %v3536, %v3534
    %v3539 = vld [vmem:[%s989] ss:$8 sm:$0x3]
    %v3541 = vlaneseq
    %v3542 = vshrl.u32 %v3541, 7
    %v3543 = vsub.s32 0, %v3542
    %v3544 = vrot.slane %v3539, %v3543
    %v3545 = vlaneseq
    %v3546 = vshrl.u32 %v3545, 7
    %v3547 = vsub.s32 1, %v3546
    %v3548 = vrot.slane %v3539, %v3547
    %v3551 = vmul.f32 %v3537, %v3544
    %v3552 = vmul.f32 %v3538, %v3548
    %s3553 = sld [smem:[#allocation6 + $0xe0]]
    %v3554 = vstv %s3553
    %v3555 = vmul.f32 %v3554, %v3551
    %v3556 = vmul.f32 %v3554, %v3552
    %v3557 = vadd.f32 %v3525, %v3555
    %v3558 = vadd.f32 %v3526, %v3556
    %s3559 = sld [smem:[#allocation6 + $0x104]]
    %v3560 = vstv %s3559
    %v3561 = vmul.f32 %v3560, %v3551
    %v3562 = vmul.f32 %v3560, %v3552
    %v3563 = vadd.f32 %v3531, %v3561
    %v3564 = vadd.f32 %v3532, %v3562
    %v3565 = vld [vmem:[#allocation2 + $0x10] sm:$0xff]
    %v3566 = vld [vmem:[#allocation2 + $0x18] sm:$0xff]
    %3567 = vrot.lane.b32.xlu0 %v3565, 17
    %v3568 = vpop.permute.xlu0 %3567
    %3569 = vrot.lane.b32.xlu0 %v3566, 17
    %v3570 = vpop.permute.xlu0 %3569
    %v3571 = vsel %vm71, %v3568, %v3570
    %v3572 = vsel %vm71, %v3570, %v3568
    %v3573 = vmul.f32 %v3572, %v3294
    %v3574 = vmul.f32 %v3571, %v3298
    %s3575 = sld [smem:[#allocation6 + $0xe1]]
    %v3576 = vstv %s3575
    %v3577 = vmul.f32 %v3576, %v3573
    %v3578 = vmul.f32 %v3576, %v3574
    %v3579 = vadd.f32 %v3557, %v3577
    %v3580 = vadd.f32 %v3558, %v3578
    %s3581 = sld [smem:[#allocation6 + $0x105]]
    %v3582 = vstv %s3581
    %v3583 = vmul.f32 %v3582, %v3573
    %v3584 = vmul.f32 %v3582, %v3574
    %v3585 = vadd.f32 %v3563, %v3583
    %v3586 = vadd.f32 %v3564, %v3584
    %3587 = vrot.lane.b32.xlu0 %v3565, 16
    %v3588 = vpop.permute.xlu0 %3587
    %3589 = vrot.lane.b32.xlu0 %v3566, 16
    %v3590 = vpop.permute.xlu0 %3589
    %v3591 = vsel %vm104, %v3588, %v3590
    %v3592 = vsel %vm104, %v3590, %v3588
    %v3593 = vmul.f32 %v3592, %v3326
    %v3594 = vmul.f32 %v3591, %v3330
    %s3595 = sld [smem:[#allocation6 + $0xe2]]
    %v3596 = vstv %s3595
    %v3597 = vmul.f32 %v3596, %v3593
    %v3598 = vmul.f32 %v3596, %v3594
    %v3599 = vadd.f32 %v3579, %v3597
    %v3600 = vadd.f32 %v3580, %v3598
    %s3601 = sld [smem:[#allocation6 + $0x106]]
    %v3602 = vstv %s3601
    %v3603 = vmul.f32 %v3602, %v3593
    %v3604 = vmul.f32 %v3602, %v3594
    %v3605 = vadd.f32 %v3585, %v3603
    %v3606 = vadd.f32 %v3586, %v3604
    %3607 = vrot.lane.b32.xlu0 %v3565, 15
    %v3608 = vpop.permute.xlu0 %3607
    %3609 = vrot.lane.b32.xlu0 %v3566, 15
    %v3610 = vpop.permute.xlu0 %3609
    %v3611 = vsel %vm138, %v3608, %v3610
    %v3612 = vsel %vm138, %v3610, %v3608
    %v3613 = vmul.f32 %v3612, %v3358
    %v3614 = vmul.f32 %v3611, %v3362
    %s3615 = sld [smem:[#allocation6 + $0xe3]]
    %v3616 = vstv %s3615
    %v3617 = vmul.f32 %v3616, %v3613
    %v3618 = vmul.f32 %v3616, %v3614
    %v3619 = vadd.f32 %v3599, %v3617
    %v3620 = vadd.f32 %v3600, %v3618
    %s3621 = sld [smem:[#allocation6 + $0x107]]
    %v3622 = vstv %s3621
    %v3623 = vmul.f32 %v3622, %v3613
    %v3624 = vmul.f32 %v3622, %v3614
    %v3625 = vadd.f32 %v3605, %v3623
    %v3626 = vadd.f32 %v3606, %v3624
    %3627 = vrot.lane.b32.xlu0 %v3565, 1
    %v3628 = vpop.permute.xlu0 %3627
    %3629 = vrot.lane.b32.xlu0 %v3566, 1
    %v3630 = vpop.permute.xlu0 %3629
    %v3631 = vsel %vm172, %v3628, %v3630
    %v3632 = vsel %vm172, %v3630, %v3628
    %v3633 = vmul.f32 %v3632, %v3390
    %v3634 = vmul.f32 %v3631, %v3394
    %s3635 = sld [smem:[#allocation6 + $0xe4]]
    %v3636 = vstv %s3635
    %v3637 = vmul.f32 %v3636, %v3633
    %v3638 = vmul.f32 %v3636, %v3634
    %v3639 = vadd.f32 %v3619, %v3637
    %v3640 = vadd.f32 %v3620, %v3638
    %s3641 = sld [smem:[#allocation6 + $0x108]]
    %v3642 = vstv %s3641
    %v3643 = vmul.f32 %v3642, %v3633
    %v3644 = vmul.f32 %v3642, %v3634
    %v3645 = vadd.f32 %v3625, %v3643
    %v3646 = vadd.f32 %v3626, %v3644
    %v3647 = vmul.f32 %v3565, %v3416
    %v3648 = vmul.f32 %v3566, %v3420
    %s3649 = sld [smem:[#allocation6 + $0xe5]]
    %v3650 = vstv %s3649
    %v3651 = vmul.f32 %v3650, %v3647
    %v3652 = vmul.f32 %v3650, %v3648
    %v3653 = vadd.f32 %v3639, %v3651
    %v3654 = vadd.f32 %v3640, %v3652
    %s3655 = sld [smem:[#allocation6 + $0x109]]
    %v3656 = vstv %s3655
    %v3657 = vmul.f32 %v3656, %v3647
    %v3658 = vmul.f32 %v3656, %v3648
    %v3659 = vadd.f32 %v3645, %v3657
    %v3660 = vadd.f32 %v3646, %v3658
    %3661 = vrot.lane.b32.xlu0 %v3565, 127
    %v3662 = vpop.permute.xlu0 %3661
    %3663 = vrot.lane.b32.xlu0 %v3566, 127
    %v3664 = vpop.permute.xlu0 %3663
    %v3665 = vsel %vm233, %v3662, %v3664
    %v3666 = vsel %vm233, %v3664, %v3662
    %v3667 = vmul.f32 %v3665, %v3448
    %v3668 = vmul.f32 %v3666, %v3452
    %s3669 = sld [smem:[#allocation6 + $0xe6]]
    %v3670 = vstv %s3669
    %v3671 = vmul.f32 %v3670, %v3667
    %v3672 = vmul.f32 %v3670, %v3668
    %v3673 = vadd.f32 %v3653, %v3671
    %v3674 = vadd.f32 %v3654, %v3672
    %s3675 = sld [smem:[#allocation6 + $0x10a]]
    %v3676 = vstv %s3675
    %v3677 = vmul.f32 %v3676, %v3667
    %v3678 = vmul.f32 %v3676, %v3668
    %v3679 = vadd.f32 %v3659, %v3677
    %v3680 = vadd.f32 %v3660, %v3678
    %3681 = vrot.lane.b32.xlu0 %v3565, 113
    %v3682 = vpop.permute.xlu0 %3681
    %3683 = vrot.lane.b32.xlu0 %v3566, 113
    %v3684 = vpop.permute.xlu0 %3683
    %v3685 = vsel %vm267, %v3682, %v3684
    %v3686 = vsel %vm267, %v3684, %v3682
    %v3687 = vmul.f32 %v3685, %v3480
    %v3688 = vmul.f32 %v3686, %v3484
    %s3689 = sld [smem:[#allocation6 + $0xe7]]
    %v3690 = vstv %s3689
    %v3691 = vmul.f32 %v3690, %v3687
    %v3692 = vmul.f32 %v3690, %v3688
    %v3693 = vadd.f32 %v3673, %v3691
    %v3694 = vadd.f32 %v3674, %v3692
    %s3695 = sld [smem:[#allocation6 + $0x10b]]
    %v3696 = vstv %s3695
    %v3697 = vmul.f32 %v3696, %v3687
    %v3698 = vmul.f32 %v3696, %v3688
    %v3699 = vadd.f32 %v3679, %v3697
    %v3700 = vadd.f32 %v3680, %v3698
    %3701 = vrot.lane.b32.xlu0 %v3565, 112
    %v3702 = vpop.permute.xlu0 %3701
    %3703 = vrot.lane.b32.xlu0 %v3566, 112
    %v3704 = vpop.permute.xlu0 %3703
    %v3705 = vsel %vm301, %v3702, %v3704
    %v3706 = vsel %vm301, %v3704, %v3702
    %v3707 = vmul.f32 %v3705, %v3512
    %v3708 = vmul.f32 %v3706, %v3516
    %s3709 = sld [smem:[#allocation6 + $0xe8]]
    %v3710 = vstv %s3709
    %v3711 = vmul.f32 %v3710, %v3707
    %v3712 = vmul.f32 %v3710, %v3708
    %v3713 = vadd.f32 %v3693, %v3711
    %v3714 = vadd.f32 %v3694, %v3712
    %s3715 = sld [smem:[#allocation6 + $0x10c]]
    %v3716 = vstv %s3715
    %v3717 = vmul.f32 %v3716, %v3707
    %v3718 = vmul.f32 %v3716, %v3708
    %v3719 = vadd.f32 %v3699, %v3717
    %v3720 = vadd.f32 %v3700, %v3718
    %3721 = vrot.lane.b32.xlu0 %v3565, 111
    %v3722 = vpop.permute.xlu0 %3721
    %3723 = vrot.lane.b32.xlu0 %v3566, 111
    %v3724 = vpop.permute.xlu0 %3723
    %v3725 = vsel %vm335, %v3722, %v3724
    %v3726 = vsel %vm335, %v3724, %v3722
    %v3727 = vmul.f32 %v3725, %v3544
    %v3728 = vmul.f32 %v3726, %v3548
    %s3729 = sld [smem:[#allocation6 + $0xe9]]
    %v3730 = vstv %s3729
    %v3731 = vmul.f32 %v3730, %v3727
    %v3732 = vmul.f32 %v3730, %v3728
    %v3733 = vadd.f32 %v3713, %v3731
    %v3734 = vadd.f32 %v3714, %v3732
    %s3735 = sld [smem:[#allocation6 + $0x10d]]
    %v3736 = vstv %s3735
    %v3737 = vmul.f32 %v3736, %v3727
    %v3738 = vmul.f32 %v3736, %v3728
    %v3739 = vadd.f32 %v3719, %v3737
    %v3740 = vadd.f32 %v3720, %v3738
    %v3741 = vld [vmem:[#allocation2 + $0x20] sm:$0xff]
    %v3742 = vld [vmem:[#allocation2 + $0x28] sm:$0xff]
    %3743 = vrot.lane.b32.xlu0 %v3741, 17
    %v3744 = vpop.permute.xlu0 %3743
    %3745 = vrot.lane.b32.xlu0 %v3742, 17
    %v3746 = vpop.permute.xlu0 %3745
    %v3747 = vsel %vm71, %v3744, %v3746
    %v3748 = vsel %vm71, %v3746, %v3744
    %v3749 = vmul.f32 %v3748, %v3294
    %v3750 = vmul.f32 %v3747, %v3298
    %s3751 = sld [smem:[#allocation6 + $0xea]]
    %v3752 = vstv %s3751
    %v3753 = vmul.f32 %v3752, %v3749
    %v3754 = vmul.f32 %v3752, %v3750
    %v3755 = vadd.f32 %v3733, %v3753
    %v3756 = vadd.f32 %v3734, %v3754
    %s3757 = sld [smem:[#allocation6 + $0x10e]]
    %v3758 = vstv %s3757
    %v3759 = vmul.f32 %v3758, %v3749
    %v3760 = vmul.f32 %v3758, %v3750
    %v3761 = vadd.f32 %v3739, %v3759
    %v3762 = vadd.f32 %v3740, %v3760
    %3763 = vrot.lane.b32.xlu0 %v3741, 16
    %v3764 = vpop.permute.xlu0 %3763
    %3765 = vrot.lane.b32.xlu0 %v3742, 16
    %v3766 = vpop.permute.xlu0 %3765
    %v3767 = vsel %vm104, %v3764, %v3766
    %v3768 = vsel %vm104, %v3766, %v3764
    %v3769 = vmul.f32 %v3768, %v3326
    %v3770 = vmul.f32 %v3767, %v3330
    %s3771 = sld [smem:[#allocation6 + $0xeb]]
    %v3772 = vstv %s3771
    %v3773 = vmul.f32 %v3772, %v3769
    %v3774 = vmul.f32 %v3772, %v3770
    %v3775 = vadd.f32 %v3755, %v3773
    %v3776 = vadd.f32 %v3756, %v3774
    %s3777 = sld [smem:[#allocation6 + $0x10f]]
    %v3778 = vstv %s3777
    %v3779 = vmul.f32 %v3778, %v3769
    %v3780 = vmul.f32 %v3778, %v3770
    %v3781 = vadd.f32 %v3761, %v3779
    %v3782 = vadd.f32 %v3762, %v3780
    %3783 = vrot.lane.b32.xlu0 %v3741, 15
    %v3784 = vpop.permute.xlu0 %3783
    %3785 = vrot.lane.b32.xlu0 %v3742, 15
    %v3786 = vpop.permute.xlu0 %3785
    %v3787 = vsel %vm138, %v3784, %v3786
    %v3788 = vsel %vm138, %v3786, %v3784
    %v3789 = vmul.f32 %v3788, %v3358
    %v3790 = vmul.f32 %v3787, %v3362
    %s3791 = sld [smem:[#allocation6 + $0xec]]
    %v3792 = vstv %s3791
    %v3793 = vmul.f32 %v3792, %v3789
    %v3794 = vmul.f32 %v3792, %v3790
    %v3795 = vadd.f32 %v3775, %v3793
    %v3796 = vadd.f32 %v3776, %v3794
    %s3797 = sld [smem:[#allocation6 + $0x110]]
    %v3798 = vstv %s3797
    %v3799 = vmul.f32 %v3798, %v3789
    %v3800 = vmul.f32 %v3798, %v3790
    %v3801 = vadd.f32 %v3781, %v3799
    %v3802 = vadd.f32 %v3782, %v3800
    %3803 = vrot.lane.b32.xlu0 %v3741, 1
    %v3804 = vpop.permute.xlu0 %3803
    %3805 = vrot.lane.b32.xlu0 %v3742, 1
    %v3806 = vpop.permute.xlu0 %3805
    %v3807 = vsel %vm172, %v3804, %v3806
    %v3808 = vsel %vm172, %v3806, %v3804
    %v3809 = vmul.f32 %v3808, %v3390
    %v3810 = vmul.f32 %v3807, %v3394
    %s3811 = sld [smem:[#allocation6 + $0xed]]
    %v3812 = vstv %s3811
    %v3813 = vmul.f32 %v3812, %v3809
    %v3814 = vmul.f32 %v3812, %v3810
    %v3815 = vadd.f32 %v3795, %v3813
    %v3816 = vadd.f32 %v3796, %v3814
    %s3817 = sld [smem:[#allocation6 + $0x111]]
    %v3818 = vstv %s3817
    %v3819 = vmul.f32 %v3818, %v3809
    %v3820 = vmul.f32 %v3818, %v3810
    %v3821 = vadd.f32 %v3801, %v3819
    %v3822 = vadd.f32 %v3802, %v3820
    %v3823 = vmul.f32 %v3741, %v3416
    %v3824 = vmul.f32 %v3742, %v3420
    %s3825 = sld [smem:[#allocation6 + $0xee]]
    %v3826 = vstv %s3825
    %v3827 = vmul.f32 %v3826, %v3823
    %v3828 = vmul.f32 %v3826, %v3824
    %v3829 = vadd.f32 %v3815, %v3827
    %v3830 = vadd.f32 %v3816, %v3828
    %s3831 = sld [smem:[#allocation6 + $0x112]]
    %v3832 = vstv %s3831
    %v3833 = vmul.f32 %v3832, %v3823
    %v3834 = vmul.f32 %v3832, %v3824
    %v3835 = vadd.f32 %v3821, %v3833
    %v3836 = vadd.f32 %v3822, %v3834
    %3837 = vrot.lane.b32.xlu0 %v3741, 127
    %v3838 = vpop.permute.xlu0 %3837
    %3839 = vrot.lane.b32.xlu0 %v3742, 127
    %v3840 = vpop.permute.xlu0 %3839
    %v3841 = vsel %vm233, %v3838, %v3840
    %v3842 = vsel %vm233, %v3840, %v3838
    %v3843 = vmul.f32 %v3841, %v3448
    %v3844 = vmul.f32 %v3842, %v3452
    %s3845 = sld [smem:[#allocation6 + $0xef]]
    %v3846 = vstv %s3845
    %v3847 = vmul.f32 %v3846, %v3843
    %v3848 = vmul.f32 %v3846, %v3844
    %v3849 = vadd.f32 %v3829, %v3847
    %v3850 = vadd.f32 %v3830, %v3848
    %s3851 = sld [smem:[#allocation6 + $0x113]]
    %v3852 = vstv %s3851
    %v3853 = vmul.f32 %v3852, %v3843
    %v3854 = vmul.f32 %v3852, %v3844
    %v3855 = vadd.f32 %v3835, %v3853
    %v3856 = vadd.f32 %v3836, %v3854
    %3857 = vrot.lane.b32.xlu0 %v3741, 113
    %v3858 = vpop.permute.xlu0 %3857
    %3859 = vrot.lane.b32.xlu0 %v3742, 113
    %v3860 = vpop.permute.xlu0 %3859
    %v3861 = vsel %vm267, %v3858, %v3860
    %v3862 = vsel %vm267, %v3860, %v3858
    %v3863 = vmul.f32 %v3861, %v3480
    %v3864 = vmul.f32 %v3862, %v3484
    %s3865 = sld [smem:[#allocation6 + $0xf0]]
    %v3866 = vstv %s3865
    %v3867 = vmul.f32 %v3866, %v3863
    %v3868 = vmul.f32 %v3866, %v3864
    %v3869 = vadd.f32 %v3849, %v3867
    %v3870 = vadd.f32 %v3850, %v3868
    %s3871 = sld [smem:[#allocation6 + $0x114]]
    %v3872 = vstv %s3871
    %v3873 = vmul.f32 %v3872, %v3863
    %v3874 = vmul.f32 %v3872, %v3864
    %v3875 = vadd.f32 %v3855, %v3873
    %v3876 = vadd.f32 %v3856, %v3874
    %3877 = vrot.lane.b32.xlu0 %v3741, 112
    %v3878 = vpop.permute.xlu0 %3877
    %3879 = vrot.lane.b32.xlu0 %v3742, 112
    %v3880 = vpop.permute.xlu0 %3879
    %v3881 = vsel %vm301, %v3878, %v3880
    %v3882 = vsel %vm301, %v3880, %v3878
    %v3883 = vmul.f32 %v3881, %v3512
    %v3884 = vmul.f32 %v3882, %v3516
    %s3885 = sld [smem:[#allocation6 + $0xf1]]
    %v3886 = vstv %s3885
    %v3887 = vmul.f32 %v3886, %v3883
    %v3888 = vmul.f32 %v3886, %v3884
    %v3889 = vadd.f32 %v3869, %v3887
    %v3890 = vadd.f32 %v3870, %v3888
    %s3891 = sld [smem:[#allocation6 + $0x115]]
    %v3892 = vstv %s3891
    %v3893 = vmul.f32 %v3892, %v3883
    %v3894 = vmul.f32 %v3892, %v3884
    %v3895 = vadd.f32 %v3875, %v3893
    %v3896 = vadd.f32 %v3876, %v3894
    %3897 = vrot.lane.b32.xlu0 %v3741, 111
    %v3898 = vpop.permute.xlu0 %3897
    %3899 = vrot.lane.b32.xlu0 %v3742, 111
    %v3900 = vpop.permute.xlu0 %3899
    %v3901 = vsel %vm335, %v3898, %v3900
    %v3902 = vsel %vm335, %v3900, %v3898
    %v3903 = vmul.f32 %v3901, %v3544
    %v3904 = vmul.f32 %v3902, %v3548
    %s3905 = sld [smem:[#allocation6 + $0xf2]]
    %v3906 = vstv %s3905
    %v3907 = vmul.f32 %v3906, %v3903
    %v3908 = vmul.f32 %v3906, %v3904
    %v3909 = vadd.f32 %v3889, %v3907
    %v3910 = vadd.f32 %v3890, %v3908
    %s3911 = sld [smem:[#allocation6 + $0x116]]
    %v3912 = vstv %s3911
    %v3913 = vmul.f32 %v3912, %v3903
    %v3914 = vmul.f32 %v3912, %v3904
    %v3915 = vadd.f32 %v3895, %v3913
    %v3916 = vadd.f32 %v3896, %v3914
    %v3917 = vld [vmem:[#allocation2 + $0x30] sm:$0xff]
    %v3918 = vld [vmem:[#allocation2 + $0x38] sm:$0xff]
    %3919 = vrot.lane.b32.xlu0 %v3917, 17
    %v3920 = vpop.permute.xlu0 %3919
    %3921 = vrot.lane.b32.xlu0 %v3918, 17
    %v3922 = vpop.permute.xlu0 %3921
    %v3923 = vsel %vm71, %v3920, %v3922
    %v3924 = vsel %vm71, %v3922, %v3920
    %v3925 = vmul.f32 %v3924, %v3294
    %v3926 = vmul.f32 %v3923, %v3298
    %s3927 = sld [smem:[#allocation6 + $0xf3]]
    %v3928 = vstv %s3927
    %v3929 = vmul.f32 %v3928, %v3925
    %v3930 = vmul.f32 %v3928, %v3926
    %v3931 = vadd.f32 %v3909, %v3929
    %v3932 = vadd.f32 %v3910, %v3930
    %s3933 = sld [smem:[#allocation6 + $0x117]]
    %v3934 = vstv %s3933
    %v3935 = vmul.f32 %v3934, %v3925
    %v3936 = vmul.f32 %v3934, %v3926
    %v3937 = vadd.f32 %v3915, %v3935
    %v3938 = vadd.f32 %v3916, %v3936
    %3939 = vrot.lane.b32.xlu0 %v3917, 16
    %v3940 = vpop.permute.xlu0 %3939
    %3941 = vrot.lane.b32.xlu0 %v3918, 16
    %v3942 = vpop.permute.xlu0 %3941
    %v3943 = vsel %vm104, %v3940, %v3942
    %v3944 = vsel %vm104, %v3942, %v3940
    %v3945 = vmul.f32 %v3944, %v3326
    %v3946 = vmul.f32 %v3943, %v3330
    %s3947 = sld [smem:[#allocation6 + $0xf4]]
    %v3948 = vstv %s3947
    %v3949 = vmul.f32 %v3948, %v3945
    %v3950 = vmul.f32 %v3948, %v3946
    %v3951 = vadd.f32 %v3931, %v3949
    %v3952 = vadd.f32 %v3932, %v3950
    %s3953 = sld [smem:[#allocation6 + $0x118]]
    %v3954 = vstv %s3953
    %v3955 = vmul.f32 %v3954, %v3945
    %v3956 = vmul.f32 %v3954, %v3946
    %v3957 = vadd.f32 %v3937, %v3955
    %v3958 = vadd.f32 %v3938, %v3956
    %3959 = vrot.lane.b32.xlu0 %v3917, 15
    %v3960 = vpop.permute.xlu0 %3959
    %3961 = vrot.lane.b32.xlu0 %v3918, 15
    %v3962 = vpop.permute.xlu0 %3961
    %v3963 = vsel %vm138, %v3960, %v3962
    %v3964 = vsel %vm138, %v3962, %v3960
    %v3965 = vmul.f32 %v3964, %v3358
    %v3966 = vmul.f32 %v3963, %v3362
    %s3967 = sld [smem:[#allocation6 + $0xf5]]
    %v3968 = vstv %s3967
    %v3969 = vmul.f32 %v3968, %v3965
    %v3970 = vmul.f32 %v3968, %v3966
    %v3971 = vadd.f32 %v3951, %v3969
    %v3972 = vadd.f32 %v3952, %v3970
    %s3973 = sld [smem:[#allocation6 + $0x119]]
    %v3974 = vstv %s3973
    %v3975 = vmul.f32 %v3974, %v3965
    %v3976 = vmul.f32 %v3974, %v3966
    %v3977 = vadd.f32 %v3957, %v3975
    %v3978 = vadd.f32 %v3958, %v3976
    %3979 = vrot.lane.b32.xlu0 %v3917, 1
    %v3980 = vpop.permute.xlu0 %3979
    %3981 = vrot.lane.b32.xlu0 %v3918, 1
    %v3982 = vpop.permute.xlu0 %3981
    %v3983 = vsel %vm172, %v3980, %v3982
    %v3984 = vsel %vm172, %v3982, %v3980
    %v3985 = vmul.f32 %v3984, %v3390
    %v3986 = vmul.f32 %v3983, %v3394
    %s3987 = sld [smem:[#allocation6 + $0xf6]]
    %v3988 = vstv %s3987
    %v3989 = vmul.f32 %v3988, %v3985
    %v3990 = vmul.f32 %v3988, %v3986
    %v3991 = vadd.f32 %v3971, %v3989
    %v3992 = vadd.f32 %v3972, %v3990
    %s3993 = sld [smem:[#allocation6 + $0x11a]]
    %v3994 = vstv %s3993
    %v3995 = vmul.f32 %v3994, %v3985
    %v3996 = vmul.f32 %v3994, %v3986
    %v3997 = vadd.f32 %v3977, %v3995
    %v3998 = vadd.f32 %v3978, %v3996
    %v3999 = vmul.f32 %v3917, %v3416
    %v4000 = vmul.f32 %v3918, %v3420
    %s4001 = sld [smem:[#allocation6 + $0xf7]]
    %v4002 = vstv %s4001
    %v4003 = vmul.f32 %v4002, %v3999
    %v4004 = vmul.f32 %v4002, %v4000
    %v4005 = vadd.f32 %v3991, %v4003
    %v4006 = vadd.f32 %v3992, %v4004
    %s4007 = sld [smem:[#allocation6 + $0x11b]]
    %v4008 = vstv %s4007
    %v4009 = vmul.f32 %v4008, %v3999
    %v4010 = vmul.f32 %v4008, %v4000
    %v4011 = vadd.f32 %v3997, %v4009
    %v4012 = vadd.f32 %v3998, %v4010
    %4013 = vrot.lane.b32.xlu0 %v3917, 127
    %v4014 = vpop.permute.xlu0 %4013
    %4015 = vrot.lane.b32.xlu0 %v3918, 127
    %v4016 = vpop.permute.xlu0 %4015
    %v4017 = vsel %vm233, %v4014, %v4016
    %v4018 = vsel %vm233, %v4016, %v4014
    %v4019 = vmul.f32 %v4017, %v3448
    %v4020 = vmul.f32 %v4018, %v3452
    %s4021 = sld [smem:[#allocation6 + $0xf8]]
    %v4022 = vstv %s4021
    %v4023 = vmul.f32 %v4022, %v4019
    %v4024 = vmul.f32 %v4022, %v4020
    %v4025 = vadd.f32 %v4005, %v4023
    %v4026 = vadd.f32 %v4006, %v4024
    %s4027 = sld [smem:[#allocation6 + $0x11c]]
    %v4028 = vstv %s4027
    %v4029 = vmul.f32 %v4028, %v4019
    %v4030 = vmul.f32 %v4028, %v4020
    %v4031 = vadd.f32 %v4011, %v4029
    %v4032 = vadd.f32 %v4012, %v4030
    %4033 = vrot.lane.b32.xlu0 %v3917, 113
    %v4034 = vpop.permute.xlu0 %4033
    %4035 = vrot.lane.b32.xlu0 %v3918, 113
    %v4036 = vpop.permute.xlu0 %4035
    %v4037 = vsel %vm267, %v4034, %v4036
    %v4038 = vsel %vm267, %v4036, %v4034
    %v4039 = vmul.f32 %v4037, %v3480
    %v4040 = vmul.f32 %v4038, %v3484
    %s4041 = sld [smem:[#allocation6 + $0xf9]]
    %v4042 = vstv %s4041
    %v4043 = vmul.f32 %v4042, %v4039
    %v4044 = vmul.f32 %v4042, %v4040
    %v4045 = vadd.f32 %v4025, %v4043
    %v4046 = vadd.f32 %v4026, %v4044
    %s4047 = sld [smem:[#allocation6 + $0x11d]]
    %v4048 = vstv %s4047
    %v4049 = vmul.f32 %v4048, %v4039
    %v4050 = vmul.f32 %v4048, %v4040
    %v4051 = vadd.f32 %v4031, %v4049
    %v4052 = vadd.f32 %v4032, %v4050
    %4053 = vrot.lane.b32.xlu0 %v3917, 112
    %v4054 = vpop.permute.xlu0 %4053
    %4055 = vrot.lane.b32.xlu0 %v3918, 112
    %v4056 = vpop.permute.xlu0 %4055
    %v4057 = vsel %vm301, %v4054, %v4056
    %v4058 = vsel %vm301, %v4056, %v4054
    %v4059 = vmul.f32 %v4057, %v3512
    %v4060 = vmul.f32 %v4058, %v3516
    %s4061 = sld [smem:[#allocation6 + $0xfa]]
    %v4062 = vstv %s4061
    %v4063 = vmul.f32 %v4062, %v4059
    %v4064 = vmul.f32 %v4062, %v4060
    %v4065 = vadd.f32 %v4045, %v4063
    %v4066 = vadd.f32 %v4046, %v4064
    %s4067 = sld [smem:[#allocation6 + $0x11e]]
    %v4068 = vstv %s4067
    %v4069 = vmul.f32 %v4068, %v4059
    %v4070 = vmul.f32 %v4068, %v4060
    %v4071 = vadd.f32 %v4051, %v4069
    %v4072 = vadd.f32 %v4052, %v4070
    %4073 = vrot.lane.b32.xlu0 %v3917, 111
    %v4074 = vpop.permute.xlu0 %4073
    %4075 = vrot.lane.b32.xlu0 %v3918, 111
    %v4076 = vpop.permute.xlu0 %4075
    %v4077 = vsel %vm335, %v4074, %v4076
    %v4078 = vsel %vm335, %v4076, %v4074
    %v4079 = vmul.f32 %v4077, %v3544
    %v4080 = vmul.f32 %v4078, %v3548
    %s4081 = sld [smem:[#allocation6 + $0xfb]]
    %v4082 = vstv %s4081
    %v4083 = vmul.f32 %v4082, %v4079
    %v4084 = vmul.f32 %v4082, %v4080
    %v4085 = vadd.f32 %v4065, %v4083
    %v4086 = vadd.f32 %v4066, %v4084
    %s4087 = sld [smem:[#allocation6 + $0x11f]]
    %v4088 = vstv %s4087
    %v4089 = vmul.f32 %v4088, %v4079
    %v4090 = vmul.f32 %v4088, %v4080
    %v4091 = vadd.f32 %v4071, %v4089
    %v4092 = vadd.f32 %v4072, %v4090
    %s4093 = scalar_lea.vmem %s6, 6
    %v4094 = vld [vmem:[%s4093] ss:$8 sm:$0x3]
    %v4096 = vlaneseq
    %v4097 = vshrl.u32 %v4096, 7
    %v4098 = vsub.s32 0, %v4097
    %v4099 = vrot.slane %v4094, %v4098
    %v4100 = vlaneseq
    %v4101 = vshrl.u32 %v4100, 7
    %v4102 = vsub.s32 1, %v4101
    %v4103 = vrot.slane %v4094, %v4102
    %v4106 = vadd.f32 %v4085, %v4099
    %v4107 = vadd.f32 %v4086, %v4103
    %v4108 = vmax.f32 %v4106, 0.0
    %v4109 = vmax.f32 %v4107, 0.0
    %4110 = vst [vmem:[#allocation3 + $0x60] sm:$0xff] %v4108
    %4111 = vst [vmem:[#allocation3 + $0x68] sm:$0xff] %v4109
    %s4112 = scalar_lea.vmem %s6, 7
    %v4113 = vld [vmem:[%s4112] ss:$8 sm:$0x3]
    %v4115 = vlaneseq
    %v4116 = vshrl.u32 %v4115, 7
    %v4117 = vsub.s32 0, %v4116
    %v4118 = vrot.slane %v4113, %v4117
    %v4119 = vlaneseq
    %v4120 = vshrl.u32 %v4119, 7
    %v4121 = vsub.s32 1, %v4120
    %v4122 = vrot.slane %v4113, %v4121
    %v4125 = vadd.f32 %v4091, %v4118
    %v4126 = vadd.f32 %v4092, %v4122
    %v4127 = vmax.f32 %v4125, 0.0
    %v4128 = vmax.f32 %v4126, 0.0
    %4129 = vst [vmem:[#allocation3 + $0x70] sm:$0xff] %v4127
    %4130 = vst [vmem:[#allocation3 + $0x78] sm:$0xff] %v4128
    %v4131 = vld [vmem:[#allocation3] sm:$0xff]
    %v4132 = vld [vmem:[#allocation3 + $0x8] sm:$0xff]
    %v4133 = vld [vmem:[#allocation3 + $0x10] sm:$0xff]
    %v4134 = vld [vmem:[#allocation3 + $0x18] sm:$0xff]
    %v4135 = vld [vmem:[#allocation3 + $0x20] sm:$0xff]
    %v4136 = vld [vmem:[#allocation3 + $0x28] sm:$0xff]
    %v4137 = vld [vmem:[#allocation3 + $0x30] sm:$0xff]
    %v4138 = vld [vmem:[#allocation3 + $0x38] sm:$0xff]
    %v4139 = vld [vmem:[#allocation3 + $0x40] sm:$0xff]
    %v4140 = vld [vmem:[#allocation3 + $0x48] sm:$0xff]
    %v4141 = vld [vmem:[#allocation3 + $0x50] sm:$0xff]
    %v4142 = vld [vmem:[#allocation3 + $0x58] sm:$0xff]
    %v4143 = vld [vmem:[#allocation3 + $0x60] sm:$0xff]
    %v4144 = vld [vmem:[#allocation3 + $0x68] sm:$0xff]
    %v4145 = vld [vmem:[#allocation3 + $0x70] sm:$0xff]
    %v4146 = vld [vmem:[#allocation3 + $0x78] sm:$0xff]
    %v4147 = vld [vmem:[%s7] sm:$0xff]
    %v4148 = vld [vmem:[%s7 + $0x8] sm:$0xff]
    %v4149 = vld [vmem:[%s7 + $0x10] sm:$0xff]
    %v4150 = vld [vmem:[%s7 + $0x18] sm:$0xff]
    %v4151 = vld [vmem:[%s7 + $0x20] sm:$0xff]
    %v4152 = vld [vmem:[%s7 + $0x28] sm:$0xff]
    %v4153 = vld [vmem:[%s7 + $0x30] sm:$0xff]
    %v4154 = vld [vmem:[%s7 + $0x38] sm:$0xff]
    %v4155 = vld [vmem:[%s7 + $0x40] sm:$0xff]
    %v4156 = vld [vmem:[%s7 + $0x48] sm:$0xff]
    %v4157 = vld [vmem:[%s7 + $0x50] sm:$0xff]
    %v4158 = vld [vmem:[%s7 + $0x58] sm:$0xff]
    %v4159 = vld [vmem:[%s7 + $0x60] sm:$0xff]
    %v4160 = vld [vmem:[%s7 + $0x68] sm:$0xff]
    %v4161 = vld [vmem:[%s7 + $0x70] sm:$0xff]
    %v4162 = vld [vmem:[%s7 + $0x78] sm:$0xff]
    %v4163 = vld [vmem:[%s7 + $0x80] sm:$0xff]
    %v4164 = vld [vmem:[%s7 + $0x88] sm:$0xff]
    %v4165 = vld [vmem:[%s7 + $0x90] sm:$0xff]
    %v4166 = vld [vmem:[%s7 + $0x98] sm:$0xff]
    %v4167 = vld [vmem:[%s7 + $0xa0] sm:$0xff]
    %v4168 = vld [vmem:[%s7 + $0xa8] sm:$0xff]
    %v4169 = vld [vmem:[%s7 + $0xb0] sm:$0xff]
    %v4170 = vld [vmem:[%s7 + $0xb8] sm:$0xff]
    %v4171 = vld [vmem:[%s7 + $0xc0] sm:$0xff]
    %v4172 = vld [vmem:[%s7 + $0xc8] sm:$0xff]
    %v4173 = vld [vmem:[%s7 + $0xd0] sm:$0xff]
    %v4174 = vld [vmem:[%s7 + $0xd8] sm:$0xff]
    %v4175 = vld [vmem:[%s7 + $0xe0] sm:$0xff]
    %v4176 = vld [vmem:[%s7 + $0xe8] sm:$0xff]
    %v4177 = vld [vmem:[%s7 + $0xf0] sm:$0xff]
    %v4178 = vld [vmem:[%s7 + $0xf8] sm:$0xff]
    %v4179 = vld [vmem:[%s7 + $0x100] sm:$0xff]
    %v4180 = vld [vmem:[%s7 + $0x108] sm:$0xff]
    %v4181 = vld [vmem:[%s7 + $0x110] sm:$0xff]
    %v4182 = vld [vmem:[%s7 + $0x118] sm:$0xff]
    %v4183 = vld [vmem:[%s7 + $0x120] sm:$0xff]
    %v4184 = vld [vmem:[%s7 + $0x128] sm:$0xff]
    %v4185 = vld [vmem:[%s7 + $0x130] sm:$0xff]
    %v4186 = vld [vmem:[%s7 + $0x138] sm:$0xff]
    %v4187 = vld [vmem:[%s7 + $0x140] sm:$0xff]
    %v4188 = vld [vmem:[%s7 + $0x148] sm:$0xff]
    %v4189 = vld [vmem:[%s7 + $0x150] sm:$0xff]
    %v4190 = vld [vmem:[%s7 + $0x158] sm:$0xff]
    %v4191 = vld [vmem:[%s7 + $0x160] sm:$0xff]
    %v4192 = vld [vmem:[%s7 + $0x168] sm:$0xff]
    %v4193 = vld [vmem:[%s7 + $0x170] sm:$0xff]
    %v4194 = vld [vmem:[%s7 + $0x178] sm:$0xff]
    %v4195 = vld [vmem:[%s7 + $0x180] sm:$0xff]
    %v4196 = vld [vmem:[%s7 + $0x188] sm:$0xff]
    %v4197 = vld [vmem:[%s7 + $0x190] sm:$0xff]
    %v4198 = vld [vmem:[%s7 + $0x198] sm:$0xff]
    %v4199 = vld [vmem:[%s7 + $0x1a0] sm:$0xff]
    %v4200 = vld [vmem:[%s7 + $0x1a8] sm:$0xff]
    %v4201 = vld [vmem:[%s7 + $0x1b0] sm:$0xff]
    %v4202 = vld [vmem:[%s7 + $0x1b8] sm:$0xff]
    %v4203 = vld [vmem:[%s7 + $0x1c0] sm:$0xff]
    %v4204 = vld [vmem:[%s7 + $0x1c8] sm:$0xff]
    %v4205 = vld [vmem:[%s7 + $0x1d0] sm:$0xff]
    %v4206 = vld [vmem:[%s7 + $0x1d8] sm:$0xff]
    %v4207 = vld [vmem:[%s7 + $0x1e0] sm:$0xff]
    %v4208 = vld [vmem:[%s7 + $0x1e8] sm:$0xff]
    %v4209 = vld [vmem:[%s7 + $0x1f0] sm:$0xff]
    %v4210 = vld [vmem:[%s7 + $0x1f8] sm:$0xff]
    %v4211 = vld [vmem:[%s7 + $0x200] sm:$0xff]
    %v4212 = vld [vmem:[%s7 + $0x208] sm:$0xff]
    %v4213 = vld [vmem:[%s7 + $0x210] sm:$0xff]
    %v4214 = vld [vmem:[%s7 + $0x218] sm:$0xff]
    %v4215 = vld [vmem:[%s7 + $0x220] sm:$0xff]
    %v4216 = vld [vmem:[%s7 + $0x228] sm:$0xff]
    %v4217 = vld [vmem:[%s7 + $0x230] sm:$0xff]
    %v4218 = vld [vmem:[%s7 + $0x238] sm:$0xff]
    %v4219 = vld [vmem:[%s7 + $0x240] sm:$0xff]
    %v4220 = vld [vmem:[%s7 + $0x248] sm:$0xff]
    %v4221 = vld [vmem:[%s7 + $0x250] sm:$0xff]
    %v4222 = vld [vmem:[%s7 + $0x258] sm:$0xff]
    %v4223 = vld [vmem:[%s7 + $0x260] sm:$0xff]
    %v4224 = vld [vmem:[%s7 + $0x268] sm:$0xff]
    %v4225 = vld [vmem:[%s7 + $0x270] sm:$0xff]
    %v4226 = vld [vmem:[%s7 + $0x278] sm:$0xff]
    %v4227 = vld [vmem:[%s7 + $0x280] sm:$0xff]
    %v4228 = vld [vmem:[%s7 + $0x288] sm:$0xff]
    %v4229 = vld [vmem:[%s7 + $0x290] sm:$0xff]
    %v4230 = vld [vmem:[%s7 + $0x298] sm:$0xff]
    %v4231 = vld [vmem:[%s7 + $0x2a0] sm:$0xff]
    %v4232 = vld [vmem:[%s7 + $0x2a8] sm:$0xff]
    %v4233 = vld [vmem:[%s7 + $0x2b0] sm:$0xff]
    %v4234 = vld [vmem:[%s7 + $0x2b8] sm:$0xff]
    %v4235 = vld [vmem:[%s7 + $0x2c0] sm:$0xff]
    %v4236 = vld [vmem:[%s7 + $0x2c8] sm:$0xff]
    %v4237 = vld [vmem:[%s7 + $0x2d0] sm:$0xff]
    %v4238 = vld [vmem:[%s7 + $0x2d8] sm:$0xff]
    %v4239 = vld [vmem:[%s7 + $0x2e0] sm:$0xff]
    %v4240 = vld [vmem:[%s7 + $0x2e8] sm:$0xff]
    %v4241 = vld [vmem:[%s7 + $0x2f0] sm:$0xff]
    %v4242 = vld [vmem:[%s7 + $0x2f8] sm:$0xff]
    %v4243 = vld [vmem:[%s7 + $0x300] sm:$0xff]
    %v4244 = vld [vmem:[%s7 + $0x308] sm:$0xff]
    %v4245 = vld [vmem:[%s7 + $0x310] sm:$0xff]
    %v4246 = vld [vmem:[%s7 + $0x318] sm:$0xff]
    %v4247 = vld [vmem:[%s7 + $0x320] sm:$0xff]
    %v4248 = vld [vmem:[%s7 + $0x328] sm:$0xff]
    %v4249 = vld [vmem:[%s7 + $0x330] sm:$0xff]
    %v4250 = vld [vmem:[%s7 + $0x338] sm:$0xff]
    %v4251 = vld [vmem:[%s7 + $0x340] sm:$0xff]
    %v4252 = vld [vmem:[%s7 + $0x348] sm:$0xff]
    %v4253 = vld [vmem:[%s7 + $0x350] sm:$0xff]
    %v4254 = vld [vmem:[%s7 + $0x358] sm:$0xff]
    %v4255 = vld [vmem:[%s7 + $0x360] sm:$0xff]
    %v4256 = vld [vmem:[%s7 + $0x368] sm:$0xff]
    %v4257 = vld [vmem:[%s7 + $0x370] sm:$0xff]
    %v4258 = vld [vmem:[%s7 + $0x378] sm:$0xff]
    %v4259 = vld [vmem:[%s7 + $0x380] sm:$0xff]
    %v4260 = vld [vmem:[%s7 + $0x388] sm:$0xff]
    %v4261 = vld [vmem:[%s7 + $0x390] sm:$0xff]
    %v4262 = vld [vmem:[%s7 + $0x398] sm:$0xff]
    %v4263 = vld [vmem:[%s7 + $0x3a0] sm:$0xff]
    %v4264 = vld [vmem:[%s7 + $0x3a8] sm:$0xff]
    %v4265 = vld [vmem:[%s7 + $0x3b0] sm:$0xff]
    %v4266 = vld [vmem:[%s7 + $0x3b8] sm:$0xff]
    %v4267 = vld [vmem:[%s7 + $0x3c0] sm:$0xff]
    %v4268 = vld [vmem:[%s7 + $0x3c8] sm:$0xff]
    %v4269 = vld [vmem:[%s7 + $0x3d0] sm:$0xff]
    %v4270 = vld [vmem:[%s7 + $0x3d8] sm:$0xff]
    %v4271 = vld [vmem:[%s7 + $0x3e0] sm:$0xff]
    %v4272 = vld [vmem:[%s7 + $0x3e8] sm:$0xff]
    %v4273 = vld [vmem:[%s7 + $0x3f0] sm:$0xff]
    %v4274 = vld [vmem:[%s7 + $0x3f8] sm:$0xff]
    %v4275 = vld [vmem:[%s7 + $0x400] sm:$0xff]
    %v4276 = vld [vmem:[%s7 + $0x408] sm:$0xff]
    %v4277 = vld [vmem:[%s7 + $0x410] sm:$0xff]
    %v4278 = vld [vmem:[%s7 + $0x418] sm:$0xff]
    %v4279 = vld [vmem:[%s7 + $0x420] sm:$0xff]
    %v4280 = vld [vmem:[%s7 + $0x428] sm:$0xff]
    %v4281 = vld [vmem:[%s7 + $0x430] sm:$0xff]
    %v4282 = vld [vmem:[%s7 + $0x438] sm:$0xff]
    %v4283 = vld [vmem:[%s7 + $0x440] sm:$0xff]
    %v4284 = vld [vmem:[%s7 + $0x448] sm:$0xff]
    %v4285 = vld [vmem:[%s7 + $0x450] sm:$0xff]
    %v4286 = vld [vmem:[%s7 + $0x458] sm:$0xff]
    %v4287 = vld [vmem:[%s7 + $0x460] sm:$0xff]
    %v4288 = vld [vmem:[%s7 + $0x468] sm:$0xff]
    %v4289 = vld [vmem:[%s7 + $0x470] sm:$0xff]
    %v4290 = vld [vmem:[%s7 + $0x478] sm:$0xff]
    %v4291 = vld [vmem:[%s7 + $0x480] sm:$0xff]
    %v4292 = vld [vmem:[%s7 + $0x488] sm:$0xff]
    %v4293 = vld [vmem:[%s7 + $0x490] sm:$0xff]
    %v4294 = vld [vmem:[%s7 + $0x498] sm:$0xff]
    %v4295 = vld [vmem:[%s7 + $0x4a0] sm:$0xff]
    %v4296 = vld [vmem:[%s7 + $0x4a8] sm:$0xff]
    %v4297 = vld [vmem:[%s7 + $0x4b0] sm:$0xff]
    %v4298 = vld [vmem:[%s7 + $0x4b8] sm:$0xff]
    %v4299 = vld [vmem:[%s7 + $0x4c0] sm:$0xff]
    %v4300 = vld [vmem:[%s7 + $0x4c8] sm:$0xff]
    %v4301 = vld [vmem:[%s7 + $0x4d0] sm:$0xff]
    %v4302 = vld [vmem:[%s7 + $0x4d8] sm:$0xff]
    %v4303 = vld [vmem:[%s7 + $0x4e0] sm:$0xff]
    %v4304 = vld [vmem:[%s7 + $0x4e8] sm:$0xff]
    %v4305 = vld [vmem:[%s7 + $0x4f0] sm:$0xff]
    %v4306 = vld [vmem:[%s7 + $0x4f8] sm:$0xff]
    %v4307 = vld [vmem:[%s7 + $0x500] sm:$0xff]
    %v4308 = vld [vmem:[%s7 + $0x508] sm:$0xff]
    %v4309 = vld [vmem:[%s7 + $0x510] sm:$0xff]
    %v4310 = vld [vmem:[%s7 + $0x518] sm:$0xff]
    %v4311 = vld [vmem:[%s7 + $0x520] sm:$0xff]
    %v4312 = vld [vmem:[%s7 + $0x528] sm:$0xff]
    %v4313 = vld [vmem:[%s7 + $0x530] sm:$0xff]
    %v4314 = vld [vmem:[%s7 + $0x538] sm:$0xff]
    %v4315 = vld [vmem:[%s7 + $0x540] sm:$0xff]
    %v4316 = vld [vmem:[%s7 + $0x548] sm:$0xff]
    %v4317 = vld [vmem:[%s7 + $0x550] sm:$0xff]
    %v4318 = vld [vmem:[%s7 + $0x558] sm:$0xff]
    %v4319 = vld [vmem:[%s7 + $0x560] sm:$0xff]
    %v4320 = vld [vmem:[%s7 + $0x568] sm:$0xff]
    %v4321 = vld [vmem:[%s7 + $0x570] sm:$0xff]
    %v4322 = vld [vmem:[%s7 + $0x578] sm:$0xff]
    %v4323 = vld [vmem:[%s7 + $0x580] sm:$0xff]
    %v4324 = vld [vmem:[%s7 + $0x588] sm:$0xff]
    %v4325 = vld [vmem:[%s7 + $0x590] sm:$0xff]
    %v4326 = vld [vmem:[%s7 + $0x598] sm:$0xff]
    %v4327 = vld [vmem:[%s7 + $0x5a0] sm:$0xff]
    %v4328 = vld [vmem:[%s7 + $0x5a8] sm:$0xff]
    %v4329 = vld [vmem:[%s7 + $0x5b0] sm:$0xff]
    %v4330 = vld [vmem:[%s7 + $0x5b8] sm:$0xff]
    %v4331 = vld [vmem:[%s7 + $0x5c0] sm:$0xff]
    %v4332 = vld [vmem:[%s7 + $0x5c8] sm:$0xff]
    %v4333 = vld [vmem:[%s7 + $0x5d0] sm:$0xff]
    %v4334 = vld [vmem:[%s7 + $0x5d8] sm:$0xff]
    %v4335 = vld [vmem:[%s7 + $0x5e0] sm:$0xff]
    %v4336 = vld [vmem:[%s7 + $0x5e8] sm:$0xff]
    %v4337 = vld [vmem:[%s7 + $0x5f0] sm:$0xff]
    %v4338 = vld [vmem:[%s7 + $0x5f8] sm:$0xff]
    %v4339 = vld [vmem:[%s7 + $0x600] sm:$0xff]
    %v4340 = vld [vmem:[%s7 + $0x608] sm:$0xff]
    %v4341 = vld [vmem:[%s7 + $0x610] sm:$0xff]
    %v4342 = vld [vmem:[%s7 + $0x618] sm:$0xff]
    %v4343 = vld [vmem:[%s7 + $0x620] sm:$0xff]
    %v4344 = vld [vmem:[%s7 + $0x628] sm:$0xff]
    %v4345 = vld [vmem:[%s7 + $0x630] sm:$0xff]
    %v4346 = vld [vmem:[%s7 + $0x638] sm:$0xff]
    %v4347 = vld [vmem:[%s7 + $0x640] sm:$0xff]
    %v4348 = vld [vmem:[%s7 + $0x648] sm:$0xff]
    %v4349 = vld [vmem:[%s7 + $0x650] sm:$0xff]
    %v4350 = vld [vmem:[%s7 + $0x658] sm:$0xff]
    %v4351 = vld [vmem:[%s7 + $0x660] sm:$0xff]
    %v4352 = vld [vmem:[%s7 + $0x668] sm:$0xff]
    %v4353 = vld [vmem:[%s7 + $0x670] sm:$0xff]
    %v4354 = vld [vmem:[%s7 + $0x678] sm:$0xff]
    %v4355 = vld [vmem:[%s7 + $0x680] sm:$0xff]
    %v4356 = vld [vmem:[%s7 + $0x688] sm:$0xff]
    %v4357 = vld [vmem:[%s7 + $0x690] sm:$0xff]
    %v4358 = vld [vmem:[%s7 + $0x698] sm:$0xff]
    %v4359 = vld [vmem:[%s7 + $0x6a0] sm:$0xff]
    %v4360 = vld [vmem:[%s7 + $0x6a8] sm:$0xff]
    %v4361 = vld [vmem:[%s7 + $0x6b0] sm:$0xff]
    %v4362 = vld [vmem:[%s7 + $0x6b8] sm:$0xff]
    %v4363 = vld [vmem:[%s7 + $0x6c0] sm:$0xff]
    %v4364 = vld [vmem:[%s7 + $0x6c8] sm:$0xff]
    %v4365 = vld [vmem:[%s7 + $0x6d0] sm:$0xff]
    %v4366 = vld [vmem:[%s7 + $0x6d8] sm:$0xff]
    %v4367 = vld [vmem:[%s7 + $0x6e0] sm:$0xff]
    %v4368 = vld [vmem:[%s7 + $0x6e8] sm:$0xff]
    %v4369 = vld [vmem:[%s7 + $0x6f0] sm:$0xff]
    %v4370 = vld [vmem:[%s7 + $0x6f8] sm:$0xff]
    %v4371 = vld [vmem:[%s7 + $0x700] sm:$0xff]
    %v4372 = vld [vmem:[%s7 + $0x708] sm:$0xff]
    %v4373 = vld [vmem:[%s7 + $0x710] sm:$0xff]
    %v4374 = vld [vmem:[%s7 + $0x718] sm:$0xff]
    %v4375 = vld [vmem:[%s7 + $0x720] sm:$0xff]
    %v4376 = vld [vmem:[%s7 + $0x728] sm:$0xff]
    %v4377 = vld [vmem:[%s7 + $0x730] sm:$0xff]
    %v4378 = vld [vmem:[%s7 + $0x738] sm:$0xff]
    %v4379 = vld [vmem:[%s7 + $0x740] sm:$0xff]
    %v4380 = vld [vmem:[%s7 + $0x748] sm:$0xff]
    %v4381 = vld [vmem:[%s7 + $0x750] sm:$0xff]
    %v4382 = vld [vmem:[%s7 + $0x758] sm:$0xff]
    %v4383 = vld [vmem:[%s7 + $0x760] sm:$0xff]
    %v4384 = vld [vmem:[%s7 + $0x768] sm:$0xff]
    %v4385 = vld [vmem:[%s7 + $0x770] sm:$0xff]
    %v4386 = vld [vmem:[%s7 + $0x778] sm:$0xff]
    %v4387 = vld [vmem:[%s7 + $0x780] sm:$0xff]
    %v4388 = vld [vmem:[%s7 + $0x788] sm:$0xff]
    %v4389 = vld [vmem:[%s7 + $0x790] sm:$0xff]
    %v4390 = vld [vmem:[%s7 + $0x798] sm:$0xff]
    %v4391 = vld [vmem:[%s7 + $0x7a0] sm:$0xff]
    %v4392 = vld [vmem:[%s7 + $0x7a8] sm:$0xff]
    %v4393 = vld [vmem:[%s7 + $0x7b0] sm:$0xff]
    %v4394 = vld [vmem:[%s7 + $0x7b8] sm:$0xff]
    %v4395 = vld [vmem:[%s7 + $0x7c0] sm:$0xff]
    %v4396 = vld [vmem:[%s7 + $0x7c8] sm:$0xff]
    %v4397 = vld [vmem:[%s7 + $0x7d0] sm:$0xff]
    %v4398 = vld [vmem:[%s7 + $0x7d8] sm:$0xff]
    %v4399 = vld [vmem:[%s7 + $0x7e0] sm:$0xff]
    %v4400 = vld [vmem:[%s7 + $0x7e8] sm:$0xff]
    %v4401 = vld [vmem:[%s7 + $0x7f0] sm:$0xff]
    %v4402 = vld [vmem:[%s7 + $0x7f8] sm:$0xff]
    %v4403 = vld [vmem:[%s9] sm:$0x1]
    %v4405 = vlaneseq
    %v4406 = vshrl.u32 %v4405, 7
    %v4407 = vsub.s32 0, %v4406
    %v4408 = vrot.slane %v4403, %v4407
    %4410 = vmatprep.subr.mxu0 0.0
    %4411 = vmatpush1.msra.mxu0 %v4147
    %4412 = vmatprep.subr.mxu0 0.0
    %4413 = vmatpush1.msra.mxu0 %v4148
    %4414 = vmatprep.subr.mxu0 0.0
    %4415 = vmatpush1.msra.mxu0 %v4149
    %4416 = vmatprep.subr.mxu0 0.0
    %4417 = vmatpush1.msra.mxu0 %v4150
    %4418 = vmatprep.subr.mxu0 0.0
    %4419 = vmatpush1.msra.mxu0 %v4151
    %4420 = vmatprep.subr.mxu0 0.0
    %4421 = vmatpush1.msra.mxu0 %v4152
    %4422 = vmatprep.subr.mxu0 0.0
    %4423 = vmatpush1.msra.mxu0 %v4153
    %4424 = vmatprep.subr.mxu0 0.0
    %4425 = vmatpush1.msra.mxu0 %v4154
    %4426 = vmatprep.subr.mxu0 0.0
    %4427 = vmatpush1.msra.mxu0 %v4155
    %4428 = vmatprep.subr.mxu0 0.0
    %4429 = vmatpush1.msra.mxu0 %v4156
    %4430 = vmatprep.subr.mxu0 0.0
    %4431 = vmatpush1.msra.mxu0 %v4157
    %4432 = vmatprep.subr.mxu0 0.0
    %4433 = vmatpush1.msra.mxu0 %v4158
    %4434 = vmatprep.subr.mxu0 0.0
    %4435 = vmatpush1.msra.mxu0 %v4159
    %4436 = vmatprep.subr.mxu0 0.0
    %4437 = vmatpush1.msra.mxu0 %v4160
    %4438 = vmatprep.subr.mxu0 0.0
    %4439 = vmatpush1.msra.mxu0 %v4161
    %4440 = vmatprep.subr.mxu0 0.0
    %4441 = vmatpush1.msra.mxu0 %v4162
    %4442 = vmatprep.subr.mxu0 0.0
    %4443 = vmatpush1.msra.mxu0 %v4163
    %4444 = vmatprep.subr.mxu0 0.0
    %4445 = vmatpush1.msra.mxu0 %v4164
    %4446 = vmatprep.subr.mxu0 0.0
    %4447 = vmatpush1.msra.mxu0 %v4165
    %4448 = vmatprep.subr.mxu0 0.0
    %4449 = vmatpush1.msra.mxu0 %v4166
    %4450 = vmatprep.subr.mxu0 0.0
    %4451 = vmatpush1.msra.mxu0 %v4167
    %4452 = vmatprep.subr.mxu0 0.0
    %4453 = vmatpush1.msra.mxu0 %v4168
    %4454 = vmatprep.subr.mxu0 0.0
    %4455 = vmatpush1.msra.mxu0 %v4169
    %4456 = vmatprep.subr.mxu0 0.0
    %4457 = vmatpush1.msra.mxu0 %v4170
    %4458 = vmatprep.subr.mxu0 0.0
    %4459 = vmatpush1.msra.mxu0 %v4171
    %4460 = vmatprep.subr.mxu0 0.0
    %4461 = vmatpush1.msra.mxu0 %v4172
    %4462 = vmatprep.subr.mxu0 0.0
    %4463 = vmatpush1.msra.mxu0 %v4173
    %4464 = vmatprep.subr.mxu0 0.0
    %4465 = vmatpush1.msra.mxu0 %v4174
    %4466 = vmatprep.subr.mxu0 0.0
    %4467 = vmatpush1.msra.mxu0 %v4175
    %4468 = vmatprep.subr.mxu0 0.0
    %4469 = vmatpush1.msra.mxu0 %v4176
    %4470 = vmatprep.subr.mxu0 0.0
    %4471 = vmatpush1.msra.mxu0 %v4177
    %4472 = vmatprep.subr.mxu0 0.0
    %4473 = vmatpush1.msra.mxu0 %v4178
    %4474 = vmatprep.mubr.f32.mxu0 %v4132
    %4475 = vmatmul.mubr.f32.gmra.mrb[0].mxu0 %v4131
    %v4476 = vpop.f32.mrb[0].mxu0
    %v4477 = vadd.f32 %v4408, %v4476
    %v4478 = vpop.f32.mrb[0].mxu0
    %4479 = vdwg.mxu0
    %4480 = vmatprep.subr.mxu0 0.0
    %4481 = vmatpush1.msra.mxu0 %v4179
    %4482 = vmatprep.subr.mxu0 0.0
    %4483 = vmatpush1.msra.mxu0 %v4180
    %4484 = vmatprep.subr.mxu0 0.0
    %4485 = vmatpush1.msra.mxu0 %v4181
    %4486 = vmatprep.subr.mxu0 0.0
    %4487 = vmatpush1.msra.mxu0 %v4182
    %4488 = vmatprep.subr.mxu0 0.0
    %4489 = vmatpush1.msra.mxu0 %v4183
    %4490 = vmatprep.subr.mxu0 0.0
    %4491 = vmatpush1.msra.mxu0 %v4184
    %4492 = vmatprep.subr.mxu0 0.0
    %4493 = vmatpush1.msra.mxu0 %v4185
    %4494 = vmatprep.subr.mxu0 0.0
    %4495 = vmatpush1.msra.mxu0 %v4186
    %4496 = vmatprep.subr.mxu0 0.0
    %4497 = vmatpush1.msra.mxu0 %v4187
    %4498 = vmatprep.subr.mxu0 0.0
    %4499 = vmatpush1.msra.mxu0 %v4188
    %4500 = vmatprep.subr.mxu0 0.0
    %4501 = vmatpush1.msra.mxu0 %v4189
    %4502 = vmatprep.subr.mxu0 0.0
    %4503 = vmatpush1.msra.mxu0 %v4190
    %4504 = vmatprep.subr.mxu0 0.0
    %4505 = vmatpush1.msra.mxu0 %v4191
    %4506 = vmatprep.subr.mxu0 0.0
    %4507 = vmatpush1.msra.mxu0 %v4192
    %4508 = vmatprep.subr.mxu0 0.0
    %4509 = vmatpush1.msra.mxu0 %v4193
    %4510 = vmatprep.subr.mxu0 0.0
    %4511 = vmatpush1.msra.mxu0 %v4194
    %4512 = vmatprep.subr.mxu0 0.0
    %4513 = vmatpush1.msra.mxu0 %v4195
    %4514 = vmatprep.subr.mxu0 0.0
    %4515 = vmatpush1.msra.mxu0 %v4196
    %4516 = vmatprep.subr.mxu0 0.0
    %4517 = vmatpush1.msra.mxu0 %v4197
    %4518 = vmatprep.subr.mxu0 0.0
    %4519 = vmatpush1.msra.mxu0 %v4198
    %4520 = vmatprep.subr.mxu0 0.0
    %4521 = vmatpush1.msra.mxu0 %v4199
    %4522 = vmatprep.subr.mxu0 0.0
    %4523 = vmatpush1.msra.mxu0 %v4200
    %4524 = vmatprep.subr.mxu0 0.0
    %4525 = vmatpush1.msra.mxu0 %v4201
    %4526 = vmatprep.subr.mxu0 0.0
    %4527 = vmatpush1.msra.mxu0 %v4202
    %4528 = vmatprep.subr.mxu0 0.0
    %4529 = vmatpush1.msra.mxu0 %v4203
    %4530 = vmatprep.subr.mxu0 0.0
    %4531 = vmatpush1.msra.mxu0 %v4204
    %4532 = vmatprep.subr.mxu0 0.0
    %4533 = vmatpush1.msra.mxu0 %v4205
    %4534 = vmatprep.subr.mxu0 0.0
    %4535 = vmatpush1.msra.mxu0 %v4206
    %4536 = vmatprep.subr.mxu0 0.0
    %4537 = vmatpush1.msra.mxu0 %v4207
    %4538 = vmatprep.subr.mxu0 0.0
    %4539 = vmatpush1.msra.mxu0 %v4208
    %4540 = vmatprep.subr.mxu0 0.0
    %4541 = vmatpush1.msra.mxu0 %v4209
    %4542 = vmatprep.subr.mxu0 0.0
    %4543 = vmatpush1.msra.mxu0 %v4210
    %4544 = vmatprep.mubr.f32.mxu0 %v4134
    %4545 = vmatmul.mubr.f32.gmra.mrb[0].mxu0 %v4133
    %v4546 = vpop.f32.mrb[0].mxu0
    %v4547 = vadd.f32 %v4477, %v4546
    %v4548 = vpop.f32.mrb[0].mxu0
    %4549 = vdwg.mxu0
    %4550 = vmatprep.subr.mxu0 0.0
    %4551 = vmatpush1.msra.mxu0 %v4211
    %4552 = vmatprep.subr.mxu0 0.0
    %4553 = vmatpush1.msra.mxu0 %v4212
    %4554 = vmatprep.subr.mxu0 0.0
    %4555 = vmatpush1.msra.mxu0 %v4213
    %4556 = vmatprep.subr.mxu0 0.0
    %4557 = vmatpush1.msra.mxu0 %v4214
    %4558 = vmatprep.subr.mxu0 0.0
    %4559 = vmatpush1.msra.mxu0 %v4215
    %4560 = vmatprep.subr.mxu0 0.0
    %4561 = vmatpush1.msra.mxu0 %v4216
    %4562 = vmatprep.subr.mxu0 0.0
    %4563 = vmatpush1.msra.mxu0 %v4217
    %4564 = vmatprep.subr.mxu0 0.0
    %4565 = vmatpush1.msra.mxu0 %v4218
    %4566 = vmatprep.subr.mxu0 0.0
    %4567 = vmatpush1.msra.mxu0 %v4219
    %4568 = vmatprep.subr.mxu0 0.0
    %4569 = vmatpush1.msra.mxu0 %v4220
    %4570 = vmatprep.subr.mxu0 0.0
    %4571 = vmatpush1.msra.mxu0 %v4221
    %4572 = vmatprep.subr.mxu0 0.0
    %4573 = vmatpush1.msra.mxu0 %v4222
    %4574 = vmatprep.subr.mxu0 0.0
    %4575 = vmatpush1.msra.mxu0 %v4223
    %4576 = vmatprep.subr.mxu0 0.0
    %4577 = vmatpush1.msra.mxu0 %v4224
    %4578 = vmatprep.subr.mxu0 0.0
    %4579 = vmatpush1.msra.mxu0 %v4225
    %4580 = vmatprep.subr.mxu0 0.0
    %4581 = vmatpush1.msra.mxu0 %v4226
    %4582 = vmatprep.subr.mxu0 0.0
    %4583 = vmatpush1.msra.mxu0 %v4227
    %4584 = vmatprep.subr.mxu0 0.0
    %4585 = vmatpush1.msra.mxu0 %v4228
    %4586 = vmatprep.subr.mxu0 0.0
    %4587 = vmatpush1.msra.mxu0 %v4229
    %4588 = vmatprep.subr.mxu0 0.0
    %4589 = vmatpush1.msra.mxu0 %v4230
    %4590 = vmatprep.subr.mxu0 0.0
    %4591 = vmatpush1.msra.mxu0 %v4231
    %4592 = vmatprep.subr.mxu0 0.0
    %4593 = vmatpush1.msra.mxu0 %v4232
    %4594 = vmatprep.subr.mxu0 0.0
    %4595 = vmatpush1.msra.mxu0 %v4233
    %4596 = vmatprep.subr.mxu0 0.0
    %4597 = vmatpush1.msra.mxu0 %v4234
    %4598 = vmatprep.subr.mxu0 0.0
    %4599 = vmatpush1.msra.mxu0 %v4235
    %4600 = vmatprep.subr.mxu0 0.0
    %4601 = vmatpush1.msra.mxu0 %v4236
    %4602 = vmatprep.subr.mxu0 0.0
    %4603 = vmatpush1.msra.mxu0 %v4237
    %4604 = vmatprep.subr.mxu0 0.0
    %4605 = vmatpush1.msra.mxu0 %v4238
    %4606 = vmatprep.subr.mxu0 0.0
    %4607 = vmatpush1.msra.mxu0 %v4239
    %4608 = vmatprep.subr.mxu0 0.0
    %4609 = vmatpush1.msra.mxu0 %v4240
    %4610 = vmatprep.subr.mxu0 0.0
    %4611 = vmatpush1.msra.mxu0 %v4241
    %4612 = vmatprep.subr.mxu0 0.0
    %4613 = vmatpush1.msra.mxu0 %v4242
    %4614 = vmatprep.mubr.f32.mxu0 %v4136
    %4615 = vmatmul.mubr.f32.gmra.mrb[0].mxu0 %v4135
    %v4616 = vpop.f32.mrb[0].mxu0
    %v4617 = vadd.f32 %v4547, %v4616
    %v4618 = vpop.f32.mrb[0].mxu0
    %4619 = vdwg.mxu0
    %4620 = vmatprep.subr.mxu0 0.0
    %4621 = vmatpush1.msra.mxu0 %v4243
    %4622 = vmatprep.subr.mxu0 0.0
    %4623 = vmatpush1.msra.mxu0 %v4244
    %4624 = vmatprep.subr.mxu0 0.0
    %4625 = vmatpush1.msra.mxu0 %v4245
    %4626 = vmatprep.subr.mxu0 0.0
    %4627 = vmatpush1.msra.mxu0 %v4246
    %4628 = vmatprep.subr.mxu0 0.0
    %4629 = vmatpush1.msra.mxu0 %v4247
    %4630 = vmatprep.subr.mxu0 0.0
    %4631 = vmatpush1.msra.mxu0 %v4248
    %4632 = vmatprep.subr.mxu0 0.0
    %4633 = vmatpush1.msra.mxu0 %v4249
    %4634 = vmatprep.subr.mxu0 0.0
    %4635 = vmatpush1.msra.mxu0 %v4250
    %4636 = vmatprep.subr.mxu0 0.0
    %4637 = vmatpush1.msra.mxu0 %v4251
    %4638 = vmatprep.subr.mxu0 0.0
    %4639 = vmatpush1.msra.mxu0 %v4252
    %4640 = vmatprep.subr.mxu0 0.0
    %4641 = vmatpush1.msra.mxu0 %v4253
    %4642 = vmatprep.subr.mxu0 0.0
    %4643 = vmatpush1.msra.mxu0 %v4254
    %4644 = vmatprep.subr.mxu0 0.0
    %4645 = vmatpush1.msra.mxu0 %v4255
    %4646 = vmatprep.subr.mxu0 0.0
    %4647 = vmatpush1.msra.mxu0 %v4256
    %4648 = vmatprep.subr.mxu0 0.0
    %4649 = vmatpush1.msra.mxu0 %v4257
    %4650 = vmatprep.subr.mxu0 0.0
    %4651 = vmatpush1.msra.mxu0 %v4258
    %4652 = vmatprep.subr.mxu0 0.0
    %4653 = vmatpush1.msra.mxu0 %v4259
    %4654 = vmatprep.subr.mxu0 0.0
    %4655 = vmatpush1.msra.mxu0 %v4260
    %4656 = vmatprep.subr.mxu0 0.0
    %4657 = vmatpush1.msra.mxu0 %v4261
    %4658 = vmatprep.subr.mxu0 0.0
    %4659 = vmatpush1.msra.mxu0 %v4262
    %4660 = vmatprep.subr.mxu0 0.0
    %4661 = vmatpush1.msra.mxu0 %v4263
    %4662 = vmatprep.subr.mxu0 0.0
    %4663 = vmatpush1.msra.mxu0 %v4264
    %4664 = vmatprep.subr.mxu0 0.0
    %4665 = vmatpush1.msra.mxu0 %v4265
    %4666 = vmatprep.subr.mxu0 0.0
    %4667 = vmatpush1.msra.mxu0 %v4266
    %4668 = vmatprep.subr.mxu0 0.0
    %4669 = vmatpush1.msra.mxu0 %v4267
    %4670 = vmatprep.subr.mxu0 0.0
    %4671 = vmatpush1.msra.mxu0 %v4268
    %4672 = vmatprep.subr.mxu0 0.0
    %4673 = vmatpush1.msra.mxu0 %v4269
    %4674 = vmatprep.subr.mxu0 0.0
    %4675 = vmatpush1.msra.mxu0 %v4270
    %4676 = vmatprep.subr.mxu0 0.0
    %4677 = vmatpush1.msra.mxu0 %v4271
    %4678 = vmatprep.subr.mxu0 0.0
    %4679 = vmatpush1.msra.mxu0 %v4272
    %4680 = vmatprep.subr.mxu0 0.0
    %4681 = vmatpush1.msra.mxu0 %v4273
    %4682 = vmatprep.subr.mxu0 0.0
    %4683 = vmatpush1.msra.mxu0 %v4274
    %4684 = vmatprep.mubr.f32.mxu0 %v4138
    %4685 = vmatmul.mubr.f32.gmra.mrb[0].mxu0 %v4137
    %v4686 = vpop.f32.mrb[0].mxu0
    %v4687 = vadd.f32 %v4617, %v4686
    %v4688 = vpop.f32.mrb[0].mxu0
    %4689 = vdwg.mxu0
    %4690 = vmatprep.subr.mxu0 0.0
    %4691 = vmatpush1.msra.mxu0 %v4275
    %4692 = vmatprep.subr.mxu0 0.0
    %4693 = vmatpush1.msra.mxu0 %v4276
    %4694 = vmatprep.subr.mxu0 0.0
    %4695 = vmatpush1.msra.mxu0 %v4277
    %4696 = vmatprep.subr.mxu0 0.0
    %4697 = vmatpush1.msra.mxu0 %v4278
    %4698 = vmatprep.subr.mxu0 0.0
    %4699 = vmatpush1.msra.mxu0 %v4279
    %4700 = vmatprep.subr.mxu0 0.0
    %4701 = vmatpush1.msra.mxu0 %v4280
    %4702 = vmatprep.subr.mxu0 0.0
    %4703 = vmatpush1.msra.mxu0 %v4281
    %4704 = vmatprep.subr.mxu0 0.0
    %4705 = vmatpush1.msra.mxu0 %v4282
    %4706 = vmatprep.subr.mxu0 0.0
    %4707 = vmatpush1.msra.mxu0 %v4283
    %4708 = vmatprep.subr.mxu0 0.0
    %4709 = vmatpush1.msra.mxu0 %v4284
    %4710 = vmatprep.subr.mxu0 0.0
    %4711 = vmatpush1.msra.mxu0 %v4285
    %4712 = vmatprep.subr.mxu0 0.0
    %4713 = vmatpush1.msra.mxu0 %v4286
    %4714 = vmatprep.subr.mxu0 0.0
    %4715 = vmatpush1.msra.mxu0 %v4287
    %4716 = vmatprep.subr.mxu0 0.0
    %4717 = vmatpush1.msra.mxu0 %v4288
    %4718 = vmatprep.subr.mxu0 0.0
    %4719 = vmatpush1.msra.mxu0 %v4289
    %4720 = vmatprep.subr.mxu0 0.0
    %4721 = vmatpush1.msra.mxu0 %v4290
    %4722 = vmatprep.subr.mxu0 0.0
    %4723 = vmatpush1.msra.mxu0 %v4291
    %4724 = vmatprep.subr.mxu0 0.0
    %4725 = vmatpush1.msra.mxu0 %v4292
    %4726 = vmatprep.subr.mxu0 0.0
    %4727 = vmatpush1.msra.mxu0 %v4293
    %4728 = vmatprep.subr.mxu0 0.0
    %4729 = vmatpush1.msra.mxu0 %v4294
    %4730 = vmatprep.subr.mxu0 0.0
    %4731 = vmatpush1.msra.mxu0 %v4295
    %4732 = vmatprep.subr.mxu0 0.0
    %4733 = vmatpush1.msra.mxu0 %v4296
    %4734 = vmatprep.subr.mxu0 0.0
    %4735 = vmatpush1.msra.mxu0 %v4297
    %4736 = vmatprep.subr.mxu0 0.0
    %4737 = vmatpush1.msra.mxu0 %v4298
    %4738 = vmatprep.subr.mxu0 0.0
    %4739 = vmatpush1.msra.mxu0 %v4299
    %4740 = vmatprep.subr.mxu0 0.0
    %4741 = vmatpush1.msra.mxu0 %v4300
    %4742 = vmatprep.subr.mxu0 0.0
    %4743 = vmatpush1.msra.mxu0 %v4301
    %4744 = vmatprep.subr.mxu0 0.0
    %4745 = vmatpush1.msra.mxu0 %v4302
    %4746 = vmatprep.subr.mxu0 0.0
    %4747 = vmatpush1.msra.mxu0 %v4303
    %4748 = vmatprep.subr.mxu0 0.0
    %4749 = vmatpush1.msra.mxu0 %v4304
    %4750 = vmatprep.subr.mxu0 0.0
    %4751 = vmatpush1.msra.mxu0 %v4305
    %4752 = vmatprep.subr.mxu0 0.0
    %4753 = vmatpush1.msra.mxu0 %v4306
    %4754 = vmatprep.mubr.f32.mxu0 %v4140
    %4755 = vmatmul.mubr.f32.gmra.mrb[0].mxu0 %v4139
    %v4756 = vpop.f32.mrb[0].mxu0
    %v4757 = vadd.f32 %v4687, %v4756
    %v4758 = vpop.f32.mrb[0].mxu0
    %4759 = vdwg.mxu0
    %4760 = vmatprep.subr.mxu0 0.0
    %4761 = vmatpush1.msra.mxu0 %v4307
    %4762 = vmatprep.subr.mxu0 0.0
    %4763 = vmatpush1.msra.mxu0 %v4308
    %4764 = vmatprep.subr.mxu0 0.0
    %4765 = vmatpush1.msra.mxu0 %v4309
    %4766 = vmatprep.subr.mxu0 0.0
    %4767 = vmatpush1.msra.mxu0 %v4310
    %4768 = vmatprep.subr.mxu0 0.0
    %4769 = vmatpush1.msra.mxu0 %v4311
    %4770 = vmatprep.subr.mxu0 0.0
    %4771 = vmatpush1.msra.mxu0 %v4312
    %4772 = vmatprep.subr.mxu0 0.0
    %4773 = vmatpush1.msra.mxu0 %v4313
    %4774 = vmatprep.subr.mxu0 0.0
    %4775 = vmatpush1.msra.mxu0 %v4314
    %4776 = vmatprep.subr.mxu0 0.0
    %4777 = vmatpush1.msra.mxu0 %v4315
    %4778 = vmatprep.subr.mxu0 0.0
    %4779 = vmatpush1.msra.mxu0 %v4316
    %4780 = vmatprep.subr.mxu0 0.0
    %4781 = vmatpush1.msra.mxu0 %v4317
    %4782 = vmatprep.subr.mxu0 0.0
    %4783 = vmatpush1.msra.mxu0 %v4318
    %4784 = vmatprep.subr.mxu0 0.0
    %4785 = vmatpush1.msra.mxu0 %v4319
    %4786 = vmatprep.subr.mxu0 0.0
    %4787 = vmatpush1.msra.mxu0 %v4320
    %4788 = vmatprep.subr.mxu0 0.0
    %4789 = vmatpush1.msra.mxu0 %v4321
    %4790 = vmatprep.subr.mxu0 0.0
    %4791 = vmatpush1.msra.mxu0 %v4322
    %4792 = vmatprep.subr.mxu0 0.0
    %4793 = vmatpush1.msra.mxu0 %v4323
    %4794 = vmatprep.subr.mxu0 0.0
    %4795 = vmatpush1.msra.mxu0 %v4324
    %4796 = vmatprep.subr.mxu0 0.0
    %4797 = vmatpush1.msra.mxu0 %v4325
    %4798 = vmatprep.subr.mxu0 0.0
    %4799 = vmatpush1.msra.mxu0 %v4326
    %4800 = vmatprep.subr.mxu0 0.0
    %4801 = vmatpush1.msra.mxu0 %v4327
    %4802 = vmatprep.subr.mxu0 0.0
    %4803 = vmatpush1.msra.mxu0 %v4328
    %4804 = vmatprep.subr.mxu0 0.0
    %4805 = vmatpush1.msra.mxu0 %v4329
    %4806 = vmatprep.subr.mxu0 0.0
    %4807 = vmatpush1.msra.mxu0 %v4330
    %4808 = vmatprep.subr.mxu0 0.0
    %4809 = vmatpush1.msra.mxu0 %v4331
    %4810 = vmatprep.subr.mxu0 0.0
    %4811 = vmatpush1.msra.mxu0 %v4332
    %4812 = vmatprep.subr.mxu0 0.0
    %4813 = vmatpush1.msra.mxu0 %v4333
    %4814 = vmatprep.subr.mxu0 0.0
    %4815 = vmatpush1.msra.mxu0 %v4334
    %4816 = vmatprep.subr.mxu0 0.0
    %4817 = vmatpush1.msra.mxu0 %v4335
    %4818 = vmatprep.subr.mxu0 0.0
    %4819 = vmatpush1.msra.mxu0 %v4336
    %4820 = vmatprep.subr.mxu0 0.0
    %4821 = vmatpush1.msra.mxu0 %v4337
    %4822 = vmatprep.subr.mxu0 0.0
    %4823 = vmatpush1.msra.mxu0 %v4338
    %4824 = vmatprep.mubr.f32.mxu0 %v4142
    %4825 = vmatmul.mubr.f32.gmra.mrb[0].mxu0 %v4141
    %v4826 = vpop.f32.mrb[0].mxu0
    %v4827 = vadd.f32 %v4757, %v4826
    %v4828 = vpop.f32.mrb[0].mxu0
    %4829 = vdwg.mxu0
    %4830 = vmatprep.subr.mxu0 0.0
    %4831 = vmatpush1.msra.mxu0 %v4339
    %4832 = vmatprep.subr.mxu0 0.0
    %4833 = vmatpush1.msra.mxu0 %v4340
    %4834 = vmatprep.subr.mxu0 0.0
    %4835 = vmatpush1.msra.mxu0 %v4341
    %4836 = vmatprep.subr.mxu0 0.0
    %4837 = vmatpush1.msra.mxu0 %v4342
    %4838 = vmatprep.subr.mxu0 0.0
    %4839 = vmatpush1.msra.mxu0 %v4343
    %4840 = vmatprep.subr.mxu0 0.0
    %4841 = vmatpush1.msra.mxu0 %v4344
    %4842 = vmatprep.subr.mxu0 0.0
    %4843 = vmatpush1.msra.mxu0 %v4345
    %4844 = vmatprep.subr.mxu0 0.0
    %4845 = vmatpush1.msra.mxu0 %v4346
    %4846 = vmatprep.subr.mxu0 0.0
    %4847 = vmatpush1.msra.mxu0 %v4347
    %4848 = vmatprep.subr.mxu0 0.0
    %4849 = vmatpush1.msra.mxu0 %v4348
    %4850 = vmatprep.subr.mxu0 0.0
    %4851 = vmatpush1.msra.mxu0 %v4349
    %4852 = vmatprep.subr.mxu0 0.0
    %4853 = vmatpush1.msra.mxu0 %v4350
    %4854 = vmatprep.subr.mxu0 0.0
    %4855 = vmatpush1.msra.mxu0 %v4351
    %4856 = vmatprep.subr.mxu0 0.0
    %4857 = vmatpush1.msra.mxu0 %v4352
    %4858 = vmatprep.subr.mxu0 0.0
    %4859 = vmatpush1.msra.mxu0 %v4353
    %4860 = vmatprep.subr.mxu0 0.0
    %4861 = vmatpush1.msra.mxu0 %v4354
    %4862 = vmatprep.subr.mxu0 0.0
    %4863 = vmatpush1.msra.mxu0 %v4355
    %4864 = vmatprep.subr.mxu0 0.0
    %4865 = vmatpush1.msra.mxu0 %v4356
    %4866 = vmatprep.subr.mxu0 0.0
    %4867 = vmatpush1.msra.mxu0 %v4357
    %4868 = vmatprep.subr.mxu0 0.0
    %4869 = vmatpush1.msra.mxu0 %v4358
    %4870 = vmatprep.subr.mxu0 0.0
    %4871 = vmatpush1.msra.mxu0 %v4359
    %4872 = vmatprep.subr.mxu0 0.0
    %4873 = vmatpush1.msra.mxu0 %v4360
    %4874 = vmatprep.subr.mxu0 0.0
    %4875 = vmatpush1.msra.mxu0 %v4361
    %4876 = vmatprep.subr.mxu0 0.0
    %4877 = vmatpush1.msra.mxu0 %v4362
    %4878 = vmatprep.subr.mxu0 0.0
    %4879 = vmatpush1.msra.mxu0 %v4363
    %4880 = vmatprep.subr.mxu0 0.0
    %4881 = vmatpush1.msra.mxu0 %v4364
    %4882 = vmatprep.subr.mxu0 0.0
    %4883 = vmatpush1.msra.mxu0 %v4365
    %4884 = vmatprep.subr.mxu0 0.0
    %4885 = vmatpush1.msra.mxu0 %v4366
    %4886 = vmatprep.subr.mxu0 0.0
    %4887 = vmatpush1.msra.mxu0 %v4367
    %4888 = vmatprep.subr.mxu0 0.0
    %4889 = vmatpush1.msra.mxu0 %v4368
    %4890 = vmatprep.subr.mxu0 0.0
    %4891 = vmatpush1.msra.mxu0 %v4369
    %4892 = vmatprep.subr.mxu0 0.0
    %4893 = vmatpush1.msra.mxu0 %v4370
    %4894 = vmatprep.mubr.f32.mxu0 %v4144
    %4895 = vmatmul.mubr.f32.gmra.mrb[0].mxu0 %v4143
    %v4896 = vpop.f32.mrb[0].mxu0
    %v4897 = vadd.f32 %v4827, %v4896
    %v4898 = vpop.f32.mrb[0].mxu0
    %4899 = vdwg.mxu0
    %4900 = vmatprep.subr.mxu0 0.0
    %4901 = vmatpush1.msra.mxu0 %v4371
    %4902 = vmatprep.subr.mxu0 0.0
    %4903 = vmatpush1.msra.mxu0 %v4372
    %4904 = vmatprep.subr.mxu0 0.0
    %4905 = vmatpush1.msra.mxu0 %v4373
    %4906 = vmatprep.subr.mxu0 0.0
    %4907 = vmatpush1.msra.mxu0 %v4374
    %4908 = vmatprep.subr.mxu0 0.0
    %4909 = vmatpush1.msra.mxu0 %v4375
    %4910 = vmatprep.subr.mxu0 0.0
    %4911 = vmatpush1.msra.mxu0 %v4376
    %4912 = vmatprep.subr.mxu0 0.0
    %4913 = vmatpush1.msra.mxu0 %v4377
    %4914 = vmatprep.subr.mxu0 0.0
    %4915 = vmatpush1.msra.mxu0 %v4378
    %4916 = vmatprep.subr.mxu0 0.0
    %4917 = vmatpush1.msra.mxu0 %v4379
    %4918 = vmatprep.subr.mxu0 0.0
    %4919 = vmatpush1.msra.mxu0 %v4380
    %4920 = vmatprep.subr.mxu0 0.0
    %4921 = vmatpush1.msra.mxu0 %v4381
    %4922 = vmatprep.subr.mxu0 0.0
    %4923 = vmatpush1.msra.mxu0 %v4382
    %4924 = vmatprep.subr.mxu0 0.0
    %4925 = vmatpush1.msra.mxu0 %v4383
    %4926 = vmatprep.subr.mxu0 0.0
    %4927 = vmatpush1.msra.mxu0 %v4384
    %4928 = vmatprep.subr.mxu0 0.0
    %4929 = vmatpush1.msra.mxu0 %v4385
    %4930 = vmatprep.subr.mxu0 0.0
    %4931 = vmatpush1.msra.mxu0 %v4386
    %4932 = vmatprep.subr.mxu0 0.0
    %4933 = vmatpush1.msra.mxu0 %v4387
    %4934 = vmatprep.subr.mxu0 0.0
    %4935 = vmatpush1.msra.mxu0 %v4388
    %4936 = vmatprep.subr.mxu0 0.0
    %4937 = vmatpush1.msra.mxu0 %v4389
    %4938 = vmatprep.subr.mxu0 0.0
    %4939 = vmatpush1.msra.mxu0 %v4390
    %4940 = vmatprep.subr.mxu0 0.0
    %4941 = vmatpush1.msra.mxu0 %v4391
    %4942 = vmatprep.subr.mxu0 0.0
    %4943 = vmatpush1.msra.mxu0 %v4392
    %4944 = vmatprep.subr.mxu0 0.0
    %4945 = vmatpush1.msra.mxu0 %v4393
    %4946 = vmatprep.subr.mxu0 0.0
    %4947 = vmatpush1.msra.mxu0 %v4394
    %4948 = vmatprep.subr.mxu0 0.0
    %4949 = vmatpush1.msra.mxu0 %v4395
    %4950 = vmatprep.subr.mxu0 0.0
    %4951 = vmatpush1.msra.mxu0 %v4396
    %4952 = vmatprep.subr.mxu0 0.0
    %4953 = vmatpush1.msra.mxu0 %v4397
    %4954 = vmatprep.subr.mxu0 0.0
    %4955 = vmatpush1.msra.mxu0 %v4398
    %4956 = vmatprep.subr.mxu0 0.0
    %4957 = vmatpush1.msra.mxu0 %v4399
    %4958 = vmatprep.subr.mxu0 0.0
    %4959 = vmatpush1.msra.mxu0 %v4400
    %4960 = vmatprep.subr.mxu0 0.0
    %4961 = vmatpush1.msra.mxu0 %v4401
    %4962 = vmatprep.subr.mxu0 0.0
    %4963 = vmatpush1.msra.mxu0 %v4402
    %4964 = vmatprep.mubr.f32.mxu0 %v4146
    %4965 = vmatmul.mubr.f32.gmra.mrb[0].mxu0 %v4145
    %v4966 = vpop.f32.mrb[0].mxu0
    %v4967 = vadd.f32 %v4897, %v4966
    %v4968 = vpop.f32.mrb[0].mxu0
    %4969 = vdwg.mxu0
    %v4970 = vmax.f32 %v4967, 0.0
    %v4971 = vld [vmem:[%s8] sm:$0xff]
    %v4972 = vld [vmem:[%s8 + $0x8] sm:$0xff]
    %v4973 = vld [vmem:[%s8 + $0x10] sm:$0xff]
    %v4974 = vld [vmem:[%s8 + $0x18] sm:$0xff]
    %v4975 = vld [vmem:[%s10] sm:$0x1]
    %v4977 = vlaneseq
    %v4978 = vshrl.u32 %v4977, 7
    %v4979 = vsub.s32 0, %v4978
    %v4980 = vrot.slane %v4975, %v4979
    %vm4982 = vcmask 261120
    %v4984 = vsel %vm4982, %v4970, 0
    %4986 = vmatprep.subr.mxu0 0.0
    %4987 = vmatpush1.msra.mxu0 %v4971
    %4988 = vmatprep.subr.mxu0 0.0
    %4989 = vmatpush1.msra.mxu0 %v4972
    %4990 = vmatprep.subr.mxu0 0.0
    %4991 = vmatpush1.msra.mxu0 %v4973
    %4992 = vmatprep.subr.mxu0 0.0
    %4993 = vmatpush1.msra.mxu0 %v4974
    %4994 = vmatprep.subr.mxu0 0.0
    %4995 = vmatpush1.msra.mxu0 0.0
    %4996 = vmatprep.subr.mxu0 0.0
    %4997 = vmatpush1.msra.mxu0 0.0
    %4998 = vmatprep.subr.mxu0 0.0
    %4999 = vmatpush1.msra.mxu0 0.0
    %5000 = vmatprep.subr.mxu0 0.0
    %5001 = vmatpush1.msra.mxu0 0.0
    %5002 = vmatprep.subr.mxu0 0.0
    %5003 = vmatpush1.msra.mxu0 0.0
    %5004 = vmatprep.subr.mxu0 0.0
    %5005 = vmatpush1.msra.mxu0 0.0
    %5006 = vmatprep.subr.mxu0 0.0
    %5007 = vmatpush1.msra.mxu0 0.0
    %5008 = vmatprep.subr.mxu0 0.0
    %5009 = vmatpush1.msra.mxu0 0.0
    %5010 = vmatprep.subr.mxu0 0.0
    %5011 = vmatpush1.msra.mxu0 0.0
    %5012 = vmatprep.subr.mxu0 0.0
    %5013 = vmatpush1.msra.mxu0 0.0
    %5014 = vmatprep.subr.mxu0 0.0
    %5015 = vmatpush1.msra.mxu0 0.0
    %5016 = vmatprep.subr.mxu0 0.0
    %5017 = vmatpush1.msra.mxu0 0.0
    %5018 = vmatprep.subr.mxu0 0.0
    %5019 = vmatpush1.msra.mxu0 0.0
    %5020 = vmatprep.subr.mxu0 0.0
    %5021 = vmatpush1.msra.mxu0 0.0
    %5022 = vmatprep.subr.mxu0 0.0
    %5023 = vmatpush1.msra.mxu0 0.0
    %5024 = vmatprep.subr.mxu0 0.0
    %5025 = vmatpush1.msra.mxu0 0.0
    %5026 = vmatprep.subr.mxu0 0.0
    %5027 = vmatpush1.msra.mxu0 0.0
    %5028 = vmatprep.subr.mxu0 0.0
    %5029 = vmatpush1.msra.mxu0 0.0
    %5030 = vmatprep.subr.mxu0 0.0
    %5031 = vmatpush1.msra.mxu0 0.0
    %5032 = vmatprep.subr.mxu0 0.0
    %5033 = vmatpush1.msra.mxu0 0.0
    %5034 = vmatprep.subr.mxu0 0.0
    %5035 = vmatpush1.msra.mxu0 0.0
    %5036 = vmatprep.subr.mxu0 0.0
    %5037 = vmatpush1.msra.mxu0 0.0
    %5038 = vmatprep.subr.mxu0 0.0
    %5039 = vmatpush1.msra.mxu0 0.0
    %5040 = vmatprep.subr.mxu0 0.0
    %5041 = vmatpush1.msra.mxu0 0.0
    %5042 = vmatprep.subr.mxu0 0.0
    %5043 = vmatpush1.msra.mxu0 0.0
    %5044 = vmatprep.subr.mxu0 0.0
    %5045 = vmatpush1.msra.mxu0 0.0
    %5046 = vmatprep.subr.mxu0 0.0
    %5047 = vmatpush1.msra.mxu0 0.0
    %5048 = vmatprep.subr.mxu0 0.0
    %5049 = vmatpush1.msra.mxu0 0.0
    %5050 = vmatprep.mubr.f32.mxu0 0.0
    %5051 = vmatmul.mubr.f32.gmra.mrb[0].mxu0 %v4984
    %v5052 = vpop.f32.mrb[0].mxu0
    %v5053 = vadd.f32 %v4980, %v5052
    %v5054 = vpop.f32.mrb[0].mxu0
    %5055 = vdwg.mxu0
    %5056 = vst [vmem:[%s11] sm:$0xff] %v5053
    // Predicated region
    $region54: #{forward.1} parent=1 // pred_check
      _
    $region55: #{forward.1} parent=1 // pred_check_branch
      %5058 = sbr.rel (0) target = $region57
    $region56: #{forward.1} parent=1 // pred_region
      _
    $region57: #{forward.1} parent=1 // pred_fallthru
      _
    // Predicated region
    $region58: #{forward.1} parent=1 // pred_check
      _
    $region59: #{forward.1} parent=1 // pred_check_branch
      %5060 = sbr.rel (0) target = $region61
    $region60: #{forward.1} parent=1 // pred_region
      _
    $region61: #{forward.1} parent=1 // pred_fallthru
      _
    %5061 = vsyncpa [#allocation5], 1
    %5062 = vsyncpa [#allocation7], 1

</llo_original>
